<compile_context>
chip_gen: v6e
topology: v6e:2x2x1
jax: 0.10.0
libtpu: 0.0.40
codegen_flags: <defaults>
</compile_context>

<pallas_src>
import jax
import jax.numpy as jnp
from jax.experimental import pallas as pl
from jax.experimental.pallas import tpu as pltpu

LANES = 128                      # lane-dense output width for every kernel
VMEM_LIMIT = 32 * 1024 * 1024    # safe on v5e/v6e (128 MiB) and v7x (64 MiB)


# ----------------------------- Pallas kernels -----------------------------

def _conv_relu_pool_kernel(q0_ref, q1_ref, q2_ref, q3_ref, w_ref, b_ref, o_ref):
    """Fused im2col-matmul + bias + ReLU + 2x2 maxpool.

    q{0..3}_ref: (TILE_M, K) patch rows for the 4 positions of each pool
    window (same pooled output row across the four refs).  Pool commutes with
    the per-channel bias add and with ReLU, so: max over the 4 matmuls, then
    bias, then ReLU.
    """
    w = w_ref[...]
    acc = jnp.dot(q0_ref[...], w, preferred_element_type=jnp.float32)
    for q_ref in (q1_ref, q2_ref, q3_ref):
        acc = jnp.maximum(
            acc, jnp.dot(q_ref[...], w, preferred_element_type=jnp.float32))
    acc = jnp.maximum(acc + b_ref[...], 0.0)
    o_ref[...] = acc.astype(o_ref.dtype)


def _conv_pool_fc_kernel(q0_ref, q1_ref, q2_ref, q3_ref,
                         wc_ref, bc_ref,
                         w1_ref, b1_ref, w2_ref, b2_ref, w3_ref, b3_ref,
                         o_ref, acc_ref):
    """conv2 im2col-matmul + bias + ReLU + 2x2 maxpool, then fc1->fc2->fc3.

    Quad patch rows are position-major (row = p * B_pad + b) so the fc1
    contraction over the 25 spatial positions is 25 aligned
    (B_pad,128)x(128,128) matmuls on the pooled activations still sitting in
    VMEM -- no reshape across the (8,128) tile boundary, no HBM round-trip
    between conv2 and the FC stack.  Weights are zero-padded to 128 output
    lanes, so padded hidden lanes stay exactly zero through the stack.
    """
    wc = wc_ref[...]
    acc = jnp.dot(q0_ref[...], wc, preferred_element_type=jnp.float32)
    for q_ref in (q1_ref, q2_ref, q3_ref):
        acc = jnp.maximum(
            acc, jnp.dot(q_ref[...], wc, preferred_element_type=jnp.float32))
    acc_ref[...] = jnp.maximum(acc + bc_ref[...], 0.0)      # (25*B_pad, 128)

    bp = o_ref.shape[0]                                     # B_pad (mult of 8)
    n_pos = acc_ref.shape[0] // bp                          # 25
    h = jnp.zeros((bp, w1_ref.shape[2]), jnp.float32)
    for p in range(n_pos):                                  # 8-aligned slices
        h = h + jnp.dot(acc_ref[p * bp:(p + 1) * bp, :], w1_ref[p],
                        preferred_element_type=jnp.float32)
    h = jnp.maximum(h + b1_ref[...], 0.0)
    h = jnp.maximum(
        jnp.dot(h, w2_ref[...], preferred_element_type=jnp.float32)
        + b2_ref[...], 0.0)
    o = jnp.dot(h, w3_ref[...], preferred_element_type=jnp.float32) + b3_ref[...]
    o_ref[...] = o.astype(o_ref.dtype)


# ------------------------------ wrappers ------------------------------

def _round_rows(m, max_tile):
    """Pick (padded_rows, tile_rows): tile is 8-aligned, <= max_tile."""
    m8 = -(-m // 8) * 8
    if m8 <= max_tile:
        return m8, m8
    m_pad = -(-m8 // max_tile) * max_tile
    return m_pad, max_tile


def _pad_rows(x, m_pad):
    if x.shape[0] == m_pad:
        return x
    return jnp.pad(x, ((0, m_pad - x.shape[0]), (0, 0)))


def conv_relu_pool(quads, w, b, *, max_tile=512):
    """quads: 4 arrays (M, K); w: (K, 128); b: (1, 128) -> (M_pad, 128)."""
    M, K = quads[0].shape
    N = w.shape[1]
    m_pad, tile = _round_rows(M, max_tile)
    quads = [_pad_rows(q, m_pad) for q in quads]
    grid = (m_pad // tile,)

    flops = 2 * 4 * m_pad * K * N + 6 * m_pad * N
    bytes_accessed = 4 * (4 * m_pad * K + K * N + N + m_pad * N)

    return pl.pallas_call(
        _conv_relu_pool_kernel,
        out_shape=jax.ShapeDtypeStruct((m_pad, N), jnp.float32),
        grid_spec=pltpu.PrefetchScalarGridSpec(
            num_scalar_prefetch=0,
            grid=grid,
            in_specs=[pl.BlockSpec((tile, K), lambda i: (i, 0))] * 4
            + [pl.BlockSpec((K, N), lambda i: (0, 0)),
               pl.BlockSpec((1, N), lambda i: (0, 0))],
            out_specs=pl.BlockSpec((tile, N), lambda i: (i, 0)),
        ),
        compiler_params=pltpu.CompilerParams(
            dimension_semantics=("parallel",),
            vmem_limit_bytes=VMEM_LIMIT),
        cost_estimate=pl.CostEstimate(
            flops=int(flops), transcendentals=0,
            bytes_accessed=int(bytes_accessed)),
    )(*quads, w, b)


def conv_pool_fc(quads, wc, bc, w1, b1, w2, b2, w3, b3, b_pad):
    """Fused conv2+pool+fc stack.

    quads: 4 arrays (25*b_pad, K) position-major; wc: (K, 128); bc: (1, 128);
    w1: (25, 128, 128); w2/w3: (128, 128); biases (1, 128) -> (b_pad, 128).
    """
    M, K = quads[0].shape
    N = wc.shape[1]
    n_pos = M // b_pad

    flops = (2 * 4 * M * K * N + 6 * M * N
             + 2 * b_pad * (n_pos * N * w1.shape[2] + w2.size + w3.size))
    bytes_accessed = 4 * (4 * M * K + K * N + w1.size + w2.size + w3.size
                          + 4 * N + b_pad * N)

    return pl.pallas_call(
        _conv_pool_fc_kernel,
        out_shape=jax.ShapeDtypeStruct((b_pad, w3.shape[1]), jnp.float32),
        grid_spec=pltpu.PrefetchScalarGridSpec(
            num_scalar_prefetch=0,
            grid=(1,),
            in_specs=[pl.BlockSpec((M, K), lambda i: (0, 0))] * 4 + [
                pl.BlockSpec(wc.shape, lambda i: (0, 0)),
                pl.BlockSpec(bc.shape, lambda i: (0, 0)),
                pl.BlockSpec(w1.shape, lambda i: (0, 0, 0)),
                pl.BlockSpec(b1.shape, lambda i: (0, 0)),
                pl.BlockSpec(w2.shape, lambda i: (0, 0)),
                pl.BlockSpec(b2.shape, lambda i: (0, 0)),
                pl.BlockSpec(w3.shape, lambda i: (0, 0)),
                pl.BlockSpec(b3.shape, lambda i: (0, 0)),
            ],
            out_specs=pl.BlockSpec((b_pad, w3.shape[1]), lambda i: (0, 0)),
            scratch_shapes=[pltpu.VMEM((M, N), jnp.float32)],
        ),
        compiler_params=pltpu.CompilerParams(
            dimension_semantics=("arbitrary",),
            vmem_limit_bytes=VMEM_LIMIT),
        cost_estimate=pl.CostEstimate(
            flops=int(flops), transcendentals=0,
            bytes_accessed=int(bytes_accessed)),
    )(*quads, wc, bc, w1, b1, w2, b2, w3, b3)


# ------------------------- host-side patch extraction -------------------------

def _im2col(x_nhwc, kh, kw):
    """(B,H,W,Cin) -> (B,Ho,Wo,Cin*kh*kw), feature order (c, ki, kj)."""
    B, H, W, Cin = x_nhwc.shape
    Ho, Wo = H - kh + 1, W - kw + 1
    patches = [x_nhwc[:, ki:ki + Ho, kj:kj + Wo, :]
               for ki in range(kh) for kj in range(kw)]
    p = jnp.stack(patches, axis=-1)                 # (B,Ho,Wo,Cin,kh*kw)
    return p.reshape(B, Ho, Wo, Cin * kh * kw), (Ho, Wo)


def _pool_quadrant_patches(x_nhwc, kh, kw):
    """Batch-major quad patches: 4 arrays (B*Hp*Wp, Cin*kh*kw).

    Row r = b*Hp*Wp + hp*Wp + wp; one array per pool-window position
    (di, dj) in ((0,0),(0,1),(1,0),(1,1)).
    """
    B = x_nhwc.shape[0]
    p, (Ho, Wo) = _im2col(x_nhwc, kh, kw)
    Hp, Wp = Ho // 2, Wo // 2
    quads = []
    for di in range(2):
        for dj in range(2):
            q = p[:, di:di + 2 * Hp:2, dj:dj + 2 * Wp:2, :]
            quads.append(q.reshape(B * Hp * Wp, -1))
    return quads, (Hp, Wp)


def _pool_quadrant_patches_pos_major(x_nhwc, kh, kw, b_pad):
    """Position-major quad patches: 4 arrays (Hp*Wp*b_pad, Cin*kh*kw).

    Row r = (hp*Wp + wp)*b_pad + b; batch axis zero-padded to b_pad.
    """
    B = x_nhwc.shape[0]
    p, (Ho, Wo) = _im2col(x_nhwc, kh, kw)
    Hp, Wp = Ho // 2, Wo // 2
    quads = []
    for di in range(2):
        for dj in range(2):
            q = p[:, di:di + 2 * Hp:2, dj:dj + 2 * Wp:2, :]   # (B,Hp,Wp,K)
            q = jnp.transpose(q, (1, 2, 0, 3))                # (Hp,Wp,B,K)
            if b_pad != B:
                q = jnp.pad(q, ((0, 0), (0, 0), (0, b_pad - B), (0, 0)))
            quads.append(q.reshape(Hp * Wp * b_pad, -1))
    return quads, (Hp, Wp)


# ------------------------------ parameter prep ------------------------------

def _pad_cols(a, n):
    return jnp.pad(a, ((0, 0), (0, n - a.shape[1])))


def prepare_params(params):
    """One-time reshape/transpose/zero-pad of PyTorch-layout weights."""
    p = {}
    # Conv weights (Cout, Cin, KH, KW) -> (Cin*KH*KW, 128); biases -> (1, 128).
    for name in ("conv1", "conv2"):
        w = params[name + "_w"]
        cout = w.shape[0]
        p[name + "_w"] = _pad_cols(w.reshape(cout, -1).T, LANES)
        p[name + "_b"] = _pad_cols(params[name + "_b"].reshape(1, -1), LANES)
    # fc1 consumes the pooled conv2 activations directly from VMEM laid out as
    # 25 position rows of 128 (padded) channels per batch row.  Rearrange the
    # PyTorch (c, h, w) feature order into (p=(h,w), c_pad128, out_pad128).
    w1 = params["fc1_w"].reshape(120, 16, 5, 5)                 # (o, c, h, w)
    w1 = w1.transpose(2, 3, 1, 0).reshape(25, 16, 120)          # (p, c, o)
    p["fc1_w"] = jnp.pad(w1, ((0, 0), (0, LANES - 16), (0, LANES - 120)))
    p["fc1_b"] = _pad_cols(params["fc1_b"].reshape(1, -1), LANES)
    # fc2 / fc3: (out, in) -> (in_pad128, out_pad128), zero-padded.
    for name, k_in in (("fc2", 120), ("fc3", 84)):
        w = params[name + "_w"].T                               # (in, out)
        p[name + "_w"] = jnp.pad(
            w, ((0, LANES - k_in), (0, LANES - w.shape[1])))
        p[name + "_b"] = _pad_cols(params[name + "_b"].reshape(1, -1), LANES)
    return p


# ------------------------------ LeNet forward ------------------------------

def lenet_forward(prep, x):
    """x: (B, 1, 28, 28) NCHW float32 -> (B, 10)."""
    B = x.shape[0]
    # conv1 (pad=2) + ReLU + 2x2 maxpool, fused in one Pallas kernel.
    x = jnp.transpose(x, (0, 2, 3, 1))                       # NHWC (B,28,28,1)
    x = jnp.pad(x, ((0, 0), (2, 2), (2, 2), (0, 0)))         # (B,32,32,1)
    quads1, (hp1, wp1) = _pool_quadrant_patches(x, 5, 5)
    y1 = conv_relu_pool(quads1, prep["conv1_w"], prep["conv1_b"])
    y1 = y1[:B * hp1 * wp1, :6].reshape(B, hp1, wp1, 6)      # (B,14,14,6) NHWC

    # conv2 (no pad) + ReLU + 2x2 maxpool + fc1/fc2/fc3, all in ONE kernel.
    b_pad = -(-B // 8) * 8
    quads2, _ = _pool_quadrant_patches_pos_major(y1, 5, 5, b_pad)
    out = conv_pool_fc(quads2, prep["conv2_w"], prep["conv2_b"],
                       prep["fc1_w"], prep["fc1_b"],
                       prep["fc2_w"], prep["fc2_b"],
                       prep["fc3_w"], prep["fc3_b"], b_pad)
    return out[:B, :10]


# ---------------------------- reference & init ----------------------------

def lenet_reference(params, x):
    """Pure-JAX reference (same math as the PyTorch module)."""
    dn = ("NCHW", "OIHW", "NCHW")
    y = jax.lax.conv_general_dilated(x, params["conv1_w"], (1, 1),
                                     ((2, 2), (2, 2)), dimension_numbers=dn)
    y = jax.nn.relu(y + params["conv1_b"].reshape(1, -1, 1, 1))
    y = jax.lax.reduce_window(y, -jnp.inf, jax.lax.max,
                              (1, 1, 2, 2), (1, 1, 2, 2), "VALID")
    y = jax.lax.conv_general_dilated(y, params["conv2_w"], (1, 1),
                                     ((0, 0), (0, 0)), dimension_numbers=dn)
    y = jax.nn.relu(y + params["conv2_b"].reshape(1, -1, 1, 1))
    y = jax.lax.reduce_window(y, -jnp.inf, jax.lax.max,
                              (1, 1, 2, 2), (1, 1, 2, 2), "VALID")
    y = y.reshape(y.shape[0], -1)
    y = jax.nn.relu(y @ params["fc1_w"].T + params["fc1_b"])
    y = jax.nn.relu(y @ params["fc2_w"].T + params["fc2_b"])
    return y @ params["fc3_w"].T + params["fc3_b"]


def init_params(key):
    """PyTorch-default-style U(-1/sqrt(fan_in), +1/sqrt(fan_in)) init."""
    def u(k, shape, fan_in):
        bound = 1.0 / jnp.sqrt(jnp.float32(fan_in))
        return jax.random.uniform(k, shape, jnp.float32, -bound, bound)

    ks = jax.random.split(key, 10)
    return {
        "conv1_w": u(ks[0], (6, 1, 5, 5), 1 * 5 * 5),
        "conv1_b": u(ks[1], (6,), 1 * 5 * 5),
        "conv2_w": u(ks[2], (16, 6, 5, 5), 6 * 5 * 5),
        "conv2_b": u(ks[3], (16,), 6 * 5 * 5),
        "fc1_w": u(ks[4], (120, 400), 400),
        "fc1_b": u(ks[5], (120,), 400),
        "fc2_w": u(ks[6], (84, 120), 120),
        "fc2_b": u(ks[7], (84,), 120),
        "fc3_w": u(ks[8], (10, 84), 84),
        "fc3_b": u(ks[9], (10,), 84),
    }


if __name__ == "__main__":
    key = jax.random.PRNGKey(0)
    pkey, xkey = jax.random.split(key)
    params = init_params(pkey)
    prep = prepare_params(params)          # one-time weight layout prep
    # LeNet with conv1 padding=2 expects 28x28 single-channel inputs.
    x = jax.random.normal(xkey, (2, 1, 28, 28), dtype=jnp.float32)

    out = jax.block_until_ready(jax.jit(lenet_forward)(prep, x))
    assert out.shape == (2, 10), out.shape
    assert out.dtype == jnp.float32

    ref = jax.block_until_ready(jax.jit(lenet_reference)(params, x))
    err = float(jnp.max(jnp.abs(out - ref)))
    assert err < 2e-2, f"mismatch vs reference: max abs err = {err}"
    print("KERNEL_OK")
</pallas_src>

<mosaic_0001>
module attributes {stable_mosaic.version = 11 : i64} {
  func.func @_conv_relu_pool_kernel(%arg0: i32, %arg1: memref<392x25xf32, #tpu.memory_space<vmem>>, %arg2: memref<392x25xf32, #tpu.memory_space<vmem>>, %arg3: memref<392x25xf32, #tpu.memory_space<vmem>>, %arg4: memref<392x25xf32, #tpu.memory_space<vmem>>, %arg5: memref<25x128xf32, #tpu.memory_space<vmem>>, %arg6: memref<1x128xf32, #tpu.memory_space<vmem>>, %arg7: memref<392x128xf32, #tpu.memory_space<vmem>>) attributes {dimension_semantics = [#tpu.dimension_semantics<parallel>], iteration_bounds = array<i64: 1>, scalar_prefetch = 0 : i64, scratch_operands = 0 : i64, tpu.core_type = #tpu.core_type<tc>, window_params = [{transform_indices = @transform_0, window_bounds = array<i64: 392, 25>}, {transform_indices = @transform_1, window_bounds = array<i64: 392, 25>}, {transform_indices = @transform_2, window_bounds = array<i64: 392, 25>}, {transform_indices = @transform_3, window_bounds = array<i64: 392, 25>}, {pipeline_mode = #tpu.pipeline_mode<synchronous>, transform_indices = @transform_4, window_bounds = array<i64: 25, 128>}, {pipeline_mode = #tpu.pipeline_mode<synchronous>, transform_indices = @transform_5, window_bounds = array<i64: 1, 128>}, {transform_indices = @transform_6, window_bounds = array<i64: 392, 128>}]} {
    %c0 = arith.constant 0 : index
    %c0_0 = arith.constant 0 : index
    %0 = vector.load %arg5[%c0, %c0_0] : memref<25x128xf32, #tpu.memory_space<vmem>>, vector<25x128xf32>
    %c0_1 = arith.constant 0 : index
    %c0_2 = arith.constant 0 : index
    %1 = vector.load %arg1[%c0_1, %c0_2] : memref<392x25xf32, #tpu.memory_space<vmem>>, vector<392x25xf32>
    %cst = arith.constant dense<0.000000e+00> : vector<392x128xf32>
    %2 = tpu.matmul %1, %0, %cst {dimension_numbers = #tpu.dot_dimension_numbers<[1], [0], [0], [1], [0, 0, 1, 1], [], []>} : vector<392x25xf32>, vector<25x128xf32>, vector<392x128xf32> -> vector<392x128xf32>
    %c0_3 = arith.constant 0 : index
    %c0_4 = arith.constant 0 : index
    %3 = vector.load %arg2[%c0_3, %c0_4] : memref<392x25xf32, #tpu.memory_space<vmem>>, vector<392x25xf32>
    %cst_5 = arith.constant dense<0.000000e+00> : vector<392x128xf32>
    %4 = tpu.matmul %3, %0, %cst_5 {dimension_numbers = #tpu.dot_dimension_numbers<[1], [0], [0], [1], [0, 0, 1, 1], [], []>} : vector<392x25xf32>, vector<25x128xf32>, vector<392x128xf32> -> vector<392x128xf32>
    %5 = arith.maximumf %2, %4 : vector<392x128xf32>
    %c0_6 = arith.constant 0 : index
    %c0_7 = arith.constant 0 : index
    %6 = vector.load %arg3[%c0_6, %c0_7] : memref<392x25xf32, #tpu.memory_space<vmem>>, vector<392x25xf32>
    %cst_8 = arith.constant dense<0.000000e+00> : vector<392x128xf32>
    %7 = tpu.matmul %6, %0, %cst_8 {dimension_numbers = #tpu.dot_dimension_numbers<[1], [0], [0], [1], [0, 0, 1, 1], [], []>} : vector<392x25xf32>, vector<25x128xf32>, vector<392x128xf32> -> vector<392x128xf32>
    %8 = arith.maximumf %5, %7 : vector<392x128xf32>
    %c0_9 = arith.constant 0 : index
    %c0_10 = arith.constant 0 : index
    %9 = vector.load %arg4[%c0_9, %c0_10] : memref<392x25xf32, #tpu.memory_space<vmem>>, vector<392x25xf32>
    %cst_11 = arith.constant dense<0.000000e+00> : vector<392x128xf32>
    %10 = tpu.matmul %9, %0, %cst_11 {dimension_numbers = #tpu.dot_dimension_numbers<[1], [0], [0], [1], [0, 0, 1, 1], [], []>} : vector<392x25xf32>, vector<25x128xf32>, vector<392x128xf32> -> vector<392x128xf32>
    %11 = arith.maximumf %8, %10 : vector<392x128xf32>
    %c0_12 = arith.constant 0 : index
    %c0_13 = arith.constant 0 : index
    %12 = vector.load %arg6[%c0_12, %c0_13] : memref<1x128xf32, #tpu.memory_space<vmem>>, vector<1x128xf32>
    %13 = vector.broadcast %12 : vector<1x128xf32> to vector<392x128xf32>
    %14 = arith.addf %11, %13 : vector<392x128xf32>
    %cst_14 = arith.constant 0.000000e+00 : f32
    %15 = vector.broadcast %cst_14 : f32 to vector<392x128xf32>
    %16 = arith.maximumf %14, %15 : vector<392x128xf32>
    %c0_15 = arith.constant 0 : index
    %c0_16 = arith.constant 0 : index
    %17 = vector.load %arg7[%c0_15, %c0_16] : memref<392x128xf32, #tpu.memory_space<vmem>>, vector<392x128xf32>
    tpu.vector_store %arg7[%c0_15, %c0_16], %16 {strides = array<i32>} : memref<392x128xf32, #tpu.memory_space<vmem>>, vector<392x128xf32>,
    return
  }
  func.func @transform_0(%arg0: i32) -> (i32, i32) {
    %c0_i32 = arith.constant 0 : i32
    %c0_i32_0 = arith.constant 0 : i32
    return %arg0, %c0_i32 : i32, i32
  }
  func.func @transform_1(%arg0: i32) -> (i32, i32) {
    %c0_i32 = arith.constant 0 : i32
    %c0_i32_0 = arith.constant 0 : i32
    return %arg0, %c0_i32 : i32, i32
  }
  func.func @transform_2(%arg0: i32) -> (i32, i32) {
    %c0_i32 = arith.constant 0 : i32
    %c0_i32_0 = arith.constant 0 : i32
    return %arg0, %c0_i32 : i32, i32
  }
  func.func @transform_3(%arg0: i32) -> (i32, i32) {
    %c0_i32 = arith.constant 0 : i32
    %c0_i32_0 = arith.constant 0 : i32
    return %arg0, %c0_i32 : i32, i32
  }
  func.func @transform_4(%arg0: i32) -> (i32, i32) {
    %c0_i32 = arith.constant 0 : i32
    %c0_i32_0 = arith.constant 0 : i32
    %c0_i32_1 = arith.constant 0 : i32
    return %c0_i32, %c0_i32_0 : i32, i32
  }
  func.func @transform_5(%arg0: i32) -> (i32, i32) {
    %c0_i32 = arith.constant 0 : i32
    %c0_i32_0 = arith.constant 0 : i32
    %c0_i32_1 = arith.constant 0 : i32
    return %c0_i32, %c0_i32_0 : i32, i32
  }
  func.func @transform_6(%arg0: i32) -> (i32, i32) {
    %c0_i32 = arith.constant 0 : i32
    %c0_i32_0 = arith.constant 0 : i32
    return %arg0, %c0_i32 : i32, i32
  }
}

module attributes {stable_mosaic.version = 11 : i64} {
  func.func @_conv_pool_fc_kernel(%arg0: i32, %arg1: memref<200x150xf32, #tpu.memory_space<vmem>>, %arg2: memref<200x150xf32, #tpu.memory_space<vmem>>, %arg3: memref<200x150xf32, #tpu.memory_space<vmem>>, %arg4: memref<200x150xf32, #tpu.memory_space<vmem>>, %arg5: memref<150x128xf32, #tpu.memory_space<vmem>>, %arg6: memref<1x128xf32, #tpu.memory_space<vmem>>, %arg7: memref<25x128x128xf32, #tpu.memory_space<vmem>>, %arg8: memref<1x128xf32, #tpu.memory_space<vmem>>, %arg9: memref<128x128xf32, #tpu.memory_space<vmem>>, %arg10: memref<1x128xf32, #tpu.memory_space<vmem>>, %arg11: memref<128x128xf32, #tpu.memory_space<vmem>>, %arg12: memref<1x128xf32, #tpu.memory_space<vmem>>, %arg13: memref<8x128xf32, #tpu.memory_space<vmem>>, %arg14: memref<200x128xf32, #tpu.memory_space<vmem>>) attributes {dimension_semantics = [#tpu.dimension_semantics<arbitrary>], iteration_bounds = array<i64: 1>, scalar_prefetch = 0 : i64, scratch_operands = 1 : i64, tpu.core_type = #tpu.core_type<tc>, window_params = [{pipeline_mode = #tpu.pipeline_mode<synchronous>, transform_indices = @transform_0, window_bounds = array<i64: 200, 150>}, {pipeline_mode = #tpu.pipeline_mode<synchronous>, transform_indices = @transform_1, window_bounds = array<i64: 200, 150>}, {pipeline_mode = #tpu.pipeline_mode<synchronous>, transform_indices = @transform_2, window_bounds = array<i64: 200, 150>}, {pipeline_mode = #tpu.pipeline_mode<synchronous>, transform_indices = @transform_3, window_bounds = array<i64: 200, 150>}, {pipeline_mode = #tpu.pipeline_mode<synchronous>, transform_indices = @transform_4, window_bounds = array<i64: 150, 128>}, {pipeline_mode = #tpu.pipeline_mode<synchronous>, transform_indices = @transform_5, window_bounds = array<i64: 1, 128>}, {pipeline_mode = #tpu.pipeline_mode<synchronous>, transform_indices = @transform_6, window_bounds = array<i64: 25, 128, 128>}, {pipeline_mode = #tpu.pipeline_mode<synchronous>, transform_indices = @transform_7, window_bounds = array<i64: 1, 128>}, {pipeline_mode = #tpu.pipeline_mode<synchronous>, transform_indices = @transform_8, window_bounds = array<i64: 128, 128>}, {pipeline_mode = #tpu.pipeline_mode<synchronous>, transform_indices = @transform_9, window_bounds = array<i64: 1, 128>}, {pipeline_mode = #tpu.pipeline_mode<synchronous>, transform_indices = @transform_10, window_bounds = array<i64: 128, 128>}, {pipeline_mode = #tpu.pipeline_mode<synchronous>, transform_indices = @transform_11, window_bounds = array<i64: 1, 128>}, {pipeline_mode = #tpu.pipeline_mode<synchronous>, transform_indices = @transform_12, window_bounds = array<i64: 8, 128>}]} {
    %c0 = arith.constant 0 : index
    %c0_0 = arith.constant 0 : index
    %0 = vector.load %arg5[%c0, %c0_0] : memref<150x128xf32, #tpu.memory_space<vmem>>, vector<150x128xf32>
    %c0_1 = arith.constant 0 : index
    %c0_2 = arith.constant 0 : index
    %1 = vector.load %arg1[%c0_1, %c0_2] : memref<200x150xf32, #tpu.memory_space<vmem>>, vector<200x150xf32>
    %cst = arith.constant dense<0.000000e+00> : vector<200x128xf32>
    %2 = tpu.matmul %1, %0, %cst {dimension_numbers = #tpu.dot_dimension_numbers<[1], [0], [0], [1], [0, 0, 1, 1], [], []>} : vector<200x150xf32>, vector<150x128xf32>, vector<200x128xf32> -> vector<200x128xf32>
    %c0_3 = arith.constant 0 : index
    %c0_4 = arith.constant 0 : index
    %3 = vector.load %arg2[%c0_3, %c0_4] : memref<200x150xf32, #tpu.memory_space<vmem>>, vector<200x150xf32>
    %cst_5 = arith.constant dense<0.000000e+00> : vector<200x128xf32>
    %4 = tpu.matmul %3, %0, %cst_5 {dimension_numbers = #tpu.dot_dimension_numbers<[1], [0], [0], [1], [0, 0, 1, 1], [], []>} : vector<200x150xf32>, vector<150x128xf32>, vector<200x128xf32> -> vector<200x128xf32>
    %5 = arith.maximumf %2, %4 : vector<200x128xf32>
    %c0_6 = arith.constant 0 : index
    %c0_7 = arith.constant 0 : index
    %6 = vector.load %arg3[%c0_6, %c0_7] : memref<200x150xf32, #tpu.memory_space<vmem>>, vector<200x150xf32>
    %cst_8 = arith.constant dense<0.000000e+00> : vector<200x128xf32>
    %7 = tpu.matmul %6, %0, %cst_8 {dimension_numbers = #tpu.dot_dimension_numbers<[1], [0], [0], [1], [0, 0, 1, 1], [], []>} : vector<200x150xf32>, vector<150x128xf32>, vector<200x128xf32> -> vector<200x128xf32>
    %8 = arith.maximumf %5, %7 : vector<200x128xf32>
    %c0_9 = arith.constant 0 : index
    %c0_10 = arith.constant 0 : index
    %9 = vector.load %arg4[%c0_9, %c0_10] : memref<200x150xf32, #tpu.memory_space<vmem>>, vector<200x150xf32>
    %cst_11 = arith.constant dense<0.000000e+00> : vector<200x128xf32>
    %10 = tpu.matmul %9, %0, %cst_11 {dimension_numbers = #tpu.dot_dimension_numbers<[1], [0], [0], [1], [0, 0, 1, 1], [], []>} : vector<200x150xf32>, vector<150x128xf32>, vector<200x128xf32> -> vector<200x128xf32>
    %11 = arith.maximumf %8, %10 : vector<200x128xf32>
    %c0_12 = arith.constant 0 : index
    %c0_13 = arith.constant 0 : index
    %12 = vector.load %arg6[%c0_12, %c0_13] : memref<1x128xf32, #tpu.memory_space<vmem>>, vector<1x128xf32>
    %13 = vector.broadcast %12 : vector<1x128xf32> to vector<200x128xf32>
    %14 = arith.addf %11, %13 : vector<200x128xf32>
    %cst_14 = arith.constant 0.000000e+00 : f32
    %15 = vector.broadcast %cst_14 : f32 to vector<200x128xf32>
    %16 = arith.maximumf %14, %15 : vector<200x128xf32>
    %c0_15 = arith.constant 0 : index
    %c0_16 = arith.constant 0 : index
    %17 = vector.load %arg14[%c0_15, %c0_16] : memref<200x128xf32, #tpu.memory_space<vmem>>, vector<200x128xf32>
    tpu.vector_store %arg14[%c0_15, %c0_16], %16 {strides = array<i32>} : memref<200x128xf32, #tpu.memory_space<vmem>>, vector<200x128xf32>,
    %cst_17 = arith.constant 0.000000e+00 : f32
    %18 = vector.broadcast %cst_17 : f32 to vector<8x128xf32>
    %c0_18 = arith.constant 0 : index
    %c0_19 = arith.constant 0 : index
    %19 = vector.load %arg14[%c0_18, %c0_19] : memref<200x128xf32, #tpu.memory_space<vmem>>, vector<8x128xf32>
    %c0_20 = arith.constant 0 : index
    %c0_21 = arith.constant 0 : index
    %c0_22 = arith.constant 0 : index
    %20 = vector.load %arg7[%c0_20, %c0_21, %c0_22] : memref<25x128x128xf32, #tpu.memory_space<vmem>>, vector<1x128x128xf32>
    %21 = vector.shape_cast %20 : vector<1x128x128xf32> to vector<128x128xf32>
    %cst_23 = arith.constant dense<0.000000e+00> : vector<8x128xf32>
    %22 = tpu.matmul %19, %21, %cst_23 {dimension_numbers = #tpu.dot_dimension_numbers<[1], [0], [0], [1], [0, 0, 1, 1], [], []>} : vector<8x128xf32>, vector<128x128xf32>, vector<8x128xf32> -> vector<8x128xf32>
    %23 = arith.addf %18, %22 : vector<8x128xf32>
    %c8 = arith.constant 8 : index
    %c0_24 = arith.constant 0 : index
    %24 = vector.load %arg14[%c8, %c0_24] : memref<200x128xf32, #tpu.memory_space<vmem>>, vector<8x128xf32>
    %c1 = arith.constant 1 : index
    %c0_25 = arith.constant 0 : index
    %c0_26 = arith.constant 0 : index
    %25 = vector.load %arg7[%c1, %c0_25, %c0_26] : memref<25x128x128xf32, #tpu.memory_space<vmem>>, vector<1x128x128xf32>
    %26 = vector.shape_cast %25 : vector<1x128x128xf32> to vector<128x128xf32>
    %cst_27 = arith.constant dense<0.000000e+00> : vector<8x128xf32>
    %27 = tpu.matmul %24, %26, %cst_27 {dimension_numbers = #tpu.dot_dimension_numbers<[1], [0], [0], [1], [0, 0, 1, 1], [], []>} : vector<8x128xf32>, vector<128x128xf32>, vector<8x128xf32> -> vector<8x128xf32>
    %28 = arith.addf %23, %27 : vector<8x128xf32>
    %c16 = arith.constant 16 : index
    %c0_28 = arith.constant 0 : index
    %29 = vector.load %arg14[%c16, %c0_28] : memref<200x128xf32, #tpu.memory_space<vmem>>, vector<8x128xf32>
    %c2 = arith.constant 2 : index
    %c0_29 = arith.constant 0 : index
    %c0_30 = arith.constant 0 : index
    %30 = vector.load %arg7[%c2, %c0_29, %c0_30] : memref<25x128x128xf32, #tpu.memory_space<vmem>>, vector<1x128x128xf32>
    %31 = vector.shape_cast %30 : vector<1x128x128xf32> to vector<128x128xf32>
    %cst_31 = arith.constant dense<0.000000e+00> : vector<8x128xf32>
    %32 = tpu.matmul %29, %31, %cst_31 {dimension_numbers = #tpu.dot_dimension_numbers<[1], [0], [0], [1], [0, 0, 1, 1], [], []>} : vector<8x128xf32>, vector<128x128xf32>, vector<8x128xf32> -> vector<8x128xf32>
    %33 = arith.addf %28, %32 : vector<8x128xf32>
    %c24 = arith.constant 24 : index
    %c0_32 = arith.constant 0 : index
    %34 = vector.load %arg14[%c24, %c0_32] : memref<200x128xf32, #tpu.memory_space<vmem>>, vector<8x128xf32>
    %c3 = arith.constant 3 : index
    %c0_33 = arith.constant 0 : index
    %c0_34 = arith.constant 0 : index
    %35 = vector.load %arg7[%c3, %c0_33, %c0_34] : memref<25x128x128xf32, #tpu.memory_space<vmem>>, vector<1x128x128xf32>
    %36 = vector.shape_cast %35 : vector<1x128x128xf32> to vector<128x128xf32>
    %cst_35 = arith.constant dense<0.000000e+00> : vector<8x128xf32>
    %37 = tpu.matmul %34, %36, %cst_35 {dimension_numbers = #tpu.dot_dimension_numbers<[1], [0], [0], [1], [0, 0, 1, 1], [], []>} : vector<8x128xf32>, vector<128x128xf32>, vector<8x128xf32> -> vector<8x128xf32>
    %38 = arith.addf %33, %37 : vector<8x128xf32>
    %c32 = arith.constant 32 : index
    %c0_36 = arith.constant 0 : index
    %39 = vector.load %arg14[%c32, %c0_36] : memref<200x128xf32, #tpu.memory_space<vmem>>, vector<8x128xf32>
    %c4 = arith.constant 4 : index
    %c0_37 = arith.constant 0 : index
    %c0_38 = arith.constant 0 : index
    %40 = vector.load %arg7[%c4, %c0_37, %c0_38] : memref<25x128x128xf32, #tpu.memory_space<vmem>>, vector<1x128x128xf32>
    %41 = vector.shape_cast %40 : vector<1x128x128xf32> to vector<128x128xf32>
    %cst_39 = arith.constant dense<0.000000e+00> : vector<8x128xf32>
    %42 = tpu.matmul %39, %41, %cst_39 {dimension_numbers = #tpu.dot_dimension_numbers<[1], [0], [0], [1], [0, 0, 1, 1], [], []>} : vector<8x128xf32>, vector<128x128xf32>, vector<8x128xf32> -> vector<8x128xf32>
    %43 = arith.addf %38, %42 : vector<8x128xf32>
    %c40 = arith.constant 40 : index
    %c0_40 = arith.constant 0 : index
    %44 = vector.load %arg14[%c40, %c0_40] : memref<200x128xf32, #tpu.memory_space<vmem>>, vector<8x128xf32>
    %c5 = arith.constant 5 : index
    %c0_41 = arith.constant 0 : index
    %c0_42 = arith.constant 0 : index
    %45 = vector.load %arg7[%c5, %c0_41, %c0_42] : memref<25x128x128xf32, #tpu.memory_space<vmem>>, vector<1x128x128xf32>
    %46 = vector.shape_cast %45 : vector<1x128x128xf32> to vector<128x128xf32>
    %cst_43 = arith.constant dense<0.000000e+00> : vector<8x128xf32>
    %47 = tpu.matmul %44, %46, %cst_43 {dimension_numbers = #tpu.dot_dimension_numbers<[1], [0], [0], [1], [0, 0, 1, 1], [], []>} : vector<8x128xf32>, vector<128x128xf32>, vector<8x128xf32> -> vector<8x128xf32>
    %48 = arith.addf %43, %47 : vector<8x128xf32>
    %c48 = arith.constant 48 : index
    %c0_44 = arith.constant 0 : index
    %49 = vector.load %arg14[%c48, %c0_44] : memref<200x128xf32, #tpu.memory_space<vmem>>, vector<8x128xf32>
    %c6 = arith.constant 6 : index
    %c0_45 = arith.constant 0 : index
    %c0_46 = arith.constant 0 : index
    %50 = vector.load %arg7[%c6, %c0_45, %c0_46] : memref<25x128x128xf32, #tpu.memory_space<vmem>>, vector<1x128x128xf32>
    %51 = vector.shape_cast %50 : vector<1x128x128xf32> to vector<128x128xf32>
    %cst_47 = arith.constant dense<0.000000e+00> : vector<8x128xf32>
    %52 = tpu.matmul %49, %51, %cst_47 {dimension_numbers = #tpu.dot_dimension_numbers<[1], [0], [0], [1], [0, 0, 1, 1], [], []>} : vector<8x128xf32>, vector<128x128xf32>, vector<8x128xf32> -> vector<8x128xf32>
    %53 = arith.addf %48, %52 : vector<8x128xf32>
    %c56 = arith.constant 56 : index
    %c0_48 = arith.constant 0 : index
    %54 = vector.load %arg14[%c56, %c0_48] : memref<200x128xf32, #tpu.memory_space<vmem>>, vector<8x128xf32>
    %c7 = arith.constant 7 : index
    %c0_49 = arith.constant 0 : index
    %c0_50 = arith.constant 0 : index
    %55 = vector.load %arg7[%c7, %c0_49, %c0_50] : memref<25x128x128xf32, #tpu.memory_space<vmem>>, vector<1x128x128xf32>
    %56 = vector.shape_cast %55 : vector<1x128x128xf32> to vector<128x128xf32>
    %cst_51 = arith.constant dense<0.000000e+00> : vector<8x128xf32>
    %57 = tpu.matmul %54, %56, %cst_51 {dimension_numbers = #tpu.dot_dimension_numbers<[1], [0], [0], [1], [0, 0, 1, 1], [], []>} : vector<8x128xf32>, vector<128x128xf32>, vector<8x128xf32> -> vector<8x128xf32>
    %58 = arith.addf %53, %57 : vector<8x128xf32>
    %c64 = arith.constant 64 : index
    %c0_52 = arith.constant 0 : index
    %59 = vector.load %arg14[%c64, %c0_52] : memref<200x128xf32, #tpu.memory_space<vmem>>, vector<8x128xf32>
    %c8_53 = arith.constant 8 : index
    %c0_54 = arith.constant 0 : index
    %c0_55 = arith.constant 0 : index
    %60 = vector.load %arg7[%c8_53, %c0_54, %c0_55] : memref<25x128x128xf32, #tpu.memory_space<vmem>>, vector<1x128x128xf32>
    %61 = vector.shape_cast %60 : vector<1x128x128xf32> to vector<128x128xf32>
    %cst_56 = arith.constant dense<0.000000e+00> : vector<8x128xf32>
    %62 = tpu.matmul %59, %61, %cst_56 {dimension_numbers = #tpu.dot_dimension_numbers<[1], [0], [0], [1], [0, 0, 1, 1], [], []>} : vector<8x128xf32>, vector<128x128xf32>, vector<8x128xf32> -> vector<8x128xf32>
    %63 = arith.addf %58, %62 : vector<8x128xf32>
    %c72 = arith.constant 72 : index
    %c0_57 = arith.constant 0 : index
    %64 = vector.load %arg14[%c72, %c0_57] : memref<200x128xf32, #tpu.memory_space<vmem>>, vector<8x128xf32>
    %c9 = arith.constant 9 : index
    %c0_58 = arith.constant 0 : index
    %c0_59 = arith.constant 0 : index
    %65 = vector.load %arg7[%c9, %c0_58, %c0_59] : memref<25x128x128xf32, #tpu.memory_space<vmem>>, vector<1x128x128xf32>
    %66 = vector.shape_cast %65 : vector<1x128x128xf32> to vector<128x128xf32>
    %cst_60 = arith.constant dense<0.000000e+00> : vector<8x128xf32>
    %67 = tpu.matmul %64, %66, %cst_60 {dimension_numbers = #tpu.dot_dimension_numbers<[1], [0], [0], [1], [0, 0, 1, 1], [], []>} : vector<8x128xf32>, vector<128x128xf32>, vector<8x128xf32> -> vector<8x128xf32>
    %68 = arith.addf %63, %67 : vector<8x128xf32>
    %c80 = arith.constant 80 : index
    %c0_61 = arith.constant 0 : index
    %69 = vector.load %arg14[%c80, %c0_61] : memref<200x128xf32, #tpu.memory_space<vmem>>, vector<8x128xf32>
    %c10 = arith.constant 10 : index
    %c0_62 = arith.constant 0 : index
    %c0_63 = arith.constant 0 : index
    %70 = vector.load %arg7[%c10, %c0_62, %c0_63] : memref<25x128x128xf32, #tpu.memory_space<vmem>>, vector<1x128x128xf32>
    %71 = vector.shape_cast %70 : vector<1x128x128xf32> to vector<128x128xf32>
    %cst_64 = arith.constant dense<0.000000e+00> : vector<8x128xf32>
    %72 = tpu.matmul %69, %71, %cst_64 {dimension_numbers = #tpu.dot_dimension_numbers<[1], [0], [0], [1], [0, 0, 1, 1], [], []>} : vector<8x128xf32>, vector<128x128xf32>, vector<8x128xf32> -> vector<8x128xf32>
    %73 = arith.addf %68, %72 : vector<8x128xf32>
    %c88 = arith.constant 88 : index
    %c0_65 = arith.constant 0 : index
    %74 = vector.load %arg14[%c88, %c0_65] : memref<200x128xf32, #tpu.memory_space<vmem>>, vector<8x128xf32>
    %c11 = arith.constant 11 : index
    %c0_66 = arith.constant 0 : index
    %c0_67 = arith.constant 0 : index
    %75 = vector.load %arg7[%c11, %c0_66, %c0_67] : memref<25x128x128xf32, #tpu.memory_space<vmem>>, vector<1x128x128xf32>
    %76 = vector.shape_cast %75 : vector<1x128x128xf32> to vector<128x128xf32>
    %cst_68 = arith.constant dense<0.000000e+00> : vector<8x128xf32>
    %77 = tpu.matmul %74, %76, %cst_68 {dimension_numbers = #tpu.dot_dimension_numbers<[1], [0], [0], [1], [0, 0, 1, 1], [], []>} : vector<8x128xf32>, vector<128x128xf32>, vector<8x128xf32> -> vector<8x128xf32>
    %78 = arith.addf %73, %77 : vector<8x128xf32>
    %c96 = arith.constant 96 : index
    %c0_69 = arith.constant 0 : index
    %79 = vector.load %arg14[%c96, %c0_69] : memref<200x128xf32, #tpu.memory_space<vmem>>, vector<8x128xf32>
    %c12 = arith.constant 12 : index
    %c0_70 = arith.constant 0 : index
    %c0_71 = arith.constant 0 : index
    %80 = vector.load %arg7[%c12, %c0_70, %c0_71] : memref<25x128x128xf32, #tpu.memory_space<vmem>>, vector<1x128x128xf32>
    %81 = vector.shape_cast %80 : vector<1x128x128xf32> to vector<128x128xf32>
    %cst_72 = arith.constant dense<0.000000e+00> : vector<8x128xf32>
    %82 = tpu.matmul %79, %81, %cst_72 {dimension_numbers = #tpu.dot_dimension_numbers<[1], [0], [0], [1], [0, 0, 1, 1], [], []>} : vector<8x128xf32>, vector<128x128xf32>, vector<8x128xf32> -> vector<8x128xf32>
    %83 = arith.addf %78, %82 : vector<8x128xf32>
    %c104 = arith.constant 104 : index
    %c0_73 = arith.constant 0 : index
    %84 = vector.load %arg14[%c104, %c0_73] : memref<200x128xf32, #tpu.memory_space<vmem>>, vector<8x128xf32>
    %c13 = arith.constant 13 : index
    %c0_74 = arith.constant 0 : index
    %c0_75 = arith.constant 0 : index
    %85 = vector.load %arg7[%c13, %c0_74, %c0_75] : memref<25x128x128xf32, #tpu.memory_space<vmem>>, vector<1x128x128xf32>
    %86 = vector.shape_cast %85 : vector<1x128x128xf32> to vector<128x128xf32>
    %cst_76 = arith.constant dense<0.000000e+00> : vector<8x128xf32>
    %87 = tpu.matmul %84, %86, %cst_76 {dimension_numbers = #tpu.dot_dimension_numbers<[1], [0], [0], [1], [0, 0, 1, 1], [], []>} : vector<8x128xf32>, vector<128x128xf32>, vector<8x128xf32> -> vector<8x128xf32>
    %88 = arith.addf %83, %87 : vector<8x128xf32>
    %c112 = arith.constant 112 : index
    %c0_77 = arith.constant 0 : index
    %89 = vector.load %arg14[%c112, %c0_77] : memref<200x128xf32, #tpu.memory_space<vmem>>, vector<8x128xf32>
    %c14 = arith.constant 14 : index
    %c0_78 = arith.constant 0 : index
    %c0_79 = arith.constant 0 : index
    %90 = vector.load %arg7[%c14, %c0_78, %c0_79] : memref<25x128x128xf32, #tpu.memory_space<vmem>>, vector<1x128x128xf32>
    %91 = vector.shape_cast %90 : vector<1x128x128xf32> to vector<128x128xf32>
    %cst_80 = arith.constant dense<0.000000e+00> : vector<8x128xf32>
    %92 = tpu.matmul %89, %91, %cst_80 {dimension_numbers = #tpu.dot_dimension_numbers<[1], [0], [0], [1], [0, 0, 1, 1], [], []>} : vector<8x128xf32>, vector<128x128xf32>, vector<8x128xf32> -> vector<8x128xf32>
    %93 = arith.addf %88, %92 : vector<8x128xf32>
    %c120 = arith.constant 120 : index
    %c0_81 = arith.constant 0 : index
    %94 = vector.load %arg14[%c120, %c0_81] : memref<200x128xf32, #tpu.memory_space<vmem>>, vector<8x128xf32>
    %c15 = arith.constant 15 : index
    %c0_82 = arith.constant 0 : index
    %c0_83 = arith.constant 0 : index
    %95 = vector.load %arg7[%c15, %c0_82, %c0_83] : memref<25x128x128xf32, #tpu.memory_space<vmem>>, vector<1x128x128xf32>
    %96 = vector.shape_cast %95 : vector<1x128x128xf32> to vector<128x128xf32>
    %cst_84 = arith.constant dense<0.000000e+00> : vector<8x128xf32>
    %97 = tpu.matmul %94, %96, %cst_84 {dimension_numbers = #tpu.dot_dimension_numbers<[1], [0], [0], [1], [0, 0, 1, 1], [], []>} : vector<8x128xf32>, vector<128x128xf32>, vector<8x128xf32> -> vector<8x128xf32>
    %98 = arith.addf %93, %97 : vector<8x128xf32>
    %c128 = arith.constant 128 : index
    %c0_85 = arith.constant 0 : index
    %99 = vector.load %arg14[%c128, %c0_85] : memref<200x128xf32, #tpu.memory_space<vmem>>, vector<8x128xf32>
    %c16_86 = arith.constant 16 : index
    %c0_87 = arith.constant 0 : index
    %c0_88 = arith.constant 0 : index
    %100 = vector.load %arg7[%c16_86, %c0_87, %c0_88] : memref<25x128x128xf32, #tpu.memory_space<vmem>>, vector<1x128x128xf32>
    %101 = vector.shape_cast %100 : vector<1x128x128xf32> to vector<128x128xf32>
    %cst_89 = arith.constant dense<0.000000e+00> : vector<8x128xf32>
    %102 = tpu.matmul %99, %101, %cst_89 {dimension_numbers = #tpu.dot_dimension_numbers<[1], [0], [0], [1], [0, 0, 1, 1], [], []>} : vector<8x128xf32>, vector<128x128xf32>, vector<8x128xf32> -> vector<8x128xf32>
    %103 = arith.addf %98, %102 : vector<8x128xf32>
    %c136 = arith.constant 136 : index
    %c0_90 = arith.constant 0 : index
    %104 = vector.load %arg14[%c136, %c0_90] : memref<200x128xf32, #tpu.memory_space<vmem>>, vector<8x128xf32>
    %c17 = arith.constant 17 : index
    %c0_91 = arith.constant 0 : index
    %c0_92 = arith.constant 0 : index
    %105 = vector.load %arg7[%c17, %c0_91, %c0_92] : memref<25x128x128xf32, #tpu.memory_space<vmem>>, vector<1x128x128xf32>
    %106 = vector.shape_cast %105 : vector<1x128x128xf32> to vector<128x128xf32>
    %cst_93 = arith.constant dense<0.000000e+00> : vector<8x128xf32>
    %107 = tpu.matmul %104, %106, %cst_93 {dimension_numbers = #tpu.dot_dimension_numbers<[1], [0], [0], [1], [0, 0, 1, 1], [], []>} : vector<8x128xf32>, vector<128x128xf32>, vector<8x128xf32> -> vector<8x128xf32>
    %108 = arith.addf %103, %107 : vector<8x128xf32>
    %c144 = arith.constant 144 : index
    %c0_94 = arith.constant 0 : index
    %109 = vector.load %arg14[%c144, %c0_94] : memref<200x128xf32, #tpu.memory_space<vmem>>, vector<8x128xf32>
    %c18 = arith.constant 18 : index
    %c0_95 = arith.constant 0 : index
    %c0_96 = arith.constant 0 : index
    %110 = vector.load %arg7[%c18, %c0_95, %c0_96] : memref<25x128x128xf32, #tpu.memory_space<vmem>>, vector<1x128x128xf32>
    %111 = vector.shape_cast %110 : vector<1x128x128xf32> to vector<128x128xf32>
    %cst_97 = arith.constant dense<0.000000e+00> : vector<8x128xf32>
    %112 = tpu.matmul %109, %111, %cst_97 {dimension_numbers = #tpu.dot_dimension_numbers<[1], [0], [0], [1], [0, 0, 1, 1], [], []>} : vector<8x128xf32>, vector<128x128xf32>, vector<8x128xf32> -> vector<8x128xf32>
    %113 = arith.addf %108, %112 : vector<8x128xf32>
    %c152 = arith.constant 152 : index
    %c0_98 = arith.constant 0 : index
    %114 = vector.load %arg14[%c152, %c0_98] : memref<200x128xf32, #tpu.memory_space<vmem>>, vector<8x128xf32>
    %c19 = arith.constant 19 : index
    %c0_99 = arith.constant 0 : index
    %c0_100 = arith.constant 0 : index
    %115 = vector.load %arg7[%c19, %c0_99, %c0_100] : memref<25x128x128xf32, #tpu.memory_space<vmem>>, vector<1x128x128xf32>
    %116 = vector.shape_cast %115 : vector<1x128x128xf32> to vector<128x128xf32>
    %cst_101 = arith.constant dense<0.000000e+00> : vector<8x128xf32>
    %117 = tpu.matmul %114, %116, %cst_101 {dimension_numbers = #tpu.dot_dimension_numbers<[1], [0], [0], [1], [0, 0, 1, 1], [], []>} : vector<8x128xf32>, vector<128x128xf32>, vector<8x128xf32> -> vector<8x128xf32>
    %118 = arith.addf %113, %117 : vector<8x128xf32>
    %c160 = arith.constant 160 : index
    %c0_102 = arith.constant 0 : index
    %119 = vector.load %arg14[%c160, %c0_102] : memref<200x128xf32, #tpu.memory_space<vmem>>, vector<8x128xf32>
    %c20 = arith.constant 20 : index
    %c0_103 = arith.constant 0 : index
    %c0_104 = arith.constant 0 : index
    %120 = vector.load %arg7[%c20, %c0_103, %c0_104] : memref<25x128x128xf32, #tpu.memory_space<vmem>>, vector<1x128x128xf32>
    %121 = vector.shape_cast %120 : vector<1x128x128xf32> to vector<128x128xf32>
    %cst_105 = arith.constant dense<0.000000e+00> : vector<8x128xf32>
    %122 = tpu.matmul %119, %121, %cst_105 {dimension_numbers = #tpu.dot_dimension_numbers<[1], [0], [0], [1], [0, 0, 1, 1], [], []>} : vector<8x128xf32>, vector<128x128xf32>, vector<8x128xf32> -> vector<8x128xf32>
    %123 = arith.addf %118, %122 : vector<8x128xf32>
    %c168 = arith.constant 168 : index
    %c0_106 = arith.constant 0 : index
    %124 = vector.load %arg14[%c168, %c0_106] : memref<200x128xf32, #tpu.memory_space<vmem>>, vector<8x128xf32>
    %c21 = arith.constant 21 : index
    %c0_107 = arith.constant 0 : index
    %c0_108 = arith.constant 0 : index
    %125 = vector.load %arg7[%c21, %c0_107, %c0_108] : memref<25x128x128xf32, #tpu.memory_space<vmem>>, vector<1x128x128xf32>
    %126 = vector.shape_cast %125 : vector<1x128x128xf32> to vector<128x128xf32>
    %cst_109 = arith.constant dense<0.000000e+00> : vector<8x128xf32>
    %127 = tpu.matmul %124, %126, %cst_109 {dimension_numbers = #tpu.dot_dimension_numbers<[1], [0], [0], [1], [0, 0, 1, 1], [], []>} : vector<8x128xf32>, vector<128x128xf32>, vector<8x128xf32> -> vector<8x128xf32>
    %128 = arith.addf %123, %127 : vector<8x128xf32>
    %c176 = arith.constant 176 : index
    %c0_110 = arith.constant 0 : index
    %129 = vector.load %arg14[%c176, %c0_110] : memref<200x128xf32, #tpu.memory_space<vmem>>, vector<8x128xf32>
    %c22 = arith.constant 22 : index
    %c0_111 = arith.constant 0 : index
    %c0_112 = arith.constant 0 : index
    %130 = vector.load %arg7[%c22, %c0_111, %c0_112] : memref<25x128x128xf32, #tpu.memory_space<vmem>>, vector<1x128x128xf32>
    %131 = vector.shape_cast %130 : vector<1x128x128xf32> to vector<128x128xf32>
    %cst_113 = arith.constant dense<0.000000e+00> : vector<8x128xf32>
    %132 = tpu.matmul %129, %131, %cst_113 {dimension_numbers = #tpu.dot_dimension_numbers<[1], [0], [0], [1], [0, 0, 1, 1], [], []>} : vector<8x128xf32>, vector<128x128xf32>, vector<8x128xf32> -> vector<8x128xf32>
    %133 = arith.addf %128, %132 : vector<8x128xf32>
    %c184 = arith.constant 184 : index
    %c0_114 = arith.constant 0 : index
    %134 = vector.load %arg14[%c184, %c0_114] : memref<200x128xf32, #tpu.memory_space<vmem>>, vector<8x128xf32>
    %c23 = arith.constant 23 : index
    %c0_115 = arith.constant 0 : index
    %c0_116 = arith.constant 0 : index
    %135 = vector.load %arg7[%c23, %c0_115, %c0_116] : memref<25x128x128xf32, #tpu.memory_space<vmem>>, vector<1x128x128xf32>
    %136 = vector.shape_cast %135 : vector<1x128x128xf32> to vector<128x128xf32>
    %cst_117 = arith.constant dense<0.000000e+00> : vector<8x128xf32>
    %137 = tpu.matmul %134, %136, %cst_117 {dimension_numbers = #tpu.dot_dimension_numbers<[1], [0], [0], [1], [0, 0, 1, 1], [], []>} : vector<8x128xf32>, vector<128x128xf32>, vector<8x128xf32> -> vector<8x128xf32>
    %138 = arith.addf %133, %137 : vector<8x128xf32>
    %c192 = arith.constant 192 : index
    %c0_118 = arith.constant 0 : index
    %139 = vector.load %arg14[%c192, %c0_118] : memref<200x128xf32, #tpu.memory_space<vmem>>, vector<8x128xf32>
    %c24_119 = arith.constant 24 : index
    %c0_120 = arith.constant 0 : index
    %c0_121 = arith.constant 0 : index
    %140 = vector.load %arg7[%c24_119, %c0_120, %c0_121] : memref<25x128x128xf32, #tpu.memory_space<vmem>>, vector<1x128x128xf32>
    %141 = vector.shape_cast %140 : vector<1x128x128xf32> to vector<128x128xf32>
    %cst_122 = arith.constant dense<0.000000e+00> : vector<8x128xf32>
    %142 = tpu.matmul %139, %141, %cst_122 {dimension_numbers = #tpu.dot_dimension_numbers<[1], [0], [0], [1], [0, 0, 1, 1], [], []>} : vector<8x128xf32>, vector<128x128xf32>, vector<8x128xf32> -> vector<8x128xf32>
    %143 = arith.addf %138, %142 : vector<8x128xf32>
    %c0_123 = arith.constant 0 : index
    %c0_124 = arith.constant 0 : index
    %144 = vector.load %arg8[%c0_123, %c0_124] : memref<1x128xf32, #tpu.memory_space<vmem>>, vector<1x128xf32>
    %145 = vector.broadcast %144 : vector<1x128xf32> to vector<8x128xf32>
    %146 = arith.addf %143, %145 : vector<8x128xf32>
    %cst_125 = arith.constant 0.000000e+00 : f32
    %147 = vector.broadcast %cst_125 : f32 to vector<8x128xf32>
    %148 = arith.maximumf %146, %147 : vector<8x128xf32>
    %c0_126 = arith.constant 0 : index
    %c0_127 = arith.constant 0 : index
    %149 = vector.load %arg9[%c0_126, %c0_127] : memref<128x128xf32, #tpu.memory_space<vmem>>, vector<128x128xf32>
    %cst_128 = arith.constant dense<0.000000e+00> : vector<8x128xf32>
    %150 = tpu.matmul %148, %149, %cst_128 {dimension_numbers = #tpu.dot_dimension_numbers<[1], [0], [0], [1], [0, 0, 1, 1], [], []>} : vector<8x128xf32>, vector<128x128xf32>, vector<8x128xf32> -> vector<8x128xf32>
    %c0_129 = arith.constant 0 : index
    %c0_130 = arith.constant 0 : index
    %151 = vector.load %arg10[%c0_129, %c0_130] : memref<1x128xf32, #tpu.memory_space<vmem>>, vector<1x128xf32>
    %152 = vector.broadcast %151 : vector<1x128xf32> to vector<8x128xf32>
    %153 = arith.addf %150, %152 : vector<8x128xf32>
    %cst_131 = arith.constant 0.000000e+00 : f32
    %154 = vector.broadcast %cst_131 : f32 to vector<8x128xf32>
    %155 = arith.maximumf %153, %154 : vector<8x128xf32>
    %c0_132 = arith.constant 0 : index
    %c0_133 = arith.constant 0 : index
    %156 = vector.load %arg11[%c0_132, %c0_133] : memref<128x128xf32, #tpu.memory_space<vmem>>, vector<128x128xf32>
    %cst_134 = arith.constant dense<0.000000e+00> : vector<8x128xf32>
    %157 = tpu.matmul %155, %156, %cst_134 {dimension_numbers = #tpu.dot_dimension_numbers<[1], [0], [0], [1], [0, 0, 1, 1], [], []>} : vector<8x128xf32>, vector<128x128xf32>, vector<8x128xf32> -> vector<8x128xf32>
    %c0_135 = arith.constant 0 : index
    %c0_136 = arith.constant 0 : index
    %158 = vector.load %arg12[%c0_135, %c0_136] : memref<1x128xf32, #tpu.memory_space<vmem>>, vector<1x128xf32>
    %159 = vector.broadcast %158 : vector<1x128xf32> to vector<8x128xf32>
    %160 = arith.addf %157, %159 : vector<8x128xf32>
    %c0_137 = arith.constant 0 : index
    %c0_138 = arith.constant 0 : index
    %161 = vector.load %arg13[%c0_137, %c0_138] : memref<8x128xf32, #tpu.memory_space<vmem>>, vector<8x128xf32>
    tpu.vector_store %arg13[%c0_137, %c0_138], %160 {strides = array<i32>} : memref<8x128xf32, #tpu.memory_space<vmem>>, vector<8x128xf32>,
    return
  }
  func.func @transform_0(%arg0: i32) -> (i32, i32) {
    %c0_i32 = arith.constant 0 : i32
    %c0_i32_0 = arith.constant 0 : i32
    %c0_i32_1 = arith.constant 0 : i32
    return %c0_i32, %c0_i32_0 : i32, i32
  }
  func.func @transform_1(%arg0: i32) -> (i32, i32) {
    %c0_i32 = arith.constant 0 : i32
    %c0_i32_0 = arith.constant 0 : i32
    %c0_i32_1 = arith.constant 0 : i32
    return %c0_i32, %c0_i32_0 : i32, i32
  }
  func.func @transform_2(%arg0: i32) -> (i32, i32) {
    %c0_i32 = arith.constant 0 : i32
    %c0_i32_0 = arith.constant 0 : i32
    %c0_i32_1 = arith.constant 0 : i32
    return %c0_i32, %c0_i32_0 : i32, i32
  }
  func.func @transform_3(%arg0: i32) -> (i32, i32) {
    %c0_i32 = arith.constant 0 : i32
    %c0_i32_0 = arith.constant 0 : i32
    %c0_i32_1 = arith.constant 0 : i32
    return %c0_i32, %c0_i32_0 : i32, i32
  }
  func.func @transform_4(%arg0: i32) -> (i32, i32) {
    %c0_i32 = arith.constant 0 : i32
    %c0_i32_0 = arith.constant 0 : i32
    %c0_i32_1 = arith.constant 0 : i32
    return %c0_i32, %c0_i32_0 : i32, i32
  }
  func.func @transform_5(%arg0: i32) -> (i32, i32) {
    %c0_i32 = arith.constant 0 : i32
    %c0_i32_0 = arith.constant 0 : i32
    %c0_i32_1 = arith.constant 0 : i32
    return %c0_i32, %c0_i32_0 : i32, i32
  }
  func.func @transform_6(%arg0: i32) -> (i32, i32, i32) {
    %c0_i32 = arith.constant 0 : i32
    %c0_i32_0 = arith.constant 0 : i32
    %c0_i32_1 = arith.constant 0 : i32
    %c0_i32_2 = arith.constant 0 : i32
    return %c0_i32, %c0_i32_0, %c0_i32_1 : i32, i32, i32
  }
  func.func @transform_7(%arg0: i32) -> (i32, i32) {
    %c0_i32 = arith.constant 0 : i32
    %c0_i32_0 = arith.constant 0 : i32
    %c0_i32_1 = arith.constant 0 : i32
    return %c0_i32, %c0_i32_0 : i32, i32
  }
  func.func @transform_8(%arg0: i32) -> (i32, i32) {
    %c0_i32 = arith.constant 0 : i32
    %c0_i32_0 = arith.constant 0 : i32
    %c0_i32_1 = arith.constant 0 : i32
    return %c0_i32, %c0_i32_0 : i32, i32
  }
  func.func @transform_9(%arg0: i32) -> (i32, i32) {
    %c0_i32 = arith.constant 0 : i32
    %c0_i32_0 = arith.constant 0 : i32
    %c0_i32_1 = arith.constant 0 : i32
    return %c0_i32, %c0_i32_0 : i32, i32
  }
  func.func @transform_10(%arg0: i32) -> (i32, i32) {
    %c0_i32 = arith.constant 0 : i32
    %c0_i32_0 = arith.constant 0 : i32
    %c0_i32_1 = arith.constant 0 : i32
    return %c0_i32, %c0_i32_0 : i32, i32
  }
  func.func @transform_11(%arg0: i32) -> (i32, i32) {
    %c0_i32 = arith.constant 0 : i32
    %c0_i32_0 = arith.constant 0 : i32
    %c0_i32_1 = arith.constant 0 : i32
    return %c0_i32, %c0_i32_0 : i32, i32
  }
  func.func @transform_12(%arg0: i32) -> (i32, i32) {
    %c0_i32 = arith.constant 0 : i32
    %c0_i32_0 = arith.constant 0 : i32
    %c0_i32_1 = arith.constant 0 : i32
    return %c0_i32, %c0_i32_0 : i32, i32
  }
}

</mosaic_0001>

<llo_original>
// kernel: lenet_forward.2
$region0: #{lenet_forward.2}
  #allocation0 [shape = 'u32[]', space=smem, size = 0x4, offset = 0x4, fixed_abs, tag = 'smem constant byte address 0x4 - core index']
  #allocation1 [shape = 'u32[144,128]{1,0:T(1,128)}', space=vmem, size = 0x12000, scoped, tag = 'internal scratch']
  %s0 = inlined_call_operand.vmem [shape: f32[392,25], index: 0, kind: input, shape index: {}]
  %s1 = inlined_call_operand.vmem [shape: f32[392,25], index: 1, kind: input, shape index: {}]
  %s2 = inlined_call_operand.vmem [shape: f32[392,25], index: 2, kind: input, shape index: {}]
  %s3 = inlined_call_operand.vmem [shape: f32[392,25], index: 3, kind: input, shape index: {}]
  %s4 = inlined_call_operand.vmem [shape: f32[25,128], index: 4, kind: input, shape index: {}]
  %s5 = inlined_call_operand.vmem [shape: f32[1,128], index: 5, kind: input, shape index: {}]
  %s6 = inlined_call_operand.vmem [shape: f32[392,128], index: 6, kind: output, shape index: {}]
  %s7 = sld [smem:[#allocation0]]
  $region34: #{lenet_forward.2} parent=0
    _
  %s9 = ssub.s32 1, %s7
  %s10 = scalar_select 0, %s9, %s7
  // Predicated region
  $region2: #{lenet_forward.2} parent=0 // pred_check
    _
  $region3: #{lenet_forward.2} parent=0 // pred_check_branch
    %12 = sbr.rel (0) target = $region5
  $region4: #{lenet_forward.2} parent=0 // pred_region
    _
  $region5: #{lenet_forward.2} parent=0 // pred_fallthru
    _
  // Predicated region
  $region6: #{lenet_forward.2} parent=0 // pred_check
    _
  $region7: #{lenet_forward.2} parent=0 // pred_check_branch
    %14 = sbr.rel (0) target = $region9
  $region8: #{lenet_forward.2} parent=0 // pred_region
    _
  $region9: #{lenet_forward.2} parent=0 // pred_fallthru
    _
  // Predicated region
  $region10: #{lenet_forward.2} parent=0 // pred_check
    _
  $region11: #{lenet_forward.2} parent=0 // pred_check_branch
    %16 = sbr.rel (0) target = $region13
  $region12: #{lenet_forward.2} parent=0 // pred_region
    _
  $region13: #{lenet_forward.2} parent=0 // pred_fallthru
    _
  // Predicated region
  $region14: #{lenet_forward.2} parent=0 // pred_check
    _
  $region15: #{lenet_forward.2} parent=0 // pred_check_branch
    %18 = sbr.rel (0) target = $region17
  $region16: #{lenet_forward.2} parent=0 // pred_region
    _
  $region17: #{lenet_forward.2} parent=0 // pred_fallthru
    _
  // Predicated region
  $region18: #{lenet_forward.2} parent=0 // pred_check
    _
  $region19: #{lenet_forward.2} parent=0 // pred_check_branch
    %20 = sbr.rel (0) target = $region21
  $region20: #{lenet_forward.2} parent=0 // pred_region
    _
  $region21: #{lenet_forward.2} parent=0 // pred_fallthru
    _
  // Predicated region
  $region22: #{lenet_forward.2} parent=0 // pred_check
    _
  $region23: #{lenet_forward.2} parent=0 // pred_check_branch
    %22 = sbr.rel (0) target = $region25
  $region24: #{lenet_forward.2} parent=0 // pred_region
    _
  $region25: #{lenet_forward.2} parent=0 // pred_fallthru
    _
  %v23 = vld [vmem:[%s4] sm:$0xff]
  %v24 = vld [vmem:[%s4 + $0x8] sm:$0xff]
  %v25 = vld [vmem:[%s4 + $0x10] sm:$0xff]
  %v26 = vld [vmem:[%s4 + $0x18] sm:$0x1]
  %v27 = vld [vmem:[%s0] sm:$0xff]
  %v28 = vld [vmem:[%s0 + $0x8] sm:$0xff]
  %v29 = vld [vmem:[%s0 + $0x10] sm:$0xff]
  %v30 = vld [vmem:[%s0 + $0x18] sm:$0xff]
  %v31 = vld [vmem:[%s0 + $0x20] sm:$0xff]
  %v32 = vld [vmem:[%s0 + $0x28] sm:$0xff]
  %v33 = vld [vmem:[%s0 + $0x30] sm:$0xff]
  %v34 = vld [vmem:[%s0 + $0x38] sm:$0xff]
  %v35 = vld [vmem:[%s0 + $0x40] sm:$0xff]
  %v36 = vld [vmem:[%s0 + $0x48] sm:$0xff]
  %v37 = vld [vmem:[%s0 + $0x50] sm:$0xff]
  %v38 = vld [vmem:[%s0 + $0x58] sm:$0xff]
  %v39 = vld [vmem:[%s0 + $0x60] sm:$0xff]
  %v40 = vld [vmem:[%s0 + $0x68] sm:$0xff]
  %v41 = vld [vmem:[%s0 + $0x70] sm:$0xff]
  %v42 = vld [vmem:[%s0 + $0x78] sm:$0xff]
  %v43 = vld [vmem:[%s0 + $0x80] sm:$0xff]
  %v44 = vld [vmem:[%s0 + $0x88] sm:$0xff]
  %v45 = vld [vmem:[%s0 + $0x90] sm:$0xff]
  %v46 = vld [vmem:[%s0 + $0x98] sm:$0xff]
  %v47 = vld [vmem:[%s0 + $0xa0] sm:$0xff]
  %v48 = vld [vmem:[%s0 + $0xa8] sm:$0xff]
  %v49 = vld [vmem:[%s0 + $0xb0] sm:$0xff]
  %v50 = vld [vmem:[%s0 + $0xb8] sm:$0xff]
  %v51 = vld [vmem:[%s0 + $0xc0] sm:$0xff]
  %v52 = vld [vmem:[%s0 + $0xc8] sm:$0xff]
  %v53 = vld [vmem:[%s0 + $0xd0] sm:$0xff]
  %v54 = vld [vmem:[%s0 + $0xd8] sm:$0xff]
  %v55 = vld [vmem:[%s0 + $0xe0] sm:$0xff]
  %v56 = vld [vmem:[%s0 + $0xe8] sm:$0xff]
  %v57 = vld [vmem:[%s0 + $0xf0] sm:$0xff]
  %v58 = vld [vmem:[%s0 + $0xf8] sm:$0xff]
  %v59 = vld [vmem:[%s0 + $0x100] sm:$0xff]
  %v60 = vld [vmem:[%s0 + $0x108] sm:$0xff]
  %v61 = vld [vmem:[%s0 + $0x110] sm:$0xff]
  %v62 = vld [vmem:[%s0 + $0x118] sm:$0xff]
  %v63 = vld [vmem:[%s0 + $0x120] sm:$0xff]
  %v64 = vld [vmem:[%s0 + $0x128] sm:$0xff]
  %v65 = vld [vmem:[%s0 + $0x130] sm:$0xff]
  %v66 = vld [vmem:[%s0 + $0x138] sm:$0xff]
  %v67 = vld [vmem:[%s0 + $0x140] sm:$0xff]
  %v68 = vld [vmem:[%s0 + $0x148] sm:$0xff]
  %v69 = vld [vmem:[%s0 + $0x150] sm:$0xff]
  %v70 = vld [vmem:[%s0 + $0x158] sm:$0xff]
  %v71 = vld [vmem:[%s0 + $0x160] sm:$0xff]
  %v72 = vld [vmem:[%s0 + $0x168] sm:$0xff]
  %v73 = vld [vmem:[%s0 + $0x170] sm:$0xff]
  %v74 = vld [vmem:[%s0 + $0x178] sm:$0xff]
  %v75 = vld [vmem:[%s0 + $0x180] sm:$0xff]
  %vm76 = vcmask 203776
  %v78 = vsel %vm76, %v27, 0
  %v81 = vsel %vm76, %v28, 0
  %v84 = vsel %vm76, %v29, 0
  %v87 = vsel %vm76, %v30, 0
  %v90 = vsel %vm76, %v31, 0
  %v93 = vsel %vm76, %v32, 0
  %v96 = vsel %vm76, %v33, 0
  %v99 = vsel %vm76, %v34, 0
  %v102 = vsel %vm76, %v35, 0
  %v105 = vsel %vm76, %v36, 0
  %v108 = vsel %vm76, %v37, 0
  %v111 = vsel %vm76, %v38, 0
  %v114 = vsel %vm76, %v39, 0
  %v117 = vsel %vm76, %v40, 0
  %v120 = vsel %vm76, %v41, 0
  %v123 = vsel %vm76, %v42, 0
  %v126 = vsel %vm76, %v43, 0
  %v129 = vsel %vm76, %v44, 0
  %v132 = vsel %vm76, %v45, 0
  %v135 = vsel %vm76, %v46, 0
  %v138 = vsel %vm76, %v47, 0
  %v141 = vsel %vm76, %v48, 0
  %v144 = vsel %vm76, %v49, 0
  %v147 = vsel %vm76, %v50, 0
  %v150 = vsel %vm76, %v51, 0
  %v153 = vsel %vm76, %v52, 0
  %v156 = vsel %vm76, %v53, 0
  %v159 = vsel %vm76, %v54, 0
  %v162 = vsel %vm76, %v55, 0
  %v165 = vsel %vm76, %v56, 0
  %v168 = vsel %vm76, %v57, 0
  %v171 = vsel %vm76, %v58, 0
  %v174 = vsel %vm76, %v59, 0
  %v177 = vsel %vm76, %v60, 0
  %v180 = vsel %vm76, %v61, 0
  %v183 = vsel %vm76, %v62, 0
  %v186 = vsel %vm76, %v63, 0
  %v189 = vsel %vm76, %v64, 0
  %v192 = vsel %vm76, %v65, 0
  %v195 = vsel %vm76, %v66, 0
  %v198 = vsel %vm76, %v67, 0
  %v201 = vsel %vm76, %v68, 0
  %v204 = vsel %vm76, %v69, 0
  %v207 = vsel %vm76, %v70, 0
  %v210 = vsel %vm76, %v71, 0
  %v213 = vsel %vm76, %v72, 0
  %v216 = vsel %vm76, %v73, 0
  %v219 = vsel %vm76, %v74, 0
  %v222 = vsel %vm76, %v75, 0
  %vm224 = vcmask 1040384
  %v226 = vsel %vm224, %v26, 0
  %228 = vmatprep.subr.mxu0 0.0
  %229 = vmatpush1.msra.mxu0 0.0
  %230 = vmatprep.subr.mxu0 0.0
  %231 = vmatpush1.msra.mxu0 0.0
  %232 = vmatprep.subr.mxu0 0.0
  %233 = vmatpush1.msra.mxu0 0.0
  %234 = vmatprep.subr.mxu0 0.0
  %235 = vmatpush1.msra.mxu0 0.0
  %236 = vmatprep.subr.mxu0 0.0
  %237 = vmatpush1.msra.mxu0 0.0
  %238 = vmatprep.subr.mxu0 0.0
  %239 = vmatpush1.msra.mxu0 0.0
  %240 = vmatprep.subr.mxu0 0.0
  %241 = vmatpush1.msra.mxu0 0.0
  %242 = vmatprep.subr.mxu0 0.0
  %243 = vmatpush1.msra.mxu0 0.0
  %244 = vmatprep.subr.mxu0 0.0
  %245 = vmatpush1.msra.mxu0 0.0
  %246 = vmatprep.subr.mxu0 0.0
  %247 = vmatpush1.msra.mxu0 0.0
  %248 = vmatprep.subr.mxu0 0.0
  %249 = vmatpush1.msra.mxu0 0.0
  %250 = vmatprep.subr.mxu0 0.0
  %251 = vmatpush1.msra.mxu0 0.0
  %252 = vmatprep.subr.mxu0 0.0
  %253 = vmatpush1.msra.mxu0 %v226
  %254 = vmatprep.subr.mxu0 0.0
  %255 = vmatpush1.msra.mxu0 %v25
  %256 = vmatprep.subr.mxu0 0.0
  %257 = vmatpush1.msra.mxu0 %v24
  %258 = vmatprep.subr.mxu0 0.0
  %259 = vmatpush1.msra.mxu0 %v23
  %260 = vmatprep.subr.mxu0 0.0
  %261 = vmatpush2.msra.mxu0 0.0
  %262 = vmatprep.subr.mxu0 0.0
  %263 = vmatpush2.msra.mxu0 0.0
  %264 = vmatprep.subr.mxu0 0.0
  %265 = vmatpush2.msra.mxu0 0.0
  %266 = vmatprep.subr.mxu0 0.0
  %267 = vmatpush2.msra.mxu0 0.0
  %268 = vmatprep.subr.mxu0 0.0
  %269 = vmatpush2.msra.mxu0 0.0
  %270 = vmatprep.subr.mxu0 0.0
  %271 = vmatpush2.msra.mxu0 0.0
  %272 = vmatprep.subr.mxu0 0.0
  %273 = vmatpush2.msra.mxu0 0.0
  %274 = vmatprep.subr.mxu0 0.0
  %275 = vmatpush2.msra.mxu0 0.0
  %276 = vmatprep.subr.mxu0 0.0
  %277 = vmatpush2.msra.mxu0 0.0
  %278 = vmatprep.subr.mxu0 0.0
  %279 = vmatpush2.msra.mxu0 0.0
  %280 = vmatprep.subr.mxu0 0.0
  %281 = vmatpush2.msra.mxu0 0.0
  %282 = vmatprep.subr.mxu0 0.0
  %283 = vmatpush2.msra.mxu0 0.0
  %284 = vmatprep.subr.mxu0 0.0
  %285 = vmatpush2.msra.mxu0 0.0
  %286 = vmatprep.subr.mxu0 0.0
  %287 = vmatpush2.msra.mxu0 0.0
  %288 = vmatprep.subr.mxu0 0.0
  %289 = vmatpush2.msra.mxu0 0.0
  %290 = vmatprep.subr.mxu0 0.0
  %291 = vmatpush2.msra.mxu0 0.0
  %292 = vmatprep.mubr.f32.mxu0 0.0
  %293 = vmatmul.mubr.f32.gmra.mxu0 %v78
  %v294 = vpop.f32.mrf.mxu0
  %v295 = vadd.f32 0.0, %v294
  %v296 = vpop.f32.mrf.mxu0
  %297 = vmatprep.mubr.f32.mxu0 0.0
  %298 = vmatmul.mubr.f32.gmra.mxu0 %v81
  %v299 = vpop.f32.mrf.mxu0
  %v300 = vadd.f32 0.0, %v299
  %v301 = vpop.f32.mrf.mxu0
  %302 = vmatprep.mubr.f32.mxu0 0.0
  %303 = vmatmul.mubr.f32.gmra.mxu0 %v84
  %v304 = vpop.f32.mrf.mxu0
  %v305 = vadd.f32 0.0, %v304
  %v306 = vpop.f32.mrf.mxu0
  %307 = vmatprep.mubr.f32.mxu0 0.0
  %308 = vmatmul.mubr.f32.gmra.mxu0 %v87
  %v309 = vpop.f32.mrf.mxu0
  %v310 = vadd.f32 0.0, %v309
  %v311 = vpop.f32.mrf.mxu0
  %312 = vmatprep.mubr.f32.mxu0 0.0
  %313 = vmatmul.mubr.f32.gmra.mxu0 %v90
  %v314 = vpop.f32.mrf.mxu0
  %v315 = vadd.f32 0.0, %v314
  %v316 = vpop.f32.mrf.mxu0
  %317 = vmatprep.mubr.f32.mxu0 0.0
  %318 = vmatmul.mubr.f32.gmra.mxu0 %v93
  %v319 = vpop.f32.mrf.mxu0
  %v320 = vadd.f32 0.0, %v319
  %v321 = vpop.f32.mrf.mxu0
  %322 = vmatprep.mubr.f32.mxu0 0.0
  %323 = vmatmul.mubr.f32.gmra.mxu0 %v96
  %v324 = vpop.f32.mrf.mxu0
  %v325 = vadd.f32 0.0, %v324
  %v326 = vpop.f32.mrf.mxu0
  %327 = vmatprep.mubr.f32.mxu0 0.0
  %328 = vmatmul.mubr.f32.gmra.mxu0 %v99
  %v329 = vpop.f32.mrf.mxu0
  %v330 = vadd.f32 0.0, %v329
  %v331 = vpop.f32.mrf.mxu0
  %332 = vmatprep.mubr.f32.mxu0 0.0
  %333 = vmatmul.mubr.f32.gmra.mxu0 %v102
  %v334 = vpop.f32.mrf.mxu0
  %v335 = vadd.f32 0.0, %v334
  %v336 = vpop.f32.mrf.mxu0
  %337 = vmatprep.mubr.f32.mxu0 0.0
  %338 = vmatmul.mubr.f32.gmra.mxu0 %v105
  %v339 = vpop.f32.mrf.mxu0
  %v340 = vadd.f32 0.0, %v339
  %v341 = vpop.f32.mrf.mxu0
  %342 = vmatprep.mubr.f32.mxu0 0.0
  %343 = vmatmul.mubr.f32.gmra.mxu0 %v108
  %v344 = vpop.f32.mrf.mxu0
  %v345 = vadd.f32 0.0, %v344
  %v346 = vpop.f32.mrf.mxu0
  %347 = vmatprep.mubr.f32.mxu0 0.0
  %348 = vmatmul.mubr.f32.gmra.mxu0 %v111
  %v349 = vpop.f32.mrf.mxu0
  %v350 = vadd.f32 0.0, %v349
  %v351 = vpop.f32.mrf.mxu0
  %352 = vmatprep.mubr.f32.mxu0 0.0
  %353 = vmatmul.mubr.f32.gmra.mxu0 %v114
  %v354 = vpop.f32.mrf.mxu0
  %v355 = vadd.f32 0.0, %v354
  %v356 = vpop.f32.mrf.mxu0
  %357 = vmatprep.mubr.f32.mxu0 0.0
  %358 = vmatmul.mubr.f32.gmra.mxu0 %v117
  %v359 = vpop.f32.mrf.mxu0
  %v360 = vadd.f32 0.0, %v359
  %v361 = vpop.f32.mrf.mxu0
  %362 = vmatprep.mubr.f32.mxu0 0.0
  %363 = vmatmul.mubr.f32.gmra.mxu0 %v120
  %v364 = vpop.f32.mrf.mxu0
  %v365 = vadd.f32 0.0, %v364
  %v366 = vpop.f32.mrf.mxu0
  %367 = vmatprep.mubr.f32.mxu0 0.0
  %368 = vmatmul.mubr.f32.gmra.mxu0 %v123
  %v369 = vpop.f32.mrf.mxu0
  %v370 = vadd.f32 0.0, %v369
  %v371 = vpop.f32.mrf.mxu0
  %372 = vmatprep.mubr.f32.mxu0 0.0
  %373 = vmatmul.mubr.f32.gmra.mxu0 %v126
  %v374 = vpop.f32.mrf.mxu0
  %v375 = vadd.f32 0.0, %v374
  %v376 = vpop.f32.mrf.mxu0
  %377 = vmatprep.mubr.f32.mxu0 0.0
  %378 = vmatmul.mubr.f32.gmra.mxu0 %v129
  %v379 = vpop.f32.mrf.mxu0
  %v380 = vadd.f32 0.0, %v379
  %v381 = vpop.f32.mrf.mxu0
  %382 = vmatprep.mubr.f32.mxu0 0.0
  %383 = vmatmul.mubr.f32.gmra.mxu0 %v132
  %v384 = vpop.f32.mrf.mxu0
  %v385 = vadd.f32 0.0, %v384
  %v386 = vpop.f32.mrf.mxu0
  %387 = vmatprep.mubr.f32.mxu0 0.0
  %388 = vmatmul.mubr.f32.gmra.mxu0 %v135
  %v389 = vpop.f32.mrf.mxu0
  %v390 = vadd.f32 0.0, %v389
  %v391 = vpop.f32.mrf.mxu0
  %392 = vmatprep.mubr.f32.mxu0 0.0
  %393 = vmatmul.mubr.f32.gmra.mxu0 %v138
  %v394 = vpop.f32.mrf.mxu0
  %v395 = vadd.f32 0.0, %v394
  %v396 = vpop.f32.mrf.mxu0
  %397 = vmatprep.mubr.f32.mxu0 0.0
  %398 = vmatmul.mubr.f32.gmra.mxu0 %v141
  %v399 = vpop.f32.mrf.mxu0
  %v400 = vadd.f32 0.0, %v399
  %v401 = vpop.f32.mrf.mxu0
  %402 = vmatprep.mubr.f32.mxu0 0.0
  %403 = vmatmul.mubr.f32.gmra.mxu0 %v144
  %v404 = vpop.f32.mrf.mxu0
  %v405 = vadd.f32 0.0, %v404
  %v406 = vpop.f32.mrf.mxu0
  %407 = vmatprep.mubr.f32.mxu0 0.0
  %408 = vmatmul.mubr.f32.gmra.mxu0 %v147
  %v409 = vpop.f32.mrf.mxu0
  %v410 = vadd.f32 0.0, %v409
  %v411 = vpop.f32.mrf.mxu0
  %412 = vmatprep.mubr.f32.mxu0 0.0
  %413 = vmatmul.mubr.f32.gmra.mxu0 %v150
  %v414 = vpop.f32.mrf.mxu0
  %v415 = vadd.f32 0.0, %v414
  %v416 = vpop.f32.mrf.mxu0
  %417 = vmatprep.mubr.f32.mxu0 0.0
  %418 = vmatmul.mubr.f32.gmra.mxu0 %v153
  %v419 = vpop.f32.mrf.mxu0
  %v420 = vadd.f32 0.0, %v419
  %v421 = vpop.f32.mrf.mxu0
  %422 = vmatprep.mubr.f32.mxu0 0.0
  %423 = vmatmul.mubr.f32.gmra.mxu0 %v156
  %v424 = vpop.f32.mrf.mxu0
  %v425 = vadd.f32 0.0, %v424
  %v426 = vpop.f32.mrf.mxu0
  %427 = vmatprep.mubr.f32.mxu0 0.0
  %428 = vmatmul.mubr.f32.gmra.mxu0 %v159
  %v429 = vpop.f32.mrf.mxu0
  %v430 = vadd.f32 0.0, %v429
  %v431 = vpop.f32.mrf.mxu0
  %432 = vmatprep.mubr.f32.mxu0 0.0
  %433 = vmatmul.mubr.f32.gmra.mxu0 %v162
  %v434 = vpop.f32.mrf.mxu0
  %v435 = vadd.f32 0.0, %v434
  %v436 = vpop.f32.mrf.mxu0
  %437 = vmatprep.mubr.f32.mxu0 0.0
  %438 = vmatmul.mubr.f32.gmra.mxu0 %v165
  %v439 = vpop.f32.mrf.mxu0
  %v440 = vadd.f32 0.0, %v439
  %v441 = vpop.f32.mrf.mxu0
  %442 = vmatprep.mubr.f32.mxu0 0.0
  %443 = vmatmul.mubr.f32.gmra.mxu0 %v168
  %v444 = vpop.f32.mrf.mxu0
  %v445 = vadd.f32 0.0, %v444
  %v446 = vpop.f32.mrf.mxu0
  %447 = vmatprep.mubr.f32.mxu0 0.0
  %448 = vmatmul.mubr.f32.gmra.mxu0 %v171
  %v449 = vpop.f32.mrf.mxu0
  %v450 = vadd.f32 0.0, %v449
  %v451 = vpop.f32.mrf.mxu0
  %452 = vmatprep.mubr.f32.mxu0 0.0
  %453 = vmatmul.mubr.f32.gmra.mxu0 %v174
  %v454 = vpop.f32.mrf.mxu0
  %v455 = vadd.f32 0.0, %v454
  %v456 = vpop.f32.mrf.mxu0
  %457 = vmatprep.mubr.f32.mxu0 0.0
  %458 = vmatmul.mubr.f32.gmra.mxu0 %v177
  %v459 = vpop.f32.mrf.mxu0
  %v460 = vadd.f32 0.0, %v459
  %v461 = vpop.f32.mrf.mxu0
  %462 = vmatprep.mubr.f32.mxu0 0.0
  %463 = vmatmul.mubr.f32.gmra.mxu0 %v180
  %v464 = vpop.f32.mrf.mxu0
  %v465 = vadd.f32 0.0, %v464
  %v466 = vpop.f32.mrf.mxu0
  %467 = vmatprep.mubr.f32.mxu0 0.0
  %468 = vmatmul.mubr.f32.gmra.mxu0 %v183
  %v469 = vpop.f32.mrf.mxu0
  %v470 = vadd.f32 0.0, %v469
  %v471 = vpop.f32.mrf.mxu0
  %472 = vmatprep.mubr.f32.mxu0 0.0
  %473 = vmatmul.mubr.f32.gmra.mxu0 %v186
  %v474 = vpop.f32.mrf.mxu0
  %v475 = vadd.f32 0.0, %v474
  %v476 = vpop.f32.mrf.mxu0
  %477 = vmatprep.mubr.f32.mxu0 0.0
  %478 = vmatmul.mubr.f32.gmra.mxu0 %v189
  %v479 = vpop.f32.mrf.mxu0
  %v480 = vadd.f32 0.0, %v479
  %v481 = vpop.f32.mrf.mxu0
  %482 = vmatprep.mubr.f32.mxu0 0.0
  %483 = vmatmul.mubr.f32.gmra.mxu0 %v192
  %v484 = vpop.f32.mrf.mxu0
  %v485 = vadd.f32 0.0, %v484
  %v486 = vpop.f32.mrf.mxu0
  %487 = vmatprep.mubr.f32.mxu0 0.0
  %488 = vmatmul.mubr.f32.gmra.mxu0 %v195
  %v489 = vpop.f32.mrf.mxu0
  %v490 = vadd.f32 0.0, %v489
  %v491 = vpop.f32.mrf.mxu0
  %492 = vmatprep.mubr.f32.mxu0 0.0
  %493 = vmatmul.mubr.f32.gmra.mxu0 %v198
  %v494 = vpop.f32.mrf.mxu0
  %v495 = vadd.f32 0.0, %v494
  %v496 = vpop.f32.mrf.mxu0
  %497 = vmatprep.mubr.f32.mxu0 0.0
  %498 = vmatmul.mubr.f32.gmra.mxu0 %v201
  %v499 = vpop.f32.mrf.mxu0
  %v500 = vadd.f32 0.0, %v499
  %v501 = vpop.f32.mrf.mxu0
  %502 = vmatprep.mubr.f32.mxu0 0.0
  %503 = vmatmul.mubr.f32.gmra.mxu0 %v204
  %v504 = vpop.f32.mrf.mxu0
  %v505 = vadd.f32 0.0, %v504
  %v506 = vpop.f32.mrf.mxu0
  %507 = vmatprep.mubr.f32.mxu0 0.0
  %508 = vmatmul.mubr.f32.gmra.mxu0 %v207
  %v509 = vpop.f32.mrf.mxu0
  %v510 = vadd.f32 0.0, %v509
  %v511 = vpop.f32.mrf.mxu0
  %512 = vmatprep.mubr.f32.mxu0 0.0
  %513 = vmatmul.mubr.f32.gmra.mxu0 %v210
  %v514 = vpop.f32.mrf.mxu0
  %v515 = vadd.f32 0.0, %v514
  %v516 = vpop.f32.mrf.mxu0
  %517 = vmatprep.mubr.f32.mxu0 0.0
  %518 = vmatmul.mubr.f32.gmra.mxu0 %v213
  %v519 = vpop.f32.mrf.mxu0
  %v520 = vadd.f32 0.0, %v519
  %v521 = vpop.f32.mrf.mxu0
  %522 = vmatprep.mubr.f32.mxu0 0.0
  %523 = vmatmul.mubr.f32.gmra.mxu0 %v216
  %v524 = vpop.f32.mrf.mxu0
  %v525 = vadd.f32 0.0, %v524
  %v526 = vpop.f32.mrf.mxu0
  %527 = vmatprep.mubr.f32.mxu0 0.0
  %528 = vmatmul.mubr.f32.gmra.mxu0 %v219
  %v529 = vpop.f32.mrf.mxu0
  %v530 = vadd.f32 0.0, %v529
  %v531 = vpop.f32.mrf.mxu0
  %532 = vmatprep.mubr.f32.mxu0 0.0
  %533 = vmatmul.mubr.f32.gmra.mxu0 %v222
  %v534 = vpop.f32.mrf.mxu0
  %v535 = vadd.f32 0.0, %v534
  %v536 = vpop.f32.mrf.mxu0
  %537 = vdwg.mxu0
  %v538 = vld [vmem:[%s1] sm:$0xff]
  %v539 = vld [vmem:[%s1 + $0x8] sm:$0xff]
  %v540 = vld [vmem:[%s1 + $0x10] sm:$0xff]
  %v541 = vld [vmem:[%s1 + $0x18] sm:$0xff]
  %v542 = vld [vmem:[%s1 + $0x20] sm:$0xff]
  %v543 = vld [vmem:[%s1 + $0x28] sm:$0xff]
  %v544 = vld [vmem:[%s1 + $0x30] sm:$0xff]
  %v545 = vld [vmem:[%s1 + $0x38] sm:$0xff]
  %v546 = vld [vmem:[%s1 + $0x40] sm:$0xff]
  %v547 = vld [vmem:[%s1 + $0x48] sm:$0xff]
  %v548 = vld [vmem:[%s1 + $0x50] sm:$0xff]
  %v549 = vld [vmem:[%s1 + $0x58] sm:$0xff]
  %v550 = vld [vmem:[%s1 + $0x60] sm:$0xff]
  %v551 = vld [vmem:[%s1 + $0x68] sm:$0xff]
  %v552 = vld [vmem:[%s1 + $0x70] sm:$0xff]
  %v553 = vld [vmem:[%s1 + $0x78] sm:$0xff]
  %v554 = vld [vmem:[%s1 + $0x80] sm:$0xff]
  %v555 = vld [vmem:[%s1 + $0x88] sm:$0xff]
  %v556 = vld [vmem:[%s1 + $0x90] sm:$0xff]
  %v557 = vld [vmem:[%s1 + $0x98] sm:$0xff]
  %v558 = vld [vmem:[%s1 + $0xa0] sm:$0xff]
  %v559 = vld [vmem:[%s1 + $0xa8] sm:$0xff]
  %v560 = vld [vmem:[%s1 + $0xb0] sm:$0xff]
  %v561 = vld [vmem:[%s1 + $0xb8] sm:$0xff]
  %v562 = vld [vmem:[%s1 + $0xc0] sm:$0xff]
  %v563 = vld [vmem:[%s1 + $0xc8] sm:$0xff]
  %v564 = vld [vmem:[%s1 + $0xd0] sm:$0xff]
  %v565 = vld [vmem:[%s1 + $0xd8] sm:$0xff]
  %v566 = vld [vmem:[%s1 + $0xe0] sm:$0xff]
  %v567 = vld [vmem:[%s1 + $0xe8] sm:$0xff]
  %v568 = vld [vmem:[%s1 + $0xf0] sm:$0xff]
  %v569 = vld [vmem:[%s1 + $0xf8] sm:$0xff]
  %v570 = vld [vmem:[%s1 + $0x100] sm:$0xff]
  %v571 = vld [vmem:[%s1 + $0x108] sm:$0xff]
  %v572 = vld [vmem:[%s1 + $0x110] sm:$0xff]
  %v573 = vld [vmem:[%s1 + $0x118] sm:$0xff]
  %v574 = vld [vmem:[%s1 + $0x120] sm:$0xff]
  %v575 = vld [vmem:[%s1 + $0x128] sm:$0xff]
  %v576 = vld [vmem:[%s1 + $0x130] sm:$0xff]
  %v577 = vld [vmem:[%s1 + $0x138] sm:$0xff]
  %v578 = vld [vmem:[%s1 + $0x140] sm:$0xff]
  %v579 = vld [vmem:[%s1 + $0x148] sm:$0xff]
  %v580 = vld [vmem:[%s1 + $0x150] sm:$0xff]
  %v581 = vld [vmem:[%s1 + $0x158] sm:$0xff]
  %v582 = vld [vmem:[%s1 + $0x160] sm:$0xff]
  %v583 = vld [vmem:[%s1 + $0x168] sm:$0xff]
  %v584 = vld [vmem:[%s1 + $0x170] sm:$0xff]
  %v585 = vld [vmem:[%s1 + $0x178] sm:$0xff]
  %v586 = vld [vmem:[%s1 + $0x180] sm:$0xff]
  %v588 = vsel %vm76, %v538, 0
  %v591 = vsel %vm76, %v539, 0
  %v594 = vsel %vm76, %v540, 0
  %v597 = vsel %vm76, %v541, 0
  %v600 = vsel %vm76, %v542, 0
  %v603 = vsel %vm76, %v543, 0
  %v606 = vsel %vm76, %v544, 0
  %v609 = vsel %vm76, %v545, 0
  %v612 = vsel %vm76, %v546, 0
  %v615 = vsel %vm76, %v547, 0
  %v618 = vsel %vm76, %v548, 0
  %v621 = vsel %vm76, %v549, 0
  %v624 = vsel %vm76, %v550, 0
  %v627 = vsel %vm76, %v551, 0
  %v630 = vsel %vm76, %v552, 0
  %v633 = vsel %vm76, %v553, 0
  %v636 = vsel %vm76, %v554, 0
  %v639 = vsel %vm76, %v555, 0
  %v642 = vsel %vm76, %v556, 0
  %v645 = vsel %vm76, %v557, 0
  %v648 = vsel %vm76, %v558, 0
  %v651 = vsel %vm76, %v559, 0
  %v654 = vsel %vm76, %v560, 0
  %v657 = vsel %vm76, %v561, 0
  %v660 = vsel %vm76, %v562, 0
  %v663 = vsel %vm76, %v563, 0
  %v666 = vsel %vm76, %v564, 0
  %v669 = vsel %vm76, %v565, 0
  %v672 = vsel %vm76, %v566, 0
  %v675 = vsel %vm76, %v567, 0
  %v678 = vsel %vm76, %v568, 0
  %v681 = vsel %vm76, %v569, 0
  %v684 = vsel %vm76, %v570, 0
  %v687 = vsel %vm76, %v571, 0
  %v690 = vsel %vm76, %v572, 0
  %v693 = vsel %vm76, %v573, 0
  %v696 = vsel %vm76, %v574, 0
  %v699 = vsel %vm76, %v575, 0
  %v702 = vsel %vm76, %v576, 0
  %v705 = vsel %vm76, %v577, 0
  %v708 = vsel %vm76, %v578, 0
  %v711 = vsel %vm76, %v579, 0
  %v714 = vsel %vm76, %v580, 0
  %v717 = vsel %vm76, %v581, 0
  %v720 = vsel %vm76, %v582, 0
  %v723 = vsel %vm76, %v583, 0
  %v726 = vsel %vm76, %v584, 0
  %v729 = vsel %vm76, %v585, 0
  %v732 = vsel %vm76, %v586, 0
  %734 = vmatprep.subr.mxu0 0.0
  %735 = vmatpush1.msra.mxu0 0.0
  %736 = vmatprep.subr.mxu0 0.0
  %737 = vmatpush1.msra.mxu0 0.0
  %738 = vmatprep.subr.mxu0 0.0
  %739 = vmatpush1.msra.mxu0 0.0
  %740 = vmatprep.subr.mxu0 0.0
  %741 = vmatpush1.msra.mxu0 0.0
  %742 = vmatprep.subr.mxu0 0.0
  %743 = vmatpush1.msra.mxu0 0.0
  %744 = vmatprep.subr.mxu0 0.0
  %745 = vmatpush1.msra.mxu0 0.0
  %746 = vmatprep.subr.mxu0 0.0
  %747 = vmatpush1.msra.mxu0 0.0
  %748 = vmatprep.subr.mxu0 0.0
  %749 = vmatpush1.msra.mxu0 0.0
  %750 = vmatprep.subr.mxu0 0.0
  %751 = vmatpush1.msra.mxu0 0.0
  %752 = vmatprep.subr.mxu0 0.0
  %753 = vmatpush1.msra.mxu0 0.0
  %754 = vmatprep.subr.mxu0 0.0
  %755 = vmatpush1.msra.mxu0 0.0
  %756 = vmatprep.subr.mxu0 0.0
  %757 = vmatpush1.msra.mxu0 0.0
  %758 = vmatprep.subr.mxu0 0.0
  %759 = vmatpush1.msra.mxu0 %v226
  %760 = vmatprep.subr.mxu0 0.0
  %761 = vmatpush1.msra.mxu0 %v25
  %762 = vmatprep.subr.mxu0 0.0
  %763 = vmatpush1.msra.mxu0 %v24
  %764 = vmatprep.subr.mxu0 0.0
  %765 = vmatpush1.msra.mxu0 %v23
  %766 = vmatprep.subr.mxu0 0.0
  %767 = vmatpush2.msra.mxu0 0.0
  %768 = vmatprep.subr.mxu0 0.0
  %769 = vmatpush2.msra.mxu0 0.0
  %770 = vmatprep.subr.mxu0 0.0
  %771 = vmatpush2.msra.mxu0 0.0
  %772 = vmatprep.subr.mxu0 0.0
  %773 = vmatpush2.msra.mxu0 0.0
  %774 = vmatprep.subr.mxu0 0.0
  %775 = vmatpush2.msra.mxu0 0.0
  %776 = vmatprep.subr.mxu0 0.0
  %777 = vmatpush2.msra.mxu0 0.0
  %778 = vmatprep.subr.mxu0 0.0
  %779 = vmatpush2.msra.mxu0 0.0
  %780 = vmatprep.subr.mxu0 0.0
  %781 = vmatpush2.msra.mxu0 0.0
  %782 = vmatprep.subr.mxu0 0.0
  %783 = vmatpush2.msra.mxu0 0.0
  %784 = vmatprep.subr.mxu0 0.0
  %785 = vmatpush2.msra.mxu0 0.0
  %786 = vmatprep.subr.mxu0 0.0
  %787 = vmatpush2.msra.mxu0 0.0
  %788 = vmatprep.subr.mxu0 0.0
  %789 = vmatpush2.msra.mxu0 0.0
  %790 = vmatprep.subr.mxu0 0.0
  %791 = vmatpush2.msra.mxu0 0.0
  %792 = vmatprep.subr.mxu0 0.0
  %793 = vmatpush2.msra.mxu0 0.0
  %794 = vmatprep.subr.mxu0 0.0
  %795 = vmatpush2.msra.mxu0 0.0
  %796 = vmatprep.subr.mxu0 0.0
  %797 = vmatpush2.msra.mxu0 0.0
  %798 = vmatprep.mubr.f32.mxu0 0.0
  %799 = vmatmul.mubr.f32.gmra.mxu0 %v588
  %v800 = vpop.f32.mrf.mxu0
  %v801 = vadd.f32 0.0, %v800
  %v802 = vpop.f32.mrf.mxu0
  %803 = vmatprep.mubr.f32.mxu0 0.0
  %804 = vmatmul.mubr.f32.gmra.mxu0 %v591
  %v805 = vpop.f32.mrf.mxu0
  %v806 = vadd.f32 0.0, %v805
  %v807 = vpop.f32.mrf.mxu0
  %808 = vmatprep.mubr.f32.mxu0 0.0
  %809 = vmatmul.mubr.f32.gmra.mxu0 %v594
  %v810 = vpop.f32.mrf.mxu0
  %v811 = vadd.f32 0.0, %v810
  %v812 = vpop.f32.mrf.mxu0
  %813 = vmatprep.mubr.f32.mxu0 0.0
  %814 = vmatmul.mubr.f32.gmra.mxu0 %v597
  %v815 = vpop.f32.mrf.mxu0
  %v816 = vadd.f32 0.0, %v815
  %v817 = vpop.f32.mrf.mxu0
  %818 = vmatprep.mubr.f32.mxu0 0.0
  %819 = vmatmul.mubr.f32.gmra.mxu0 %v600
  %v820 = vpop.f32.mrf.mxu0
  %v821 = vadd.f32 0.0, %v820
  %v822 = vpop.f32.mrf.mxu0
  %823 = vmatprep.mubr.f32.mxu0 0.0
  %824 = vmatmul.mubr.f32.gmra.mxu0 %v603
  %v825 = vpop.f32.mrf.mxu0
  %v826 = vadd.f32 0.0, %v825
  %v827 = vpop.f32.mrf.mxu0
  %828 = vmatprep.mubr.f32.mxu0 0.0
  %829 = vmatmul.mubr.f32.gmra.mxu0 %v606
  %v830 = vpop.f32.mrf.mxu0
  %v831 = vadd.f32 0.0, %v830
  %v832 = vpop.f32.mrf.mxu0
  %833 = vmatprep.mubr.f32.mxu0 0.0
  %834 = vmatmul.mubr.f32.gmra.mxu0 %v609
  %v835 = vpop.f32.mrf.mxu0
  %v836 = vadd.f32 0.0, %v835
  %v837 = vpop.f32.mrf.mxu0
  %838 = vmatprep.mubr.f32.mxu0 0.0
  %839 = vmatmul.mubr.f32.gmra.mxu0 %v612
  %v840 = vpop.f32.mrf.mxu0
  %v841 = vadd.f32 0.0, %v840
  %v842 = vpop.f32.mrf.mxu0
  %843 = vmatprep.mubr.f32.mxu0 0.0
  %844 = vmatmul.mubr.f32.gmra.mxu0 %v615
  %v845 = vpop.f32.mrf.mxu0
  %v846 = vadd.f32 0.0, %v845
  %v847 = vpop.f32.mrf.mxu0
  %848 = vmatprep.mubr.f32.mxu0 0.0
  %849 = vmatmul.mubr.f32.gmra.mxu0 %v618
  %v850 = vpop.f32.mrf.mxu0
  %v851 = vadd.f32 0.0, %v850
  %v852 = vpop.f32.mrf.mxu0
  %853 = vmatprep.mubr.f32.mxu0 0.0
  %854 = vmatmul.mubr.f32.gmra.mxu0 %v621
  %v855 = vpop.f32.mrf.mxu0
  %v856 = vadd.f32 0.0, %v855
  %v857 = vpop.f32.mrf.mxu0
  %858 = vmatprep.mubr.f32.mxu0 0.0
  %859 = vmatmul.mubr.f32.gmra.mxu0 %v624
  %v860 = vpop.f32.mrf.mxu0
  %v861 = vadd.f32 0.0, %v860
  %v862 = vpop.f32.mrf.mxu0
  %863 = vmatprep.mubr.f32.mxu0 0.0
  %864 = vmatmul.mubr.f32.gmra.mxu0 %v627
  %v865 = vpop.f32.mrf.mxu0
  %v866 = vadd.f32 0.0, %v865
  %v867 = vpop.f32.mrf.mxu0
  %868 = vmatprep.mubr.f32.mxu0 0.0
  %869 = vmatmul.mubr.f32.gmra.mxu0 %v630
  %v870 = vpop.f32.mrf.mxu0
  %v871 = vadd.f32 0.0, %v870
  %v872 = vpop.f32.mrf.mxu0
  %873 = vmatprep.mubr.f32.mxu0 0.0
  %874 = vmatmul.mubr.f32.gmra.mxu0 %v633
  %v875 = vpop.f32.mrf.mxu0
  %v876 = vadd.f32 0.0, %v875
  %v877 = vpop.f32.mrf.mxu0
  %878 = vmatprep.mubr.f32.mxu0 0.0
  %879 = vmatmul.mubr.f32.gmra.mxu0 %v636
  %v880 = vpop.f32.mrf.mxu0
  %v881 = vadd.f32 0.0, %v880
  %v882 = vpop.f32.mrf.mxu0
  %883 = vmatprep.mubr.f32.mxu0 0.0
  %884 = vmatmul.mubr.f32.gmra.mxu0 %v639
  %v885 = vpop.f32.mrf.mxu0
  %v886 = vadd.f32 0.0, %v885
  %v887 = vpop.f32.mrf.mxu0
  %888 = vmatprep.mubr.f32.mxu0 0.0
  %889 = vmatmul.mubr.f32.gmra.mxu0 %v642
  %v890 = vpop.f32.mrf.mxu0
  %v891 = vadd.f32 0.0, %v890
  %v892 = vpop.f32.mrf.mxu0
  %893 = vmatprep.mubr.f32.mxu0 0.0
  %894 = vmatmul.mubr.f32.gmra.mxu0 %v645
  %v895 = vpop.f32.mrf.mxu0
  %v896 = vadd.f32 0.0, %v895
  %v897 = vpop.f32.mrf.mxu0
  %898 = vmatprep.mubr.f32.mxu0 0.0
  %899 = vmatmul.mubr.f32.gmra.mxu0 %v648
  %v900 = vpop.f32.mrf.mxu0
  %v901 = vadd.f32 0.0, %v900
  %v902 = vpop.f32.mrf.mxu0
  %903 = vmatprep.mubr.f32.mxu0 0.0
  %904 = vmatmul.mubr.f32.gmra.mxu0 %v651
  %v905 = vpop.f32.mrf.mxu0
  %v906 = vadd.f32 0.0, %v905
  %v907 = vpop.f32.mrf.mxu0
  %908 = vmatprep.mubr.f32.mxu0 0.0
  %909 = vmatmul.mubr.f32.gmra.mxu0 %v654
  %v910 = vpop.f32.mrf.mxu0
  %v911 = vadd.f32 0.0, %v910
  %v912 = vpop.f32.mrf.mxu0
  %913 = vmatprep.mubr.f32.mxu0 0.0
  %914 = vmatmul.mubr.f32.gmra.mxu0 %v657
  %v915 = vpop.f32.mrf.mxu0
  %v916 = vadd.f32 0.0, %v915
  %v917 = vpop.f32.mrf.mxu0
  %918 = vmatprep.mubr.f32.mxu0 0.0
  %919 = vmatmul.mubr.f32.gmra.mxu0 %v660
  %v920 = vpop.f32.mrf.mxu0
  %v921 = vadd.f32 0.0, %v920
  %v922 = vpop.f32.mrf.mxu0
  %923 = vmatprep.mubr.f32.mxu0 0.0
  %924 = vmatmul.mubr.f32.gmra.mxu0 %v663
  %v925 = vpop.f32.mrf.mxu0
  %v926 = vadd.f32 0.0, %v925
  %v927 = vpop.f32.mrf.mxu0
  %928 = vmatprep.mubr.f32.mxu0 0.0
  %929 = vmatmul.mubr.f32.gmra.mxu0 %v666
  %v930 = vpop.f32.mrf.mxu0
  %v931 = vadd.f32 0.0, %v930
  %v932 = vpop.f32.mrf.mxu0
  %933 = vmatprep.mubr.f32.mxu0 0.0
  %934 = vmatmul.mubr.f32.gmra.mxu0 %v669
  %v935 = vpop.f32.mrf.mxu0
  %v936 = vadd.f32 0.0, %v935
  %v937 = vpop.f32.mrf.mxu0
  %938 = vmatprep.mubr.f32.mxu0 0.0
  %939 = vmatmul.mubr.f32.gmra.mxu0 %v672
  %v940 = vpop.f32.mrf.mxu0
  %v941 = vadd.f32 0.0, %v940
  %v942 = vpop.f32.mrf.mxu0
  %943 = vmatprep.mubr.f32.mxu0 0.0
  %944 = vmatmul.mubr.f32.gmra.mxu0 %v675
  %v945 = vpop.f32.mrf.mxu0
  %v946 = vadd.f32 0.0, %v945
  %v947 = vpop.f32.mrf.mxu0
  %948 = vmatprep.mubr.f32.mxu0 0.0
  %949 = vmatmul.mubr.f32.gmra.mxu0 %v678
  %v950 = vpop.f32.mrf.mxu0
  %v951 = vadd.f32 0.0, %v950
  %v952 = vpop.f32.mrf.mxu0
  %953 = vmatprep.mubr.f32.mxu0 0.0
  %954 = vmatmul.mubr.f32.gmra.mxu0 %v681
  %v955 = vpop.f32.mrf.mxu0
  %v956 = vadd.f32 0.0, %v955
  %v957 = vpop.f32.mrf.mxu0
  %958 = vmatprep.mubr.f32.mxu0 0.0
  %959 = vmatmul.mubr.f32.gmra.mxu0 %v684
  %v960 = vpop.f32.mrf.mxu0
  %v961 = vadd.f32 0.0, %v960
  %v962 = vpop.f32.mrf.mxu0
  %963 = vmatprep.mubr.f32.mxu0 0.0
  %964 = vmatmul.mubr.f32.gmra.mxu0 %v687
  %v965 = vpop.f32.mrf.mxu0
  %v966 = vadd.f32 0.0, %v965
  %v967 = vpop.f32.mrf.mxu0
  %968 = vmatprep.mubr.f32.mxu0 0.0
  %969 = vmatmul.mubr.f32.gmra.mxu0 %v690
  %v970 = vpop.f32.mrf.mxu0
  %v971 = vadd.f32 0.0, %v970
  %v972 = vpop.f32.mrf.mxu0
  %973 = vmatprep.mubr.f32.mxu0 0.0
  %974 = vmatmul.mubr.f32.gmra.mxu0 %v693
  %v975 = vpop.f32.mrf.mxu0
  %v976 = vadd.f32 0.0, %v975
  %v977 = vpop.f32.mrf.mxu0
  %978 = vmatprep.mubr.f32.mxu0 0.0
  %979 = vmatmul.mubr.f32.gmra.mxu0 %v696
  %v980 = vpop.f32.mrf.mxu0
  %v981 = vadd.f32 0.0, %v980
  %v982 = vpop.f32.mrf.mxu0
  %983 = vmatprep.mubr.f32.mxu0 0.0
  %984 = vmatmul.mubr.f32.gmra.mxu0 %v699
  %v985 = vpop.f32.mrf.mxu0
  %v986 = vadd.f32 0.0, %v985
  %v987 = vpop.f32.mrf.mxu0
  %988 = vmatprep.mubr.f32.mxu0 0.0
  %989 = vmatmul.mubr.f32.gmra.mxu0 %v702
  %v990 = vpop.f32.mrf.mxu0
  %v991 = vadd.f32 0.0, %v990
  %v992 = vpop.f32.mrf.mxu0
  %993 = vmatprep.mubr.f32.mxu0 0.0
  %994 = vmatmul.mubr.f32.gmra.mxu0 %v705
  %v995 = vpop.f32.mrf.mxu0
  %v996 = vadd.f32 0.0, %v995
  %v997 = vpop.f32.mrf.mxu0
  %998 = vmatprep.mubr.f32.mxu0 0.0
  %999 = vmatmul.mubr.f32.gmra.mxu0 %v708
  %v1000 = vpop.f32.mrf.mxu0
  %v1001 = vadd.f32 0.0, %v1000
  %v1002 = vpop.f32.mrf.mxu0
  %1003 = vmatprep.mubr.f32.mxu0 0.0
  %1004 = vmatmul.mubr.f32.gmra.mxu0 %v711
  %v1005 = vpop.f32.mrf.mxu0
  %v1006 = vadd.f32 0.0, %v1005
  %v1007 = vpop.f32.mrf.mxu0
  %1008 = vmatprep.mubr.f32.mxu0 0.0
  %1009 = vmatmul.mubr.f32.gmra.mxu0 %v714
  %v1010 = vpop.f32.mrf.mxu0
  %v1011 = vadd.f32 0.0, %v1010
  %v1012 = vpop.f32.mrf.mxu0
  %1013 = vmatprep.mubr.f32.mxu0 0.0
  %1014 = vmatmul.mubr.f32.gmra.mxu0 %v717
  %v1015 = vpop.f32.mrf.mxu0
  %v1016 = vadd.f32 0.0, %v1015
  %v1017 = vpop.f32.mrf.mxu0
  %1018 = vmatprep.mubr.f32.mxu0 0.0
  %1019 = vmatmul.mubr.f32.gmra.mxu0 %v720
  %v1020 = vpop.f32.mrf.mxu0
  %v1021 = vadd.f32 0.0, %v1020
  %v1022 = vpop.f32.mrf.mxu0
  %1023 = vmatprep.mubr.f32.mxu0 0.0
  %1024 = vmatmul.mubr.f32.gmra.mxu0 %v723
  %v1025 = vpop.f32.mrf.mxu0
  %v1026 = vadd.f32 0.0, %v1025
  %v1027 = vpop.f32.mrf.mxu0
  %1028 = vmatprep.mubr.f32.mxu0 0.0
  %1029 = vmatmul.mubr.f32.gmra.mxu0 %v726
  %v1030 = vpop.f32.mrf.mxu0
  %v1031 = vadd.f32 0.0, %v1030
  %v1032 = vpop.f32.mrf.mxu0
  %1033 = vmatprep.mubr.f32.mxu0 0.0
  %1034 = vmatmul.mubr.f32.gmra.mxu0 %v729
  %v1035 = vpop.f32.mrf.mxu0
  %v1036 = vadd.f32 0.0, %v1035
  %v1037 = vpop.f32.mrf.mxu0
  %1038 = vmatprep.mubr.f32.mxu0 0.0
  %1039 = vmatmul.mubr.f32.gmra.mxu0 %v732
  %v1040 = vpop.f32.mrf.mxu0
  %v1041 = vadd.f32 0.0, %v1040
  %v1042 = vpop.f32.mrf.mxu0
  %1043 = vdwg.mxu0
  %v1044 = vmax.f32 %v295, %v801
  %v1045 = vmax.f32 %v300, %v806
  %v1046 = vmax.f32 %v305, %v811
  %v1047 = vmax.f32 %v310, %v816
  %v1048 = vmax.f32 %v315, %v821
  %v1049 = vmax.f32 %v320, %v826
  %v1050 = vmax.f32 %v325, %v831
  %v1051 = vmax.f32 %v330, %v836
  %v1052 = vmax.f32 %v335, %v841
  %v1053 = vmax.f32 %v340, %v846
  %v1054 = vmax.f32 %v345, %v851
  %v1055 = vmax.f32 %v350, %v856
  %v1056 = vmax.f32 %v355, %v861
  %v1057 = vmax.f32 %v360, %v866
  %v1058 = vmax.f32 %v365, %v871
  %v1059 = vmax.f32 %v370, %v876
  %v1060 = vmax.f32 %v375, %v881
  %v1061 = vmax.f32 %v380, %v886
  %v1062 = vmax.f32 %v385, %v891
  %v1063 = vmax.f32 %v390, %v896
  %v1064 = vmax.f32 %v395, %v901
  %v1065 = vmax.f32 %v400, %v906
  %v1066 = vmax.f32 %v405, %v911
  %v1067 = vmax.f32 %v410, %v916
  %v1068 = vmax.f32 %v415, %v921
  %v1069 = vmax.f32 %v420, %v926
  %v1070 = vmax.f32 %v425, %v931
  %v1071 = vmax.f32 %v430, %v936
  %v1072 = vmax.f32 %v435, %v941
  %v1073 = vmax.f32 %v440, %v946
  %v1074 = vmax.f32 %v445, %v951
  %v1075 = vmax.f32 %v450, %v956
  %v1076 = vmax.f32 %v455, %v961
  %v1077 = vmax.f32 %v460, %v966
  %v1078 = vmax.f32 %v465, %v971
  %v1079 = vmax.f32 %v470, %v976
  %v1080 = vmax.f32 %v475, %v981
  %v1081 = vmax.f32 %v480, %v986
  %v1082 = vmax.f32 %v485, %v991
  %v1083 = vmax.f32 %v490, %v996
  %v1084 = vmax.f32 %v495, %v1001
  %v1085 = vmax.f32 %v500, %v1006
  %v1086 = vmax.f32 %v505, %v1011
  %v1087 = vmax.f32 %v510, %v1016
  %v1088 = vmax.f32 %v515, %v1021
  %v1089 = vmax.f32 %v520, %v1026
  %v1090 = vmax.f32 %v525, %v1031
  %v1091 = vmax.f32 %v530, %v1036
  %v1092 = vmax.f32 %v535, %v1041
  %v1093 = vld [vmem:[%s2] sm:$0xff]
  %v1094 = vld [vmem:[%s2 + $0x8] sm:$0xff]
  %v1095 = vld [vmem:[%s2 + $0x10] sm:$0xff]
  %v1096 = vld [vmem:[%s2 + $0x18] sm:$0xff]
  %v1097 = vld [vmem:[%s2 + $0x20] sm:$0xff]
  %v1098 = vld [vmem:[%s2 + $0x28] sm:$0xff]
  %v1099 = vld [vmem:[%s2 + $0x30] sm:$0xff]
  %v1100 = vld [vmem:[%s2 + $0x38] sm:$0xff]
  %v1101 = vld [vmem:[%s2 + $0x40] sm:$0xff]
  %v1102 = vld [vmem:[%s2 + $0x48] sm:$0xff]
  %v1103 = vld [vmem:[%s2 + $0x50] sm:$0xff]
  %v1104 = vld [vmem:[%s2 + $0x58] sm:$0xff]
  %v1105 = vld [vmem:[%s2 + $0x60] sm:$0xff]
  %v1106 = vld [vmem:[%s2 + $0x68] sm:$0xff]
  %v1107 = vld [vmem:[%s2 + $0x70] sm:$0xff]
  %v1108 = vld [vmem:[%s2 + $0x78] sm:$0xff]
  %v1109 = vld [vmem:[%s2 + $0x80] sm:$0xff]
  %v1110 = vld [vmem:[%s2 + $0x88] sm:$0xff]
  %v1111 = vld [vmem:[%s2 + $0x90] sm:$0xff]
  %v1112 = vld [vmem:[%s2 + $0x98] sm:$0xff]
  %v1113 = vld [vmem:[%s2 + $0xa0] sm:$0xff]
  %v1114 = vld [vmem:[%s2 + $0xa8] sm:$0xff]
  %v1115 = vld [vmem:[%s2 + $0xb0] sm:$0xff]
  %v1116 = vld [vmem:[%s2 + $0xb8] sm:$0xff]
  %v1117 = vld [vmem:[%s2 + $0xc0] sm:$0xff]
  %v1118 = vld [vmem:[%s2 + $0xc8] sm:$0xff]
  %v1119 = vld [vmem:[%s2 + $0xd0] sm:$0xff]
  %v1120 = vld [vmem:[%s2 + $0xd8] sm:$0xff]
  %v1121 = vld [vmem:[%s2 + $0xe0] sm:$0xff]
  %v1122 = vld [vmem:[%s2 + $0xe8] sm:$0xff]
  %v1123 = vld [vmem:[%s2 + $0xf0] sm:$0xff]
  %v1124 = vld [vmem:[%s2 + $0xf8] sm:$0xff]
  %v1125 = vld [vmem:[%s2 + $0x100] sm:$0xff]
  %v1126 = vld [vmem:[%s2 + $0x108] sm:$0xff]
  %v1127 = vld [vmem:[%s2 + $0x110] sm:$0xff]
  %v1128 = vld [vmem:[%s2 + $0x118] sm:$0xff]
  %v1129 = vld [vmem:[%s2 + $0x120] sm:$0xff]
  %v1130 = vld [vmem:[%s2 + $0x128] sm:$0xff]
  %v1131 = vld [vmem:[%s2 + $0x130] sm:$0xff]
  %v1132 = vld [vmem:[%s2 + $0x138] sm:$0xff]
  %v1133 = vld [vmem:[%s2 + $0x140] sm:$0xff]
  %v1134 = vld [vmem:[%s2 + $0x148] sm:$0xff]
  %v1135 = vld [vmem:[%s2 + $0x150] sm:$0xff]
  %v1136 = vld [vmem:[%s2 + $0x158] sm:$0xff]
  %v1137 = vld [vmem:[%s2 + $0x160] sm:$0xff]
  %v1138 = vld [vmem:[%s2 + $0x168] sm:$0xff]
  %v1139 = vld [vmem:[%s2 + $0x170] sm:$0xff]
  %v1140 = vld [vmem:[%s2 + $0x178] sm:$0xff]
  %v1141 = vld [vmem:[%s2 + $0x180] sm:$0xff]
  %v1143 = vsel %vm76, %v1093, 0
  %v1146 = vsel %vm76, %v1094, 0
  %v1149 = vsel %vm76, %v1095, 0
  %v1152 = vsel %vm76, %v1096, 0
  %v1155 = vsel %vm76, %v1097, 0
  %v1158 = vsel %vm76, %v1098, 0
  %v1161 = vsel %vm76, %v1099, 0
  %v1164 = vsel %vm76, %v1100, 0
  %v1167 = vsel %vm76, %v1101, 0
  %v1170 = vsel %vm76, %v1102, 0
  %v1173 = vsel %vm76, %v1103, 0
  %v1176 = vsel %vm76, %v1104, 0
  %v1179 = vsel %vm76, %v1105, 0
  %v1182 = vsel %vm76, %v1106, 0
  %v1185 = vsel %vm76, %v1107, 0
  %v1188 = vsel %vm76, %v1108, 0
  %v1191 = vsel %vm76, %v1109, 0
  %v1194 = vsel %vm76, %v1110, 0
  %v1197 = vsel %vm76, %v1111, 0
  %v1200 = vsel %vm76, %v1112, 0
  %v1203 = vsel %vm76, %v1113, 0
  %v1206 = vsel %vm76, %v1114, 0
  %v1209 = vsel %vm76, %v1115, 0
  %v1212 = vsel %vm76, %v1116, 0
  %v1215 = vsel %vm76, %v1117, 0
  %v1218 = vsel %vm76, %v1118, 0
  %v1221 = vsel %vm76, %v1119, 0
  %v1224 = vsel %vm76, %v1120, 0
  %v1227 = vsel %vm76, %v1121, 0
  %v1230 = vsel %vm76, %v1122, 0
  %v1233 = vsel %vm76, %v1123, 0
  %v1236 = vsel %vm76, %v1124, 0
  %v1239 = vsel %vm76, %v1125, 0
  %v1242 = vsel %vm76, %v1126, 0
  %v1245 = vsel %vm76, %v1127, 0
  %v1248 = vsel %vm76, %v1128, 0
  %v1251 = vsel %vm76, %v1129, 0
  %v1254 = vsel %vm76, %v1130, 0
  %v1257 = vsel %vm76, %v1131, 0
  %v1260 = vsel %vm76, %v1132, 0
  %v1263 = vsel %vm76, %v1133, 0
  %v1266 = vsel %vm76, %v1134, 0
  %v1269 = vsel %vm76, %v1135, 0
  %v1272 = vsel %vm76, %v1136, 0
  %v1275 = vsel %vm76, %v1137, 0
  %v1278 = vsel %vm76, %v1138, 0
  %v1281 = vsel %vm76, %v1139, 0
  %v1284 = vsel %vm76, %v1140, 0
  %v1287 = vsel %vm76, %v1141, 0
  %1289 = vmatprep.subr.mxu0 0.0
  %1290 = vmatpush1.msra.mxu0 0.0
  %1291 = vmatprep.subr.mxu0 0.0
  %1292 = vmatpush1.msra.mxu0 0.0
  %1293 = vmatprep.subr.mxu0 0.0
  %1294 = vmatpush1.msra.mxu0 0.0
  %1295 = vmatprep.subr.mxu0 0.0
  %1296 = vmatpush1.msra.mxu0 0.0
  %1297 = vmatprep.subr.mxu0 0.0
  %1298 = vmatpush1.msra.mxu0 0.0
  %1299 = vmatprep.subr.mxu0 0.0
  %1300 = vmatpush1.msra.mxu0 0.0
  %1301 = vmatprep.subr.mxu0 0.0
  %1302 = vmatpush1.msra.mxu0 0.0
  %1303 = vmatprep.subr.mxu0 0.0
  %1304 = vmatpush1.msra.mxu0 0.0
  %1305 = vmatprep.subr.mxu0 0.0
  %1306 = vmatpush1.msra.mxu0 0.0
  %1307 = vmatprep.subr.mxu0 0.0
  %1308 = vmatpush1.msra.mxu0 0.0
  %1309 = vmatprep.subr.mxu0 0.0
  %1310 = vmatpush1.msra.mxu0 0.0
  %1311 = vmatprep.subr.mxu0 0.0
  %1312 = vmatpush1.msra.mxu0 0.0
  %1313 = vmatprep.subr.mxu0 0.0
  %1314 = vmatpush1.msra.mxu0 %v226
  %1315 = vmatprep.subr.mxu0 0.0
  %1316 = vmatpush1.msra.mxu0 %v25
  %1317 = vmatprep.subr.mxu0 0.0
  %1318 = vmatpush1.msra.mxu0 %v24
  %1319 = vmatprep.subr.mxu0 0.0
  %1320 = vmatpush1.msra.mxu0 %v23
  %1321 = vmatprep.subr.mxu0 0.0
  %1322 = vmatpush2.msra.mxu0 0.0
  %1323 = vmatprep.subr.mxu0 0.0
  %1324 = vmatpush2.msra.mxu0 0.0
  %1325 = vmatprep.subr.mxu0 0.0
  %1326 = vmatpush2.msra.mxu0 0.0
  %1327 = vmatprep.subr.mxu0 0.0
  %1328 = vmatpush2.msra.mxu0 0.0
  %1329 = vmatprep.subr.mxu0 0.0
  %1330 = vmatpush2.msra.mxu0 0.0
  %1331 = vmatprep.subr.mxu0 0.0
  %1332 = vmatpush2.msra.mxu0 0.0
  %1333 = vmatprep.subr.mxu0 0.0
  %1334 = vmatpush2.msra.mxu0 0.0
  %1335 = vmatprep.subr.mxu0 0.0
  %1336 = vmatpush2.msra.mxu0 0.0
  %1337 = vmatprep.subr.mxu0 0.0
  %1338 = vmatpush2.msra.mxu0 0.0
  %1339 = vmatprep.subr.mxu0 0.0
  %1340 = vmatpush2.msra.mxu0 0.0
  %1341 = vmatprep.subr.mxu0 0.0
  %1342 = vmatpush2.msra.mxu0 0.0
  %1343 = vmatprep.subr.mxu0 0.0
  %1344 = vmatpush2.msra.mxu0 0.0
  %1345 = vmatprep.subr.mxu0 0.0
  %1346 = vmatpush2.msra.mxu0 0.0
  %1347 = vmatprep.subr.mxu0 0.0
  %1348 = vmatpush2.msra.mxu0 0.0
  %1349 = vmatprep.subr.mxu0 0.0
  %1350 = vmatpush2.msra.mxu0 0.0
  %1351 = vmatprep.subr.mxu0 0.0
  %1352 = vmatpush2.msra.mxu0 0.0
  %1353 = vmatprep.mubr.f32.mxu0 0.0
  %1354 = vmatmul.mubr.f32.gmra.mxu0 %v1143
  %v1355 = vpop.f32.mrf.mxu0
  %v1356 = vadd.f32 0.0, %v1355
  %v1357 = vpop.f32.mrf.mxu0
  %1358 = vmatprep.mubr.f32.mxu0 0.0
  %1359 = vmatmul.mubr.f32.gmra.mxu0 %v1146
  %v1360 = vpop.f32.mrf.mxu0
  %v1361 = vadd.f32 0.0, %v1360
  %v1362 = vpop.f32.mrf.mxu0
  %1363 = vmatprep.mubr.f32.mxu0 0.0
  %1364 = vmatmul.mubr.f32.gmra.mxu0 %v1149
  %v1365 = vpop.f32.mrf.mxu0
  %v1366 = vadd.f32 0.0, %v1365
  %v1367 = vpop.f32.mrf.mxu0
  %1368 = vmatprep.mubr.f32.mxu0 0.0
  %1369 = vmatmul.mubr.f32.gmra.mxu0 %v1152
  %v1370 = vpop.f32.mrf.mxu0
  %v1371 = vadd.f32 0.0, %v1370
  %v1372 = vpop.f32.mrf.mxu0
  %1373 = vmatprep.mubr.f32.mxu0 0.0
  %1374 = vmatmul.mubr.f32.gmra.mxu0 %v1155
  %v1375 = vpop.f32.mrf.mxu0
  %v1376 = vadd.f32 0.0, %v1375
  %v1377 = vpop.f32.mrf.mxu0
  %1378 = vmatprep.mubr.f32.mxu0 0.0
  %1379 = vmatmul.mubr.f32.gmra.mxu0 %v1158
  %v1380 = vpop.f32.mrf.mxu0
  %v1381 = vadd.f32 0.0, %v1380
  %v1382 = vpop.f32.mrf.mxu0
  %1383 = vmatprep.mubr.f32.mxu0 0.0
  %1384 = vmatmul.mubr.f32.gmra.mxu0 %v1161
  %v1385 = vpop.f32.mrf.mxu0
  %v1386 = vadd.f32 0.0, %v1385
  %v1387 = vpop.f32.mrf.mxu0
  %1388 = vmatprep.mubr.f32.mxu0 0.0
  %1389 = vmatmul.mubr.f32.gmra.mxu0 %v1164
  %v1390 = vpop.f32.mrf.mxu0
  %v1391 = vadd.f32 0.0, %v1390
  %v1392 = vpop.f32.mrf.mxu0
  %1393 = vmatprep.mubr.f32.mxu0 0.0
  %1394 = vmatmul.mubr.f32.gmra.mxu0 %v1167
  %v1395 = vpop.f32.mrf.mxu0
  %v1396 = vadd.f32 0.0, %v1395
  %v1397 = vpop.f32.mrf.mxu0
  %1398 = vmatprep.mubr.f32.mxu0 0.0
  %1399 = vmatmul.mubr.f32.gmra.mxu0 %v1170
  %v1400 = vpop.f32.mrf.mxu0
  %v1401 = vadd.f32 0.0, %v1400
  %v1402 = vpop.f32.mrf.mxu0
  %1403 = vmatprep.mubr.f32.mxu0 0.0
  %1404 = vmatmul.mubr.f32.gmra.mxu0 %v1173
  %v1405 = vpop.f32.mrf.mxu0
  %v1406 = vadd.f32 0.0, %v1405
  %v1407 = vpop.f32.mrf.mxu0
  %1408 = vmatprep.mubr.f32.mxu0 0.0
  %1409 = vmatmul.mubr.f32.gmra.mxu0 %v1176
  %v1410 = vpop.f32.mrf.mxu0
  %v1411 = vadd.f32 0.0, %v1410
  %v1412 = vpop.f32.mrf.mxu0
  %1413 = vmatprep.mubr.f32.mxu0 0.0
  %1414 = vmatmul.mubr.f32.gmra.mxu0 %v1179
  %v1415 = vpop.f32.mrf.mxu0
  %v1416 = vadd.f32 0.0, %v1415
  %v1417 = vpop.f32.mrf.mxu0
  %1418 = vmatprep.mubr.f32.mxu0 0.0
  %1419 = vmatmul.mubr.f32.gmra.mxu0 %v1182
  %v1420 = vpop.f32.mrf.mxu0
  %v1421 = vadd.f32 0.0, %v1420
  %v1422 = vpop.f32.mrf.mxu0
  %1423 = vmatprep.mubr.f32.mxu0 0.0
  %1424 = vmatmul.mubr.f32.gmra.mxu0 %v1185
  %v1425 = vpop.f32.mrf.mxu0
  %v1426 = vadd.f32 0.0, %v1425
  %v1427 = vpop.f32.mrf.mxu0
  %1428 = vmatprep.mubr.f32.mxu0 0.0
  %1429 = vmatmul.mubr.f32.gmra.mxu0 %v1188
  %v1430 = vpop.f32.mrf.mxu0
  %v1431 = vadd.f32 0.0, %v1430
  %v1432 = vpop.f32.mrf.mxu0
  %1433 = vmatprep.mubr.f32.mxu0 0.0
  %1434 = vmatmul.mubr.f32.gmra.mxu0 %v1191
  %v1435 = vpop.f32.mrf.mxu0
  %v1436 = vadd.f32 0.0, %v1435
  %v1437 = vpop.f32.mrf.mxu0
  %1438 = vmatprep.mubr.f32.mxu0 0.0
  %1439 = vmatmul.mubr.f32.gmra.mxu0 %v1194
  %v1440 = vpop.f32.mrf.mxu0
  %v1441 = vadd.f32 0.0, %v1440
  %v1442 = vpop.f32.mrf.mxu0
  %1443 = vmatprep.mubr.f32.mxu0 0.0
  %1444 = vmatmul.mubr.f32.gmra.mxu0 %v1197
  %v1445 = vpop.f32.mrf.mxu0
  %v1446 = vadd.f32 0.0, %v1445
  %v1447 = vpop.f32.mrf.mxu0
  %1448 = vmatprep.mubr.f32.mxu0 0.0
  %1449 = vmatmul.mubr.f32.gmra.mxu0 %v1200
  %v1450 = vpop.f32.mrf.mxu0
  %v1451 = vadd.f32 0.0, %v1450
  %v1452 = vpop.f32.mrf.mxu0
  %1453 = vmatprep.mubr.f32.mxu0 0.0
  %1454 = vmatmul.mubr.f32.gmra.mxu0 %v1203
  %v1455 = vpop.f32.mrf.mxu0
  %v1456 = vadd.f32 0.0, %v1455
  %v1457 = vpop.f32.mrf.mxu0
  %1458 = vmatprep.mubr.f32.mxu0 0.0
  %1459 = vmatmul.mubr.f32.gmra.mxu0 %v1206
  %v1460 = vpop.f32.mrf.mxu0
  %v1461 = vadd.f32 0.0, %v1460
  %v1462 = vpop.f32.mrf.mxu0
  %1463 = vmatprep.mubr.f32.mxu0 0.0
  %1464 = vmatmul.mubr.f32.gmra.mxu0 %v1209
  %v1465 = vpop.f32.mrf.mxu0
  %v1466 = vadd.f32 0.0, %v1465
  %v1467 = vpop.f32.mrf.mxu0
  %1468 = vmatprep.mubr.f32.mxu0 0.0
  %1469 = vmatmul.mubr.f32.gmra.mxu0 %v1212
  %v1470 = vpop.f32.mrf.mxu0
  %v1471 = vadd.f32 0.0, %v1470
  %v1472 = vpop.f32.mrf.mxu0
  %1473 = vmatprep.mubr.f32.mxu0 0.0
  %1474 = vmatmul.mubr.f32.gmra.mxu0 %v1215
  %v1475 = vpop.f32.mrf.mxu0
  %v1476 = vadd.f32 0.0, %v1475
  %v1477 = vpop.f32.mrf.mxu0
  %1478 = vmatprep.mubr.f32.mxu0 0.0
  %1479 = vmatmul.mubr.f32.gmra.mxu0 %v1218
  %v1480 = vpop.f32.mrf.mxu0
  %v1481 = vadd.f32 0.0, %v1480
  %v1482 = vpop.f32.mrf.mxu0
  %1483 = vmatprep.mubr.f32.mxu0 0.0
  %1484 = vmatmul.mubr.f32.gmra.mxu0 %v1221
  %v1485 = vpop.f32.mrf.mxu0
  %v1486 = vadd.f32 0.0, %v1485
  %v1487 = vpop.f32.mrf.mxu0
  %1488 = vmatprep.mubr.f32.mxu0 0.0
  %1489 = vmatmul.mubr.f32.gmra.mxu0 %v1224
  %v1490 = vpop.f32.mrf.mxu0
  %v1491 = vadd.f32 0.0, %v1490
  %v1492 = vpop.f32.mrf.mxu0
  %1493 = vmatprep.mubr.f32.mxu0 0.0
  %1494 = vmatmul.mubr.f32.gmra.mxu0 %v1227
  %v1495 = vpop.f32.mrf.mxu0
  %v1496 = vadd.f32 0.0, %v1495
  %v1497 = vpop.f32.mrf.mxu0
  %1498 = vmatprep.mubr.f32.mxu0 0.0
  %1499 = vmatmul.mubr.f32.gmra.mxu0 %v1230
  %v1500 = vpop.f32.mrf.mxu0
  %v1501 = vadd.f32 0.0, %v1500
  %v1502 = vpop.f32.mrf.mxu0
  %1503 = vmatprep.mubr.f32.mxu0 0.0
  %1504 = vmatmul.mubr.f32.gmra.mxu0 %v1233
  %v1505 = vpop.f32.mrf.mxu0
  %v1506 = vadd.f32 0.0, %v1505
  %v1507 = vpop.f32.mrf.mxu0
  %1508 = vmatprep.mubr.f32.mxu0 0.0
  %1509 = vmatmul.mubr.f32.gmra.mxu0 %v1236
  %v1510 = vpop.f32.mrf.mxu0
  %v1511 = vadd.f32 0.0, %v1510
  %v1512 = vpop.f32.mrf.mxu0
  %1513 = vmatprep.mubr.f32.mxu0 0.0
  %1514 = vmatmul.mubr.f32.gmra.mxu0 %v1239
  %v1515 = vpop.f32.mrf.mxu0
  %v1516 = vadd.f32 0.0, %v1515
  %v1517 = vpop.f32.mrf.mxu0
  %1518 = vmatprep.mubr.f32.mxu0 0.0
  %1519 = vmatmul.mubr.f32.gmra.mxu0 %v1242
  %v1520 = vpop.f32.mrf.mxu0
  %v1521 = vadd.f32 0.0, %v1520
  %v1522 = vpop.f32.mrf.mxu0
  %1523 = vmatprep.mubr.f32.mxu0 0.0
  %1524 = vmatmul.mubr.f32.gmra.mxu0 %v1245
  %v1525 = vpop.f32.mrf.mxu0
  %v1526 = vadd.f32 0.0, %v1525
  %v1527 = vpop.f32.mrf.mxu0
  %1528 = vmatprep.mubr.f32.mxu0 0.0
  %1529 = vmatmul.mubr.f32.gmra.mxu0 %v1248
  %v1530 = vpop.f32.mrf.mxu0
  %v1531 = vadd.f32 0.0, %v1530
  %v1532 = vpop.f32.mrf.mxu0
  %1533 = vmatprep.mubr.f32.mxu0 0.0
  %1534 = vmatmul.mubr.f32.gmra.mxu0 %v1251
  %v1535 = vpop.f32.mrf.mxu0
  %v1536 = vadd.f32 0.0, %v1535
  %v1537 = vpop.f32.mrf.mxu0
  %1538 = vmatprep.mubr.f32.mxu0 0.0
  %1539 = vmatmul.mubr.f32.gmra.mxu0 %v1254
  %v1540 = vpop.f32.mrf.mxu0
  %v1541 = vadd.f32 0.0, %v1540
  %v1542 = vpop.f32.mrf.mxu0
  %1543 = vmatprep.mubr.f32.mxu0 0.0
  %1544 = vmatmul.mubr.f32.gmra.mxu0 %v1257
  %v1545 = vpop.f32.mrf.mxu0
  %v1546 = vadd.f32 0.0, %v1545
  %v1547 = vpop.f32.mrf.mxu0
  %1548 = vmatprep.mubr.f32.mxu0 0.0
  %1549 = vmatmul.mubr.f32.gmra.mxu0 %v1260
  %v1550 = vpop.f32.mrf.mxu0
  %v1551 = vadd.f32 0.0, %v1550
  %v1552 = vpop.f32.mrf.mxu0
  %1553 = vmatprep.mubr.f32.mxu0 0.0
  %1554 = vmatmul.mubr.f32.gmra.mxu0 %v1263
  %v1555 = vpop.f32.mrf.mxu0
  %v1556 = vadd.f32 0.0, %v1555
  %v1557 = vpop.f32.mrf.mxu0
  %1558 = vmatprep.mubr.f32.mxu0 0.0
  %1559 = vmatmul.mubr.f32.gmra.mxu0 %v1266
  %v1560 = vpop.f32.mrf.mxu0
  %v1561 = vadd.f32 0.0, %v1560
  %v1562 = vpop.f32.mrf.mxu0
  %1563 = vmatprep.mubr.f32.mxu0 0.0
  %1564 = vmatmul.mubr.f32.gmra.mxu0 %v1269
  %v1565 = vpop.f32.mrf.mxu0
  %v1566 = vadd.f32 0.0, %v1565
  %v1567 = vpop.f32.mrf.mxu0
  %1568 = vmatprep.mubr.f32.mxu0 0.0
  %1569 = vmatmul.mubr.f32.gmra.mxu0 %v1272
  %v1570 = vpop.f32.mrf.mxu0
  %v1571 = vadd.f32 0.0, %v1570
  %v1572 = vpop.f32.mrf.mxu0
  %1573 = vmatprep.mubr.f32.mxu0 0.0
  %1574 = vmatmul.mubr.f32.gmra.mxu0 %v1275
  %v1575 = vpop.f32.mrf.mxu0
  %v1576 = vadd.f32 0.0, %v1575
  %v1577 = vpop.f32.mrf.mxu0
  %1578 = vmatprep.mubr.f32.mxu0 0.0
  %1579 = vmatmul.mubr.f32.gmra.mxu0 %v1278
  %v1580 = vpop.f32.mrf.mxu0
  %v1581 = vadd.f32 0.0, %v1580
  %v1582 = vpop.f32.mrf.mxu0
  %1583 = vmatprep.mubr.f32.mxu0 0.0
  %1584 = vmatmul.mubr.f32.gmra.mxu0 %v1281
  %v1585 = vpop.f32.mrf.mxu0
  %v1586 = vadd.f32 0.0, %v1585
  %v1587 = vpop.f32.mrf.mxu0
  %1588 = vmatprep.mubr.f32.mxu0 0.0
  %1589 = vmatmul.mubr.f32.gmra.mxu0 %v1284
  %v1590 = vpop.f32.mrf.mxu0
  %v1591 = vadd.f32 0.0, %v1590
  %v1592 = vpop.f32.mrf.mxu0
  %1593 = vmatprep.mubr.f32.mxu0 0.0
  %1594 = vmatmul.mubr.f32.gmra.mxu0 %v1287
  %v1595 = vpop.f32.mrf.mxu0
  %v1596 = vadd.f32 0.0, %v1595
  %v1597 = vpop.f32.mrf.mxu0
  %1598 = vdwg.mxu0
  %v1599 = vmax.f32 %v1044, %v1356
  %v1600 = vmax.f32 %v1045, %v1361
  %v1601 = vmax.f32 %v1046, %v1366
  %v1602 = vmax.f32 %v1047, %v1371
  %v1603 = vmax.f32 %v1048, %v1376
  %v1604 = vmax.f32 %v1049, %v1381
  %v1605 = vmax.f32 %v1050, %v1386
  %v1606 = vmax.f32 %v1051, %v1391
  %v1607 = vmax.f32 %v1052, %v1396
  %v1608 = vmax.f32 %v1053, %v1401
  %v1609 = vmax.f32 %v1054, %v1406
  %v1610 = vmax.f32 %v1055, %v1411
  %v1611 = vmax.f32 %v1056, %v1416
  %v1612 = vmax.f32 %v1057, %v1421
  %v1613 = vmax.f32 %v1058, %v1426
  %v1614 = vmax.f32 %v1059, %v1431
  %v1615 = vmax.f32 %v1060, %v1436
  %v1616 = vmax.f32 %v1061, %v1441
  %v1617 = vmax.f32 %v1062, %v1446
  %v1618 = vmax.f32 %v1063, %v1451
  %v1619 = vmax.f32 %v1064, %v1456
  %v1620 = vmax.f32 %v1065, %v1461
  %v1621 = vmax.f32 %v1066, %v1466
  %v1622 = vmax.f32 %v1067, %v1471
  %v1623 = vmax.f32 %v1068, %v1476
  %v1624 = vmax.f32 %v1069, %v1481
  %v1625 = vmax.f32 %v1070, %v1486
  %v1626 = vmax.f32 %v1071, %v1491
  %v1627 = vmax.f32 %v1072, %v1496
  %v1628 = vmax.f32 %v1073, %v1501
  %v1629 = vmax.f32 %v1074, %v1506
  %v1630 = vmax.f32 %v1075, %v1511
  %v1631 = vmax.f32 %v1076, %v1516
  %v1632 = vmax.f32 %v1077, %v1521
  %v1633 = vmax.f32 %v1078, %v1526
  %v1634 = vmax.f32 %v1079, %v1531
  %v1635 = vmax.f32 %v1080, %v1536
  %v1636 = vmax.f32 %v1081, %v1541
  %v1637 = vmax.f32 %v1082, %v1546
  %v1638 = vmax.f32 %v1083, %v1551
  %v1639 = vmax.f32 %v1084, %v1556
  %v1640 = vmax.f32 %v1085, %v1561
  %v1641 = vmax.f32 %v1086, %v1566
  %v1642 = vmax.f32 %v1087, %v1571
  %v1643 = vmax.f32 %v1088, %v1576
  %v1644 = vmax.f32 %v1089, %v1581
  %v1645 = vmax.f32 %v1090, %v1586
  %v1646 = vmax.f32 %v1091, %v1591
  %v1647 = vmax.f32 %v1092, %v1596
  %v1648 = vld [vmem:[%s3] sm:$0xff]
  %v1649 = vld [vmem:[%s3 + $0x8] sm:$0xff]
  %v1650 = vld [vmem:[%s3 + $0x10] sm:$0xff]
  %v1651 = vld [vmem:[%s3 + $0x18] sm:$0xff]
  %v1652 = vld [vmem:[%s3 + $0x20] sm:$0xff]
  %v1653 = vld [vmem:[%s3 + $0x28] sm:$0xff]
  %v1654 = vld [vmem:[%s3 + $0x30] sm:$0xff]
  %v1655 = vld [vmem:[%s3 + $0x38] sm:$0xff]
  %v1656 = vld [vmem:[%s3 + $0x40] sm:$0xff]
  %v1657 = vld [vmem:[%s3 + $0x48] sm:$0xff]
  %v1658 = vld [vmem:[%s3 + $0x50] sm:$0xff]
  %v1659 = vld [vmem:[%s3 + $0x58] sm:$0xff]
  %v1660 = vld [vmem:[%s3 + $0x60] sm:$0xff]
  %v1661 = vld [vmem:[%s3 + $0x68] sm:$0xff]
  %v1662 = vld [vmem:[%s3 + $0x70] sm:$0xff]
  %v1663 = vld [vmem:[%s3 + $0x78] sm:$0xff]
  %v1664 = vld [vmem:[%s3 + $0x80] sm:$0xff]
  %v1665 = vld [vmem:[%s3 + $0x88] sm:$0xff]
  %v1666 = vld [vmem:[%s3 + $0x90] sm:$0xff]
  %v1667 = vld [vmem:[%s3 + $0x98] sm:$0xff]
  %v1668 = vld [vmem:[%s3 + $0xa0] sm:$0xff]
  %v1669 = vld [vmem:[%s3 + $0xa8] sm:$0xff]
  %v1670 = vld [vmem:[%s3 + $0xb0] sm:$0xff]
  %v1671 = vld [vmem:[%s3 + $0xb8] sm:$0xff]
  %v1672 = vld [vmem:[%s3 + $0xc0] sm:$0xff]
  %v1673 = vld [vmem:[%s3 + $0xc8] sm:$0xff]
  %v1674 = vld [vmem:[%s3 + $0xd0] sm:$0xff]
  %v1675 = vld [vmem:[%s3 + $0xd8] sm:$0xff]
  %v1676 = vld [vmem:[%s3 + $0xe0] sm:$0xff]
  %v1677 = vld [vmem:[%s3 + $0xe8] sm:$0xff]
  %v1678 = vld [vmem:[%s3 + $0xf0] sm:$0xff]
  %v1679 = vld [vmem:[%s3 + $0xf8] sm:$0xff]
  %v1680 = vld [vmem:[%s3 + $0x100] sm:$0xff]
  %v1681 = vld [vmem:[%s3 + $0x108] sm:$0xff]
  %v1682 = vld [vmem:[%s3 + $0x110] sm:$0xff]
  %v1683 = vld [vmem:[%s3 + $0x118] sm:$0xff]
  %v1684 = vld [vmem:[%s3 + $0x120] sm:$0xff]
  %v1685 = vld [vmem:[%s3 + $0x128] sm:$0xff]
  %v1686 = vld [vmem:[%s3 + $0x130] sm:$0xff]
  %v1687 = vld [vmem:[%s3 + $0x138] sm:$0xff]
  %v1688 = vld [vmem:[%s3 + $0x140] sm:$0xff]
  %v1689 = vld [vmem:[%s3 + $0x148] sm:$0xff]
  %v1690 = vld [vmem:[%s3 + $0x150] sm:$0xff]
  %v1691 = vld [vmem:[%s3 + $0x158] sm:$0xff]
  %v1692 = vld [vmem:[%s3 + $0x160] sm:$0xff]
  %v1693 = vld [vmem:[%s3 + $0x168] sm:$0xff]
  %v1694 = vld [vmem:[%s3 + $0x170] sm:$0xff]
  %v1695 = vld [vmem:[%s3 + $0x178] sm:$0xff]
  %v1696 = vld [vmem:[%s3 + $0x180] sm:$0xff]
  %v1698 = vsel %vm76, %v1648, 0
  %v1701 = vsel %vm76, %v1649, 0
  %v1704 = vsel %vm76, %v1650, 0
  %v1707 = vsel %vm76, %v1651, 0
  %v1710 = vsel %vm76, %v1652, 0
  %v1713 = vsel %vm76, %v1653, 0
  %v1716 = vsel %vm76, %v1654, 0
  %v1719 = vsel %vm76, %v1655, 0
  %v1722 = vsel %vm76, %v1656, 0
  %v1725 = vsel %vm76, %v1657, 0
  %v1728 = vsel %vm76, %v1658, 0
  %v1731 = vsel %vm76, %v1659, 0
  %v1734 = vsel %vm76, %v1660, 0
  %v1737 = vsel %vm76, %v1661, 0
  %v1740 = vsel %vm76, %v1662, 0
  %v1743 = vsel %vm76, %v1663, 0
  %v1746 = vsel %vm76, %v1664, 0
  %v1749 = vsel %vm76, %v1665, 0
  %v1752 = vsel %vm76, %v1666, 0
  %v1755 = vsel %vm76, %v1667, 0
  %v1758 = vsel %vm76, %v1668, 0
  %v1761 = vsel %vm76, %v1669, 0
  %v1764 = vsel %vm76, %v1670, 0
  %v1767 = vsel %vm76, %v1671, 0
  %v1770 = vsel %vm76, %v1672, 0
  %v1773 = vsel %vm76, %v1673, 0
  %v1776 = vsel %vm76, %v1674, 0
  %v1779 = vsel %vm76, %v1675, 0
  %v1782 = vsel %vm76, %v1676, 0
  %v1785 = vsel %vm76, %v1677, 0
  %v1788 = vsel %vm76, %v1678, 0
  %v1791 = vsel %vm76, %v1679, 0
  %v1794 = vsel %vm76, %v1680, 0
  %v1797 = vsel %vm76, %v1681, 0
  %v1800 = vsel %vm76, %v1682, 0
  %v1803 = vsel %vm76, %v1683, 0
  %v1806 = vsel %vm76, %v1684, 0
  %v1809 = vsel %vm76, %v1685, 0
  %v1812 = vsel %vm76, %v1686, 0
  %v1815 = vsel %vm76, %v1687, 0
  %v1818 = vsel %vm76, %v1688, 0
  %v1821 = vsel %vm76, %v1689, 0
  %v1824 = vsel %vm76, %v1690, 0
  %v1827 = vsel %vm76, %v1691, 0
  %v1830 = vsel %vm76, %v1692, 0
  %v1833 = vsel %vm76, %v1693, 0
  %v1836 = vsel %vm76, %v1694, 0
  %v1839 = vsel %vm76, %v1695, 0
  %v1842 = vsel %vm76, %v1696, 0
  %1844 = vmatprep.subr.mxu0 0.0
  %1845 = vmatpush1.msra.mxu0 0.0
  %1846 = vmatprep.subr.mxu0 0.0
  %1847 = vmatpush1.msra.mxu0 0.0
  %1848 = vmatprep.subr.mxu0 0.0
  %1849 = vmatpush1.msra.mxu0 0.0
  %1850 = vmatprep.subr.mxu0 0.0
  %1851 = vmatpush1.msra.mxu0 0.0
  %1852 = vmatprep.subr.mxu0 0.0
  %1853 = vmatpush1.msra.mxu0 0.0
  %1854 = vmatprep.subr.mxu0 0.0
  %1855 = vmatpush1.msra.mxu0 0.0
  %1856 = vmatprep.subr.mxu0 0.0
  %1857 = vmatpush1.msra.mxu0 0.0
  %1858 = vmatprep.subr.mxu0 0.0
  %1859 = vmatpush1.msra.mxu0 0.0
  %1860 = vmatprep.subr.mxu0 0.0
  %1861 = vmatpush1.msra.mxu0 0.0
  %1862 = vmatprep.subr.mxu0 0.0
  %1863 = vmatpush1.msra.mxu0 0.0
  %1864 = vmatprep.subr.mxu0 0.0
  %1865 = vmatpush1.msra.mxu0 0.0
  %1866 = vmatprep.subr.mxu0 0.0
  %1867 = vmatpush1.msra.mxu0 0.0
  %1868 = vmatprep.subr.mxu0 0.0
  %1869 = vmatpush1.msra.mxu0 %v226
  %1870 = vmatprep.subr.mxu0 0.0
  %1871 = vmatpush1.msra.mxu0 %v25
  %1872 = vmatprep.subr.mxu0 0.0
  %1873 = vmatpush1.msra.mxu0 %v24
  %1874 = vmatprep.subr.mxu0 0.0
  %1875 = vmatpush1.msra.mxu0 %v23
  %1876 = vmatprep.subr.mxu0 0.0
  %1877 = vmatpush2.msra.mxu0 0.0
  %1878 = vmatprep.subr.mxu0 0.0
  %1879 = vmatpush2.msra.mxu0 0.0
  %1880 = vmatprep.subr.mxu0 0.0
  %1881 = vmatpush2.msra.mxu0 0.0
  %1882 = vmatprep.subr.mxu0 0.0
  %1883 = vmatpush2.msra.mxu0 0.0
  %1884 = vmatprep.subr.mxu0 0.0
  %1885 = vmatpush2.msra.mxu0 0.0
  %1886 = vmatprep.subr.mxu0 0.0
  %1887 = vmatpush2.msra.mxu0 0.0
  %1888 = vmatprep.subr.mxu0 0.0
  %1889 = vmatpush2.msra.mxu0 0.0
  %1890 = vmatprep.subr.mxu0 0.0
  %1891 = vmatpush2.msra.mxu0 0.0
  %1892 = vmatprep.subr.mxu0 0.0
  %1893 = vmatpush2.msra.mxu0 0.0
  %1894 = vmatprep.subr.mxu0 0.0
  %1895 = vmatpush2.msra.mxu0 0.0
  %1896 = vmatprep.subr.mxu0 0.0
  %1897 = vmatpush2.msra.mxu0 0.0
  %1898 = vmatprep.subr.mxu0 0.0
  %1899 = vmatpush2.msra.mxu0 0.0
  %1900 = vmatprep.subr.mxu0 0.0
  %1901 = vmatpush2.msra.mxu0 0.0
  %1902 = vmatprep.subr.mxu0 0.0
  %1903 = vmatpush2.msra.mxu0 0.0
  %1904 = vmatprep.subr.mxu0 0.0
  %1905 = vmatpush2.msra.mxu0 0.0
  %1906 = vmatprep.subr.mxu0 0.0
  %1907 = vmatpush2.msra.mxu0 0.0
  %1908 = vmatprep.mubr.f32.mxu0 0.0
  %1909 = vmatmul.mubr.f32.gmra.mxu0 %v1698
  %v1910 = vpop.f32.mrf.mxu0
  %v1911 = vadd.f32 0.0, %v1910
  %v1912 = vpop.f32.mrf.mxu0
  %1913 = vmatprep.mubr.f32.mxu0 0.0
  %1914 = vmatmul.mubr.f32.gmra.mxu0 %v1701
  %v1915 = vpop.f32.mrf.mxu0
  %v1916 = vadd.f32 0.0, %v1915
  %v1917 = vpop.f32.mrf.mxu0
  %1918 = vmatprep.mubr.f32.mxu0 0.0
  %1919 = vmatmul.mubr.f32.gmra.mxu0 %v1704
  %v1920 = vpop.f32.mrf.mxu0
  %v1921 = vadd.f32 0.0, %v1920
  %v1922 = vpop.f32.mrf.mxu0
  %1923 = vmatprep.mubr.f32.mxu0 0.0
  %1924 = vmatmul.mubr.f32.gmra.mxu0 %v1707
  %v1925 = vpop.f32.mrf.mxu0
  %v1926 = vadd.f32 0.0, %v1925
  %v1927 = vpop.f32.mrf.mxu0
  %1928 = vmatprep.mubr.f32.mxu0 0.0
  %1929 = vmatmul.mubr.f32.gmra.mxu0 %v1710
  %v1930 = vpop.f32.mrf.mxu0
  %v1931 = vadd.f32 0.0, %v1930
  %v1932 = vpop.f32.mrf.mxu0
  %1933 = vmatprep.mubr.f32.mxu0 0.0
  %1934 = vmatmul.mubr.f32.gmra.mxu0 %v1713
  %v1935 = vpop.f32.mrf.mxu0
  %v1936 = vadd.f32 0.0, %v1935
  %v1937 = vpop.f32.mrf.mxu0
  %1938 = vmatprep.mubr.f32.mxu0 0.0
  %1939 = vmatmul.mubr.f32.gmra.mxu0 %v1716
  %v1940 = vpop.f32.mrf.mxu0
  %v1941 = vadd.f32 0.0, %v1940
  %v1942 = vpop.f32.mrf.mxu0
  %1943 = vmatprep.mubr.f32.mxu0 0.0
  %1944 = vmatmul.mubr.f32.gmra.mxu0 %v1719
  %v1945 = vpop.f32.mrf.mxu0
  %v1946 = vadd.f32 0.0, %v1945
  %v1947 = vpop.f32.mrf.mxu0
  %1948 = vmatprep.mubr.f32.mxu0 0.0
  %1949 = vmatmul.mubr.f32.gmra.mxu0 %v1722
  %v1950 = vpop.f32.mrf.mxu0
  %v1951 = vadd.f32 0.0, %v1950
  %v1952 = vpop.f32.mrf.mxu0
  %1953 = vmatprep.mubr.f32.mxu0 0.0
  %1954 = vmatmul.mubr.f32.gmra.mxu0 %v1725
  %v1955 = vpop.f32.mrf.mxu0
  %v1956 = vadd.f32 0.0, %v1955
  %v1957 = vpop.f32.mrf.mxu0
  %1958 = vmatprep.mubr.f32.mxu0 0.0
  %1959 = vmatmul.mubr.f32.gmra.mxu0 %v1728
  %v1960 = vpop.f32.mrf.mxu0
  %v1961 = vadd.f32 0.0, %v1960
  %v1962 = vpop.f32.mrf.mxu0
  %1963 = vmatprep.mubr.f32.mxu0 0.0
  %1964 = vmatmul.mubr.f32.gmra.mxu0 %v1731
  %v1965 = vpop.f32.mrf.mxu0
  %v1966 = vadd.f32 0.0, %v1965
  %v1967 = vpop.f32.mrf.mxu0
  %1968 = vmatprep.mubr.f32.mxu0 0.0
  %1969 = vmatmul.mubr.f32.gmra.mxu0 %v1734
  %v1970 = vpop.f32.mrf.mxu0
  %v1971 = vadd.f32 0.0, %v1970
  %v1972 = vpop.f32.mrf.mxu0
  %1973 = vmatprep.mubr.f32.mxu0 0.0
  %1974 = vmatmul.mubr.f32.gmra.mxu0 %v1737
  %v1975 = vpop.f32.mrf.mxu0
  %v1976 = vadd.f32 0.0, %v1975
  %v1977 = vpop.f32.mrf.mxu0
  %1978 = vmatprep.mubr.f32.mxu0 0.0
  %1979 = vmatmul.mubr.f32.gmra.mxu0 %v1740
  %v1980 = vpop.f32.mrf.mxu0
  %v1981 = vadd.f32 0.0, %v1980
  %v1982 = vpop.f32.mrf.mxu0
  %1983 = vmatprep.mubr.f32.mxu0 0.0
  %1984 = vmatmul.mubr.f32.gmra.mxu0 %v1743
  %v1985 = vpop.f32.mrf.mxu0
  %v1986 = vadd.f32 0.0, %v1985
  %v1987 = vpop.f32.mrf.mxu0
  %1988 = vmatprep.mubr.f32.mxu0 0.0
  %1989 = vmatmul.mubr.f32.gmra.mxu0 %v1746
  %v1990 = vpop.f32.mrf.mxu0
  %v1991 = vadd.f32 0.0, %v1990
  %v1992 = vpop.f32.mrf.mxu0
  %1993 = vmatprep.mubr.f32.mxu0 0.0
  %1994 = vmatmul.mubr.f32.gmra.mxu0 %v1749
  %v1995 = vpop.f32.mrf.mxu0
  %v1996 = vadd.f32 0.0, %v1995
  %v1997 = vpop.f32.mrf.mxu0
  %1998 = vmatprep.mubr.f32.mxu0 0.0
  %1999 = vmatmul.mubr.f32.gmra.mxu0 %v1752
  %v2000 = vpop.f32.mrf.mxu0
  %v2001 = vadd.f32 0.0, %v2000
  %v2002 = vpop.f32.mrf.mxu0
  %2003 = vmatprep.mubr.f32.mxu0 0.0
  %2004 = vmatmul.mubr.f32.gmra.mxu0 %v1755
  %v2005 = vpop.f32.mrf.mxu0
  %v2006 = vadd.f32 0.0, %v2005
  %v2007 = vpop.f32.mrf.mxu0
  %2008 = vmatprep.mubr.f32.mxu0 0.0
  %2009 = vmatmul.mubr.f32.gmra.mxu0 %v1758
  %v2010 = vpop.f32.mrf.mxu0
  %v2011 = vadd.f32 0.0, %v2010
  %v2012 = vpop.f32.mrf.mxu0
  %2013 = vmatprep.mubr.f32.mxu0 0.0
  %2014 = vmatmul.mubr.f32.gmra.mxu0 %v1761
  %v2015 = vpop.f32.mrf.mxu0
  %v2016 = vadd.f32 0.0, %v2015
  %v2017 = vpop.f32.mrf.mxu0
  %2018 = vmatprep.mubr.f32.mxu0 0.0
  %2019 = vmatmul.mubr.f32.gmra.mxu0 %v1764
  %v2020 = vpop.f32.mrf.mxu0
  %v2021 = vadd.f32 0.0, %v2020
  %v2022 = vpop.f32.mrf.mxu0
  %2023 = vmatprep.mubr.f32.mxu0 0.0
  %2024 = vmatmul.mubr.f32.gmra.mxu0 %v1767
  %v2025 = vpop.f32.mrf.mxu0
  %v2026 = vadd.f32 0.0, %v2025
  %v2027 = vpop.f32.mrf.mxu0
  %2028 = vmatprep.mubr.f32.mxu0 0.0
  %2029 = vmatmul.mubr.f32.gmra.mxu0 %v1770
  %v2030 = vpop.f32.mrf.mxu0
  %v2031 = vadd.f32 0.0, %v2030
  %v2032 = vpop.f32.mrf.mxu0
  %2033 = vmatprep.mubr.f32.mxu0 0.0
  %2034 = vmatmul.mubr.f32.gmra.mxu0 %v1773
  %v2035 = vpop.f32.mrf.mxu0
  %v2036 = vadd.f32 0.0, %v2035
  %v2037 = vpop.f32.mrf.mxu0
  %2038 = vmatprep.mubr.f32.mxu0 0.0
  %2039 = vmatmul.mubr.f32.gmra.mxu0 %v1776
  %v2040 = vpop.f32.mrf.mxu0
  %v2041 = vadd.f32 0.0, %v2040
  %v2042 = vpop.f32.mrf.mxu0
  %2043 = vmatprep.mubr.f32.mxu0 0.0
  %2044 = vmatmul.mubr.f32.gmra.mxu0 %v1779
  %v2045 = vpop.f32.mrf.mxu0
  %v2046 = vadd.f32 0.0, %v2045
  %v2047 = vpop.f32.mrf.mxu0
  %2048 = vmatprep.mubr.f32.mxu0 0.0
  %2049 = vmatmul.mubr.f32.gmra.mxu0 %v1782
  %v2050 = vpop.f32.mrf.mxu0
  %v2051 = vadd.f32 0.0, %v2050
  %v2052 = vpop.f32.mrf.mxu0
  %2053 = vmatprep.mubr.f32.mxu0 0.0
  %2054 = vmatmul.mubr.f32.gmra.mxu0 %v1785
  %v2055 = vpop.f32.mrf.mxu0
  %v2056 = vadd.f32 0.0, %v2055
  %v2057 = vpop.f32.mrf.mxu0
  %2058 = vmatprep.mubr.f32.mxu0 0.0
  %2059 = vmatmul.mubr.f32.gmra.mxu0 %v1788
  %v2060 = vpop.f32.mrf.mxu0
  %v2061 = vadd.f32 0.0, %v2060
  %v2062 = vpop.f32.mrf.mxu0
  %2063 = vmatprep.mubr.f32.mxu0 0.0
  %2064 = vmatmul.mubr.f32.gmra.mxu0 %v1791
  %v2065 = vpop.f32.mrf.mxu0
  %v2066 = vadd.f32 0.0, %v2065
  %v2067 = vpop.f32.mrf.mxu0
  %2068 = vmatprep.mubr.f32.mxu0 0.0
  %2069 = vmatmul.mubr.f32.gmra.mxu0 %v1794
  %v2070 = vpop.f32.mrf.mxu0
  %v2071 = vadd.f32 0.0, %v2070
  %v2072 = vpop.f32.mrf.mxu0
  %2073 = vmatprep.mubr.f32.mxu0 0.0
  %2074 = vmatmul.mubr.f32.gmra.mxu0 %v1797
  %v2075 = vpop.f32.mrf.mxu0
  %v2076 = vadd.f32 0.0, %v2075
  %v2077 = vpop.f32.mrf.mxu0
  %2078 = vmatprep.mubr.f32.mxu0 0.0
  %2079 = vmatmul.mubr.f32.gmra.mxu0 %v1800
  %v2080 = vpop.f32.mrf.mxu0
  %v2081 = vadd.f32 0.0, %v2080
  %v2082 = vpop.f32.mrf.mxu0
  %2083 = vmatprep.mubr.f32.mxu0 0.0
  %2084 = vmatmul.mubr.f32.gmra.mxu0 %v1803
  %v2085 = vpop.f32.mrf.mxu0
  %v2086 = vadd.f32 0.0, %v2085
  %v2087 = vpop.f32.mrf.mxu0
  %2088 = vmatprep.mubr.f32.mxu0 0.0
  %2089 = vmatmul.mubr.f32.gmra.mxu0 %v1806
  %v2090 = vpop.f32.mrf.mxu0
  %v2091 = vadd.f32 0.0, %v2090
  %v2092 = vpop.f32.mrf.mxu0
  %2093 = vmatprep.mubr.f32.mxu0 0.0
  %2094 = vmatmul.mubr.f32.gmra.mxu0 %v1809
  %v2095 = vpop.f32.mrf.mxu0
  %v2096 = vadd.f32 0.0, %v2095
  %v2097 = vpop.f32.mrf.mxu0
  %2098 = vmatprep.mubr.f32.mxu0 0.0
  %2099 = vmatmul.mubr.f32.gmra.mxu0 %v1812
  %v2100 = vpop.f32.mrf.mxu0
  %v2101 = vadd.f32 0.0, %v2100
  %v2102 = vpop.f32.mrf.mxu0
  %2103 = vmatprep.mubr.f32.mxu0 0.0
  %2104 = vmatmul.mubr.f32.gmra.mxu0 %v1815
  %v2105 = vpop.f32.mrf.mxu0
  %v2106 = vadd.f32 0.0, %v2105
  %v2107 = vpop.f32.mrf.mxu0
  %2108 = vmatprep.mubr.f32.mxu0 0.0
  %2109 = vmatmul.mubr.f32.gmra.mxu0 %v1818
  %v2110 = vpop.f32.mrf.mxu0
  %v2111 = vadd.f32 0.0, %v2110
  %v2112 = vpop.f32.mrf.mxu0
  %2113 = vmatprep.mubr.f32.mxu0 0.0
  %2114 = vmatmul.mubr.f32.gmra.mxu0 %v1821
  %v2115 = vpop.f32.mrf.mxu0
  %v2116 = vadd.f32 0.0, %v2115
  %v2117 = vpop.f32.mrf.mxu0
  %2118 = vmatprep.mubr.f32.mxu0 0.0
  %2119 = vmatmul.mubr.f32.gmra.mxu0 %v1824
  %v2120 = vpop.f32.mrf.mxu0
  %v2121 = vadd.f32 0.0, %v2120
  %v2122 = vpop.f32.mrf.mxu0
  %2123 = vmatprep.mubr.f32.mxu0 0.0
  %2124 = vmatmul.mubr.f32.gmra.mxu0 %v1827
  %v2125 = vpop.f32.mrf.mxu0
  %v2126 = vadd.f32 0.0, %v2125
  %v2127 = vpop.f32.mrf.mxu0
  %2128 = vmatprep.mubr.f32.mxu0 0.0
  %2129 = vmatmul.mubr.f32.gmra.mxu0 %v1830
  %v2130 = vpop.f32.mrf.mxu0
  %v2131 = vadd.f32 0.0, %v2130
  %v2132 = vpop.f32.mrf.mxu0
  %2133 = vmatprep.mubr.f32.mxu0 0.0
  %2134 = vmatmul.mubr.f32.gmra.mxu0 %v1833
  %v2135 = vpop.f32.mrf.mxu0
  %v2136 = vadd.f32 0.0, %v2135
  %v2137 = vpop.f32.mrf.mxu0
  %2138 = vmatprep.mubr.f32.mxu0 0.0
  %2139 = vmatmul.mubr.f32.gmra.mxu0 %v1836
  %v2140 = vpop.f32.mrf.mxu0
  %v2141 = vadd.f32 0.0, %v2140
  %v2142 = vpop.f32.mrf.mxu0
  %2143 = vmatprep.mubr.f32.mxu0 0.0
  %2144 = vmatmul.mubr.f32.gmra.mxu0 %v1839
  %v2145 = vpop.f32.mrf.mxu0
  %v2146 = vadd.f32 0.0, %v2145
  %v2147 = vpop.f32.mrf.mxu0
  %2148 = vmatprep.mubr.f32.mxu0 0.0
  %2149 = vmatmul.mubr.f32.gmra.mxu0 %v1842
  %v2150 = vpop.f32.mrf.mxu0
  %v2151 = vadd.f32 0.0, %v2150
  %v2152 = vpop.f32.mrf.mxu0
  %2153 = vdwg.mxu0
  %v2154 = vmax.f32 %v1599, %v1911
  %v2155 = vmax.f32 %v1600, %v1916
  %v2156 = vmax.f32 %v1601, %v1921
  %v2157 = vmax.f32 %v1602, %v1926
  %v2158 = vmax.f32 %v1603, %v1931
  %v2159 = vmax.f32 %v1604, %v1936
  %v2160 = vmax.f32 %v1605, %v1941
  %v2161 = vmax.f32 %v1606, %v1946
  %v2162 = vmax.f32 %v1607, %v1951
  %v2163 = vmax.f32 %v1608, %v1956
  %v2164 = vmax.f32 %v1609, %v1961
  %v2165 = vmax.f32 %v1610, %v1966
  %v2166 = vmax.f32 %v1611, %v1971
  %v2167 = vmax.f32 %v1612, %v1976
  %v2168 = vmax.f32 %v1613, %v1981
  %v2169 = vmax.f32 %v1614, %v1986
  %v2170 = vmax.f32 %v1615, %v1991
  %v2171 = vmax.f32 %v1616, %v1996
  %v2172 = vmax.f32 %v1617, %v2001
  %v2173 = vmax.f32 %v1618, %v2006
  %v2174 = vmax.f32 %v1619, %v2011
  %v2175 = vmax.f32 %v1620, %v2016
  %v2176 = vmax.f32 %v1621, %v2021
  %v2177 = vmax.f32 %v1622, %v2026
  %v2178 = vmax.f32 %v1623, %v2031
  %v2179 = vmax.f32 %v1624, %v2036
  %v2180 = vmax.f32 %v1625, %v2041
  %v2181 = vmax.f32 %v1626, %v2046
  %v2182 = vmax.f32 %v1627, %v2051
  %v2183 = vmax.f32 %v1628, %v2056
  %v2184 = vmax.f32 %v1629, %v2061
  %v2185 = vmax.f32 %v1630, %v2066
  %v2186 = vmax.f32 %v1631, %v2071
  %v2187 = vmax.f32 %v1632, %v2076
  %v2188 = vmax.f32 %v1633, %v2081
  %v2189 = vmax.f32 %v1634, %v2086
  %v2190 = vmax.f32 %v1635, %v2091
  %v2191 = vmax.f32 %v1636, %v2096
  %v2192 = vmax.f32 %v1637, %v2101
  %v2193 = vmax.f32 %v1638, %v2106
  %v2194 = vmax.f32 %v1639, %v2111
  %v2195 = vmax.f32 %v1640, %v2116
  %v2196 = vmax.f32 %v1641, %v2121
  %v2197 = vmax.f32 %v1642, %v2126
  %v2198 = vmax.f32 %v1643, %v2131
  %v2199 = vmax.f32 %v1644, %v2136
  %v2200 = vmax.f32 %v1645, %v2141
  %v2201 = vmax.f32 %v1646, %v2146
  %v2202 = vmax.f32 %v1647, %v2151
  %v2203 = vld [vmem:[%s5] sm:$0x1]
  %v2205 = vlaneseq
  %v2206 = vshrl.u32 %v2205, 7
  %v2207 = vsub.s32 0, %v2206
  %v2208 = vrot.slane %v2203, %v2207
  %v2210 = vadd.f32 %v2154, %v2208
  %v2211 = vadd.f32 %v2155, %v2208
  %v2212 = vadd.f32 %v2156, %v2208
  %v2213 = vadd.f32 %v2157, %v2208
  %v2214 = vadd.f32 %v2158, %v2208
  %v2215 = vadd.f32 %v2159, %v2208
  %v2216 = vadd.f32 %v2160, %v2208
  %v2217 = vadd.f32 %v2161, %v2208
  %v2218 = vadd.f32 %v2162, %v2208
  %v2219 = vadd.f32 %v2163, %v2208
  %v2220 = vadd.f32 %v2164, %v2208
  %v2221 = vadd.f32 %v2165, %v2208
  %v2222 = vadd.f32 %v2166, %v2208
  %v2223 = vadd.f32 %v2167, %v2208
  %v2224 = vadd.f32 %v2168, %v2208
  %v2225 = vadd.f32 %v2169, %v2208
  %v2226 = vadd.f32 %v2170, %v2208
  %v2227 = vadd.f32 %v2171, %v2208
  %v2228 = vadd.f32 %v2172, %v2208
  %v2229 = vadd.f32 %v2173, %v2208
  %v2230 = vadd.f32 %v2174, %v2208
  %v2231 = vadd.f32 %v2175, %v2208
  %v2232 = vadd.f32 %v2176, %v2208
  %v2233 = vadd.f32 %v2177, %v2208
  %v2234 = vadd.f32 %v2178, %v2208
  %v2235 = vadd.f32 %v2179, %v2208
  %v2236 = vadd.f32 %v2180, %v2208
  %v2237 = vadd.f32 %v2181, %v2208
  %v2238 = vadd.f32 %v2182, %v2208
  %v2239 = vadd.f32 %v2183, %v2208
  %v2240 = vadd.f32 %v2184, %v2208
  %v2241 = vadd.f32 %v2185, %v2208
  %v2242 = vadd.f32 %v2186, %v2208
  %v2243 = vadd.f32 %v2187, %v2208
  %v2244 = vadd.f32 %v2188, %v2208
  %v2245 = vadd.f32 %v2189, %v2208
  %v2246 = vadd.f32 %v2190, %v2208
  %v2247 = vadd.f32 %v2191, %v2208
  %v2248 = vadd.f32 %v2192, %v2208
  %v2249 = vadd.f32 %v2193, %v2208
  %v2250 = vadd.f32 %v2194, %v2208
  %v2251 = vadd.f32 %v2195, %v2208
  %v2252 = vadd.f32 %v2196, %v2208
  %v2253 = vadd.f32 %v2197, %v2208
  %v2254 = vadd.f32 %v2198, %v2208
  %v2255 = vadd.f32 %v2199, %v2208
  %v2256 = vadd.f32 %v2200, %v2208
  %v2257 = vadd.f32 %v2201, %v2208
  %v2258 = vadd.f32 %v2202, %v2208
  %v2259 = vmax.f32 %v2210, 0.0
  %v2260 = vmax.f32 %v2211, 0.0
  %v2261 = vmax.f32 %v2212, 0.0
  %v2262 = vmax.f32 %v2213, 0.0
  %v2263 = vmax.f32 %v2214, 0.0
  %v2264 = vmax.f32 %v2215, 0.0
  %v2265 = vmax.f32 %v2216, 0.0
  %v2266 = vmax.f32 %v2217, 0.0
  %v2267 = vmax.f32 %v2218, 0.0
  %v2268 = vmax.f32 %v2219, 0.0
  %v2269 = vmax.f32 %v2220, 0.0
  %v2270 = vmax.f32 %v2221, 0.0
  %v2271 = vmax.f32 %v2222, 0.0
  %v2272 = vmax.f32 %v2223, 0.0
  %v2273 = vmax.f32 %v2224, 0.0
  %v2274 = vmax.f32 %v2225, 0.0
  %v2275 = vmax.f32 %v2226, 0.0
  %v2276 = vmax.f32 %v2227, 0.0
  %v2277 = vmax.f32 %v2228, 0.0
  %v2278 = vmax.f32 %v2229, 0.0
  %v2279 = vmax.f32 %v2230, 0.0
  %v2280 = vmax.f32 %v2231, 0.0
  %v2281 = vmax.f32 %v2232, 0.0
  %v2282 = vmax.f32 %v2233, 0.0
  %v2283 = vmax.f32 %v2234, 0.0
  %v2284 = vmax.f32 %v2235, 0.0
  %v2285 = vmax.f32 %v2236, 0.0
  %v2286 = vmax.f32 %v2237, 0.0
  %v2287 = vmax.f32 %v2238, 0.0
  %v2288 = vmax.f32 %v2239, 0.0
  %v2289 = vmax.f32 %v2240, 0.0
  %v2290 = vmax.f32 %v2241, 0.0
  %v2291 = vmax.f32 %v2242, 0.0
  %v2292 = vmax.f32 %v2243, 0.0
  %v2293 = vmax.f32 %v2244, 0.0
  %v2294 = vmax.f32 %v2245, 0.0
  %v2295 = vmax.f32 %v2246, 0.0
  %v2296 = vmax.f32 %v2247, 0.0
  %v2297 = vmax.f32 %v2248, 0.0
  %v2298 = vmax.f32 %v2249, 0.0
  %v2299 = vmax.f32 %v2250, 0.0
  %v2300 = vmax.f32 %v2251, 0.0
  %v2301 = vmax.f32 %v2252, 0.0
  %v2302 = vmax.f32 %v2253, 0.0
  %v2303 = vmax.f32 %v2254, 0.0
  %v2304 = vmax.f32 %v2255, 0.0
  %v2305 = vmax.f32 %v2256, 0.0
  %v2306 = vmax.f32 %v2257, 0.0
  %v2307 = vmax.f32 %v2258, 0.0
  %2308 = vst [vmem:[%s6] sm:$0xff] %v2259
  %2309 = vst [vmem:[%s6 + $0x8] sm:$0xff] %v2260
  %2310 = vst [vmem:[%s6 + $0x10] sm:$0xff] %v2261
  %2311 = vst [vmem:[%s6 + $0x18] sm:$0xff] %v2262
  %2312 = vst [vmem:[%s6 + $0x20] sm:$0xff] %v2263
  %2313 = vst [vmem:[%s6 + $0x28] sm:$0xff] %v2264
  %2314 = vst [vmem:[%s6 + $0x30] sm:$0xff] %v2265
  %2315 = vst [vmem:[%s6 + $0x38] sm:$0xff] %v2266
  %2316 = vst [vmem:[%s6 + $0x40] sm:$0xff] %v2267
  %2317 = vst [vmem:[%s6 + $0x48] sm:$0xff] %v2268
  %2318 = vst [vmem:[%s6 + $0x50] sm:$0xff] %v2269
  %2319 = vst [vmem:[%s6 + $0x58] sm:$0xff] %v2270
  %2320 = vst [vmem:[%s6 + $0x60] sm:$0xff] %v2271
  %2321 = vst [vmem:[%s6 + $0x68] sm:$0xff] %v2272
  %2322 = vst [vmem:[%s6 + $0x70] sm:$0xff] %v2273
  %2323 = vst [vmem:[%s6 + $0x78] sm:$0xff] %v2274
  %2324 = vst [vmem:[%s6 + $0x80] sm:$0xff] %v2275
  %2325 = vst [vmem:[%s6 + $0x88] sm:$0xff] %v2276
  %2326 = vst [vmem:[%s6 + $0x90] sm:$0xff] %v2277
  %2327 = vst [vmem:[%s6 + $0x98] sm:$0xff] %v2278
  %2328 = vst [vmem:[%s6 + $0xa0] sm:$0xff] %v2279
  %2329 = vst [vmem:[%s6 + $0xa8] sm:$0xff] %v2280
  %2330 = vst [vmem:[%s6 + $0xb0] sm:$0xff] %v2281
  %2331 = vst [vmem:[%s6 + $0xb8] sm:$0xff] %v2282
  %2332 = vst [vmem:[%s6 + $0xc0] sm:$0xff] %v2283
  %2333 = vst [vmem:[%s6 + $0xc8] sm:$0xff] %v2284
  %2334 = vst [vmem:[%s6 + $0xd0] sm:$0xff] %v2285
  %2335 = vst [vmem:[%s6 + $0xd8] sm:$0xff] %v2286
  %2336 = vst [vmem:[%s6 + $0xe0] sm:$0xff] %v2287
  %2337 = vst [vmem:[%s6 + $0xe8] sm:$0xff] %v2288
  %2338 = vst [vmem:[%s6 + $0xf0] sm:$0xff] %v2289
  %2339 = vst [vmem:[%s6 + $0xf8] sm:$0xff] %v2290
  %2340 = vst [vmem:[%s6 + $0x100] sm:$0xff] %v2291
  %2341 = vst [vmem:[%s6 + $0x108] sm:$0xff] %v2292
  %2342 = vst [vmem:[%s6 + $0x110] sm:$0xff] %v2293
  %2343 = vst [vmem:[%s6 + $0x118] sm:$0xff] %v2294
  %2344 = vst [vmem:[%s6 + $0x120] sm:$0xff] %v2295
  %2345 = vst [vmem:[%s6 + $0x128] sm:$0xff] %v2296
  %2346 = vst [vmem:[%s6 + $0x130] sm:$0xff] %v2297
  %2347 = vst [vmem:[%s6 + $0x138] sm:$0xff] %v2298
  %2348 = vst [vmem:[%s6 + $0x140] sm:$0xff] %v2299
  %2349 = vst [vmem:[%s6 + $0x148] sm:$0xff] %v2300
  %2350 = vst [vmem:[%s6 + $0x150] sm:$0xff] %v2301
  %2351 = vst [vmem:[%s6 + $0x158] sm:$0xff] %v2302
  %2352 = vst [vmem:[%s6 + $0x160] sm:$0xff] %v2303
  %2353 = vst [vmem:[%s6 + $0x168] sm:$0xff] %v2304
  %2354 = vst [vmem:[%s6 + $0x170] sm:$0xff] %v2305
  %2355 = vst [vmem:[%s6 + $0x178] sm:$0xff] %v2306
  %2356 = vst [vmem:[%s6 + $0x180] sm:$0xff] %v2307
  // Predicated region
  $region26: #{lenet_forward.2} parent=0 // pred_check
    _
  $region27: #{lenet_forward.2} parent=0 // pred_check_branch
    %2358 = sbr.rel (0) target = $region29
  $region28: #{lenet_forward.2} parent=0 // pred_region
    _
  $region29: #{lenet_forward.2} parent=0 // pred_fallthru
    _
  // Predicated region
  $region30: #{lenet_forward.2} parent=0 // pred_check
    _
  $region31: #{lenet_forward.2} parent=0 // pred_check_branch
    %2360 = sbr.rel (0) target = $region33
  $region32: #{lenet_forward.2} parent=0 // pred_region
    _
  $region33: #{lenet_forward.2} parent=0 // pred_fallthru
    _

// kernel: lenet_forward.3
$region0: #{lenet_forward.3}
  #allocation0 [shape = 'u32[]', space=smem, size = 0x4, offset = 0x4, fixed_abs, tag = 'smem constant byte address 0x4 - core index']
  #allocation1 [shape = 'u32[144,128]{1,0:T(1,128)}', space=vmem, size = 0x12000, scoped, tag = 'internal scratch']
  #allocation2 [shape = 'f32[200,128]{1,0:T(8,128)}', space=vmem, size = 0x19000, scoped, tag = 'scratch operand']
  %s0 = inlined_call_operand.vmem [shape: f32[200,150], index: 0, kind: input, shape index: {}]
  %s1 = inlined_call_operand.vmem [shape: f32[200,150], index: 1, kind: input, shape index: {}]
  %s2 = inlined_call_operand.vmem [shape: f32[200,150], index: 2, kind: input, shape index: {}]
  %s3 = inlined_call_operand.vmem [shape: f32[200,150], index: 3, kind: input, shape index: {}]
  %s4 = inlined_call_operand.vmem [shape: f32[150,128], index: 4, kind: input, shape index: {}]
  %s5 = inlined_call_operand.vmem [shape: f32[1,128], index: 5, kind: input, shape index: {}]
  %s6 = inlined_call_operand.vmem [shape: f32[25,128,128], index: 6, kind: input, shape index: {}]
  %s7 = inlined_call_operand.vmem [shape: f32[1,128], index: 7, kind: input, shape index: {}]
  %s8 = inlined_call_operand.vmem [shape: f32[128,128], index: 8, kind: input, shape index: {}]
  %s9 = inlined_call_operand.vmem [shape: f32[1,128], index: 9, kind: input, shape index: {}]
  %s10 = inlined_call_operand.vmem [shape: f32[128,128], index: 10, kind: input, shape index: {}]
  %s11 = inlined_call_operand.vmem [shape: f32[1,128], index: 11, kind: input, shape index: {}]
  %s12 = inlined_call_operand.vmem [shape: f32[8,128], index: 12, kind: output, shape index: {}]
  %s13 = sld [smem:[#allocation0]]
  $region58: #{lenet_forward.3} parent=0
    _
  %s15 = ssub.s32 1, %s13
  %s16 = scalar_select 0, %s15, %s13
  // Predicated region
  $region2: #{lenet_forward.3} parent=0 // pred_check
    _
  $region3: #{lenet_forward.3} parent=0 // pred_check_branch
    %18 = sbr.rel (0) target = $region5
  $region4: #{lenet_forward.3} parent=0 // pred_region
    _
  $region5: #{lenet_forward.3} parent=0 // pred_fallthru
    _
  // Predicated region
  $region6: #{lenet_forward.3} parent=0 // pred_check
    _
  $region7: #{lenet_forward.3} parent=0 // pred_check_branch
    %20 = sbr.rel (0) target = $region9
  $region8: #{lenet_forward.3} parent=0 // pred_region
    _
  $region9: #{lenet_forward.3} parent=0 // pred_fallthru
    _
  // Predicated region
  $region10: #{lenet_forward.3} parent=0 // pred_check
    _
  $region11: #{lenet_forward.3} parent=0 // pred_check_branch
    %22 = sbr.rel (0) target = $region13
  $region12: #{lenet_forward.3} parent=0 // pred_region
    _
  $region13: #{lenet_forward.3} parent=0 // pred_fallthru
    _
  // Predicated region
  $region14: #{lenet_forward.3} parent=0 // pred_check
    _
  $region15: #{lenet_forward.3} parent=0 // pred_check_branch
    %24 = sbr.rel (0) target = $region17
  $region16: #{lenet_forward.3} parent=0 // pred_region
    _
  $region17: #{lenet_forward.3} parent=0 // pred_fallthru
    _
  // Predicated region
  $region18: #{lenet_forward.3} parent=0 // pred_check
    _
  $region19: #{lenet_forward.3} parent=0 // pred_check_branch
    %26 = sbr.rel (0) target = $region21
  $region20: #{lenet_forward.3} parent=0 // pred_region
    _
  $region21: #{lenet_forward.3} parent=0 // pred_fallthru
    _
  // Predicated region
  $region22: #{lenet_forward.3} parent=0 // pred_check
    _
  $region23: #{lenet_forward.3} parent=0 // pred_check_branch
    %28 = sbr.rel (0) target = $region25
  $region24: #{lenet_forward.3} parent=0 // pred_region
    _
  $region25: #{lenet_forward.3} parent=0 // pred_fallthru
    _
  // Predicated region
  $region26: #{lenet_forward.3} parent=0 // pred_check
    _
  $region27: #{lenet_forward.3} parent=0 // pred_check_branch
    %30 = sbr.rel (0) target = $region29
  $region28: #{lenet_forward.3} parent=0 // pred_region
    _
  $region29: #{lenet_forward.3} parent=0 // pred_fallthru
    _
  // Predicated region
  $region30: #{lenet_forward.3} parent=0 // pred_check
    _
  $region31: #{lenet_forward.3} parent=0 // pred_check_branch
    %32 = sbr.rel (0) target = $region33
  $region32: #{lenet_forward.3} parent=0 // pred_region
    _
  $region33: #{lenet_forward.3} parent=0 // pred_fallthru
    _
  // Predicated region
  $region34: #{lenet_forward.3} parent=0 // pred_check
    _
  $region35: #{lenet_forward.3} parent=0 // pred_check_branch
    %34 = sbr.rel (0) target = $region37
  $region36: #{lenet_forward.3} parent=0 // pred_region
    _
  $region37: #{lenet_forward.3} parent=0 // pred_fallthru
    _
  // Predicated region
  $region38: #{lenet_forward.3} parent=0 // pred_check
    _
  $region39: #{lenet_forward.3} parent=0 // pred_check_branch
    %36 = sbr.rel (0) target = $region41
  $region40: #{lenet_forward.3} parent=0 // pred_region
    _
  $region41: #{lenet_forward.3} parent=0 // pred_fallthru
    _
  // Predicated region
  $region42: #{lenet_forward.3} parent=0 // pred_check
    _
  $region43: #{lenet_forward.3} parent=0 // pred_check_branch
    %38 = sbr.rel (0) target = $region45
  $region44: #{lenet_forward.3} parent=0 // pred_region
    _
  $region45: #{lenet_forward.3} parent=0 // pred_fallthru
    _
  // Predicated region
  $region46: #{lenet_forward.3} parent=0 // pred_check
    _
  $region47: #{lenet_forward.3} parent=0 // pred_check_branch
    %40 = sbr.rel (0) target = $region49
  $region48: #{lenet_forward.3} parent=0 // pred_region
    _
  $region49: #{lenet_forward.3} parent=0 // pred_fallthru
    _
  %v41 = vld [vmem:[%s4] sm:$0xff]
  %v42 = vld [vmem:[%s4 + $0x8] sm:$0xff]
  %v43 = vld [vmem:[%s4 + $0x10] sm:$0xff]
  %v44 = vld [vmem:[%s4 + $0x18] sm:$0xff]
  %v45 = vld [vmem:[%s4 + $0x20] sm:$0xff]
  %v46 = vld [vmem:[%s4 + $0x28] sm:$0xff]
  %v47 = vld [vmem:[%s4 + $0x30] sm:$0xff]
  %v48 = vld [vmem:[%s4 + $0x38] sm:$0xff]
  %v49 = vld [vmem:[%s4 + $0x40] sm:$0xff]
  %v50 = vld [vmem:[%s4 + $0x48] sm:$0xff]
  %v51 = vld [vmem:[%s4 + $0x50] sm:$0xff]
  %v52 = vld [vmem:[%s4 + $0x58] sm:$0xff]
  %v53 = vld [vmem:[%s4 + $0x60] sm:$0xff]
  %v54 = vld [vmem:[%s4 + $0x68] sm:$0xff]
  %v55 = vld [vmem:[%s4 + $0x70] sm:$0xff]
  %v56 = vld [vmem:[%s4 + $0x78] sm:$0xff]
  %v57 = vld [vmem:[%s4 + $0x80] sm:$0xff]
  %v58 = vld [vmem:[%s4 + $0x88] sm:$0xff]
  %v59 = vld [vmem:[%s4 + $0x90] sm:$0x3f]
  %v60 = vld [vmem:[%s0] sm:$0xff]
  %v61 = vld [vmem:[%s0 + $0x8] sm:$0xff]
  %v62 = vld [vmem:[%s0 + $0x10] sm:$0xff]
  %v63 = vld [vmem:[%s0 + $0x18] sm:$0xff]
  %v64 = vld [vmem:[%s0 + $0x20] sm:$0xff]
  %v65 = vld [vmem:[%s0 + $0x28] sm:$0xff]
  %v66 = vld [vmem:[%s0 + $0x30] sm:$0xff]
  %v67 = vld [vmem:[%s0 + $0x38] sm:$0xff]
  %v68 = vld [vmem:[%s0 + $0x40] sm:$0xff]
  %v69 = vld [vmem:[%s0 + $0x48] sm:$0xff]
  %v70 = vld [vmem:[%s0 + $0x50] sm:$0xff]
  %v71 = vld [vmem:[%s0 + $0x58] sm:$0xff]
  %v72 = vld [vmem:[%s0 + $0x60] sm:$0xff]
  %v73 = vld [vmem:[%s0 + $0x68] sm:$0xff]
  %v74 = vld [vmem:[%s0 + $0x70] sm:$0xff]
  %v75 = vld [vmem:[%s0 + $0x78] sm:$0xff]
  %v76 = vld [vmem:[%s0 + $0x80] sm:$0xff]
  %v77 = vld [vmem:[%s0 + $0x88] sm:$0xff]
  %v78 = vld [vmem:[%s0 + $0x90] sm:$0xff]
  %v79 = vld [vmem:[%s0 + $0x98] sm:$0xff]
  %v80 = vld [vmem:[%s0 + $0xa0] sm:$0xff]
  %v81 = vld [vmem:[%s0 + $0xa8] sm:$0xff]
  %v82 = vld [vmem:[%s0 + $0xb0] sm:$0xff]
  %v83 = vld [vmem:[%s0 + $0xb8] sm:$0xff]
  %v84 = vld [vmem:[%s0 + $0xc0] sm:$0xff]
  %v85 = vld [vmem:[%s0 + $0xc8] sm:$0xff]
  %v86 = vld [vmem:[%s0 + $0xd0] sm:$0xff]
  %v87 = vld [vmem:[%s0 + $0xd8] sm:$0xff]
  %v88 = vld [vmem:[%s0 + $0xe0] sm:$0xff]
  %v89 = vld [vmem:[%s0 + $0xe8] sm:$0xff]
  %v90 = vld [vmem:[%s0 + $0xf0] sm:$0xff]
  %v91 = vld [vmem:[%s0 + $0xf8] sm:$0xff]
  %v92 = vld [vmem:[%s0 + $0x100] sm:$0xff]
  %v93 = vld [vmem:[%s0 + $0x108] sm:$0xff]
  %v94 = vld [vmem:[%s0 + $0x110] sm:$0xff]
  %v95 = vld [vmem:[%s0 + $0x118] sm:$0xff]
  %v96 = vld [vmem:[%s0 + $0x120] sm:$0xff]
  %v97 = vld [vmem:[%s0 + $0x128] sm:$0xff]
  %v98 = vld [vmem:[%s0 + $0x130] sm:$0xff]
  %v99 = vld [vmem:[%s0 + $0x138] sm:$0xff]
  %v100 = vld [vmem:[%s0 + $0x140] sm:$0xff]
  %v101 = vld [vmem:[%s0 + $0x148] sm:$0xff]
  %v102 = vld [vmem:[%s0 + $0x150] sm:$0xff]
  %v103 = vld [vmem:[%s0 + $0x158] sm:$0xff]
  %v104 = vld [vmem:[%s0 + $0x160] sm:$0xff]
  %v105 = vld [vmem:[%s0 + $0x168] sm:$0xff]
  %v106 = vld [vmem:[%s0 + $0x170] sm:$0xff]
  %v107 = vld [vmem:[%s0 + $0x178] sm:$0xff]
  %v108 = vld [vmem:[%s0 + $0x180] sm:$0xff]
  %v109 = vld [vmem:[%s0 + $0x188] sm:$0xff]
  %vm110 = vcmask 179200
  %v112 = vsel %vm110, %v61, 0
  %v115 = vsel %vm110, %v63, 0
  %v118 = vsel %vm110, %v65, 0
  %v121 = vsel %vm110, %v67, 0
  %v124 = vsel %vm110, %v69, 0
  %v127 = vsel %vm110, %v71, 0
  %v130 = vsel %vm110, %v73, 0
  %v133 = vsel %vm110, %v75, 0
  %v136 = vsel %vm110, %v77, 0
  %v139 = vsel %vm110, %v79, 0
  %v142 = vsel %vm110, %v81, 0
  %v145 = vsel %vm110, %v83, 0
  %v148 = vsel %vm110, %v85, 0
  %v151 = vsel %vm110, %v87, 0
  %v154 = vsel %vm110, %v89, 0
  %v157 = vsel %vm110, %v91, 0
  %v160 = vsel %vm110, %v93, 0
  %v163 = vsel %vm110, %v95, 0
  %v166 = vsel %vm110, %v97, 0
  %v169 = vsel %vm110, %v99, 0
  %v172 = vsel %vm110, %v101, 0
  %v175 = vsel %vm110, %v103, 0
  %v178 = vsel %vm110, %v105, 0
  %v181 = vsel %vm110, %v107, 0
  %v184 = vsel %vm110, %v109, 0
  %vm186 = vcmask 1045504
  %v188 = vsel %vm186, %v59, 0
  %190 = vmatprep.subr.mxu0 0.0
  %191 = vmatpush1.msra.mxu0 %v56
  %192 = vmatprep.subr.mxu0 0.0
  %193 = vmatpush1.msra.mxu0 %v55
  %194 = vmatprep.subr.mxu0 0.0
  %195 = vmatpush1.msra.mxu0 %v54
  %196 = vmatprep.subr.mxu0 0.0
  %197 = vmatpush1.msra.mxu0 %v53
  %198 = vmatprep.subr.mxu0 0.0
  %199 = vmatpush1.msra.mxu0 %v52
  %200 = vmatprep.subr.mxu0 0.0
  %201 = vmatpush1.msra.mxu0 %v51
  %202 = vmatprep.subr.mxu0 0.0
  %203 = vmatpush1.msra.mxu0 %v50
  %204 = vmatprep.subr.mxu0 0.0
  %205 = vmatpush1.msra.mxu0 %v49
  %206 = vmatprep.subr.mxu0 0.0
  %207 = vmatpush1.msra.mxu0 %v48
  %208 = vmatprep.subr.mxu0 0.0
  %209 = vmatpush1.msra.mxu0 %v47
  %210 = vmatprep.subr.mxu0 0.0
  %211 = vmatpush1.msra.mxu0 %v46
  %212 = vmatprep.subr.mxu0 0.0
  %213 = vmatpush1.msra.mxu0 %v45
  %214 = vmatprep.subr.mxu0 0.0
  %215 = vmatpush1.msra.mxu0 %v44
  %216 = vmatprep.subr.mxu0 0.0
  %217 = vmatpush1.msra.mxu0 %v43
  %218 = vmatprep.subr.mxu0 0.0
  %219 = vmatpush1.msra.mxu0 %v42
  %220 = vmatprep.subr.mxu0 0.0
  %221 = vmatpush1.msra.mxu0 %v41
  %222 = vmatprep.subr.mxu0 0.0
  %223 = vmatpush2.msra.mxu0 0.0
  %224 = vmatprep.subr.mxu0 0.0
  %225 = vmatpush2.msra.mxu0 0.0
  %226 = vmatprep.subr.mxu0 0.0
  %227 = vmatpush2.msra.mxu0 0.0
  %228 = vmatprep.subr.mxu0 0.0
  %229 = vmatpush2.msra.mxu0 0.0
  %230 = vmatprep.subr.mxu0 0.0
  %231 = vmatpush2.msra.mxu0 0.0
  %232 = vmatprep.subr.mxu0 0.0
  %233 = vmatpush2.msra.mxu0 0.0
  %234 = vmatprep.subr.mxu0 0.0
  %235 = vmatpush2.msra.mxu0 0.0
  %236 = vmatprep.subr.mxu0 0.0
  %237 = vmatpush2.msra.mxu0 0.0
  %238 = vmatprep.subr.mxu0 0.0
  %239 = vmatpush2.msra.mxu0 0.0
  %240 = vmatprep.subr.mxu0 0.0
  %241 = vmatpush2.msra.mxu0 0.0
  %242 = vmatprep.subr.mxu0 0.0
  %243 = vmatpush2.msra.mxu0 0.0
  %244 = vmatprep.subr.mxu0 0.0
  %245 = vmatpush2.msra.mxu0 0.0
  %246 = vmatprep.subr.mxu0 0.0
  %247 = vmatpush2.msra.mxu0 0.0
  %248 = vmatprep.subr.mxu0 0.0
  %249 = vmatpush2.msra.mxu0 %v188
  %250 = vmatprep.subr.mxu0 0.0
  %251 = vmatpush2.msra.mxu0 %v58
  %252 = vmatprep.subr.mxu0 0.0
  %253 = vmatpush2.msra.mxu0 %v57
  %254 = vmatprep.mubr.f32.mxu0 %v112
  %255 = vmatmul.mubr.f32.gmra.mxu0 %v60
  %v256 = vpop.f32.mrf.mxu0
  %v257 = vadd.f32 0.0, %v256
  %v258 = vpop.f32.mrf.mxu0
  %259 = vmatprep.mubr.f32.mxu0 %v115
  %260 = vmatmul.mubr.f32.gmra.mxu0 %v62
  %v261 = vpop.f32.mrf.mxu0
  %v262 = vadd.f32 0.0, %v261
  %v263 = vpop.f32.mrf.mxu0
  %264 = vmatprep.mubr.f32.mxu0 %v118
  %265 = vmatmul.mubr.f32.gmra.mxu0 %v64
  %v266 = vpop.f32.mrf.mxu0
  %v267 = vadd.f32 0.0, %v266
  %v268 = vpop.f32.mrf.mxu0
  %269 = vmatprep.mubr.f32.mxu0 %v121
  %270 = vmatmul.mubr.f32.gmra.mxu0 %v66
  %v271 = vpop.f32.mrf.mxu0
  %v272 = vadd.f32 0.0, %v271
  %v273 = vpop.f32.mrf.mxu0
  %274 = vmatprep.mubr.f32.mxu0 %v124
  %275 = vmatmul.mubr.f32.gmra.mxu0 %v68
  %v276 = vpop.f32.mrf.mxu0
  %v277 = vadd.f32 0.0, %v276
  %v278 = vpop.f32.mrf.mxu0
  %279 = vmatprep.mubr.f32.mxu0 %v127
  %280 = vmatmul.mubr.f32.gmra.mxu0 %v70
  %v281 = vpop.f32.mrf.mxu0
  %v282 = vadd.f32 0.0, %v281
  %v283 = vpop.f32.mrf.mxu0
  %284 = vmatprep.mubr.f32.mxu0 %v130
  %285 = vmatmul.mubr.f32.gmra.mxu0 %v72
  %v286 = vpop.f32.mrf.mxu0
  %v287 = vadd.f32 0.0, %v286
  %v288 = vpop.f32.mrf.mxu0
  %289 = vmatprep.mubr.f32.mxu0 %v133
  %290 = vmatmul.mubr.f32.gmra.mxu0 %v74
  %v291 = vpop.f32.mrf.mxu0
  %v292 = vadd.f32 0.0, %v291
  %v293 = vpop.f32.mrf.mxu0
  %294 = vmatprep.mubr.f32.mxu0 %v136
  %295 = vmatmul.mubr.f32.gmra.mxu0 %v76
  %v296 = vpop.f32.mrf.mxu0
  %v297 = vadd.f32 0.0, %v296
  %v298 = vpop.f32.mrf.mxu0
  %299 = vmatprep.mubr.f32.mxu0 %v139
  %300 = vmatmul.mubr.f32.gmra.mxu0 %v78
  %v301 = vpop.f32.mrf.mxu0
  %v302 = vadd.f32 0.0, %v301
  %v303 = vpop.f32.mrf.mxu0
  %304 = vmatprep.mubr.f32.mxu0 %v142
  %305 = vmatmul.mubr.f32.gmra.mxu0 %v80
  %v306 = vpop.f32.mrf.mxu0
  %v307 = vadd.f32 0.0, %v306
  %v308 = vpop.f32.mrf.mxu0
  %309 = vmatprep.mubr.f32.mxu0 %v145
  %310 = vmatmul.mubr.f32.gmra.mxu0 %v82
  %v311 = vpop.f32.mrf.mxu0
  %v312 = vadd.f32 0.0, %v311
  %v313 = vpop.f32.mrf.mxu0
  %314 = vmatprep.mubr.f32.mxu0 %v148
  %315 = vmatmul.mubr.f32.gmra.mxu0 %v84
  %v316 = vpop.f32.mrf.mxu0
  %v317 = vadd.f32 0.0, %v316
  %v318 = vpop.f32.mrf.mxu0
  %319 = vmatprep.mubr.f32.mxu0 %v151
  %320 = vmatmul.mubr.f32.gmra.mxu0 %v86
  %v321 = vpop.f32.mrf.mxu0
  %v322 = vadd.f32 0.0, %v321
  %v323 = vpop.f32.mrf.mxu0
  %324 = vmatprep.mubr.f32.mxu0 %v154
  %325 = vmatmul.mubr.f32.gmra.mxu0 %v88
  %v326 = vpop.f32.mrf.mxu0
  %v327 = vadd.f32 0.0, %v326
  %v328 = vpop.f32.mrf.mxu0
  %329 = vmatprep.mubr.f32.mxu0 %v157
  %330 = vmatmul.mubr.f32.gmra.mxu0 %v90
  %v331 = vpop.f32.mrf.mxu0
  %v332 = vadd.f32 0.0, %v331
  %v333 = vpop.f32.mrf.mxu0
  %334 = vmatprep.mubr.f32.mxu0 %v160
  %335 = vmatmul.mubr.f32.gmra.mxu0 %v92
  %v336 = vpop.f32.mrf.mxu0
  %v337 = vadd.f32 0.0, %v336
  %v338 = vpop.f32.mrf.mxu0
  %339 = vmatprep.mubr.f32.mxu0 %v163
  %340 = vmatmul.mubr.f32.gmra.mxu0 %v94
  %v341 = vpop.f32.mrf.mxu0
  %v342 = vadd.f32 0.0, %v341
  %v343 = vpop.f32.mrf.mxu0
  %344 = vmatprep.mubr.f32.mxu0 %v166
  %345 = vmatmul.mubr.f32.gmra.mxu0 %v96
  %v346 = vpop.f32.mrf.mxu0
  %v347 = vadd.f32 0.0, %v346
  %v348 = vpop.f32.mrf.mxu0
  %349 = vmatprep.mubr.f32.mxu0 %v169
  %350 = vmatmul.mubr.f32.gmra.mxu0 %v98
  %v351 = vpop.f32.mrf.mxu0
  %v352 = vadd.f32 0.0, %v351
  %v353 = vpop.f32.mrf.mxu0
  %354 = vmatprep.mubr.f32.mxu0 %v172
  %355 = vmatmul.mubr.f32.gmra.mxu0 %v100
  %v356 = vpop.f32.mrf.mxu0
  %v357 = vadd.f32 0.0, %v356
  %v358 = vpop.f32.mrf.mxu0
  %359 = vmatprep.mubr.f32.mxu0 %v175
  %360 = vmatmul.mubr.f32.gmra.mxu0 %v102
  %v361 = vpop.f32.mrf.mxu0
  %v362 = vadd.f32 0.0, %v361
  %v363 = vpop.f32.mrf.mxu0
  %364 = vmatprep.mubr.f32.mxu0 %v178
  %365 = vmatmul.mubr.f32.gmra.mxu0 %v104
  %v366 = vpop.f32.mrf.mxu0
  %v367 = vadd.f32 0.0, %v366
  %v368 = vpop.f32.mrf.mxu0
  %369 = vmatprep.mubr.f32.mxu0 %v181
  %370 = vmatmul.mubr.f32.gmra.mxu0 %v106
  %v371 = vpop.f32.mrf.mxu0
  %v372 = vadd.f32 0.0, %v371
  %v373 = vpop.f32.mrf.mxu0
  %374 = vmatprep.mubr.f32.mxu0 %v184
  %375 = vmatmul.mubr.f32.gmra.mxu0 %v108
  %v376 = vpop.f32.mrf.mxu0
  %v377 = vadd.f32 0.0, %v376
  %v378 = vpop.f32.mrf.mxu0
  %379 = vdwg.mxu0
  %v380 = vld [vmem:[%s1] sm:$0xff]
  %v381 = vld [vmem:[%s1 + $0x8] sm:$0xff]
  %v382 = vld [vmem:[%s1 + $0x10] sm:$0xff]
  %v383 = vld [vmem:[%s1 + $0x18] sm:$0xff]
  %v384 = vld [vmem:[%s1 + $0x20] sm:$0xff]
  %v385 = vld [vmem:[%s1 + $0x28] sm:$0xff]
  %v386 = vld [vmem:[%s1 + $0x30] sm:$0xff]
  %v387 = vld [vmem:[%s1 + $0x38] sm:$0xff]
  %v388 = vld [vmem:[%s1 + $0x40] sm:$0xff]
  %v389 = vld [vmem:[%s1 + $0x48] sm:$0xff]
  %v390 = vld [vmem:[%s1 + $0x50] sm:$0xff]
  %v391 = vld [vmem:[%s1 + $0x58] sm:$0xff]
  %v392 = vld [vmem:[%s1 + $0x60] sm:$0xff]
  %v393 = vld [vmem:[%s1 + $0x68] sm:$0xff]
  %v394 = vld [vmem:[%s1 + $0x70] sm:$0xff]
  %v395 = vld [vmem:[%s1 + $0x78] sm:$0xff]
  %v396 = vld [vmem:[%s1 + $0x80] sm:$0xff]
  %v397 = vld [vmem:[%s1 + $0x88] sm:$0xff]
  %v398 = vld [vmem:[%s1 + $0x90] sm:$0xff]
  %v399 = vld [vmem:[%s1 + $0x98] sm:$0xff]
  %v400 = vld [vmem:[%s1 + $0xa0] sm:$0xff]
  %v401 = vld [vmem:[%s1 + $0xa8] sm:$0xff]
  %v402 = vld [vmem:[%s1 + $0xb0] sm:$0xff]
  %v403 = vld [vmem:[%s1 + $0xb8] sm:$0xff]
  %v404 = vld [vmem:[%s1 + $0xc0] sm:$0xff]
  %v405 = vld [vmem:[%s1 + $0xc8] sm:$0xff]
  %v406 = vld [vmem:[%s1 + $0xd0] sm:$0xff]
  %v407 = vld [vmem:[%s1 + $0xd8] sm:$0xff]
  %v408 = vld [vmem:[%s1 + $0xe0] sm:$0xff]
  %v409 = vld [vmem:[%s1 + $0xe8] sm:$0xff]
  %v410 = vld [vmem:[%s1 + $0xf0] sm:$0xff]
  %v411 = vld [vmem:[%s1 + $0xf8] sm:$0xff]
  %v412 = vld [vmem:[%s1 + $0x100] sm:$0xff]
  %v413 = vld [vmem:[%s1 + $0x108] sm:$0xff]
  %v414 = vld [vmem:[%s1 + $0x110] sm:$0xff]
  %v415 = vld [vmem:[%s1 + $0x118] sm:$0xff]
  %v416 = vld [vmem:[%s1 + $0x120] sm:$0xff]
  %v417 = vld [vmem:[%s1 + $0x128] sm:$0xff]
  %v418 = vld [vmem:[%s1 + $0x130] sm:$0xff]
  %v419 = vld [vmem:[%s1 + $0x138] sm:$0xff]
  %v420 = vld [vmem:[%s1 + $0x140] sm:$0xff]
  %v421 = vld [vmem:[%s1 + $0x148] sm:$0xff]
  %v422 = vld [vmem:[%s1 + $0x150] sm:$0xff]
  %v423 = vld [vmem:[%s1 + $0x158] sm:$0xff]
  %v424 = vld [vmem:[%s1 + $0x160] sm:$0xff]
  %v425 = vld [vmem:[%s1 + $0x168] sm:$0xff]
  %v426 = vld [vmem:[%s1 + $0x170] sm:$0xff]
  %v427 = vld [vmem:[%s1 + $0x178] sm:$0xff]
  %v428 = vld [vmem:[%s1 + $0x180] sm:$0xff]
  %v429 = vld [vmem:[%s1 + $0x188] sm:$0xff]
  %v431 = vsel %vm110, %v381, 0
  %v434 = vsel %vm110, %v383, 0
  %v437 = vsel %vm110, %v385, 0
  %v440 = vsel %vm110, %v387, 0
  %v443 = vsel %vm110, %v389, 0
  %v446 = vsel %vm110, %v391, 0
  %v449 = vsel %vm110, %v393, 0
  %v452 = vsel %vm110, %v395, 0
  %v455 = vsel %vm110, %v397, 0
  %v458 = vsel %vm110, %v399, 0
  %v461 = vsel %vm110, %v401, 0
  %v464 = vsel %vm110, %v403, 0
  %v467 = vsel %vm110, %v405, 0
  %v470 = vsel %vm110, %v407, 0
  %v473 = vsel %vm110, %v409, 0
  %v476 = vsel %vm110, %v411, 0
  %v479 = vsel %vm110, %v413, 0
  %v482 = vsel %vm110, %v415, 0
  %v485 = vsel %vm110, %v417, 0
  %v488 = vsel %vm110, %v419, 0
  %v491 = vsel %vm110, %v421, 0
  %v494 = vsel %vm110, %v423, 0
  %v497 = vsel %vm110, %v425, 0
  %v500 = vsel %vm110, %v427, 0
  %v503 = vsel %vm110, %v429, 0
  %505 = vmatprep.subr.mxu0 0.0
  %506 = vmatpush1.msra.mxu0 %v56
  %507 = vmatprep.subr.mxu0 0.0
  %508 = vmatpush1.msra.mxu0 %v55
  %509 = vmatprep.subr.mxu0 0.0
  %510 = vmatpush1.msra.mxu0 %v54
  %511 = vmatprep.subr.mxu0 0.0
  %512 = vmatpush1.msra.mxu0 %v53
  %513 = vmatprep.subr.mxu0 0.0
  %514 = vmatpush1.msra.mxu0 %v52
  %515 = vmatprep.subr.mxu0 0.0
  %516 = vmatpush1.msra.mxu0 %v51
  %517 = vmatprep.subr.mxu0 0.0
  %518 = vmatpush1.msra.mxu0 %v50
  %519 = vmatprep.subr.mxu0 0.0
  %520 = vmatpush1.msra.mxu0 %v49
  %521 = vmatprep.subr.mxu0 0.0
  %522 = vmatpush1.msra.mxu0 %v48
  %523 = vmatprep.subr.mxu0 0.0
  %524 = vmatpush1.msra.mxu0 %v47
  %525 = vmatprep.subr.mxu0 0.0
  %526 = vmatpush1.msra.mxu0 %v46
  %527 = vmatprep.subr.mxu0 0.0
  %528 = vmatpush1.msra.mxu0 %v45
  %529 = vmatprep.subr.mxu0 0.0
  %530 = vmatpush1.msra.mxu0 %v44
  %531 = vmatprep.subr.mxu0 0.0
  %532 = vmatpush1.msra.mxu0 %v43
  %533 = vmatprep.subr.mxu0 0.0
  %534 = vmatpush1.msra.mxu0 %v42
  %535 = vmatprep.subr.mxu0 0.0
  %536 = vmatpush1.msra.mxu0 %v41
  %537 = vmatprep.subr.mxu0 0.0
  %538 = vmatpush2.msra.mxu0 0.0
  %539 = vmatprep.subr.mxu0 0.0
  %540 = vmatpush2.msra.mxu0 0.0
  %541 = vmatprep.subr.mxu0 0.0
  %542 = vmatpush2.msra.mxu0 0.0
  %543 = vmatprep.subr.mxu0 0.0
  %544 = vmatpush2.msra.mxu0 0.0
  %545 = vmatprep.subr.mxu0 0.0
  %546 = vmatpush2.msra.mxu0 0.0
  %547 = vmatprep.subr.mxu0 0.0
  %548 = vmatpush2.msra.mxu0 0.0
  %549 = vmatprep.subr.mxu0 0.0
  %550 = vmatpush2.msra.mxu0 0.0
  %551 = vmatprep.subr.mxu0 0.0
  %552 = vmatpush2.msra.mxu0 0.0
  %553 = vmatprep.subr.mxu0 0.0
  %554 = vmatpush2.msra.mxu0 0.0
  %555 = vmatprep.subr.mxu0 0.0
  %556 = vmatpush2.msra.mxu0 0.0
  %557 = vmatprep.subr.mxu0 0.0
  %558 = vmatpush2.msra.mxu0 0.0
  %559 = vmatprep.subr.mxu0 0.0
  %560 = vmatpush2.msra.mxu0 0.0
  %561 = vmatprep.subr.mxu0 0.0
  %562 = vmatpush2.msra.mxu0 0.0
  %563 = vmatprep.subr.mxu0 0.0
  %564 = vmatpush2.msra.mxu0 %v188
  %565 = vmatprep.subr.mxu0 0.0
  %566 = vmatpush2.msra.mxu0 %v58
  %567 = vmatprep.subr.mxu0 0.0
  %568 = vmatpush2.msra.mxu0 %v57
  %569 = vmatprep.mubr.f32.mxu0 %v431
  %570 = vmatmul.mubr.f32.gmra.mxu0 %v380
  %v571 = vpop.f32.mrf.mxu0
  %v572 = vadd.f32 0.0, %v571
  %v573 = vpop.f32.mrf.mxu0
  %574 = vmatprep.mubr.f32.mxu0 %v434
  %575 = vmatmul.mubr.f32.gmra.mxu0 %v382
  %v576 = vpop.f32.mrf.mxu0
  %v577 = vadd.f32 0.0, %v576
  %v578 = vpop.f32.mrf.mxu0
  %579 = vmatprep.mubr.f32.mxu0 %v437
  %580 = vmatmul.mubr.f32.gmra.mxu0 %v384
  %v581 = vpop.f32.mrf.mxu0
  %v582 = vadd.f32 0.0, %v581
  %v583 = vpop.f32.mrf.mxu0
  %584 = vmatprep.mubr.f32.mxu0 %v440
  %585 = vmatmul.mubr.f32.gmra.mxu0 %v386
  %v586 = vpop.f32.mrf.mxu0
  %v587 = vadd.f32 0.0, %v586
  %v588 = vpop.f32.mrf.mxu0
  %589 = vmatprep.mubr.f32.mxu0 %v443
  %590 = vmatmul.mubr.f32.gmra.mxu0 %v388
  %v591 = vpop.f32.mrf.mxu0
  %v592 = vadd.f32 0.0, %v591
  %v593 = vpop.f32.mrf.mxu0
  %594 = vmatprep.mubr.f32.mxu0 %v446
  %595 = vmatmul.mubr.f32.gmra.mxu0 %v390
  %v596 = vpop.f32.mrf.mxu0
  %v597 = vadd.f32 0.0, %v596
  %v598 = vpop.f32.mrf.mxu0
  %599 = vmatprep.mubr.f32.mxu0 %v449
  %600 = vmatmul.mubr.f32.gmra.mxu0 %v392
  %v601 = vpop.f32.mrf.mxu0
  %v602 = vadd.f32 0.0, %v601
  %v603 = vpop.f32.mrf.mxu0
  %604 = vmatprep.mubr.f32.mxu0 %v452
  %605 = vmatmul.mubr.f32.gmra.mxu0 %v394
  %v606 = vpop.f32.mrf.mxu0
  %v607 = vadd.f32 0.0, %v606
  %v608 = vpop.f32.mrf.mxu0
  %609 = vmatprep.mubr.f32.mxu0 %v455
  %610 = vmatmul.mubr.f32.gmra.mxu0 %v396
  %v611 = vpop.f32.mrf.mxu0
  %v612 = vadd.f32 0.0, %v611
  %v613 = vpop.f32.mrf.mxu0
  %614 = vmatprep.mubr.f32.mxu0 %v458
  %615 = vmatmul.mubr.f32.gmra.mxu0 %v398
  %v616 = vpop.f32.mrf.mxu0
  %v617 = vadd.f32 0.0, %v616
  %v618 = vpop.f32.mrf.mxu0
  %619 = vmatprep.mubr.f32.mxu0 %v461
  %620 = vmatmul.mubr.f32.gmra.mxu0 %v400
  %v621 = vpop.f32.mrf.mxu0
  %v622 = vadd.f32 0.0, %v621
  %v623 = vpop.f32.mrf.mxu0
  %624 = vmatprep.mubr.f32.mxu0 %v464
  %625 = vmatmul.mubr.f32.gmra.mxu0 %v402
  %v626 = vpop.f32.mrf.mxu0
  %v627 = vadd.f32 0.0, %v626
  %v628 = vpop.f32.mrf.mxu0
  %629 = vmatprep.mubr.f32.mxu0 %v467
  %630 = vmatmul.mubr.f32.gmra.mxu0 %v404
  %v631 = vpop.f32.mrf.mxu0
  %v632 = vadd.f32 0.0, %v631
  %v633 = vpop.f32.mrf.mxu0
  %634 = vmatprep.mubr.f32.mxu0 %v470
  %635 = vmatmul.mubr.f32.gmra.mxu0 %v406
  %v636 = vpop.f32.mrf.mxu0
  %v637 = vadd.f32 0.0, %v636
  %v638 = vpop.f32.mrf.mxu0
  %639 = vmatprep.mubr.f32.mxu0 %v473
  %640 = vmatmul.mubr.f32.gmra.mxu0 %v408
  %v641 = vpop.f32.mrf.mxu0
  %v642 = vadd.f32 0.0, %v641
  %v643 = vpop.f32.mrf.mxu0
  %644 = vmatprep.mubr.f32.mxu0 %v476
  %645 = vmatmul.mubr.f32.gmra.mxu0 %v410
  %v646 = vpop.f32.mrf.mxu0
  %v647 = vadd.f32 0.0, %v646
  %v648 = vpop.f32.mrf.mxu0
  %649 = vmatprep.mubr.f32.mxu0 %v479
  %650 = vmatmul.mubr.f32.gmra.mxu0 %v412
  %v651 = vpop.f32.mrf.mxu0
  %v652 = vadd.f32 0.0, %v651
  %v653 = vpop.f32.mrf.mxu0
  %654 = vmatprep.mubr.f32.mxu0 %v482
  %655 = vmatmul.mubr.f32.gmra.mxu0 %v414
  %v656 = vpop.f32.mrf.mxu0
  %v657 = vadd.f32 0.0, %v656
  %v658 = vpop.f32.mrf.mxu0
  %659 = vmatprep.mubr.f32.mxu0 %v485
  %660 = vmatmul.mubr.f32.gmra.mxu0 %v416
  %v661 = vpop.f32.mrf.mxu0
  %v662 = vadd.f32 0.0, %v661
  %v663 = vpop.f32.mrf.mxu0
  %664 = vmatprep.mubr.f32.mxu0 %v488
  %665 = vmatmul.mubr.f32.gmra.mxu0 %v418
  %v666 = vpop.f32.mrf.mxu0
  %v667 = vadd.f32 0.0, %v666
  %v668 = vpop.f32.mrf.mxu0
  %669 = vmatprep.mubr.f32.mxu0 %v491
  %670 = vmatmul.mubr.f32.gmra.mxu0 %v420
  %v671 = vpop.f32.mrf.mxu0
  %v672 = vadd.f32 0.0, %v671
  %v673 = vpop.f32.mrf.mxu0
  %674 = vmatprep.mubr.f32.mxu0 %v494
  %675 = vmatmul.mubr.f32.gmra.mxu0 %v422
  %v676 = vpop.f32.mrf.mxu0
  %v677 = vadd.f32 0.0, %v676
  %v678 = vpop.f32.mrf.mxu0
  %679 = vmatprep.mubr.f32.mxu0 %v497
  %680 = vmatmul.mubr.f32.gmra.mxu0 %v424
  %v681 = vpop.f32.mrf.mxu0
  %v682 = vadd.f32 0.0, %v681
  %v683 = vpop.f32.mrf.mxu0
  %684 = vmatprep.mubr.f32.mxu0 %v500
  %685 = vmatmul.mubr.f32.gmra.mxu0 %v426
  %v686 = vpop.f32.mrf.mxu0
  %v687 = vadd.f32 0.0, %v686
  %v688 = vpop.f32.mrf.mxu0
  %689 = vmatprep.mubr.f32.mxu0 %v503
  %690 = vmatmul.mubr.f32.gmra.mxu0 %v428
  %v691 = vpop.f32.mrf.mxu0
  %v692 = vadd.f32 0.0, %v691
  %v693 = vpop.f32.mrf.mxu0
  %694 = vdwg.mxu0
  %v695 = vmax.f32 %v257, %v572
  %v696 = vmax.f32 %v262, %v577
  %v697 = vmax.f32 %v267, %v582
  %v698 = vmax.f32 %v272, %v587
  %v699 = vmax.f32 %v277, %v592
  %v700 = vmax.f32 %v282, %v597
  %v701 = vmax.f32 %v287, %v602
  %v702 = vmax.f32 %v292, %v607
  %v703 = vmax.f32 %v297, %v612
  %v704 = vmax.f32 %v302, %v617
  %v705 = vmax.f32 %v307, %v622
  %v706 = vmax.f32 %v312, %v627
  %v707 = vmax.f32 %v317, %v632
  %v708 = vmax.f32 %v322, %v637
  %v709 = vmax.f32 %v327, %v642
  %v710 = vmax.f32 %v332, %v647
  %v711 = vmax.f32 %v337, %v652
  %v712 = vmax.f32 %v342, %v657
  %v713 = vmax.f32 %v347, %v662
  %v714 = vmax.f32 %v352, %v667
  %v715 = vmax.f32 %v357, %v672
  %v716 = vmax.f32 %v362, %v677
  %v717 = vmax.f32 %v367, %v682
  %v718 = vmax.f32 %v372, %v687
  %v719 = vmax.f32 %v377, %v692
  %v720 = vld [vmem:[%s2] sm:$0xff]
  %v721 = vld [vmem:[%s2 + $0x8] sm:$0xff]
  %v722 = vld [vmem:[%s2 + $0x10] sm:$0xff]
  %v723 = vld [vmem:[%s2 + $0x18] sm:$0xff]
  %v724 = vld [vmem:[%s2 + $0x20] sm:$0xff]
  %v725 = vld [vmem:[%s2 + $0x28] sm:$0xff]
  %v726 = vld [vmem:[%s2 + $0x30] sm:$0xff]
  %v727 = vld [vmem:[%s2 + $0x38] sm:$0xff]
  %v728 = vld [vmem:[%s2 + $0x40] sm:$0xff]
  %v729 = vld [vmem:[%s2 + $0x48] sm:$0xff]
  %v730 = vld [vmem:[%s2 + $0x50] sm:$0xff]
  %v731 = vld [vmem:[%s2 + $0x58] sm:$0xff]
  %v732 = vld [vmem:[%s2 + $0x60] sm:$0xff]
  %v733 = vld [vmem:[%s2 + $0x68] sm:$0xff]
  %v734 = vld [vmem:[%s2 + $0x70] sm:$0xff]
  %v735 = vld [vmem:[%s2 + $0x78] sm:$0xff]
  %v736 = vld [vmem:[%s2 + $0x80] sm:$0xff]
  %v737 = vld [vmem:[%s2 + $0x88] sm:$0xff]
  %v738 = vld [vmem:[%s2 + $0x90] sm:$0xff]
  %v739 = vld [vmem:[%s2 + $0x98] sm:$0xff]
  %v740 = vld [vmem:[%s2 + $0xa0] sm:$0xff]
  %v741 = vld [vmem:[%s2 + $0xa8] sm:$0xff]
  %v742 = vld [vmem:[%s2 + $0xb0] sm:$0xff]
  %v743 = vld [vmem:[%s2 + $0xb8] sm:$0xff]
  %v744 = vld [vmem:[%s2 + $0xc0] sm:$0xff]
  %v745 = vld [vmem:[%s2 + $0xc8] sm:$0xff]
  %v746 = vld [vmem:[%s2 + $0xd0] sm:$0xff]
  %v747 = vld [vmem:[%s2 + $0xd8] sm:$0xff]
  %v748 = vld [vmem:[%s2 + $0xe0] sm:$0xff]
  %v749 = vld [vmem:[%s2 + $0xe8] sm:$0xff]
  %v750 = vld [vmem:[%s2 + $0xf0] sm:$0xff]
  %v751 = vld [vmem:[%s2 + $0xf8] sm:$0xff]
  %v752 = vld [vmem:[%s2 + $0x100] sm:$0xff]
  %v753 = vld [vmem:[%s2 + $0x108] sm:$0xff]
  %v754 = vld [vmem:[%s2 + $0x110] sm:$0xff]
  %v755 = vld [vmem:[%s2 + $0x118] sm:$0xff]
  %v756 = vld [vmem:[%s2 + $0x120] sm:$0xff]
  %v757 = vld [vmem:[%s2 + $0x128] sm:$0xff]
  %v758 = vld [vmem:[%s2 + $0x130] sm:$0xff]
  %v759 = vld [vmem:[%s2 + $0x138] sm:$0xff]
  %v760 = vld [vmem:[%s2 + $0x140] sm:$0xff]
  %v761 = vld [vmem:[%s2 + $0x148] sm:$0xff]
  %v762 = vld [vmem:[%s2 + $0x150] sm:$0xff]
  %v763 = vld [vmem:[%s2 + $0x158] sm:$0xff]
  %v764 = vld [vmem:[%s2 + $0x160] sm:$0xff]
  %v765 = vld [vmem:[%s2 + $0x168] sm:$0xff]
  %v766 = vld [vmem:[%s2 + $0x170] sm:$0xff]
  %v767 = vld [vmem:[%s2 + $0x178] sm:$0xff]
  %v768 = vld [vmem:[%s2 + $0x180] sm:$0xff]
  %v769 = vld [vmem:[%s2 + $0x188] sm:$0xff]
  %v771 = vsel %vm110, %v721, 0
  %v774 = vsel %vm110, %v723, 0
  %v777 = vsel %vm110, %v725, 0
  %v780 = vsel %vm110, %v727, 0
  %v783 = vsel %vm110, %v729, 0
  %v786 = vsel %vm110, %v731, 0
  %v789 = vsel %vm110, %v733, 0
  %v792 = vsel %vm110, %v735, 0
  %v795 = vsel %vm110, %v737, 0
  %v798 = vsel %vm110, %v739, 0
  %v801 = vsel %vm110, %v741, 0
  %v804 = vsel %vm110, %v743, 0
  %v807 = vsel %vm110, %v745, 0
  %v810 = vsel %vm110, %v747, 0
  %v813 = vsel %vm110, %v749, 0
  %v816 = vsel %vm110, %v751, 0
  %v819 = vsel %vm110, %v753, 0
  %v822 = vsel %vm110, %v755, 0
  %v825 = vsel %vm110, %v757, 0
  %v828 = vsel %vm110, %v759, 0
  %v831 = vsel %vm110, %v761, 0
  %v834 = vsel %vm110, %v763, 0
  %v837 = vsel %vm110, %v765, 0
  %v840 = vsel %vm110, %v767, 0
  %v843 = vsel %vm110, %v769, 0
  %845 = vmatprep.subr.mxu0 0.0
  %846 = vmatpush1.msra.mxu0 %v56
  %847 = vmatprep.subr.mxu0 0.0
  %848 = vmatpush1.msra.mxu0 %v55
  %849 = vmatprep.subr.mxu0 0.0
  %850 = vmatpush1.msra.mxu0 %v54
  %851 = vmatprep.subr.mxu0 0.0
  %852 = vmatpush1.msra.mxu0 %v53
  %853 = vmatprep.subr.mxu0 0.0
  %854 = vmatpush1.msra.mxu0 %v52
  %855 = vmatprep.subr.mxu0 0.0
  %856 = vmatpush1.msra.mxu0 %v51
  %857 = vmatprep.subr.mxu0 0.0
  %858 = vmatpush1.msra.mxu0 %v50
  %859 = vmatprep.subr.mxu0 0.0
  %860 = vmatpush1.msra.mxu0 %v49
  %861 = vmatprep.subr.mxu0 0.0
  %862 = vmatpush1.msra.mxu0 %v48
  %863 = vmatprep.subr.mxu0 0.0
  %864 = vmatpush1.msra.mxu0 %v47
  %865 = vmatprep.subr.mxu0 0.0
  %866 = vmatpush1.msra.mxu0 %v46
  %867 = vmatprep.subr.mxu0 0.0
  %868 = vmatpush1.msra.mxu0 %v45
  %869 = vmatprep.subr.mxu0 0.0
  %870 = vmatpush1.msra.mxu0 %v44
  %871 = vmatprep.subr.mxu0 0.0
  %872 = vmatpush1.msra.mxu0 %v43
  %873 = vmatprep.subr.mxu0 0.0
  %874 = vmatpush1.msra.mxu0 %v42
  %875 = vmatprep.subr.mxu0 0.0
  %876 = vmatpush1.msra.mxu0 %v41
  %877 = vmatprep.subr.mxu0 0.0
  %878 = vmatpush2.msra.mxu0 0.0
  %879 = vmatprep.subr.mxu0 0.0
  %880 = vmatpush2.msra.mxu0 0.0
  %881 = vmatprep.subr.mxu0 0.0
  %882 = vmatpush2.msra.mxu0 0.0
  %883 = vmatprep.subr.mxu0 0.0
  %884 = vmatpush2.msra.mxu0 0.0
  %885 = vmatprep.subr.mxu0 0.0
  %886 = vmatpush2.msra.mxu0 0.0
  %887 = vmatprep.subr.mxu0 0.0
  %888 = vmatpush2.msra.mxu0 0.0
  %889 = vmatprep.subr.mxu0 0.0
  %890 = vmatpush2.msra.mxu0 0.0
  %891 = vmatprep.subr.mxu0 0.0
  %892 = vmatpush2.msra.mxu0 0.0
  %893 = vmatprep.subr.mxu0 0.0
  %894 = vmatpush2.msra.mxu0 0.0
  %895 = vmatprep.subr.mxu0 0.0
  %896 = vmatpush2.msra.mxu0 0.0
  %897 = vmatprep.subr.mxu0 0.0
  %898 = vmatpush2.msra.mxu0 0.0
  %899 = vmatprep.subr.mxu0 0.0
  %900 = vmatpush2.msra.mxu0 0.0
  %901 = vmatprep.subr.mxu0 0.0
  %902 = vmatpush2.msra.mxu0 0.0
  %903 = vmatprep.subr.mxu0 0.0
  %904 = vmatpush2.msra.mxu0 %v188
  %905 = vmatprep.subr.mxu0 0.0
  %906 = vmatpush2.msra.mxu0 %v58
  %907 = vmatprep.subr.mxu0 0.0
  %908 = vmatpush2.msra.mxu0 %v57
  %909 = vmatprep.mubr.f32.mxu0 %v771
  %910 = vmatmul.mubr.f32.gmra.mxu0 %v720
  %v911 = vpop.f32.mrf.mxu0
  %v912 = vadd.f32 0.0, %v911
  %v913 = vpop.f32.mrf.mxu0
  %914 = vmatprep.mubr.f32.mxu0 %v774
  %915 = vmatmul.mubr.f32.gmra.mxu0 %v722
  %v916 = vpop.f32.mrf.mxu0
  %v917 = vadd.f32 0.0, %v916
  %v918 = vpop.f32.mrf.mxu0
  %919 = vmatprep.mubr.f32.mxu0 %v777
  %920 = vmatmul.mubr.f32.gmra.mxu0 %v724
  %v921 = vpop.f32.mrf.mxu0
  %v922 = vadd.f32 0.0, %v921
  %v923 = vpop.f32.mrf.mxu0
  %924 = vmatprep.mubr.f32.mxu0 %v780
  %925 = vmatmul.mubr.f32.gmra.mxu0 %v726
  %v926 = vpop.f32.mrf.mxu0
  %v927 = vadd.f32 0.0, %v926
  %v928 = vpop.f32.mrf.mxu0
  %929 = vmatprep.mubr.f32.mxu0 %v783
  %930 = vmatmul.mubr.f32.gmra.mxu0 %v728
  %v931 = vpop.f32.mrf.mxu0
  %v932 = vadd.f32 0.0, %v931
  %v933 = vpop.f32.mrf.mxu0
  %934 = vmatprep.mubr.f32.mxu0 %v786
  %935 = vmatmul.mubr.f32.gmra.mxu0 %v730
  %v936 = vpop.f32.mrf.mxu0
  %v937 = vadd.f32 0.0, %v936
  %v938 = vpop.f32.mrf.mxu0
  %939 = vmatprep.mubr.f32.mxu0 %v789
  %940 = vmatmul.mubr.f32.gmra.mxu0 %v732
  %v941 = vpop.f32.mrf.mxu0
  %v942 = vadd.f32 0.0, %v941
  %v943 = vpop.f32.mrf.mxu0
  %944 = vmatprep.mubr.f32.mxu0 %v792
  %945 = vmatmul.mubr.f32.gmra.mxu0 %v734
  %v946 = vpop.f32.mrf.mxu0
  %v947 = vadd.f32 0.0, %v946
  %v948 = vpop.f32.mrf.mxu0
  %949 = vmatprep.mubr.f32.mxu0 %v795
  %950 = vmatmul.mubr.f32.gmra.mxu0 %v736
  %v951 = vpop.f32.mrf.mxu0
  %v952 = vadd.f32 0.0, %v951
  %v953 = vpop.f32.mrf.mxu0
  %954 = vmatprep.mubr.f32.mxu0 %v798
  %955 = vmatmul.mubr.f32.gmra.mxu0 %v738
  %v956 = vpop.f32.mrf.mxu0
  %v957 = vadd.f32 0.0, %v956
  %v958 = vpop.f32.mrf.mxu0
  %959 = vmatprep.mubr.f32.mxu0 %v801
  %960 = vmatmul.mubr.f32.gmra.mxu0 %v740
  %v961 = vpop.f32.mrf.mxu0
  %v962 = vadd.f32 0.0, %v961
  %v963 = vpop.f32.mrf.mxu0
  %964 = vmatprep.mubr.f32.mxu0 %v804
  %965 = vmatmul.mubr.f32.gmra.mxu0 %v742
  %v966 = vpop.f32.mrf.mxu0
  %v967 = vadd.f32 0.0, %v966
  %v968 = vpop.f32.mrf.mxu0
  %969 = vmatprep.mubr.f32.mxu0 %v807
  %970 = vmatmul.mubr.f32.gmra.mxu0 %v744
  %v971 = vpop.f32.mrf.mxu0
  %v972 = vadd.f32 0.0, %v971
  %v973 = vpop.f32.mrf.mxu0
  %974 = vmatprep.mubr.f32.mxu0 %v810
  %975 = vmatmul.mubr.f32.gmra.mxu0 %v746
  %v976 = vpop.f32.mrf.mxu0
  %v977 = vadd.f32 0.0, %v976
  %v978 = vpop.f32.mrf.mxu0
  %979 = vmatprep.mubr.f32.mxu0 %v813
  %980 = vmatmul.mubr.f32.gmra.mxu0 %v748
  %v981 = vpop.f32.mrf.mxu0
  %v982 = vadd.f32 0.0, %v981
  %v983 = vpop.f32.mrf.mxu0
  %984 = vmatprep.mubr.f32.mxu0 %v816
  %985 = vmatmul.mubr.f32.gmra.mxu0 %v750
  %v986 = vpop.f32.mrf.mxu0
  %v987 = vadd.f32 0.0, %v986
  %v988 = vpop.f32.mrf.mxu0
  %989 = vmatprep.mubr.f32.mxu0 %v819
  %990 = vmatmul.mubr.f32.gmra.mxu0 %v752
  %v991 = vpop.f32.mrf.mxu0
  %v992 = vadd.f32 0.0, %v991
  %v993 = vpop.f32.mrf.mxu0
  %994 = vmatprep.mubr.f32.mxu0 %v822
  %995 = vmatmul.mubr.f32.gmra.mxu0 %v754
  %v996 = vpop.f32.mrf.mxu0
  %v997 = vadd.f32 0.0, %v996
  %v998 = vpop.f32.mrf.mxu0
  %999 = vmatprep.mubr.f32.mxu0 %v825
  %1000 = vmatmul.mubr.f32.gmra.mxu0 %v756
  %v1001 = vpop.f32.mrf.mxu0
  %v1002 = vadd.f32 0.0, %v1001
  %v1003 = vpop.f32.mrf.mxu0
  %1004 = vmatprep.mubr.f32.mxu0 %v828
  %1005 = vmatmul.mubr.f32.gmra.mxu0 %v758
  %v1006 = vpop.f32.mrf.mxu0
  %v1007 = vadd.f32 0.0, %v1006
  %v1008 = vpop.f32.mrf.mxu0
  %1009 = vmatprep.mubr.f32.mxu0 %v831
  %1010 = vmatmul.mubr.f32.gmra.mxu0 %v760
  %v1011 = vpop.f32.mrf.mxu0
  %v1012 = vadd.f32 0.0, %v1011
  %v1013 = vpop.f32.mrf.mxu0
  %1014 = vmatprep.mubr.f32.mxu0 %v834
  %1015 = vmatmul.mubr.f32.gmra.mxu0 %v762
  %v1016 = vpop.f32.mrf.mxu0
  %v1017 = vadd.f32 0.0, %v1016
  %v1018 = vpop.f32.mrf.mxu0
  %1019 = vmatprep.mubr.f32.mxu0 %v837
  %1020 = vmatmul.mubr.f32.gmra.mxu0 %v764
  %v1021 = vpop.f32.mrf.mxu0
  %v1022 = vadd.f32 0.0, %v1021
  %v1023 = vpop.f32.mrf.mxu0
  %1024 = vmatprep.mubr.f32.mxu0 %v840
  %1025 = vmatmul.mubr.f32.gmra.mxu0 %v766
  %v1026 = vpop.f32.mrf.mxu0
  %v1027 = vadd.f32 0.0, %v1026
  %v1028 = vpop.f32.mrf.mxu0
  %1029 = vmatprep.mubr.f32.mxu0 %v843
  %1030 = vmatmul.mubr.f32.gmra.mxu0 %v768
  %v1031 = vpop.f32.mrf.mxu0
  %v1032 = vadd.f32 0.0, %v1031
  %v1033 = vpop.f32.mrf.mxu0
  %1034 = vdwg.mxu0
  %v1035 = vmax.f32 %v695, %v912
  %v1036 = vmax.f32 %v696, %v917
  %v1037 = vmax.f32 %v697, %v922
  %v1038 = vmax.f32 %v698, %v927
  %v1039 = vmax.f32 %v699, %v932
  %v1040 = vmax.f32 %v700, %v937
  %v1041 = vmax.f32 %v701, %v942
  %v1042 = vmax.f32 %v702, %v947
  %v1043 = vmax.f32 %v703, %v952
  %v1044 = vmax.f32 %v704, %v957
  %v1045 = vmax.f32 %v705, %v962
  %v1046 = vmax.f32 %v706, %v967
  %v1047 = vmax.f32 %v707, %v972
  %v1048 = vmax.f32 %v708, %v977
  %v1049 = vmax.f32 %v709, %v982
  %v1050 = vmax.f32 %v710, %v987
  %v1051 = vmax.f32 %v711, %v992
  %v1052 = vmax.f32 %v712, %v997
  %v1053 = vmax.f32 %v713, %v1002
  %v1054 = vmax.f32 %v714, %v1007
  %v1055 = vmax.f32 %v715, %v1012
  %v1056 = vmax.f32 %v716, %v1017
  %v1057 = vmax.f32 %v717, %v1022
  %v1058 = vmax.f32 %v718, %v1027
  %v1059 = vmax.f32 %v719, %v1032
  %v1060 = vld [vmem:[%s3] sm:$0xff]
  %v1061 = vld [vmem:[%s3 + $0x8] sm:$0xff]
  %v1062 = vld [vmem:[%s3 + $0x10] sm:$0xff]
  %v1063 = vld [vmem:[%s3 + $0x18] sm:$0xff]
  %v1064 = vld [vmem:[%s3 + $0x20] sm:$0xff]
  %v1065 = vld [vmem:[%s3 + $0x28] sm:$0xff]
  %v1066 = vld [vmem:[%s3 + $0x30] sm:$0xff]
  %v1067 = vld [vmem:[%s3 + $0x38] sm:$0xff]
  %v1068 = vld [vmem:[%s3 + $0x40] sm:$0xff]
  %v1069 = vld [vmem:[%s3 + $0x48] sm:$0xff]
  %v1070 = vld [vmem:[%s3 + $0x50] sm:$0xff]
  %v1071 = vld [vmem:[%s3 + $0x58] sm:$0xff]
  %v1072 = vld [vmem:[%s3 + $0x60] sm:$0xff]
  %v1073 = vld [vmem:[%s3 + $0x68] sm:$0xff]
  %v1074 = vld [vmem:[%s3 + $0x70] sm:$0xff]
  %v1075 = vld [vmem:[%s3 + $0x78] sm:$0xff]
  %v1076 = vld [vmem:[%s3 + $0x80] sm:$0xff]
  %v1077 = vld [vmem:[%s3 + $0x88] sm:$0xff]
  %v1078 = vld [vmem:[%s3 + $0x90] sm:$0xff]
  %v1079 = vld [vmem:[%s3 + $0x98] sm:$0xff]
  %v1080 = vld [vmem:[%s3 + $0xa0] sm:$0xff]
  %v1081 = vld [vmem:[%s3 + $0xa8] sm:$0xff]
  %v1082 = vld [vmem:[%s3 + $0xb0] sm:$0xff]
  %v1083 = vld [vmem:[%s3 + $0xb8] sm:$0xff]
  %v1084 = vld [vmem:[%s3 + $0xc0] sm:$0xff]
  %v1085 = vld [vmem:[%s3 + $0xc8] sm:$0xff]
  %v1086 = vld [vmem:[%s3 + $0xd0] sm:$0xff]
  %v1087 = vld [vmem:[%s3 + $0xd8] sm:$0xff]
  %v1088 = vld [vmem:[%s3 + $0xe0] sm:$0xff]
  %v1089 = vld [vmem:[%s3 + $0xe8] sm:$0xff]
  %v1090 = vld [vmem:[%s3 + $0xf0] sm:$0xff]
  %v1091 = vld [vmem:[%s3 + $0xf8] sm:$0xff]
  %v1092 = vld [vmem:[%s3 + $0x100] sm:$0xff]
  %v1093 = vld [vmem:[%s3 + $0x108] sm:$0xff]
  %v1094 = vld [vmem:[%s3 + $0x110] sm:$0xff]
  %v1095 = vld [vmem:[%s3 + $0x118] sm:$0xff]
  %v1096 = vld [vmem:[%s3 + $0x120] sm:$0xff]
  %v1097 = vld [vmem:[%s3 + $0x128] sm:$0xff]
  %v1098 = vld [vmem:[%s3 + $0x130] sm:$0xff]
  %v1099 = vld [vmem:[%s3 + $0x138] sm:$0xff]
  %v1100 = vld [vmem:[%s3 + $0x140] sm:$0xff]
  %v1101 = vld [vmem:[%s3 + $0x148] sm:$0xff]
  %v1102 = vld [vmem:[%s3 + $0x150] sm:$0xff]
  %v1103 = vld [vmem:[%s3 + $0x158] sm:$0xff]
  %v1104 = vld [vmem:[%s3 + $0x160] sm:$0xff]
  %v1105 = vld [vmem:[%s3 + $0x168] sm:$0xff]
  %v1106 = vld [vmem:[%s3 + $0x170] sm:$0xff]
  %v1107 = vld [vmem:[%s3 + $0x178] sm:$0xff]
  %v1108 = vld [vmem:[%s3 + $0x180] sm:$0xff]
  %v1109 = vld [vmem:[%s3 + $0x188] sm:$0xff]
  %v1111 = vsel %vm110, %v1061, 0
  %v1114 = vsel %vm110, %v1063, 0
  %v1117 = vsel %vm110, %v1065, 0
  %v1120 = vsel %vm110, %v1067, 0
  %v1123 = vsel %vm110, %v1069, 0
  %v1126 = vsel %vm110, %v1071, 0
  %v1129 = vsel %vm110, %v1073, 0
  %v1132 = vsel %vm110, %v1075, 0
  %v1135 = vsel %vm110, %v1077, 0
  %v1138 = vsel %vm110, %v1079, 0
  %v1141 = vsel %vm110, %v1081, 0
  %v1144 = vsel %vm110, %v1083, 0
  %v1147 = vsel %vm110, %v1085, 0
  %v1150 = vsel %vm110, %v1087, 0
  %v1153 = vsel %vm110, %v1089, 0
  %v1156 = vsel %vm110, %v1091, 0
  %v1159 = vsel %vm110, %v1093, 0
  %v1162 = vsel %vm110, %v1095, 0
  %v1165 = vsel %vm110, %v1097, 0
  %v1168 = vsel %vm110, %v1099, 0
  %v1171 = vsel %vm110, %v1101, 0
  %v1174 = vsel %vm110, %v1103, 0
  %v1177 = vsel %vm110, %v1105, 0
  %v1180 = vsel %vm110, %v1107, 0
  %v1183 = vsel %vm110, %v1109, 0
  %1185 = vmatprep.subr.mxu0 0.0
  %1186 = vmatpush1.msra.mxu0 %v56
  %1187 = vmatprep.subr.mxu0 0.0
  %1188 = vmatpush1.msra.mxu0 %v55
  %1189 = vmatprep.subr.mxu0 0.0
  %1190 = vmatpush1.msra.mxu0 %v54
  %1191 = vmatprep.subr.mxu0 0.0
  %1192 = vmatpush1.msra.mxu0 %v53
  %1193 = vmatprep.subr.mxu0 0.0
  %1194 = vmatpush1.msra.mxu0 %v52
  %1195 = vmatprep.subr.mxu0 0.0
  %1196 = vmatpush1.msra.mxu0 %v51
  %1197 = vmatprep.subr.mxu0 0.0
  %1198 = vmatpush1.msra.mxu0 %v50
  %1199 = vmatprep.subr.mxu0 0.0
  %1200 = vmatpush1.msra.mxu0 %v49
  %1201 = vmatprep.subr.mxu0 0.0
  %1202 = vmatpush1.msra.mxu0 %v48
  %1203 = vmatprep.subr.mxu0 0.0
  %1204 = vmatpush1.msra.mxu0 %v47
  %1205 = vmatprep.subr.mxu0 0.0
  %1206 = vmatpush1.msra.mxu0 %v46
  %1207 = vmatprep.subr.mxu0 0.0
  %1208 = vmatpush1.msra.mxu0 %v45
  %1209 = vmatprep.subr.mxu0 0.0
  %1210 = vmatpush1.msra.mxu0 %v44
  %1211 = vmatprep.subr.mxu0 0.0
  %1212 = vmatpush1.msra.mxu0 %v43
  %1213 = vmatprep.subr.mxu0 0.0
  %1214 = vmatpush1.msra.mxu0 %v42
  %1215 = vmatprep.subr.mxu0 0.0
  %1216 = vmatpush1.msra.mxu0 %v41
  %1217 = vmatprep.subr.mxu0 0.0
  %1218 = vmatpush2.msra.mxu0 0.0
  %1219 = vmatprep.subr.mxu0 0.0
  %1220 = vmatpush2.msra.mxu0 0.0
  %1221 = vmatprep.subr.mxu0 0.0
  %1222 = vmatpush2.msra.mxu0 0.0
  %1223 = vmatprep.subr.mxu0 0.0
  %1224 = vmatpush2.msra.mxu0 0.0
  %1225 = vmatprep.subr.mxu0 0.0
  %1226 = vmatpush2.msra.mxu0 0.0
  %1227 = vmatprep.subr.mxu0 0.0
  %1228 = vmatpush2.msra.mxu0 0.0
  %1229 = vmatprep.subr.mxu0 0.0
  %1230 = vmatpush2.msra.mxu0 0.0
  %1231 = vmatprep.subr.mxu0 0.0
  %1232 = vmatpush2.msra.mxu0 0.0
  %1233 = vmatprep.subr.mxu0 0.0
  %1234 = vmatpush2.msra.mxu0 0.0
  %1235 = vmatprep.subr.mxu0 0.0
  %1236 = vmatpush2.msra.mxu0 0.0
  %1237 = vmatprep.subr.mxu0 0.0
  %1238 = vmatpush2.msra.mxu0 0.0
  %1239 = vmatprep.subr.mxu0 0.0
  %1240 = vmatpush2.msra.mxu0 0.0
  %1241 = vmatprep.subr.mxu0 0.0
  %1242 = vmatpush2.msra.mxu0 0.0
  %1243 = vmatprep.subr.mxu0 0.0
  %1244 = vmatpush2.msra.mxu0 %v188
  %1245 = vmatprep.subr.mxu0 0.0
  %1246 = vmatpush2.msra.mxu0 %v58
  %1247 = vmatprep.subr.mxu0 0.0
  %1248 = vmatpush2.msra.mxu0 %v57
  %1249 = vmatprep.mubr.f32.mxu0 %v1111
  %1250 = vmatmul.mubr.f32.gmra.mxu0 %v1060
  %v1251 = vpop.f32.mrf.mxu0
  %v1252 = vadd.f32 0.0, %v1251
  %v1253 = vpop.f32.mrf.mxu0
  %1254 = vmatprep.mubr.f32.mxu0 %v1114
  %1255 = vmatmul.mubr.f32.gmra.mxu0 %v1062
  %v1256 = vpop.f32.mrf.mxu0
  %v1257 = vadd.f32 0.0, %v1256
  %v1258 = vpop.f32.mrf.mxu0
  %1259 = vmatprep.mubr.f32.mxu0 %v1117
  %1260 = vmatmul.mubr.f32.gmra.mxu0 %v1064
  %v1261 = vpop.f32.mrf.mxu0
  %v1262 = vadd.f32 0.0, %v1261
  %v1263 = vpop.f32.mrf.mxu0
  %1264 = vmatprep.mubr.f32.mxu0 %v1120
  %1265 = vmatmul.mubr.f32.gmra.mxu0 %v1066
  %v1266 = vpop.f32.mrf.mxu0
  %v1267 = vadd.f32 0.0, %v1266
  %v1268 = vpop.f32.mrf.mxu0
  %1269 = vmatprep.mubr.f32.mxu0 %v1123
  %1270 = vmatmul.mubr.f32.gmra.mxu0 %v1068
  %v1271 = vpop.f32.mrf.mxu0
  %v1272 = vadd.f32 0.0, %v1271
  %v1273 = vpop.f32.mrf.mxu0
  %1274 = vmatprep.mubr.f32.mxu0 %v1126
  %1275 = vmatmul.mubr.f32.gmra.mxu0 %v1070
  %v1276 = vpop.f32.mrf.mxu0
  %v1277 = vadd.f32 0.0, %v1276
  %v1278 = vpop.f32.mrf.mxu0
  %1279 = vmatprep.mubr.f32.mxu0 %v1129
  %1280 = vmatmul.mubr.f32.gmra.mxu0 %v1072
  %v1281 = vpop.f32.mrf.mxu0
  %v1282 = vadd.f32 0.0, %v1281
  %v1283 = vpop.f32.mrf.mxu0
  %1284 = vmatprep.mubr.f32.mxu0 %v1132
  %1285 = vmatmul.mubr.f32.gmra.mxu0 %v1074
  %v1286 = vpop.f32.mrf.mxu0
  %v1287 = vadd.f32 0.0, %v1286
  %v1288 = vpop.f32.mrf.mxu0
  %1289 = vmatprep.mubr.f32.mxu0 %v1135
  %1290 = vmatmul.mubr.f32.gmra.mxu0 %v1076
  %v1291 = vpop.f32.mrf.mxu0
  %v1292 = vadd.f32 0.0, %v1291
  %v1293 = vpop.f32.mrf.mxu0
  %1294 = vmatprep.mubr.f32.mxu0 %v1138
  %1295 = vmatmul.mubr.f32.gmra.mxu0 %v1078
  %v1296 = vpop.f32.mrf.mxu0
  %v1297 = vadd.f32 0.0, %v1296
  %v1298 = vpop.f32.mrf.mxu0
  %1299 = vmatprep.mubr.f32.mxu0 %v1141
  %1300 = vmatmul.mubr.f32.gmra.mxu0 %v1080
  %v1301 = vpop.f32.mrf.mxu0
  %v1302 = vadd.f32 0.0, %v1301
  %v1303 = vpop.f32.mrf.mxu0
  %1304 = vmatprep.mubr.f32.mxu0 %v1144
  %1305 = vmatmul.mubr.f32.gmra.mxu0 %v1082
  %v1306 = vpop.f32.mrf.mxu0
  %v1307 = vadd.f32 0.0, %v1306
  %v1308 = vpop.f32.mrf.mxu0
  %1309 = vmatprep.mubr.f32.mxu0 %v1147
  %1310 = vmatmul.mubr.f32.gmra.mxu0 %v1084
  %v1311 = vpop.f32.mrf.mxu0
  %v1312 = vadd.f32 0.0, %v1311
  %v1313 = vpop.f32.mrf.mxu0
  %1314 = vmatprep.mubr.f32.mxu0 %v1150
  %1315 = vmatmul.mubr.f32.gmra.mxu0 %v1086
  %v1316 = vpop.f32.mrf.mxu0
  %v1317 = vadd.f32 0.0, %v1316
  %v1318 = vpop.f32.mrf.mxu0
  %1319 = vmatprep.mubr.f32.mxu0 %v1153
  %1320 = vmatmul.mubr.f32.gmra.mxu0 %v1088
  %v1321 = vpop.f32.mrf.mxu0
  %v1322 = vadd.f32 0.0, %v1321
  %v1323 = vpop.f32.mrf.mxu0
  %1324 = vmatprep.mubr.f32.mxu0 %v1156
  %1325 = vmatmul.mubr.f32.gmra.mxu0 %v1090
  %v1326 = vpop.f32.mrf.mxu0
  %v1327 = vadd.f32 0.0, %v1326
  %v1328 = vpop.f32.mrf.mxu0
  %1329 = vmatprep.mubr.f32.mxu0 %v1159
  %1330 = vmatmul.mubr.f32.gmra.mxu0 %v1092
  %v1331 = vpop.f32.mrf.mxu0
  %v1332 = vadd.f32 0.0, %v1331
  %v1333 = vpop.f32.mrf.mxu0
  %1334 = vmatprep.mubr.f32.mxu0 %v1162
  %1335 = vmatmul.mubr.f32.gmra.mxu0 %v1094
  %v1336 = vpop.f32.mrf.mxu0
  %v1337 = vadd.f32 0.0, %v1336
  %v1338 = vpop.f32.mrf.mxu0
  %1339 = vmatprep.mubr.f32.mxu0 %v1165
  %1340 = vmatmul.mubr.f32.gmra.mxu0 %v1096
  %v1341 = vpop.f32.mrf.mxu0
  %v1342 = vadd.f32 0.0, %v1341
  %v1343 = vpop.f32.mrf.mxu0
  %1344 = vmatprep.mubr.f32.mxu0 %v1168
  %1345 = vmatmul.mubr.f32.gmra.mxu0 %v1098
  %v1346 = vpop.f32.mrf.mxu0
  %v1347 = vadd.f32 0.0, %v1346
  %v1348 = vpop.f32.mrf.mxu0
  %1349 = vmatprep.mubr.f32.mxu0 %v1171
  %1350 = vmatmul.mubr.f32.gmra.mxu0 %v1100
  %v1351 = vpop.f32.mrf.mxu0
  %v1352 = vadd.f32 0.0, %v1351
  %v1353 = vpop.f32.mrf.mxu0
  %1354 = vmatprep.mubr.f32.mxu0 %v1174
  %1355 = vmatmul.mubr.f32.gmra.mxu0 %v1102
  %v1356 = vpop.f32.mrf.mxu0
  %v1357 = vadd.f32 0.0, %v1356
  %v1358 = vpop.f32.mrf.mxu0
  %1359 = vmatprep.mubr.f32.mxu0 %v1177
  %1360 = vmatmul.mubr.f32.gmra.mxu0 %v1104
  %v1361 = vpop.f32.mrf.mxu0
  %v1362 = vadd.f32 0.0, %v1361
  %v1363 = vpop.f32.mrf.mxu0
  %1364 = vmatprep.mubr.f32.mxu0 %v1180
  %1365 = vmatmul.mubr.f32.gmra.mxu0 %v1106
  %v1366 = vpop.f32.mrf.mxu0
  %v1367 = vadd.f32 0.0, %v1366
  %v1368 = vpop.f32.mrf.mxu0
  %1369 = vmatprep.mubr.f32.mxu0 %v1183
  %1370 = vmatmul.mubr.f32.gmra.mxu0 %v1108
  %v1371 = vpop.f32.mrf.mxu0
  %v1372 = vadd.f32 0.0, %v1371
  %v1373 = vpop.f32.mrf.mxu0
  %1374 = vdwg.mxu0
  %v1375 = vmax.f32 %v1035, %v1252
  %v1376 = vmax.f32 %v1036, %v1257
  %v1377 = vmax.f32 %v1037, %v1262
  %v1378 = vmax.f32 %v1038, %v1267
  %v1379 = vmax.f32 %v1039, %v1272
  %v1380 = vmax.f32 %v1040, %v1277
  %v1381 = vmax.f32 %v1041, %v1282
  %v1382 = vmax.f32 %v1042, %v1287
  %v1383 = vmax.f32 %v1043, %v1292
  %v1384 = vmax.f32 %v1044, %v1297
  %v1385 = vmax.f32 %v1045, %v1302
  %v1386 = vmax.f32 %v1046, %v1307
  %v1387 = vmax.f32 %v1047, %v1312
  %v1388 = vmax.f32 %v1048, %v1317
  %v1389 = vmax.f32 %v1049, %v1322
  %v1390 = vmax.f32 %v1050, %v1327
  %v1391 = vmax.f32 %v1051, %v1332
  %v1392 = vmax.f32 %v1052, %v1337
  %v1393 = vmax.f32 %v1053, %v1342
  %v1394 = vmax.f32 %v1054, %v1347
  %v1395 = vmax.f32 %v1055, %v1352
  %v1396 = vmax.f32 %v1056, %v1357
  %v1397 = vmax.f32 %v1057, %v1362
  %v1398 = vmax.f32 %v1058, %v1367
  %v1399 = vmax.f32 %v1059, %v1372
  %v1400 = vld [vmem:[%s5] sm:$0x1]
  %v1402 = vlaneseq
  %v1403 = vshrl.u32 %v1402, 7
  %v1404 = vsub.s32 0, %v1403
  %v1405 = vrot.slane %v1400, %v1404
  %v1407 = vadd.f32 %v1375, %v1405
  %v1408 = vadd.f32 %v1376, %v1405
  %v1409 = vadd.f32 %v1377, %v1405
  %v1410 = vadd.f32 %v1378, %v1405
  %v1411 = vadd.f32 %v1379, %v1405
  %v1412 = vadd.f32 %v1380, %v1405
  %v1413 = vadd.f32 %v1381, %v1405
  %v1414 = vadd.f32 %v1382, %v1405
  %v1415 = vadd.f32 %v1383, %v1405
  %v1416 = vadd.f32 %v1384, %v1405
  %v1417 = vadd.f32 %v1385, %v1405
  %v1418 = vadd.f32 %v1386, %v1405
  %v1419 = vadd.f32 %v1387, %v1405
  %v1420 = vadd.f32 %v1388, %v1405
  %v1421 = vadd.f32 %v1389, %v1405
  %v1422 = vadd.f32 %v1390, %v1405
  %v1423 = vadd.f32 %v1391, %v1405
  %v1424 = vadd.f32 %v1392, %v1405
  %v1425 = vadd.f32 %v1393, %v1405
  %v1426 = vadd.f32 %v1394, %v1405
  %v1427 = vadd.f32 %v1395, %v1405
  %v1428 = vadd.f32 %v1396, %v1405
  %v1429 = vadd.f32 %v1397, %v1405
  %v1430 = vadd.f32 %v1398, %v1405
  %v1431 = vadd.f32 %v1399, %v1405
  %v1432 = vmax.f32 %v1407, 0.0
  %v1433 = vmax.f32 %v1408, 0.0
  %v1434 = vmax.f32 %v1409, 0.0
  %v1435 = vmax.f32 %v1410, 0.0
  %v1436 = vmax.f32 %v1411, 0.0
  %v1437 = vmax.f32 %v1412, 0.0
  %v1438 = vmax.f32 %v1413, 0.0
  %v1439 = vmax.f32 %v1414, 0.0
  %v1440 = vmax.f32 %v1415, 0.0
  %v1441 = vmax.f32 %v1416, 0.0
  %v1442 = vmax.f32 %v1417, 0.0
  %v1443 = vmax.f32 %v1418, 0.0
  %v1444 = vmax.f32 %v1419, 0.0
  %v1445 = vmax.f32 %v1420, 0.0
  %v1446 = vmax.f32 %v1421, 0.0
  %v1447 = vmax.f32 %v1422, 0.0
  %v1448 = vmax.f32 %v1423, 0.0
  %v1449 = vmax.f32 %v1424, 0.0
  %v1450 = vmax.f32 %v1425, 0.0
  %v1451 = vmax.f32 %v1426, 0.0
  %v1452 = vmax.f32 %v1427, 0.0
  %v1453 = vmax.f32 %v1428, 0.0
  %v1454 = vmax.f32 %v1429, 0.0
  %v1455 = vmax.f32 %v1430, 0.0
  %v1456 = vmax.f32 %v1431, 0.0
  %1457 = vst [vmem:[#allocation2] sm:$0xff] %v1432
  %1458 = vst [vmem:[#allocation2 + $0x8] sm:$0xff] %v1433
  %1459 = vst [vmem:[#allocation2 + $0x10] sm:$0xff] %v1434
  %1460 = vst [vmem:[#allocation2 + $0x18] sm:$0xff] %v1435
  %1461 = vst [vmem:[#allocation2 + $0x20] sm:$0xff] %v1436
  %1462 = vst [vmem:[#allocation2 + $0x28] sm:$0xff] %v1437
  %1463 = vst [vmem:[#allocation2 + $0x30] sm:$0xff] %v1438
  %1464 = vst [vmem:[#allocation2 + $0x38] sm:$0xff] %v1439
  %1465 = vst [vmem:[#allocation2 + $0x40] sm:$0xff] %v1440
  %1466 = vst [vmem:[#allocation2 + $0x48] sm:$0xff] %v1441
  %1467 = vst [vmem:[#allocation2 + $0x50] sm:$0xff] %v1442
  %1468 = vst [vmem:[#allocation2 + $0x58] sm:$0xff] %v1443
  %1469 = vst [vmem:[#allocation2 + $0x60] sm:$0xff] %v1444
  %1470 = vst [vmem:[#allocation2 + $0x68] sm:$0xff] %v1445
  %1471 = vst [vmem:[#allocation2 + $0x70] sm:$0xff] %v1446
  %1472 = vst [vmem:[#allocation2 + $0x78] sm:$0xff] %v1447
  %1473 = vst [vmem:[#allocation2 + $0x80] sm:$0xff] %v1448
  %1474 = vst [vmem:[#allocation2 + $0x88] sm:$0xff] %v1449
  %1475 = vst [vmem:[#allocation2 + $0x90] sm:$0xff] %v1450
  %1476 = vst [vmem:[#allocation2 + $0x98] sm:$0xff] %v1451
  %1477 = vst [vmem:[#allocation2 + $0xa0] sm:$0xff] %v1452
  %1478 = vst [vmem:[#allocation2 + $0xa8] sm:$0xff] %v1453
  %1479 = vst [vmem:[#allocation2 + $0xb0] sm:$0xff] %v1454
  %1480 = vst [vmem:[#allocation2 + $0xb8] sm:$0xff] %v1455
  %1481 = vst [vmem:[#allocation2 + $0xc0] sm:$0xff] %v1456
  %v1482 = vld [vmem:[#allocation2] sm:$0xff]
  %v1483 = vld [vmem:[%s6] sm:$0xff]
  %v1484 = vld [vmem:[%s6 + $0x8] sm:$0xff]
  %v1485 = vld [vmem:[%s6 + $0x10] sm:$0xff]
  %v1486 = vld [vmem:[%s6 + $0x18] sm:$0xff]
  %v1487 = vld [vmem:[%s6 + $0x20] sm:$0xff]
  %v1488 = vld [vmem:[%s6 + $0x28] sm:$0xff]
  %v1489 = vld [vmem:[%s6 + $0x30] sm:$0xff]
  %v1490 = vld [vmem:[%s6 + $0x38] sm:$0xff]
  %v1491 = vld [vmem:[%s6 + $0x40] sm:$0xff]
  %v1492 = vld [vmem:[%s6 + $0x48] sm:$0xff]
  %v1493 = vld [vmem:[%s6 + $0x50] sm:$0xff]
  %v1494 = vld [vmem:[%s6 + $0x58] sm:$0xff]
  %v1495 = vld [vmem:[%s6 + $0x60] sm:$0xff]
  %v1496 = vld [vmem:[%s6 + $0x68] sm:$0xff]
  %v1497 = vld [vmem:[%s6 + $0x70] sm:$0xff]
  %v1498 = vld [vmem:[%s6 + $0x78] sm:$0xff]
  %v1499 = vld [vmem:[#allocation2 + $0x8] sm:$0xff]
  %s1500 = scalar_lea.vmem %s6, 128
  %v1501 = vld [vmem:[%s1500] sm:$0xff]
  %v1502 = vld [vmem:[%s1500 + $0x8] sm:$0xff]
  %v1503 = vld [vmem:[%s1500 + $0x10] sm:$0xff]
  %v1504 = vld [vmem:[%s1500 + $0x18] sm:$0xff]
  %v1505 = vld [vmem:[%s1500 + $0x20] sm:$0xff]
  %v1506 = vld [vmem:[%s1500 + $0x28] sm:$0xff]
  %v1507 = vld [vmem:[%s1500 + $0x30] sm:$0xff]
  %v1508 = vld [vmem:[%s1500 + $0x38] sm:$0xff]
  %v1509 = vld [vmem:[%s1500 + $0x40] sm:$0xff]
  %v1510 = vld [vmem:[%s1500 + $0x48] sm:$0xff]
  %v1511 = vld [vmem:[%s1500 + $0x50] sm:$0xff]
  %v1512 = vld [vmem:[%s1500 + $0x58] sm:$0xff]
  %v1513 = vld [vmem:[%s1500 + $0x60] sm:$0xff]
  %v1514 = vld [vmem:[%s1500 + $0x68] sm:$0xff]
  %v1515 = vld [vmem:[%s1500 + $0x70] sm:$0xff]
  %v1516 = vld [vmem:[%s1500 + $0x78] sm:$0xff]
  %1517 = vmatprep.subr.mxu0 0.0
  %1518 = vmatpush1.msra.mxu0 %v1516
  %1519 = vmatprep.subr.mxu0 0.0
  %1520 = vmatpush1.msra.mxu0 %v1515
  %1521 = vmatprep.subr.mxu0 0.0
  %1522 = vmatpush1.msra.mxu0 %v1514
  %1523 = vmatprep.subr.mxu0 0.0
  %1524 = vmatpush1.msra.mxu0 %v1513
  %1525 = vmatprep.subr.mxu0 0.0
  %1526 = vmatpush1.msra.mxu0 %v1512
  %1527 = vmatprep.subr.mxu0 0.0
  %1528 = vmatpush1.msra.mxu0 %v1511
  %1529 = vmatprep.subr.mxu0 0.0
  %1530 = vmatpush1.msra.mxu0 %v1510
  %1531 = vmatprep.subr.mxu0 0.0
  %1532 = vmatpush1.msra.mxu0 %v1509
  %1533 = vmatprep.subr.mxu0 0.0
  %1534 = vmatpush1.msra.mxu0 %v1508
  %1535 = vmatprep.subr.mxu0 0.0
  %1536 = vmatpush1.msra.mxu0 %v1507
  %1537 = vmatprep.subr.mxu0 0.0
  %1538 = vmatpush1.msra.mxu0 %v1506
  %1539 = vmatprep.subr.mxu0 0.0
  %1540 = vmatpush1.msra.mxu0 %v1505
  %1541 = vmatprep.subr.mxu0 0.0
  %1542 = vmatpush1.msra.mxu0 %v1504
  %1543 = vmatprep.subr.mxu0 0.0
  %1544 = vmatpush1.msra.mxu0 %v1503
  %1545 = vmatprep.subr.mxu0 0.0
  %1546 = vmatpush1.msra.mxu0 %v1502
  %1547 = vmatprep.subr.mxu0 0.0
  %1548 = vmatpush1.msra.mxu0 %v1501
  %1549 = vmatprep.subr.mxu0 0.0
  %1550 = vmatpush2.msra.mxu0 0.0
  %1551 = vmatprep.subr.mxu0 0.0
  %1552 = vmatpush2.msra.mxu0 0.0
  %1553 = vmatprep.subr.mxu0 0.0
  %1554 = vmatpush2.msra.mxu0 0.0
  %1555 = vmatprep.subr.mxu0 0.0
  %1556 = vmatpush2.msra.mxu0 0.0
  %1557 = vmatprep.subr.mxu0 0.0
  %1558 = vmatpush2.msra.mxu0 0.0
  %1559 = vmatprep.subr.mxu0 0.0
  %1560 = vmatpush2.msra.mxu0 0.0
  %1561 = vmatprep.subr.mxu0 0.0
  %1562 = vmatpush2.msra.mxu0 0.0
  %1563 = vmatprep.subr.mxu0 0.0
  %1564 = vmatpush2.msra.mxu0 0.0
  %1565 = vmatprep.subr.mxu0 0.0
  %1566 = vmatpush2.msra.mxu0 0.0
  %1567 = vmatprep.subr.mxu0 0.0
  %1568 = vmatpush2.msra.mxu0 0.0
  %1569 = vmatprep.subr.mxu0 0.0
  %1570 = vmatpush2.msra.mxu0 0.0
  %1571 = vmatprep.subr.mxu0 0.0
  %1572 = vmatpush2.msra.mxu0 0.0
  %1573 = vmatprep.subr.mxu0 0.0
  %1574 = vmatpush2.msra.mxu0 0.0
  %1575 = vmatprep.subr.mxu0 0.0
  %1576 = vmatpush2.msra.mxu0 0.0
  %1577 = vmatprep.subr.mxu0 0.0
  %1578 = vmatpush2.msra.mxu0 0.0
  %1579 = vmatprep.subr.mxu0 0.0
  %1580 = vmatpush2.msra.mxu0 0.0
  %1581 = vmatprep.mubr.f32.mxu0 0.0
  %1582 = vmatmul.mubr.f32.gmra.mxu0 %v1499
  %v1583 = vpop.f32.mrf.mxu0
  %v1584 = vadd.f32 0.0, %v1583
  %v1585 = vpop.f32.mrf.mxu0
  %1586 = vdwg.mxu0
  %1587 = vmatprep.subr.mxu0 0.0
  %1588 = vmatpush1.msra.mxu0 %v1498
  %1589 = vmatprep.subr.mxu0 0.0
  %1590 = vmatpush1.msra.mxu0 %v1497
  %1591 = vmatprep.subr.mxu0 0.0
  %1592 = vmatpush1.msra.mxu0 %v1496
  %1593 = vmatprep.subr.mxu0 0.0
  %1594 = vmatpush1.msra.mxu0 %v1495
  %1595 = vmatprep.subr.mxu0 0.0
  %1596 = vmatpush1.msra.mxu0 %v1494
  %1597 = vmatprep.subr.mxu0 0.0
  %1598 = vmatpush1.msra.mxu0 %v1493
  %1599 = vmatprep.subr.mxu0 0.0
  %1600 = vmatpush1.msra.mxu0 %v1492
  %1601 = vmatprep.subr.mxu0 0.0
  %1602 = vmatpush1.msra.mxu0 %v1491
  %1603 = vmatprep.subr.mxu0 0.0
  %1604 = vmatpush1.msra.mxu0 %v1490
  %1605 = vmatprep.subr.mxu0 0.0
  %1606 = vmatpush1.msra.mxu0 %v1489
  %1607 = vmatprep.subr.mxu0 0.0
  %1608 = vmatpush1.msra.mxu0 %v1488
  %1609 = vmatprep.subr.mxu0 0.0
  %1610 = vmatpush1.msra.mxu0 %v1487
  %1611 = vmatprep.subr.mxu0 0.0
  %1612 = vmatpush1.msra.mxu0 %v1486
  %1613 = vmatprep.subr.mxu0 0.0
  %1614 = vmatpush1.msra.mxu0 %v1485
  %1615 = vmatprep.subr.mxu0 0.0
  %1616 = vmatpush1.msra.mxu0 %v1484
  %1617 = vmatprep.subr.mxu0 0.0
  %1618 = vmatpush1.msra.mxu0 %v1483
  %1619 = vmatprep.subr.mxu0 0.0
  %1620 = vmatpush2.msra.mxu0 0.0
  %1621 = vmatprep.subr.mxu0 0.0
  %1622 = vmatpush2.msra.mxu0 0.0
  %1623 = vmatprep.subr.mxu0 0.0
  %1624 = vmatpush2.msra.mxu0 0.0
  %1625 = vmatprep.subr.mxu0 0.0
  %1626 = vmatpush2.msra.mxu0 0.0
  %1627 = vmatprep.subr.mxu0 0.0
  %1628 = vmatpush2.msra.mxu0 0.0
  %1629 = vmatprep.subr.mxu0 0.0
  %1630 = vmatpush2.msra.mxu0 0.0
  %1631 = vmatprep.subr.mxu0 0.0
  %1632 = vmatpush2.msra.mxu0 0.0
  %1633 = vmatprep.subr.mxu0 0.0
  %1634 = vmatpush2.msra.mxu0 0.0
  %1635 = vmatprep.subr.mxu0 0.0
  %1636 = vmatpush2.msra.mxu0 0.0
  %1637 = vmatprep.subr.mxu0 0.0
  %1638 = vmatpush2.msra.mxu0 0.0
  %1639 = vmatprep.subr.mxu0 0.0
  %1640 = vmatpush2.msra.mxu0 0.0
  %1641 = vmatprep.subr.mxu0 0.0
  %1642 = vmatpush2.msra.mxu0 0.0
  %1643 = vmatprep.subr.mxu0 0.0
  %1644 = vmatpush2.msra.mxu0 0.0
  %1645 = vmatprep.subr.mxu0 0.0
  %1646 = vmatpush2.msra.mxu0 0.0
  %1647 = vmatprep.subr.mxu0 0.0
  %1648 = vmatpush2.msra.mxu0 0.0
  %1649 = vmatprep.subr.mxu0 0.0
  %1650 = vmatpush2.msra.mxu0 0.0
  %1651 = vmatprep.mubr.f32.mxu0 0.0
  %1652 = vmatmul.mubr.f32.gmra.mxu0 %v1482
  %v1653 = vpop.f32.mrf.mxu0
  %v1654 = vadd.f32 %v1584, %v1653
  %v1655 = vpop.f32.mrf.mxu0
  %1656 = vdwg.mxu0
  %v1657 = vld [vmem:[#allocation2 + $0x10] sm:$0xff]
  %s1658 = scalar_lea.vmem %s6, 256
  %v1659 = vld [vmem:[%s1658] sm:$0xff]
  %v1660 = vld [vmem:[%s1658 + $0x8] sm:$0xff]
  %v1661 = vld [vmem:[%s1658 + $0x10] sm:$0xff]
  %v1662 = vld [vmem:[%s1658 + $0x18] sm:$0xff]
  %v1663 = vld [vmem:[%s1658 + $0x20] sm:$0xff]
  %v1664 = vld [vmem:[%s1658 + $0x28] sm:$0xff]
  %v1665 = vld [vmem:[%s1658 + $0x30] sm:$0xff]
  %v1666 = vld [vmem:[%s1658 + $0x38] sm:$0xff]
  %v1667 = vld [vmem:[%s1658 + $0x40] sm:$0xff]
  %v1668 = vld [vmem:[%s1658 + $0x48] sm:$0xff]
  %v1669 = vld [vmem:[%s1658 + $0x50] sm:$0xff]
  %v1670 = vld [vmem:[%s1658 + $0x58] sm:$0xff]
  %v1671 = vld [vmem:[%s1658 + $0x60] sm:$0xff]
  %v1672 = vld [vmem:[%s1658 + $0x68] sm:$0xff]
  %v1673 = vld [vmem:[%s1658 + $0x70] sm:$0xff]
  %v1674 = vld [vmem:[%s1658 + $0x78] sm:$0xff]
  %1675 = vmatprep.subr.mxu0 0.0
  %1676 = vmatpush1.msra.mxu0 %v1674
  %1677 = vmatprep.subr.mxu0 0.0
  %1678 = vmatpush1.msra.mxu0 %v1673
  %1679 = vmatprep.subr.mxu0 0.0
  %1680 = vmatpush1.msra.mxu0 %v1672
  %1681 = vmatprep.subr.mxu0 0.0
  %1682 = vmatpush1.msra.mxu0 %v1671
  %1683 = vmatprep.subr.mxu0 0.0
  %1684 = vmatpush1.msra.mxu0 %v1670
  %1685 = vmatprep.subr.mxu0 0.0
  %1686 = vmatpush1.msra.mxu0 %v1669
  %1687 = vmatprep.subr.mxu0 0.0
  %1688 = vmatpush1.msra.mxu0 %v1668
  %1689 = vmatprep.subr.mxu0 0.0
  %1690 = vmatpush1.msra.mxu0 %v1667
  %1691 = vmatprep.subr.mxu0 0.0
  %1692 = vmatpush1.msra.mxu0 %v1666
  %1693 = vmatprep.subr.mxu0 0.0
  %1694 = vmatpush1.msra.mxu0 %v1665
  %1695 = vmatprep.subr.mxu0 0.0
  %1696 = vmatpush1.msra.mxu0 %v1664
  %1697 = vmatprep.subr.mxu0 0.0
  %1698 = vmatpush1.msra.mxu0 %v1663
  %1699 = vmatprep.subr.mxu0 0.0
  %1700 = vmatpush1.msra.mxu0 %v1662
  %1701 = vmatprep.subr.mxu0 0.0
  %1702 = vmatpush1.msra.mxu0 %v1661
  %1703 = vmatprep.subr.mxu0 0.0
  %1704 = vmatpush1.msra.mxu0 %v1660
  %1705 = vmatprep.subr.mxu0 0.0
  %1706 = vmatpush1.msra.mxu0 %v1659
  %1707 = vmatprep.subr.mxu0 0.0
  %1708 = vmatpush2.msra.mxu0 0.0
  %1709 = vmatprep.subr.mxu0 0.0
  %1710 = vmatpush2.msra.mxu0 0.0
  %1711 = vmatprep.subr.mxu0 0.0
  %1712 = vmatpush2.msra.mxu0 0.0
  %1713 = vmatprep.subr.mxu0 0.0
  %1714 = vmatpush2.msra.mxu0 0.0
  %1715 = vmatprep.subr.mxu0 0.0
  %1716 = vmatpush2.msra.mxu0 0.0
  %1717 = vmatprep.subr.mxu0 0.0
  %1718 = vmatpush2.msra.mxu0 0.0
  %1719 = vmatprep.subr.mxu0 0.0
  %1720 = vmatpush2.msra.mxu0 0.0
  %1721 = vmatprep.subr.mxu0 0.0
  %1722 = vmatpush2.msra.mxu0 0.0
  %1723 = vmatprep.subr.mxu0 0.0
  %1724 = vmatpush2.msra.mxu0 0.0
  %1725 = vmatprep.subr.mxu0 0.0
  %1726 = vmatpush2.msra.mxu0 0.0
  %1727 = vmatprep.subr.mxu0 0.0
  %1728 = vmatpush2.msra.mxu0 0.0
  %1729 = vmatprep.subr.mxu0 0.0
  %1730 = vmatpush2.msra.mxu0 0.0
  %1731 = vmatprep.subr.mxu0 0.0
  %1732 = vmatpush2.msra.mxu0 0.0
  %1733 = vmatprep.subr.mxu0 0.0
  %1734 = vmatpush2.msra.mxu0 0.0
  %1735 = vmatprep.subr.mxu0 0.0
  %1736 = vmatpush2.msra.mxu0 0.0
  %1737 = vmatprep.subr.mxu0 0.0
  %1738 = vmatpush2.msra.mxu0 0.0
  %1739 = vmatprep.mubr.f32.mxu0 0.0
  %1740 = vmatmul.mubr.f32.gmra.mxu0 %v1657
  %v1741 = vpop.f32.mrf.mxu0
  %v1742 = vadd.f32 0.0, %v1741
  %v1743 = vpop.f32.mrf.mxu0
  %1744 = vdwg.mxu0
  %v1745 = vadd.f32 %v1654, %v1742
  %v1746 = vld [vmem:[#allocation2 + $0x18] sm:$0xff]
  %s1747 = scalar_lea.vmem %s6, 384
  %v1748 = vld [vmem:[%s1747] sm:$0xff]
  %v1749 = vld [vmem:[%s1747 + $0x8] sm:$0xff]
  %v1750 = vld [vmem:[%s1747 + $0x10] sm:$0xff]
  %v1751 = vld [vmem:[%s1747 + $0x18] sm:$0xff]
  %v1752 = vld [vmem:[%s1747 + $0x20] sm:$0xff]
  %v1753 = vld [vmem:[%s1747 + $0x28] sm:$0xff]
  %v1754 = vld [vmem:[%s1747 + $0x30] sm:$0xff]
  %v1755 = vld [vmem:[%s1747 + $0x38] sm:$0xff]
  %v1756 = vld [vmem:[%s1747 + $0x40] sm:$0xff]
  %v1757 = vld [vmem:[%s1747 + $0x48] sm:$0xff]
  %v1758 = vld [vmem:[%s1747 + $0x50] sm:$0xff]
  %v1759 = vld [vmem:[%s1747 + $0x58] sm:$0xff]
  %v1760 = vld [vmem:[%s1747 + $0x60] sm:$0xff]
  %v1761 = vld [vmem:[%s1747 + $0x68] sm:$0xff]
  %v1762 = vld [vmem:[%s1747 + $0x70] sm:$0xff]
  %v1763 = vld [vmem:[%s1747 + $0x78] sm:$0xff]
  %1764 = vmatprep.subr.mxu0 0.0
  %1765 = vmatpush1.msra.mxu0 %v1763
  %1766 = vmatprep.subr.mxu0 0.0
  %1767 = vmatpush1.msra.mxu0 %v1762
  %1768 = vmatprep.subr.mxu0 0.0
  %1769 = vmatpush1.msra.mxu0 %v1761
  %1770 = vmatprep.subr.mxu0 0.0
  %1771 = vmatpush1.msra.mxu0 %v1760
  %1772 = vmatprep.subr.mxu0 0.0
  %1773 = vmatpush1.msra.mxu0 %v1759
  %1774 = vmatprep.subr.mxu0 0.0
  %1775 = vmatpush1.msra.mxu0 %v1758
  %1776 = vmatprep.subr.mxu0 0.0
  %1777 = vmatpush1.msra.mxu0 %v1757
  %1778 = vmatprep.subr.mxu0 0.0
  %1779 = vmatpush1.msra.mxu0 %v1756
  %1780 = vmatprep.subr.mxu0 0.0
  %1781 = vmatpush1.msra.mxu0 %v1755
  %1782 = vmatprep.subr.mxu0 0.0
  %1783 = vmatpush1.msra.mxu0 %v1754
  %1784 = vmatprep.subr.mxu0 0.0
  %1785 = vmatpush1.msra.mxu0 %v1753
  %1786 = vmatprep.subr.mxu0 0.0
  %1787 = vmatpush1.msra.mxu0 %v1752
  %1788 = vmatprep.subr.mxu0 0.0
  %1789 = vmatpush1.msra.mxu0 %v1751
  %1790 = vmatprep.subr.mxu0 0.0
  %1791 = vmatpush1.msra.mxu0 %v1750
  %1792 = vmatprep.subr.mxu0 0.0
  %1793 = vmatpush1.msra.mxu0 %v1749
  %1794 = vmatprep.subr.mxu0 0.0
  %1795 = vmatpush1.msra.mxu0 %v1748
  %1796 = vmatprep.subr.mxu0 0.0
  %1797 = vmatpush2.msra.mxu0 0.0
  %1798 = vmatprep.subr.mxu0 0.0
  %1799 = vmatpush2.msra.mxu0 0.0
  %1800 = vmatprep.subr.mxu0 0.0
  %1801 = vmatpush2.msra.mxu0 0.0
  %1802 = vmatprep.subr.mxu0 0.0
  %1803 = vmatpush2.msra.mxu0 0.0
  %1804 = vmatprep.subr.mxu0 0.0
  %1805 = vmatpush2.msra.mxu0 0.0
  %1806 = vmatprep.subr.mxu0 0.0
  %1807 = vmatpush2.msra.mxu0 0.0
  %1808 = vmatprep.subr.mxu0 0.0
  %1809 = vmatpush2.msra.mxu0 0.0
  %1810 = vmatprep.subr.mxu0 0.0
  %1811 = vmatpush2.msra.mxu0 0.0
  %1812 = vmatprep.subr.mxu0 0.0
  %1813 = vmatpush2.msra.mxu0 0.0
  %1814 = vmatprep.subr.mxu0 0.0
  %1815 = vmatpush2.msra.mxu0 0.0
  %1816 = vmatprep.subr.mxu0 0.0
  %1817 = vmatpush2.msra.mxu0 0.0
  %1818 = vmatprep.subr.mxu0 0.0
  %1819 = vmatpush2.msra.mxu0 0.0
  %1820 = vmatprep.subr.mxu0 0.0
  %1821 = vmatpush2.msra.mxu0 0.0
  %1822 = vmatprep.subr.mxu0 0.0
  %1823 = vmatpush2.msra.mxu0 0.0
  %1824 = vmatprep.subr.mxu0 0.0
  %1825 = vmatpush2.msra.mxu0 0.0
  %1826 = vmatprep.subr.mxu0 0.0
  %1827 = vmatpush2.msra.mxu0 0.0
  %1828 = vmatprep.mubr.f32.mxu0 0.0
  %1829 = vmatmul.mubr.f32.gmra.mxu0 %v1746
  %v1830 = vpop.f32.mrf.mxu0
  %v1831 = vadd.f32 0.0, %v1830
  %v1832 = vpop.f32.mrf.mxu0
  %1833 = vdwg.mxu0
  %v1834 = vadd.f32 %v1745, %v1831
  %v1835 = vld [vmem:[#allocation2 + $0x20] sm:$0xff]
  %s1836 = scalar_lea.vmem %s6, 512
  %v1837 = vld [vmem:[%s1836] sm:$0xff]
  %v1838 = vld [vmem:[%s1836 + $0x8] sm:$0xff]
  %v1839 = vld [vmem:[%s1836 + $0x10] sm:$0xff]
  %v1840 = vld [vmem:[%s1836 + $0x18] sm:$0xff]
  %v1841 = vld [vmem:[%s1836 + $0x20] sm:$0xff]
  %v1842 = vld [vmem:[%s1836 + $0x28] sm:$0xff]
  %v1843 = vld [vmem:[%s1836 + $0x30] sm:$0xff]
  %v1844 = vld [vmem:[%s1836 + $0x38] sm:$0xff]
  %v1845 = vld [vmem:[%s1836 + $0x40] sm:$0xff]
  %v1846 = vld [vmem:[%s1836 + $0x48] sm:$0xff]
  %v1847 = vld [vmem:[%s1836 + $0x50] sm:$0xff]
  %v1848 = vld [vmem:[%s1836 + $0x58] sm:$0xff]
  %v1849 = vld [vmem:[%s1836 + $0x60] sm:$0xff]
  %v1850 = vld [vmem:[%s1836 + $0x68] sm:$0xff]
  %v1851 = vld [vmem:[%s1836 + $0x70] sm:$0xff]
  %v1852 = vld [vmem:[%s1836 + $0x78] sm:$0xff]
  %1853 = vmatprep.subr.mxu0 0.0
  %1854 = vmatpush1.msra.mxu0 %v1852
  %1855 = vmatprep.subr.mxu0 0.0
  %1856 = vmatpush1.msra.mxu0 %v1851
  %1857 = vmatprep.subr.mxu0 0.0
  %1858 = vmatpush1.msra.mxu0 %v1850
  %1859 = vmatprep.subr.mxu0 0.0
  %1860 = vmatpush1.msra.mxu0 %v1849
  %1861 = vmatprep.subr.mxu0 0.0
  %1862 = vmatpush1.msra.mxu0 %v1848
  %1863 = vmatprep.subr.mxu0 0.0
  %1864 = vmatpush1.msra.mxu0 %v1847
  %1865 = vmatprep.subr.mxu0 0.0
  %1866 = vmatpush1.msra.mxu0 %v1846
  %1867 = vmatprep.subr.mxu0 0.0
  %1868 = vmatpush1.msra.mxu0 %v1845
  %1869 = vmatprep.subr.mxu0 0.0
  %1870 = vmatpush1.msra.mxu0 %v1844
  %1871 = vmatprep.subr.mxu0 0.0
  %1872 = vmatpush1.msra.mxu0 %v1843
  %1873 = vmatprep.subr.mxu0 0.0
  %1874 = vmatpush1.msra.mxu0 %v1842
  %1875 = vmatprep.subr.mxu0 0.0
  %1876 = vmatpush1.msra.mxu0 %v1841
  %1877 = vmatprep.subr.mxu0 0.0
  %1878 = vmatpush1.msra.mxu0 %v1840
  %1879 = vmatprep.subr.mxu0 0.0
  %1880 = vmatpush1.msra.mxu0 %v1839
  %1881 = vmatprep.subr.mxu0 0.0
  %1882 = vmatpush1.msra.mxu0 %v1838
  %1883 = vmatprep.subr.mxu0 0.0
  %1884 = vmatpush1.msra.mxu0 %v1837
  %1885 = vmatprep.subr.mxu0 0.0
  %1886 = vmatpush2.msra.mxu0 0.0
  %1887 = vmatprep.subr.mxu0 0.0
  %1888 = vmatpush2.msra.mxu0 0.0
  %1889 = vmatprep.subr.mxu0 0.0
  %1890 = vmatpush2.msra.mxu0 0.0
  %1891 = vmatprep.subr.mxu0 0.0
  %1892 = vmatpush2.msra.mxu0 0.0
  %1893 = vmatprep.subr.mxu0 0.0
  %1894 = vmatpush2.msra.mxu0 0.0
  %1895 = vmatprep.subr.mxu0 0.0
  %1896 = vmatpush2.msra.mxu0 0.0
  %1897 = vmatprep.subr.mxu0 0.0
  %1898 = vmatpush2.msra.mxu0 0.0
  %1899 = vmatprep.subr.mxu0 0.0
  %1900 = vmatpush2.msra.mxu0 0.0
  %1901 = vmatprep.subr.mxu0 0.0
  %1902 = vmatpush2.msra.mxu0 0.0
  %1903 = vmatprep.subr.mxu0 0.0
  %1904 = vmatpush2.msra.mxu0 0.0
  %1905 = vmatprep.subr.mxu0 0.0
  %1906 = vmatpush2.msra.mxu0 0.0
  %1907 = vmatprep.subr.mxu0 0.0
  %1908 = vmatpush2.msra.mxu0 0.0
  %1909 = vmatprep.subr.mxu0 0.0
  %1910 = vmatpush2.msra.mxu0 0.0
  %1911 = vmatprep.subr.mxu0 0.0
  %1912 = vmatpush2.msra.mxu0 0.0
  %1913 = vmatprep.subr.mxu0 0.0
  %1914 = vmatpush2.msra.mxu0 0.0
  %1915 = vmatprep.subr.mxu0 0.0
  %1916 = vmatpush2.msra.mxu0 0.0
  %1917 = vmatprep.mubr.f32.mxu0 0.0
  %1918 = vmatmul.mubr.f32.gmra.mxu0 %v1835
  %v1919 = vpop.f32.mrf.mxu0
  %v1920 = vadd.f32 0.0, %v1919
  %v1921 = vpop.f32.mrf.mxu0
  %1922 = vdwg.mxu0
  %v1923 = vadd.f32 %v1834, %v1920
  %v1924 = vld [vmem:[#allocation2 + $0x28] sm:$0xff]
  %s1925 = scalar_lea.vmem %s6, 640
  %v1926 = vld [vmem:[%s1925] sm:$0xff]
  %v1927 = vld [vmem:[%s1925 + $0x8] sm:$0xff]
  %v1928 = vld [vmem:[%s1925 + $0x10] sm:$0xff]
  %v1929 = vld [vmem:[%s1925 + $0x18] sm:$0xff]
  %v1930 = vld [vmem:[%s1925 + $0x20] sm:$0xff]
  %v1931 = vld [vmem:[%s1925 + $0x28] sm:$0xff]
  %v1932 = vld [vmem:[%s1925 + $0x30] sm:$0xff]
  %v1933 = vld [vmem:[%s1925 + $0x38] sm:$0xff]
  %v1934 = vld [vmem:[%s1925 + $0x40] sm:$0xff]
  %v1935 = vld [vmem:[%s1925 + $0x48] sm:$0xff]
  %v1936 = vld [vmem:[%s1925 + $0x50] sm:$0xff]
  %v1937 = vld [vmem:[%s1925 + $0x58] sm:$0xff]
  %v1938 = vld [vmem:[%s1925 + $0x60] sm:$0xff]
  %v1939 = vld [vmem:[%s1925 + $0x68] sm:$0xff]
  %v1940 = vld [vmem:[%s1925 + $0x70] sm:$0xff]
  %v1941 = vld [vmem:[%s1925 + $0x78] sm:$0xff]
  %1942 = vmatprep.subr.mxu0 0.0
  %1943 = vmatpush1.msra.mxu0 %v1941
  %1944 = vmatprep.subr.mxu0 0.0
  %1945 = vmatpush1.msra.mxu0 %v1940
  %1946 = vmatprep.subr.mxu0 0.0
  %1947 = vmatpush1.msra.mxu0 %v1939
  %1948 = vmatprep.subr.mxu0 0.0
  %1949 = vmatpush1.msra.mxu0 %v1938
  %1950 = vmatprep.subr.mxu0 0.0
  %1951 = vmatpush1.msra.mxu0 %v1937
  %1952 = vmatprep.subr.mxu0 0.0
  %1953 = vmatpush1.msra.mxu0 %v1936
  %1954 = vmatprep.subr.mxu0 0.0
  %1955 = vmatpush1.msra.mxu0 %v1935
  %1956 = vmatprep.subr.mxu0 0.0
  %1957 = vmatpush1.msra.mxu0 %v1934
  %1958 = vmatprep.subr.mxu0 0.0
  %1959 = vmatpush1.msra.mxu0 %v1933
  %1960 = vmatprep.subr.mxu0 0.0
  %1961 = vmatpush1.msra.mxu0 %v1932
  %1962 = vmatprep.subr.mxu0 0.0
  %1963 = vmatpush1.msra.mxu0 %v1931
  %1964 = vmatprep.subr.mxu0 0.0
  %1965 = vmatpush1.msra.mxu0 %v1930
  %1966 = vmatprep.subr.mxu0 0.0
  %1967 = vmatpush1.msra.mxu0 %v1929
  %1968 = vmatprep.subr.mxu0 0.0
  %1969 = vmatpush1.msra.mxu0 %v1928
  %1970 = vmatprep.subr.mxu0 0.0
  %1971 = vmatpush1.msra.mxu0 %v1927
  %1972 = vmatprep.subr.mxu0 0.0
  %1973 = vmatpush1.msra.mxu0 %v1926
  %1974 = vmatprep.subr.mxu0 0.0
  %1975 = vmatpush2.msra.mxu0 0.0
  %1976 = vmatprep.subr.mxu0 0.0
  %1977 = vmatpush2.msra.mxu0 0.0
  %1978 = vmatprep.subr.mxu0 0.0
  %1979 = vmatpush2.msra.mxu0 0.0
  %1980 = vmatprep.subr.mxu0 0.0
  %1981 = vmatpush2.msra.mxu0 0.0
  %1982 = vmatprep.subr.mxu0 0.0
  %1983 = vmatpush2.msra.mxu0 0.0
  %1984 = vmatprep.subr.mxu0 0.0
  %1985 = vmatpush2.msra.mxu0 0.0
  %1986 = vmatprep.subr.mxu0 0.0
  %1987 = vmatpush2.msra.mxu0 0.0
  %1988 = vmatprep.subr.mxu0 0.0
  %1989 = vmatpush2.msra.mxu0 0.0
  %1990 = vmatprep.subr.mxu0 0.0
  %1991 = vmatpush2.msra.mxu0 0.0
  %1992 = vmatprep.subr.mxu0 0.0
  %1993 = vmatpush2.msra.mxu0 0.0
  %1994 = vmatprep.subr.mxu0 0.0
  %1995 = vmatpush2.msra.mxu0 0.0
  %1996 = vmatprep.subr.mxu0 0.0
  %1997 = vmatpush2.msra.mxu0 0.0
  %1998 = vmatprep.subr.mxu0 0.0
  %1999 = vmatpush2.msra.mxu0 0.0
  %2000 = vmatprep.subr.mxu0 0.0
  %2001 = vmatpush2.msra.mxu0 0.0
  %2002 = vmatprep.subr.mxu0 0.0
  %2003 = vmatpush2.msra.mxu0 0.0
  %2004 = vmatprep.subr.mxu0 0.0
  %2005 = vmatpush2.msra.mxu0 0.0
  %2006 = vmatprep.mubr.f32.mxu0 0.0
  %2007 = vmatmul.mubr.f32.gmra.mxu0 %v1924
  %v2008 = vpop.f32.mrf.mxu0
  %v2009 = vadd.f32 0.0, %v2008
  %v2010 = vpop.f32.mrf.mxu0
  %2011 = vdwg.mxu0
  %v2012 = vadd.f32 %v1923, %v2009
  %v2013 = vld [vmem:[#allocation2 + $0x30] sm:$0xff]
  %s2014 = scalar_lea.vmem %s6, 768
  %v2015 = vld [vmem:[%s2014] sm:$0xff]
  %v2016 = vld [vmem:[%s2014 + $0x8] sm:$0xff]
  %v2017 = vld [vmem:[%s2014 + $0x10] sm:$0xff]
  %v2018 = vld [vmem:[%s2014 + $0x18] sm:$0xff]
  %v2019 = vld [vmem:[%s2014 + $0x20] sm:$0xff]
  %v2020 = vld [vmem:[%s2014 + $0x28] sm:$0xff]
  %v2021 = vld [vmem:[%s2014 + $0x30] sm:$0xff]
  %v2022 = vld [vmem:[%s2014 + $0x38] sm:$0xff]
  %v2023 = vld [vmem:[%s2014 + $0x40] sm:$0xff]
  %v2024 = vld [vmem:[%s2014 + $0x48] sm:$0xff]
  %v2025 = vld [vmem:[%s2014 + $0x50] sm:$0xff]
  %v2026 = vld [vmem:[%s2014 + $0x58] sm:$0xff]
  %v2027 = vld [vmem:[%s2014 + $0x60] sm:$0xff]
  %v2028 = vld [vmem:[%s2014 + $0x68] sm:$0xff]
  %v2029 = vld [vmem:[%s2014 + $0x70] sm:$0xff]
  %v2030 = vld [vmem:[%s2014 + $0x78] sm:$0xff]
  %2031 = vmatprep.subr.mxu0 0.0
  %2032 = vmatpush1.msra.mxu0 %v2030
  %2033 = vmatprep.subr.mxu0 0.0
  %2034 = vmatpush1.msra.mxu0 %v2029
  %2035 = vmatprep.subr.mxu0 0.0
  %2036 = vmatpush1.msra.mxu0 %v2028
  %2037 = vmatprep.subr.mxu0 0.0
  %2038 = vmatpush1.msra.mxu0 %v2027
  %2039 = vmatprep.subr.mxu0 0.0
  %2040 = vmatpush1.msra.mxu0 %v2026
  %2041 = vmatprep.subr.mxu0 0.0
  %2042 = vmatpush1.msra.mxu0 %v2025
  %2043 = vmatprep.subr.mxu0 0.0
  %2044 = vmatpush1.msra.mxu0 %v2024
  %2045 = vmatprep.subr.mxu0 0.0
  %2046 = vmatpush1.msra.mxu0 %v2023
  %2047 = vmatprep.subr.mxu0 0.0
  %2048 = vmatpush1.msra.mxu0 %v2022
  %2049 = vmatprep.subr.mxu0 0.0
  %2050 = vmatpush1.msra.mxu0 %v2021
  %2051 = vmatprep.subr.mxu0 0.0
  %2052 = vmatpush1.msra.mxu0 %v2020
  %2053 = vmatprep.subr.mxu0 0.0
  %2054 = vmatpush1.msra.mxu0 %v2019
  %2055 = vmatprep.subr.mxu0 0.0
  %2056 = vmatpush1.msra.mxu0 %v2018
  %2057 = vmatprep.subr.mxu0 0.0
  %2058 = vmatpush1.msra.mxu0 %v2017
  %2059 = vmatprep.subr.mxu0 0.0
  %2060 = vmatpush1.msra.mxu0 %v2016
  %2061 = vmatprep.subr.mxu0 0.0
  %2062 = vmatpush1.msra.mxu0 %v2015
  %2063 = vmatprep.subr.mxu0 0.0
  %2064 = vmatpush2.msra.mxu0 0.0
  %2065 = vmatprep.subr.mxu0 0.0
  %2066 = vmatpush2.msra.mxu0 0.0
  %2067 = vmatprep.subr.mxu0 0.0
  %2068 = vmatpush2.msra.mxu0 0.0
  %2069 = vmatprep.subr.mxu0 0.0
  %2070 = vmatpush2.msra.mxu0 0.0
  %2071 = vmatprep.subr.mxu0 0.0
  %2072 = vmatpush2.msra.mxu0 0.0
  %2073 = vmatprep.subr.mxu0 0.0
  %2074 = vmatpush2.msra.mxu0 0.0
  %2075 = vmatprep.subr.mxu0 0.0
  %2076 = vmatpush2.msra.mxu0 0.0
  %2077 = vmatprep.subr.mxu0 0.0
  %2078 = vmatpush2.msra.mxu0 0.0
  %2079 = vmatprep.subr.mxu0 0.0
  %2080 = vmatpush2.msra.mxu0 0.0
  %2081 = vmatprep.subr.mxu0 0.0
  %2082 = vmatpush2.msra.mxu0 0.0
  %2083 = vmatprep.subr.mxu0 0.0
  %2084 = vmatpush2.msra.mxu0 0.0
  %2085 = vmatprep.subr.mxu0 0.0
  %2086 = vmatpush2.msra.mxu0 0.0
  %2087 = vmatprep.subr.mxu0 0.0
  %2088 = vmatpush2.msra.mxu0 0.0
  %2089 = vmatprep.subr.mxu0 0.0
  %2090 = vmatpush2.msra.mxu0 0.0
  %2091 = vmatprep.subr.mxu0 0.0
  %2092 = vmatpush2.msra.mxu0 0.0
  %2093 = vmatprep.subr.mxu0 0.0
  %2094 = vmatpush2.msra.mxu0 0.0
  %2095 = vmatprep.mubr.f32.mxu0 0.0
  %2096 = vmatmul.mubr.f32.gmra.mxu0 %v2013
  %v2097 = vpop.f32.mrf.mxu0
  %v2098 = vadd.f32 0.0, %v2097
  %v2099 = vpop.f32.mrf.mxu0
  %2100 = vdwg.mxu0
  %v2101 = vadd.f32 %v2012, %v2098
  %v2102 = vld [vmem:[#allocation2 + $0x38] sm:$0xff]
  %s2103 = scalar_lea.vmem %s6, 896
  %v2104 = vld [vmem:[%s2103] sm:$0xff]
  %v2105 = vld [vmem:[%s2103 + $0x8] sm:$0xff]
  %v2106 = vld [vmem:[%s2103 + $0x10] sm:$0xff]
  %v2107 = vld [vmem:[%s2103 + $0x18] sm:$0xff]
  %v2108 = vld [vmem:[%s2103 + $0x20] sm:$0xff]
  %v2109 = vld [vmem:[%s2103 + $0x28] sm:$0xff]
  %v2110 = vld [vmem:[%s2103 + $0x30] sm:$0xff]
  %v2111 = vld [vmem:[%s2103 + $0x38] sm:$0xff]
  %v2112 = vld [vmem:[%s2103 + $0x40] sm:$0xff]
  %v2113 = vld [vmem:[%s2103 + $0x48] sm:$0xff]
  %v2114 = vld [vmem:[%s2103 + $0x50] sm:$0xff]
  %v2115 = vld [vmem:[%s2103 + $0x58] sm:$0xff]
  %v2116 = vld [vmem:[%s2103 + $0x60] sm:$0xff]
  %v2117 = vld [vmem:[%s2103 + $0x68] sm:$0xff]
  %v2118 = vld [vmem:[%s2103 + $0x70] sm:$0xff]
  %v2119 = vld [vmem:[%s2103 + $0x78] sm:$0xff]
  %2120 = vmatprep.subr.mxu0 0.0
  %2121 = vmatpush1.msra.mxu0 %v2119
  %2122 = vmatprep.subr.mxu0 0.0
  %2123 = vmatpush1.msra.mxu0 %v2118
  %2124 = vmatprep.subr.mxu0 0.0
  %2125 = vmatpush1.msra.mxu0 %v2117
  %2126 = vmatprep.subr.mxu0 0.0
  %2127 = vmatpush1.msra.mxu0 %v2116
  %2128 = vmatprep.subr.mxu0 0.0
  %2129 = vmatpush1.msra.mxu0 %v2115
  %2130 = vmatprep.subr.mxu0 0.0
  %2131 = vmatpush1.msra.mxu0 %v2114
  %2132 = vmatprep.subr.mxu0 0.0
  %2133 = vmatpush1.msra.mxu0 %v2113
  %2134 = vmatprep.subr.mxu0 0.0
  %2135 = vmatpush1.msra.mxu0 %v2112
  %2136 = vmatprep.subr.mxu0 0.0
  %2137 = vmatpush1.msra.mxu0 %v2111
  %2138 = vmatprep.subr.mxu0 0.0
  %2139 = vmatpush1.msra.mxu0 %v2110
  %2140 = vmatprep.subr.mxu0 0.0
  %2141 = vmatpush1.msra.mxu0 %v2109
  %2142 = vmatprep.subr.mxu0 0.0
  %2143 = vmatpush1.msra.mxu0 %v2108
  %2144 = vmatprep.subr.mxu0 0.0
  %2145 = vmatpush1.msra.mxu0 %v2107
  %2146 = vmatprep.subr.mxu0 0.0
  %2147 = vmatpush1.msra.mxu0 %v2106
  %2148 = vmatprep.subr.mxu0 0.0
  %2149 = vmatpush1.msra.mxu0 %v2105
  %2150 = vmatprep.subr.mxu0 0.0
  %2151 = vmatpush1.msra.mxu0 %v2104
  %2152 = vmatprep.subr.mxu0 0.0
  %2153 = vmatpush2.msra.mxu0 0.0
  %2154 = vmatprep.subr.mxu0 0.0
  %2155 = vmatpush2.msra.mxu0 0.0
  %2156 = vmatprep.subr.mxu0 0.0
  %2157 = vmatpush2.msra.mxu0 0.0
  %2158 = vmatprep.subr.mxu0 0.0
  %2159 = vmatpush2.msra.mxu0 0.0
  %2160 = vmatprep.subr.mxu0 0.0
  %2161 = vmatpush2.msra.mxu0 0.0
  %2162 = vmatprep.subr.mxu0 0.0
  %2163 = vmatpush2.msra.mxu0 0.0
  %2164 = vmatprep.subr.mxu0 0.0
  %2165 = vmatpush2.msra.mxu0 0.0
  %2166 = vmatprep.subr.mxu0 0.0
  %2167 = vmatpush2.msra.mxu0 0.0
  %2168 = vmatprep.subr.mxu0 0.0
  %2169 = vmatpush2.msra.mxu0 0.0
  %2170 = vmatprep.subr.mxu0 0.0
  %2171 = vmatpush2.msra.mxu0 0.0
  %2172 = vmatprep.subr.mxu0 0.0
  %2173 = vmatpush2.msra.mxu0 0.0
  %2174 = vmatprep.subr.mxu0 0.0
  %2175 = vmatpush2.msra.mxu0 0.0
  %2176 = vmatprep.subr.mxu0 0.0
  %2177 = vmatpush2.msra.mxu0 0.0
  %2178 = vmatprep.subr.mxu0 0.0
  %2179 = vmatpush2.msra.mxu0 0.0
  %2180 = vmatprep.subr.mxu0 0.0
  %2181 = vmatpush2.msra.mxu0 0.0
  %2182 = vmatprep.subr.mxu0 0.0
  %2183 = vmatpush2.msra.mxu0 0.0
  %2184 = vmatprep.mubr.f32.mxu0 0.0
  %2185 = vmatmul.mubr.f32.gmra.mxu0 %v2102
  %v2186 = vpop.f32.mrf.mxu0
  %v2187 = vadd.f32 0.0, %v2186
  %v2188 = vpop.f32.mrf.mxu0
  %2189 = vdwg.mxu0
  %v2190 = vadd.f32 %v2101, %v2187
  %v2191 = vld [vmem:[#allocation2 + $0x40] sm:$0xff]
  %s2192 = scalar_lea.vmem %s6, 1024
  %v2193 = vld [vmem:[%s2192] sm:$0xff]
  %v2194 = vld [vmem:[%s2192 + $0x8] sm:$0xff]
  %v2195 = vld [vmem:[%s2192 + $0x10] sm:$0xff]
  %v2196 = vld [vmem:[%s2192 + $0x18] sm:$0xff]
  %v2197 = vld [vmem:[%s2192 + $0x20] sm:$0xff]
  %v2198 = vld [vmem:[%s2192 + $0x28] sm:$0xff]
  %v2199 = vld [vmem:[%s2192 + $0x30] sm:$0xff]
  %v2200 = vld [vmem:[%s2192 + $0x38] sm:$0xff]
  %v2201 = vld [vmem:[%s2192 + $0x40] sm:$0xff]
  %v2202 = vld [vmem:[%s2192 + $0x48] sm:$0xff]
  %v2203 = vld [vmem:[%s2192 + $0x50] sm:$0xff]
  %v2204 = vld [vmem:[%s2192 + $0x58] sm:$0xff]
  %v2205 = vld [vmem:[%s2192 + $0x60] sm:$0xff]
  %v2206 = vld [vmem:[%s2192 + $0x68] sm:$0xff]
  %v2207 = vld [vmem:[%s2192 + $0x70] sm:$0xff]
  %v2208 = vld [vmem:[%s2192 + $0x78] sm:$0xff]
  %2209 = vmatprep.subr.mxu0 0.0
  %2210 = vmatpush1.msra.mxu0 %v2208
  %2211 = vmatprep.subr.mxu0 0.0
  %2212 = vmatpush1.msra.mxu0 %v2207
  %2213 = vmatprep.subr.mxu0 0.0
  %2214 = vmatpush1.msra.mxu0 %v2206
  %2215 = vmatprep.subr.mxu0 0.0
  %2216 = vmatpush1.msra.mxu0 %v2205
  %2217 = vmatprep.subr.mxu0 0.0
  %2218 = vmatpush1.msra.mxu0 %v2204
  %2219 = vmatprep.subr.mxu0 0.0
  %2220 = vmatpush1.msra.mxu0 %v2203
  %2221 = vmatprep.subr.mxu0 0.0
  %2222 = vmatpush1.msra.mxu0 %v2202
  %2223 = vmatprep.subr.mxu0 0.0
  %2224 = vmatpush1.msra.mxu0 %v2201
  %2225 = vmatprep.subr.mxu0 0.0
  %2226 = vmatpush1.msra.mxu0 %v2200
  %2227 = vmatprep.subr.mxu0 0.0
  %2228 = vmatpush1.msra.mxu0 %v2199
  %2229 = vmatprep.subr.mxu0 0.0
  %2230 = vmatpush1.msra.mxu0 %v2198
  %2231 = vmatprep.subr.mxu0 0.0
  %2232 = vmatpush1.msra.mxu0 %v2197
  %2233 = vmatprep.subr.mxu0 0.0
  %2234 = vmatpush1.msra.mxu0 %v2196
  %2235 = vmatprep.subr.mxu0 0.0
  %2236 = vmatpush1.msra.mxu0 %v2195
  %2237 = vmatprep.subr.mxu0 0.0
  %2238 = vmatpush1.msra.mxu0 %v2194
  %2239 = vmatprep.subr.mxu0 0.0
  %2240 = vmatpush1.msra.mxu0 %v2193
  %2241 = vmatprep.subr.mxu0 0.0
  %2242 = vmatpush2.msra.mxu0 0.0
  %2243 = vmatprep.subr.mxu0 0.0
  %2244 = vmatpush2.msra.mxu0 0.0
  %2245 = vmatprep.subr.mxu0 0.0
  %2246 = vmatpush2.msra.mxu0 0.0
  %2247 = vmatprep.subr.mxu0 0.0
  %2248 = vmatpush2.msra.mxu0 0.0
  %2249 = vmatprep.subr.mxu0 0.0
  %2250 = vmatpush2.msra.mxu0 0.0
  %2251 = vmatprep.subr.mxu0 0.0
  %2252 = vmatpush2.msra.mxu0 0.0
  %2253 = vmatprep.subr.mxu0 0.0
  %2254 = vmatpush2.msra.mxu0 0.0
  %2255 = vmatprep.subr.mxu0 0.0
  %2256 = vmatpush2.msra.mxu0 0.0
  %2257 = vmatprep.subr.mxu0 0.0
  %2258 = vmatpush2.msra.mxu0 0.0
  %2259 = vmatprep.subr.mxu0 0.0
  %2260 = vmatpush2.msra.mxu0 0.0
  %2261 = vmatprep.subr.mxu0 0.0
  %2262 = vmatpush2.msra.mxu0 0.0
  %2263 = vmatprep.subr.mxu0 0.0
  %2264 = vmatpush2.msra.mxu0 0.0
  %2265 = vmatprep.subr.mxu0 0.0
  %2266 = vmatpush2.msra.mxu0 0.0
  %2267 = vmatprep.subr.mxu0 0.0
  %2268 = vmatpush2.msra.mxu0 0.0
  %2269 = vmatprep.subr.mxu0 0.0
  %2270 = vmatpush2.msra.mxu0 0.0
  %2271 = vmatprep.subr.mxu0 0.0
  %2272 = vmatpush2.msra.mxu0 0.0
  %2273 = vmatprep.mubr.f32.mxu0 0.0
  %2274 = vmatmul.mubr.f32.gmra.mxu0 %v2191
  %v2275 = vpop.f32.mrf.mxu0
  %v2276 = vadd.f32 0.0, %v2275
  %v2277 = vpop.f32.mrf.mxu0
  %2278 = vdwg.mxu0
  %v2279 = vadd.f32 %v2190, %v2276
  %v2280 = vld [vmem:[#allocation2 + $0x48] sm:$0xff]
  %s2281 = scalar_lea.vmem %s6, 1152
  %v2282 = vld [vmem:[%s2281] sm:$0xff]
  %v2283 = vld [vmem:[%s2281 + $0x8] sm:$0xff]
  %v2284 = vld [vmem:[%s2281 + $0x10] sm:$0xff]
  %v2285 = vld [vmem:[%s2281 + $0x18] sm:$0xff]
  %v2286 = vld [vmem:[%s2281 + $0x20] sm:$0xff]
  %v2287 = vld [vmem:[%s2281 + $0x28] sm:$0xff]
  %v2288 = vld [vmem:[%s2281 + $0x30] sm:$0xff]
  %v2289 = vld [vmem:[%s2281 + $0x38] sm:$0xff]
  %v2290 = vld [vmem:[%s2281 + $0x40] sm:$0xff]
  %v2291 = vld [vmem:[%s2281 + $0x48] sm:$0xff]
  %v2292 = vld [vmem:[%s2281 + $0x50] sm:$0xff]
  %v2293 = vld [vmem:[%s2281 + $0x58] sm:$0xff]
  %v2294 = vld [vmem:[%s2281 + $0x60] sm:$0xff]
  %v2295 = vld [vmem:[%s2281 + $0x68] sm:$0xff]
  %v2296 = vld [vmem:[%s2281 + $0x70] sm:$0xff]
  %v2297 = vld [vmem:[%s2281 + $0x78] sm:$0xff]
  %2298 = vmatprep.subr.mxu0 0.0
  %2299 = vmatpush1.msra.mxu0 %v2297
  %2300 = vmatprep.subr.mxu0 0.0
  %2301 = vmatpush1.msra.mxu0 %v2296
  %2302 = vmatprep.subr.mxu0 0.0
  %2303 = vmatpush1.msra.mxu0 %v2295
  %2304 = vmatprep.subr.mxu0 0.0
  %2305 = vmatpush1.msra.mxu0 %v2294
  %2306 = vmatprep.subr.mxu0 0.0
  %2307 = vmatpush1.msra.mxu0 %v2293
  %2308 = vmatprep.subr.mxu0 0.0
  %2309 = vmatpush1.msra.mxu0 %v2292
  %2310 = vmatprep.subr.mxu0 0.0
  %2311 = vmatpush1.msra.mxu0 %v2291
  %2312 = vmatprep.subr.mxu0 0.0
  %2313 = vmatpush1.msra.mxu0 %v2290
  %2314 = vmatprep.subr.mxu0 0.0
  %2315 = vmatpush1.msra.mxu0 %v2289
  %2316 = vmatprep.subr.mxu0 0.0
  %2317 = vmatpush1.msra.mxu0 %v2288
  %2318 = vmatprep.subr.mxu0 0.0
  %2319 = vmatpush1.msra.mxu0 %v2287
  %2320 = vmatprep.subr.mxu0 0.0
  %2321 = vmatpush1.msra.mxu0 %v2286
  %2322 = vmatprep.subr.mxu0 0.0
  %2323 = vmatpush1.msra.mxu0 %v2285
  %2324 = vmatprep.subr.mxu0 0.0
  %2325 = vmatpush1.msra.mxu0 %v2284
  %2326 = vmatprep.subr.mxu0 0.0
  %2327 = vmatpush1.msra.mxu0 %v2283
  %2328 = vmatprep.subr.mxu0 0.0
  %2329 = vmatpush1.msra.mxu0 %v2282
  %2330 = vmatprep.subr.mxu0 0.0
  %2331 = vmatpush2.msra.mxu0 0.0
  %2332 = vmatprep.subr.mxu0 0.0
  %2333 = vmatpush2.msra.mxu0 0.0
  %2334 = vmatprep.subr.mxu0 0.0
  %2335 = vmatpush2.msra.mxu0 0.0
  %2336 = vmatprep.subr.mxu0 0.0
  %2337 = vmatpush2.msra.mxu0 0.0
  %2338 = vmatprep.subr.mxu0 0.0
  %2339 = vmatpush2.msra.mxu0 0.0
  %2340 = vmatprep.subr.mxu0 0.0
  %2341 = vmatpush2.msra.mxu0 0.0
  %2342 = vmatprep.subr.mxu0 0.0
  %2343 = vmatpush2.msra.mxu0 0.0
  %2344 = vmatprep.subr.mxu0 0.0
  %2345 = vmatpush2.msra.mxu0 0.0
  %2346 = vmatprep.subr.mxu0 0.0
  %2347 = vmatpush2.msra.mxu0 0.0
  %2348 = vmatprep.subr.mxu0 0.0
  %2349 = vmatpush2.msra.mxu0 0.0
  %2350 = vmatprep.subr.mxu0 0.0
  %2351 = vmatpush2.msra.mxu0 0.0
  %2352 = vmatprep.subr.mxu0 0.0
  %2353 = vmatpush2.msra.mxu0 0.0
  %2354 = vmatprep.subr.mxu0 0.0
  %2355 = vmatpush2.msra.mxu0 0.0
  %2356 = vmatprep.subr.mxu0 0.0
  %2357 = vmatpush2.msra.mxu0 0.0
  %2358 = vmatprep.subr.mxu0 0.0
  %2359 = vmatpush2.msra.mxu0 0.0
  %2360 = vmatprep.subr.mxu0 0.0
  %2361 = vmatpush2.msra.mxu0 0.0
  %2362 = vmatprep.mubr.f32.mxu0 0.0
  %2363 = vmatmul.mubr.f32.gmra.mxu0 %v2280
  %v2364 = vpop.f32.mrf.mxu0
  %v2365 = vadd.f32 0.0, %v2364
  %v2366 = vpop.f32.mrf.mxu0
  %2367 = vdwg.mxu0
  %v2368 = vadd.f32 %v2279, %v2365
  %v2369 = vld [vmem:[#allocation2 + $0x50] sm:$0xff]
  %s2370 = scalar_lea.vmem %s6, 1280
  %v2371 = vld [vmem:[%s2370] sm:$0xff]
  %v2372 = vld [vmem:[%s2370 + $0x8] sm:$0xff]
  %v2373 = vld [vmem:[%s2370 + $0x10] sm:$0xff]
  %v2374 = vld [vmem:[%s2370 + $0x18] sm:$0xff]
  %v2375 = vld [vmem:[%s2370 + $0x20] sm:$0xff]
  %v2376 = vld [vmem:[%s2370 + $0x28] sm:$0xff]
  %v2377 = vld [vmem:[%s2370 + $0x30] sm:$0xff]
  %v2378 = vld [vmem:[%s2370 + $0x38] sm:$0xff]
  %v2379 = vld [vmem:[%s2370 + $0x40] sm:$0xff]
  %v2380 = vld [vmem:[%s2370 + $0x48] sm:$0xff]
  %v2381 = vld [vmem:[%s2370 + $0x50] sm:$0xff]
  %v2382 = vld [vmem:[%s2370 + $0x58] sm:$0xff]
  %v2383 = vld [vmem:[%s2370 + $0x60] sm:$0xff]
  %v2384 = vld [vmem:[%s2370 + $0x68] sm:$0xff]
  %v2385 = vld [vmem:[%s2370 + $0x70] sm:$0xff]
  %v2386 = vld [vmem:[%s2370 + $0x78] sm:$0xff]
  %2387 = vmatprep.subr.mxu0 0.0
  %2388 = vmatpush1.msra.mxu0 %v2386
  %2389 = vmatprep.subr.mxu0 0.0
  %2390 = vmatpush1.msra.mxu0 %v2385
  %2391 = vmatprep.subr.mxu0 0.0
  %2392 = vmatpush1.msra.mxu0 %v2384
  %2393 = vmatprep.subr.mxu0 0.0
  %2394 = vmatpush1.msra.mxu0 %v2383
  %2395 = vmatprep.subr.mxu0 0.0
  %2396 = vmatpush1.msra.mxu0 %v2382
  %2397 = vmatprep.subr.mxu0 0.0
  %2398 = vmatpush1.msra.mxu0 %v2381
  %2399 = vmatprep.subr.mxu0 0.0
  %2400 = vmatpush1.msra.mxu0 %v2380
  %2401 = vmatprep.subr.mxu0 0.0
  %2402 = vmatpush1.msra.mxu0 %v2379
  %2403 = vmatprep.subr.mxu0 0.0
  %2404 = vmatpush1.msra.mxu0 %v2378
  %2405 = vmatprep.subr.mxu0 0.0
  %2406 = vmatpush1.msra.mxu0 %v2377
  %2407 = vmatprep.subr.mxu0 0.0
  %2408 = vmatpush1.msra.mxu0 %v2376
  %2409 = vmatprep.subr.mxu0 0.0
  %2410 = vmatpush1.msra.mxu0 %v2375
  %2411 = vmatprep.subr.mxu0 0.0
  %2412 = vmatpush1.msra.mxu0 %v2374
  %2413 = vmatprep.subr.mxu0 0.0
  %2414 = vmatpush1.msra.mxu0 %v2373
  %2415 = vmatprep.subr.mxu0 0.0
  %2416 = vmatpush1.msra.mxu0 %v2372
  %2417 = vmatprep.subr.mxu0 0.0
  %2418 = vmatpush1.msra.mxu0 %v2371
  %2419 = vmatprep.subr.mxu0 0.0
  %2420 = vmatpush2.msra.mxu0 0.0
  %2421 = vmatprep.subr.mxu0 0.0
  %2422 = vmatpush2.msra.mxu0 0.0
  %2423 = vmatprep.subr.mxu0 0.0
  %2424 = vmatpush2.msra.mxu0 0.0
  %2425 = vmatprep.subr.mxu0 0.0
  %2426 = vmatpush2.msra.mxu0 0.0
  %2427 = vmatprep.subr.mxu0 0.0
  %2428 = vmatpush2.msra.mxu0 0.0
  %2429 = vmatprep.subr.mxu0 0.0
  %2430 = vmatpush2.msra.mxu0 0.0
  %2431 = vmatprep.subr.mxu0 0.0
  %2432 = vmatpush2.msra.mxu0 0.0
  %2433 = vmatprep.subr.mxu0 0.0
  %2434 = vmatpush2.msra.mxu0 0.0
  %2435 = vmatprep.subr.mxu0 0.0
  %2436 = vmatpush2.msra.mxu0 0.0
  %2437 = vmatprep.subr.mxu0 0.0
  %2438 = vmatpush2.msra.mxu0 0.0
  %2439 = vmatprep.subr.mxu0 0.0
  %2440 = vmatpush2.msra.mxu0 0.0
  %2441 = vmatprep.subr.mxu0 0.0
  %2442 = vmatpush2.msra.mxu0 0.0
  %2443 = vmatprep.subr.mxu0 0.0
  %2444 = vmatpush2.msra.mxu0 0.0
  %2445 = vmatprep.subr.mxu0 0.0
  %2446 = vmatpush2.msra.mxu0 0.0
  %2447 = vmatprep.subr.mxu0 0.0
  %2448 = vmatpush2.msra.mxu0 0.0
  %2449 = vmatprep.subr.mxu0 0.0
  %2450 = vmatpush2.msra.mxu0 0.0
  %2451 = vmatprep.mubr.f32.mxu0 0.0
  %2452 = vmatmul.mubr.f32.gmra.mxu0 %v2369
  %v2453 = vpop.f32.mrf.mxu0
  %v2454 = vadd.f32 0.0, %v2453
  %v2455 = vpop.f32.mrf.mxu0
  %2456 = vdwg.mxu0
  %v2457 = vadd.f32 %v2368, %v2454
  %v2458 = vld [vmem:[#allocation2 + $0x58] sm:$0xff]
  %s2459 = scalar_lea.vmem %s6, 1408
  %v2460 = vld [vmem:[%s2459] sm:$0xff]
  %v2461 = vld [vmem:[%s2459 + $0x8] sm:$0xff]
  %v2462 = vld [vmem:[%s2459 + $0x10] sm:$0xff]
  %v2463 = vld [vmem:[%s2459 + $0x18] sm:$0xff]
  %v2464 = vld [vmem:[%s2459 + $0x20] sm:$0xff]
  %v2465 = vld [vmem:[%s2459 + $0x28] sm:$0xff]
  %v2466 = vld [vmem:[%s2459 + $0x30] sm:$0xff]
  %v2467 = vld [vmem:[%s2459 + $0x38] sm:$0xff]
  %v2468 = vld [vmem:[%s2459 + $0x40] sm:$0xff]
  %v2469 = vld [vmem:[%s2459 + $0x48] sm:$0xff]
  %v2470 = vld [vmem:[%s2459 + $0x50] sm:$0xff]
  %v2471 = vld [vmem:[%s2459 + $0x58] sm:$0xff]
  %v2472 = vld [vmem:[%s2459 + $0x60] sm:$0xff]
  %v2473 = vld [vmem:[%s2459 + $0x68] sm:$0xff]
  %v2474 = vld [vmem:[%s2459 + $0x70] sm:$0xff]
  %v2475 = vld [vmem:[%s2459 + $0x78] sm:$0xff]
  %2476 = vmatprep.subr.mxu0 0.0
  %2477 = vmatpush1.msra.mxu0 %v2475
  %2478 = vmatprep.subr.mxu0 0.0
  %2479 = vmatpush1.msra.mxu0 %v2474
  %2480 = vmatprep.subr.mxu0 0.0
  %2481 = vmatpush1.msra.mxu0 %v2473
  %2482 = vmatprep.subr.mxu0 0.0
  %2483 = vmatpush1.msra.mxu0 %v2472
  %2484 = vmatprep.subr.mxu0 0.0
  %2485 = vmatpush1.msra.mxu0 %v2471
  %2486 = vmatprep.subr.mxu0 0.0
  %2487 = vmatpush1.msra.mxu0 %v2470
  %2488 = vmatprep.subr.mxu0 0.0
  %2489 = vmatpush1.msra.mxu0 %v2469
  %2490 = vmatprep.subr.mxu0 0.0
  %2491 = vmatpush1.msra.mxu0 %v2468
  %2492 = vmatprep.subr.mxu0 0.0
  %2493 = vmatpush1.msra.mxu0 %v2467
  %2494 = vmatprep.subr.mxu0 0.0
  %2495 = vmatpush1.msra.mxu0 %v2466
  %2496 = vmatprep.subr.mxu0 0.0
  %2497 = vmatpush1.msra.mxu0 %v2465
  %2498 = vmatprep.subr.mxu0 0.0
  %2499 = vmatpush1.msra.mxu0 %v2464
  %2500 = vmatprep.subr.mxu0 0.0
  %2501 = vmatpush1.msra.mxu0 %v2463
  %2502 = vmatprep.subr.mxu0 0.0
  %2503 = vmatpush1.msra.mxu0 %v2462
  %2504 = vmatprep.subr.mxu0 0.0
  %2505 = vmatpush1.msra.mxu0 %v2461
  %2506 = vmatprep.subr.mxu0 0.0
  %2507 = vmatpush1.msra.mxu0 %v2460
  %2508 = vmatprep.subr.mxu0 0.0
  %2509 = vmatpush2.msra.mxu0 0.0
  %2510 = vmatprep.subr.mxu0 0.0
  %2511 = vmatpush2.msra.mxu0 0.0
  %2512 = vmatprep.subr.mxu0 0.0
  %2513 = vmatpush2.msra.mxu0 0.0
  %2514 = vmatprep.subr.mxu0 0.0
  %2515 = vmatpush2.msra.mxu0 0.0
  %2516 = vmatprep.subr.mxu0 0.0
  %2517 = vmatpush2.msra.mxu0 0.0
  %2518 = vmatprep.subr.mxu0 0.0
  %2519 = vmatpush2.msra.mxu0 0.0
  %2520 = vmatprep.subr.mxu0 0.0
  %2521 = vmatpush2.msra.mxu0 0.0
  %2522 = vmatprep.subr.mxu0 0.0
  %2523 = vmatpush2.msra.mxu0 0.0
  %2524 = vmatprep.subr.mxu0 0.0
  %2525 = vmatpush2.msra.mxu0 0.0
  %2526 = vmatprep.subr.mxu0 0.0
  %2527 = vmatpush2.msra.mxu0 0.0
  %2528 = vmatprep.subr.mxu0 0.0
  %2529 = vmatpush2.msra.mxu0 0.0
  %2530 = vmatprep.subr.mxu0 0.0
  %2531 = vmatpush2.msra.mxu0 0.0
  %2532 = vmatprep.subr.mxu0 0.0
  %2533 = vmatpush2.msra.mxu0 0.0
  %2534 = vmatprep.subr.mxu0 0.0
  %2535 = vmatpush2.msra.mxu0 0.0
  %2536 = vmatprep.subr.mxu0 0.0
  %2537 = vmatpush2.msra.mxu0 0.0
  %2538 = vmatprep.subr.mxu0 0.0
  %2539 = vmatpush2.msra.mxu0 0.0
  %2540 = vmatprep.mubr.f32.mxu0 0.0
  %2541 = vmatmul.mubr.f32.gmra.mxu0 %v2458
  %v2542 = vpop.f32.mrf.mxu0
  %v2543 = vadd.f32 0.0, %v2542
  %v2544 = vpop.f32.mrf.mxu0
  %2545 = vdwg.mxu0
  %v2546 = vadd.f32 %v2457, %v2543
  %v2547 = vld [vmem:[#allocation2 + $0x60] sm:$0xff]
  %s2548 = scalar_lea.vmem %s6, 1536
  %v2549 = vld [vmem:[%s2548] sm:$0xff]
  %v2550 = vld [vmem:[%s2548 + $0x8] sm:$0xff]
  %v2551 = vld [vmem:[%s2548 + $0x10] sm:$0xff]
  %v2552 = vld [vmem:[%s2548 + $0x18] sm:$0xff]
  %v2553 = vld [vmem:[%s2548 + $0x20] sm:$0xff]
  %v2554 = vld [vmem:[%s2548 + $0x28] sm:$0xff]
  %v2555 = vld [vmem:[%s2548 + $0x30] sm:$0xff]
  %v2556 = vld [vmem:[%s2548 + $0x38] sm:$0xff]
  %v2557 = vld [vmem:[%s2548 + $0x40] sm:$0xff]
  %v2558 = vld [vmem:[%s2548 + $0x48] sm:$0xff]
  %v2559 = vld [vmem:[%s2548 + $0x50] sm:$0xff]
  %v2560 = vld [vmem:[%s2548 + $0x58] sm:$0xff]
  %v2561 = vld [vmem:[%s2548 + $0x60] sm:$0xff]
  %v2562 = vld [vmem:[%s2548 + $0x68] sm:$0xff]
  %v2563 = vld [vmem:[%s2548 + $0x70] sm:$0xff]
  %v2564 = vld [vmem:[%s2548 + $0x78] sm:$0xff]
  %2565 = vmatprep.subr.mxu0 0.0
  %2566 = vmatpush1.msra.mxu0 %v2564
  %2567 = vmatprep.subr.mxu0 0.0
  %2568 = vmatpush1.msra.mxu0 %v2563
  %2569 = vmatprep.subr.mxu0 0.0
  %2570 = vmatpush1.msra.mxu0 %v2562
  %2571 = vmatprep.subr.mxu0 0.0
  %2572 = vmatpush1.msra.mxu0 %v2561
  %2573 = vmatprep.subr.mxu0 0.0
  %2574 = vmatpush1.msra.mxu0 %v2560
  %2575 = vmatprep.subr.mxu0 0.0
  %2576 = vmatpush1.msra.mxu0 %v2559
  %2577 = vmatprep.subr.mxu0 0.0
  %2578 = vmatpush1.msra.mxu0 %v2558
  %2579 = vmatprep.subr.mxu0 0.0
  %2580 = vmatpush1.msra.mxu0 %v2557
  %2581 = vmatprep.subr.mxu0 0.0
  %2582 = vmatpush1.msra.mxu0 %v2556
  %2583 = vmatprep.subr.mxu0 0.0
  %2584 = vmatpush1.msra.mxu0 %v2555
  %2585 = vmatprep.subr.mxu0 0.0
  %2586 = vmatpush1.msra.mxu0 %v2554
  %2587 = vmatprep.subr.mxu0 0.0
  %2588 = vmatpush1.msra.mxu0 %v2553
  %2589 = vmatprep.subr.mxu0 0.0
  %2590 = vmatpush1.msra.mxu0 %v2552
  %2591 = vmatprep.subr.mxu0 0.0
  %2592 = vmatpush1.msra.mxu0 %v2551
  %2593 = vmatprep.subr.mxu0 0.0
  %2594 = vmatpush1.msra.mxu0 %v2550
  %2595 = vmatprep.subr.mxu0 0.0
  %2596 = vmatpush1.msra.mxu0 %v2549
  %2597 = vmatprep.subr.mxu0 0.0
  %2598 = vmatpush2.msra.mxu0 0.0
  %2599 = vmatprep.subr.mxu0 0.0
  %2600 = vmatpush2.msra.mxu0 0.0
  %2601 = vmatprep.subr.mxu0 0.0
  %2602 = vmatpush2.msra.mxu0 0.0
  %2603 = vmatprep.subr.mxu0 0.0
  %2604 = vmatpush2.msra.mxu0 0.0
  %2605 = vmatprep.subr.mxu0 0.0
  %2606 = vmatpush2.msra.mxu0 0.0
  %2607 = vmatprep.subr.mxu0 0.0
  %2608 = vmatpush2.msra.mxu0 0.0
  %2609 = vmatprep.subr.mxu0 0.0
  %2610 = vmatpush2.msra.mxu0 0.0
  %2611 = vmatprep.subr.mxu0 0.0
  %2612 = vmatpush2.msra.mxu0 0.0
  %2613 = vmatprep.subr.mxu0 0.0
  %2614 = vmatpush2.msra.mxu0 0.0
  %2615 = vmatprep.subr.mxu0 0.0
  %2616 = vmatpush2.msra.mxu0 0.0
  %2617 = vmatprep.subr.mxu0 0.0
  %2618 = vmatpush2.msra.mxu0 0.0
  %2619 = vmatprep.subr.mxu0 0.0
  %2620 = vmatpush2.msra.mxu0 0.0
  %2621 = vmatprep.subr.mxu0 0.0
  %2622 = vmatpush2.msra.mxu0 0.0
  %2623 = vmatprep.subr.mxu0 0.0
  %2624 = vmatpush2.msra.mxu0 0.0
  %2625 = vmatprep.subr.mxu0 0.0
  %2626 = vmatpush2.msra.mxu0 0.0
  %2627 = vmatprep.subr.mxu0 0.0
  %2628 = vmatpush2.msra.mxu0 0.0
  %2629 = vmatprep.mubr.f32.mxu0 0.0
  %2630 = vmatmul.mubr.f32.gmra.mxu0 %v2547
  %v2631 = vpop.f32.mrf.mxu0
  %v2632 = vadd.f32 0.0, %v2631
  %v2633 = vpop.f32.mrf.mxu0
  %2634 = vdwg.mxu0
  %v2635 = vadd.f32 %v2546, %v2632
  %v2636 = vld [vmem:[#allocation2 + $0x68] sm:$0xff]
  %s2637 = scalar_lea.vmem %s6, 1664
  %v2638 = vld [vmem:[%s2637] sm:$0xff]
  %v2639 = vld [vmem:[%s2637 + $0x8] sm:$0xff]
  %v2640 = vld [vmem:[%s2637 + $0x10] sm:$0xff]
  %v2641 = vld [vmem:[%s2637 + $0x18] sm:$0xff]
  %v2642 = vld [vmem:[%s2637 + $0x20] sm:$0xff]
  %v2643 = vld [vmem:[%s2637 + $0x28] sm:$0xff]
  %v2644 = vld [vmem:[%s2637 + $0x30] sm:$0xff]
  %v2645 = vld [vmem:[%s2637 + $0x38] sm:$0xff]
  %v2646 = vld [vmem:[%s2637 + $0x40] sm:$0xff]
  %v2647 = vld [vmem:[%s2637 + $0x48] sm:$0xff]
  %v2648 = vld [vmem:[%s2637 + $0x50] sm:$0xff]
  %v2649 = vld [vmem:[%s2637 + $0x58] sm:$0xff]
  %v2650 = vld [vmem:[%s2637 + $0x60] sm:$0xff]
  %v2651 = vld [vmem:[%s2637 + $0x68] sm:$0xff]
  %v2652 = vld [vmem:[%s2637 + $0x70] sm:$0xff]
  %v2653 = vld [vmem:[%s2637 + $0x78] sm:$0xff]
  %2654 = vmatprep.subr.mxu0 0.0
  %2655 = vmatpush1.msra.mxu0 %v2653
  %2656 = vmatprep.subr.mxu0 0.0
  %2657 = vmatpush1.msra.mxu0 %v2652
  %2658 = vmatprep.subr.mxu0 0.0
  %2659 = vmatpush1.msra.mxu0 %v2651
  %2660 = vmatprep.subr.mxu0 0.0
  %2661 = vmatpush1.msra.mxu0 %v2650
  %2662 = vmatprep.subr.mxu0 0.0
  %2663 = vmatpush1.msra.mxu0 %v2649
  %2664 = vmatprep.subr.mxu0 0.0
  %2665 = vmatpush1.msra.mxu0 %v2648
  %2666 = vmatprep.subr.mxu0 0.0
  %2667 = vmatpush1.msra.mxu0 %v2647
  %2668 = vmatprep.subr.mxu0 0.0
  %2669 = vmatpush1.msra.mxu0 %v2646
  %2670 = vmatprep.subr.mxu0 0.0
  %2671 = vmatpush1.msra.mxu0 %v2645
  %2672 = vmatprep.subr.mxu0 0.0
  %2673 = vmatpush1.msra.mxu0 %v2644
  %2674 = vmatprep.subr.mxu0 0.0
  %2675 = vmatpush1.msra.mxu0 %v2643
  %2676 = vmatprep.subr.mxu0 0.0
  %2677 = vmatpush1.msra.mxu0 %v2642
  %2678 = vmatprep.subr.mxu0 0.0
  %2679 = vmatpush1.msra.mxu0 %v2641
  %2680 = vmatprep.subr.mxu0 0.0
  %2681 = vmatpush1.msra.mxu0 %v2640
  %2682 = vmatprep.subr.mxu0 0.0
  %2683 = vmatpush1.msra.mxu0 %v2639
  %2684 = vmatprep.subr.mxu0 0.0
  %2685 = vmatpush1.msra.mxu0 %v2638
  %2686 = vmatprep.subr.mxu0 0.0
  %2687 = vmatpush2.msra.mxu0 0.0
  %2688 = vmatprep.subr.mxu0 0.0
  %2689 = vmatpush2.msra.mxu0 0.0
  %2690 = vmatprep.subr.mxu0 0.0
  %2691 = vmatpush2.msra.mxu0 0.0
  %2692 = vmatprep.subr.mxu0 0.0
  %2693 = vmatpush2.msra.mxu0 0.0
  %2694 = vmatprep.subr.mxu0 0.0
  %2695 = vmatpush2.msra.mxu0 0.0
  %2696 = vmatprep.subr.mxu0 0.0
  %2697 = vmatpush2.msra.mxu0 0.0
  %2698 = vmatprep.subr.mxu0 0.0
  %2699 = vmatpush2.msra.mxu0 0.0
  %2700 = vmatprep.subr.mxu0 0.0
  %2701 = vmatpush2.msra.mxu0 0.0
  %2702 = vmatprep.subr.mxu0 0.0
  %2703 = vmatpush2.msra.mxu0 0.0
  %2704 = vmatprep.subr.mxu0 0.0
  %2705 = vmatpush2.msra.mxu0 0.0
  %2706 = vmatprep.subr.mxu0 0.0
  %2707 = vmatpush2.msra.mxu0 0.0
  %2708 = vmatprep.subr.mxu0 0.0
  %2709 = vmatpush2.msra.mxu0 0.0
  %2710 = vmatprep.subr.mxu0 0.0
  %2711 = vmatpush2.msra.mxu0 0.0
  %2712 = vmatprep.subr.mxu0 0.0
  %2713 = vmatpush2.msra.mxu0 0.0
  %2714 = vmatprep.subr.mxu0 0.0
  %2715 = vmatpush2.msra.mxu0 0.0
  %2716 = vmatprep.subr.mxu0 0.0
  %2717 = vmatpush2.msra.mxu0 0.0
  %2718 = vmatprep.mubr.f32.mxu0 0.0
  %2719 = vmatmul.mubr.f32.gmra.mxu0 %v2636
  %v2720 = vpop.f32.mrf.mxu0
  %v2721 = vadd.f32 0.0, %v2720
  %v2722 = vpop.f32.mrf.mxu0
  %2723 = vdwg.mxu0
  %v2724 = vadd.f32 %v2635, %v2721
  %v2725 = vld [vmem:[#allocation2 + $0x70] sm:$0xff]
  %s2726 = scalar_lea.vmem %s6, 1792
  %v2727 = vld [vmem:[%s2726] sm:$0xff]
  %v2728 = vld [vmem:[%s2726 + $0x8] sm:$0xff]
  %v2729 = vld [vmem:[%s2726 + $0x10] sm:$0xff]
  %v2730 = vld [vmem:[%s2726 + $0x18] sm:$0xff]
  %v2731 = vld [vmem:[%s2726 + $0x20] sm:$0xff]
  %v2732 = vld [vmem:[%s2726 + $0x28] sm:$0xff]
  %v2733 = vld [vmem:[%s2726 + $0x30] sm:$0xff]
  %v2734 = vld [vmem:[%s2726 + $0x38] sm:$0xff]
  %v2735 = vld [vmem:[%s2726 + $0x40] sm:$0xff]
  %v2736 = vld [vmem:[%s2726 + $0x48] sm:$0xff]
  %v2737 = vld [vmem:[%s2726 + $0x50] sm:$0xff]
  %v2738 = vld [vmem:[%s2726 + $0x58] sm:$0xff]
  %v2739 = vld [vmem:[%s2726 + $0x60] sm:$0xff]
  %v2740 = vld [vmem:[%s2726 + $0x68] sm:$0xff]
  %v2741 = vld [vmem:[%s2726 + $0x70] sm:$0xff]
  %v2742 = vld [vmem:[%s2726 + $0x78] sm:$0xff]
  %2743 = vmatprep.subr.mxu0 0.0
  %2744 = vmatpush1.msra.mxu0 %v2742
  %2745 = vmatprep.subr.mxu0 0.0
  %2746 = vmatpush1.msra.mxu0 %v2741
  %2747 = vmatprep.subr.mxu0 0.0
  %2748 = vmatpush1.msra.mxu0 %v2740
  %2749 = vmatprep.subr.mxu0 0.0
  %2750 = vmatpush1.msra.mxu0 %v2739
  %2751 = vmatprep.subr.mxu0 0.0
  %2752 = vmatpush1.msra.mxu0 %v2738
  %2753 = vmatprep.subr.mxu0 0.0
  %2754 = vmatpush1.msra.mxu0 %v2737
  %2755 = vmatprep.subr.mxu0 0.0
  %2756 = vmatpush1.msra.mxu0 %v2736
  %2757 = vmatprep.subr.mxu0 0.0
  %2758 = vmatpush1.msra.mxu0 %v2735
  %2759 = vmatprep.subr.mxu0 0.0
  %2760 = vmatpush1.msra.mxu0 %v2734
  %2761 = vmatprep.subr.mxu0 0.0
  %2762 = vmatpush1.msra.mxu0 %v2733
  %2763 = vmatprep.subr.mxu0 0.0
  %2764 = vmatpush1.msra.mxu0 %v2732
  %2765 = vmatprep.subr.mxu0 0.0
  %2766 = vmatpush1.msra.mxu0 %v2731
  %2767 = vmatprep.subr.mxu0 0.0
  %2768 = vmatpush1.msra.mxu0 %v2730
  %2769 = vmatprep.subr.mxu0 0.0
  %2770 = vmatpush1.msra.mxu0 %v2729
  %2771 = vmatprep.subr.mxu0 0.0
  %2772 = vmatpush1.msra.mxu0 %v2728
  %2773 = vmatprep.subr.mxu0 0.0
  %2774 = vmatpush1.msra.mxu0 %v2727
  %2775 = vmatprep.subr.mxu0 0.0
  %2776 = vmatpush2.msra.mxu0 0.0
  %2777 = vmatprep.subr.mxu0 0.0
  %2778 = vmatpush2.msra.mxu0 0.0
  %2779 = vmatprep.subr.mxu0 0.0
  %2780 = vmatpush2.msra.mxu0 0.0
  %2781 = vmatprep.subr.mxu0 0.0
  %2782 = vmatpush2.msra.mxu0 0.0
  %2783 = vmatprep.subr.mxu0 0.0
  %2784 = vmatpush2.msra.mxu0 0.0
  %2785 = vmatprep.subr.mxu0 0.0
  %2786 = vmatpush2.msra.mxu0 0.0
  %2787 = vmatprep.subr.mxu0 0.0
  %2788 = vmatpush2.msra.mxu0 0.0
  %2789 = vmatprep.subr.mxu0 0.0
  %2790 = vmatpush2.msra.mxu0 0.0
  %2791 = vmatprep.subr.mxu0 0.0
  %2792 = vmatpush2.msra.mxu0 0.0
  %2793 = vmatprep.subr.mxu0 0.0
  %2794 = vmatpush2.msra.mxu0 0.0
  %2795 = vmatprep.subr.mxu0 0.0
  %2796 = vmatpush2.msra.mxu0 0.0
  %2797 = vmatprep.subr.mxu0 0.0
  %2798 = vmatpush2.msra.mxu0 0.0
  %2799 = vmatprep.subr.mxu0 0.0
  %2800 = vmatpush2.msra.mxu0 0.0
  %2801 = vmatprep.subr.mxu0 0.0
  %2802 = vmatpush2.msra.mxu0 0.0
  %2803 = vmatprep.subr.mxu0 0.0
  %2804 = vmatpush2.msra.mxu0 0.0
  %2805 = vmatprep.subr.mxu0 0.0
  %2806 = vmatpush2.msra.mxu0 0.0
  %2807 = vmatprep.mubr.f32.mxu0 0.0
  %2808 = vmatmul.mubr.f32.gmra.mxu0 %v2725
  %v2809 = vpop.f32.mrf.mxu0
  %v2810 = vadd.f32 0.0, %v2809
  %v2811 = vpop.f32.mrf.mxu0
  %2812 = vdwg.mxu0
  %v2813 = vadd.f32 %v2724, %v2810
  %v2814 = vld [vmem:[#allocation2 + $0x78] sm:$0xff]
  %s2815 = scalar_lea.vmem %s6, 1920
  %v2816 = vld [vmem:[%s2815] sm:$0xff]
  %v2817 = vld [vmem:[%s2815 + $0x8] sm:$0xff]
  %v2818 = vld [vmem:[%s2815 + $0x10] sm:$0xff]
  %v2819 = vld [vmem:[%s2815 + $0x18] sm:$0xff]
  %v2820 = vld [vmem:[%s2815 + $0x20] sm:$0xff]
  %v2821 = vld [vmem:[%s2815 + $0x28] sm:$0xff]
  %v2822 = vld [vmem:[%s2815 + $0x30] sm:$0xff]
  %v2823 = vld [vmem:[%s2815 + $0x38] sm:$0xff]
  %v2824 = vld [vmem:[%s2815 + $0x40] sm:$0xff]
  %v2825 = vld [vmem:[%s2815 + $0x48] sm:$0xff]
  %v2826 = vld [vmem:[%s2815 + $0x50] sm:$0xff]
  %v2827 = vld [vmem:[%s2815 + $0x58] sm:$0xff]
  %v2828 = vld [vmem:[%s2815 + $0x60] sm:$0xff]
  %v2829 = vld [vmem:[%s2815 + $0x68] sm:$0xff]
  %v2830 = vld [vmem:[%s2815 + $0x70] sm:$0xff]
  %v2831 = vld [vmem:[%s2815 + $0x78] sm:$0xff]
  %2832 = vmatprep.subr.mxu0 0.0
  %2833 = vmatpush1.msra.mxu0 %v2831
  %2834 = vmatprep.subr.mxu0 0.0
  %2835 = vmatpush1.msra.mxu0 %v2830
  %2836 = vmatprep.subr.mxu0 0.0
  %2837 = vmatpush1.msra.mxu0 %v2829
  %2838 = vmatprep.subr.mxu0 0.0
  %2839 = vmatpush1.msra.mxu0 %v2828
  %2840 = vmatprep.subr.mxu0 0.0
  %2841 = vmatpush1.msra.mxu0 %v2827
  %2842 = vmatprep.subr.mxu0 0.0
  %2843 = vmatpush1.msra.mxu0 %v2826
  %2844 = vmatprep.subr.mxu0 0.0
  %2845 = vmatpush1.msra.mxu0 %v2825
  %2846 = vmatprep.subr.mxu0 0.0
  %2847 = vmatpush1.msra.mxu0 %v2824
  %2848 = vmatprep.subr.mxu0 0.0
  %2849 = vmatpush1.msra.mxu0 %v2823
  %2850 = vmatprep.subr.mxu0 0.0
  %2851 = vmatpush1.msra.mxu0 %v2822
  %2852 = vmatprep.subr.mxu0 0.0
  %2853 = vmatpush1.msra.mxu0 %v2821
  %2854 = vmatprep.subr.mxu0 0.0
  %2855 = vmatpush1.msra.mxu0 %v2820
  %2856 = vmatprep.subr.mxu0 0.0
  %2857 = vmatpush1.msra.mxu0 %v2819
  %2858 = vmatprep.subr.mxu0 0.0
  %2859 = vmatpush1.msra.mxu0 %v2818
  %2860 = vmatprep.subr.mxu0 0.0
  %2861 = vmatpush1.msra.mxu0 %v2817
  %2862 = vmatprep.subr.mxu0 0.0
  %2863 = vmatpush1.msra.mxu0 %v2816
  %2864 = vmatprep.subr.mxu0 0.0
  %2865 = vmatpush2.msra.mxu0 0.0
  %2866 = vmatprep.subr.mxu0 0.0
  %2867 = vmatpush2.msra.mxu0 0.0
  %2868 = vmatprep.subr.mxu0 0.0
  %2869 = vmatpush2.msra.mxu0 0.0
  %2870 = vmatprep.subr.mxu0 0.0
  %2871 = vmatpush2.msra.mxu0 0.0
  %2872 = vmatprep.subr.mxu0 0.0
  %2873 = vmatpush2.msra.mxu0 0.0
  %2874 = vmatprep.subr.mxu0 0.0
  %2875 = vmatpush2.msra.mxu0 0.0
  %2876 = vmatprep.subr.mxu0 0.0
  %2877 = vmatpush2.msra.mxu0 0.0
  %2878 = vmatprep.subr.mxu0 0.0
  %2879 = vmatpush2.msra.mxu0 0.0
  %2880 = vmatprep.subr.mxu0 0.0
  %2881 = vmatpush2.msra.mxu0 0.0
  %2882 = vmatprep.subr.mxu0 0.0
  %2883 = vmatpush2.msra.mxu0 0.0
  %2884 = vmatprep.subr.mxu0 0.0
  %2885 = vmatpush2.msra.mxu0 0.0
  %2886 = vmatprep.subr.mxu0 0.0
  %2887 = vmatpush2.msra.mxu0 0.0
  %2888 = vmatprep.subr.mxu0 0.0
  %2889 = vmatpush2.msra.mxu0 0.0
  %2890 = vmatprep.subr.mxu0 0.0
  %2891 = vmatpush2.msra.mxu0 0.0
  %2892 = vmatprep.subr.mxu0 0.0
  %2893 = vmatpush2.msra.mxu0 0.0
  %2894 = vmatprep.subr.mxu0 0.0
  %2895 = vmatpush2.msra.mxu0 0.0
  %2896 = vmatprep.mubr.f32.mxu0 0.0
  %2897 = vmatmul.mubr.f32.gmra.mxu0 %v2814
  %v2898 = vpop.f32.mrf.mxu0
  %v2899 = vadd.f32 0.0, %v2898
  %v2900 = vpop.f32.mrf.mxu0
  %2901 = vdwg.mxu0
  %v2902 = vadd.f32 %v2813, %v2899
  %v2903 = vld [vmem:[#allocation2 + $0x80] sm:$0xff]
  %s2904 = scalar_lea.vmem %s6, 2048
  %v2905 = vld [vmem:[%s2904] sm:$0xff]
  %v2906 = vld [vmem:[%s2904 + $0x8] sm:$0xff]
  %v2907 = vld [vmem:[%s2904 + $0x10] sm:$0xff]
  %v2908 = vld [vmem:[%s2904 + $0x18] sm:$0xff]
  %v2909 = vld [vmem:[%s2904 + $0x20] sm:$0xff]
  %v2910 = vld [vmem:[%s2904 + $0x28] sm:$0xff]
  %v2911 = vld [vmem:[%s2904 + $0x30] sm:$0xff]
  %v2912 = vld [vmem:[%s2904 + $0x38] sm:$0xff]
  %v2913 = vld [vmem:[%s2904 + $0x40] sm:$0xff]
  %v2914 = vld [vmem:[%s2904 + $0x48] sm:$0xff]
  %v2915 = vld [vmem:[%s2904 + $0x50] sm:$0xff]
  %v2916 = vld [vmem:[%s2904 + $0x58] sm:$0xff]
  %v2917 = vld [vmem:[%s2904 + $0x60] sm:$0xff]
  %v2918 = vld [vmem:[%s2904 + $0x68] sm:$0xff]
  %v2919 = vld [vmem:[%s2904 + $0x70] sm:$0xff]
  %v2920 = vld [vmem:[%s2904 + $0x78] sm:$0xff]
  %2921 = vmatprep.subr.mxu0 0.0
  %2922 = vmatpush1.msra.mxu0 %v2920
  %2923 = vmatprep.subr.mxu0 0.0
  %2924 = vmatpush1.msra.mxu0 %v2919
  %2925 = vmatprep.subr.mxu0 0.0
  %2926 = vmatpush1.msra.mxu0 %v2918
  %2927 = vmatprep.subr.mxu0 0.0
  %2928 = vmatpush1.msra.mxu0 %v2917
  %2929 = vmatprep.subr.mxu0 0.0
  %2930 = vmatpush1.msra.mxu0 %v2916
  %2931 = vmatprep.subr.mxu0 0.0
  %2932 = vmatpush1.msra.mxu0 %v2915
  %2933 = vmatprep.subr.mxu0 0.0
  %2934 = vmatpush1.msra.mxu0 %v2914
  %2935 = vmatprep.subr.mxu0 0.0
  %2936 = vmatpush1.msra.mxu0 %v2913
  %2937 = vmatprep.subr.mxu0 0.0
  %2938 = vmatpush1.msra.mxu0 %v2912
  %2939 = vmatprep.subr.mxu0 0.0
  %2940 = vmatpush1.msra.mxu0 %v2911
  %2941 = vmatprep.subr.mxu0 0.0
  %2942 = vmatpush1.msra.mxu0 %v2910
  %2943 = vmatprep.subr.mxu0 0.0
  %2944 = vmatpush1.msra.mxu0 %v2909
  %2945 = vmatprep.subr.mxu0 0.0
  %2946 = vmatpush1.msra.mxu0 %v2908
  %2947 = vmatprep.subr.mxu0 0.0
  %2948 = vmatpush1.msra.mxu0 %v2907
  %2949 = vmatprep.subr.mxu0 0.0
  %2950 = vmatpush1.msra.mxu0 %v2906
  %2951 = vmatprep.subr.mxu0 0.0
  %2952 = vmatpush1.msra.mxu0 %v2905
  %2953 = vmatprep.subr.mxu0 0.0
  %2954 = vmatpush2.msra.mxu0 0.0
  %2955 = vmatprep.subr.mxu0 0.0
  %2956 = vmatpush2.msra.mxu0 0.0
  %2957 = vmatprep.subr.mxu0 0.0
  %2958 = vmatpush2.msra.mxu0 0.0
  %2959 = vmatprep.subr.mxu0 0.0
  %2960 = vmatpush2.msra.mxu0 0.0
  %2961 = vmatprep.subr.mxu0 0.0
  %2962 = vmatpush2.msra.mxu0 0.0
  %2963 = vmatprep.subr.mxu0 0.0
  %2964 = vmatpush2.msra.mxu0 0.0
  %2965 = vmatprep.subr.mxu0 0.0
  %2966 = vmatpush2.msra.mxu0 0.0
  %2967 = vmatprep.subr.mxu0 0.0
  %2968 = vmatpush2.msra.mxu0 0.0
  %2969 = vmatprep.subr.mxu0 0.0
  %2970 = vmatpush2.msra.mxu0 0.0
  %2971 = vmatprep.subr.mxu0 0.0
  %2972 = vmatpush2.msra.mxu0 0.0
  %2973 = vmatprep.subr.mxu0 0.0
  %2974 = vmatpush2.msra.mxu0 0.0
  %2975 = vmatprep.subr.mxu0 0.0
  %2976 = vmatpush2.msra.mxu0 0.0
  %2977 = vmatprep.subr.mxu0 0.0
  %2978 = vmatpush2.msra.mxu0 0.0
  %2979 = vmatprep.subr.mxu0 0.0
  %2980 = vmatpush2.msra.mxu0 0.0
  %2981 = vmatprep.subr.mxu0 0.0
  %2982 = vmatpush2.msra.mxu0 0.0
  %2983 = vmatprep.subr.mxu0 0.0
  %2984 = vmatpush2.msra.mxu0 0.0
  %2985 = vmatprep.mubr.f32.mxu0 0.0
  %2986 = vmatmul.mubr.f32.gmra.mxu0 %v2903
  %v2987 = vpop.f32.mrf.mxu0
  %v2988 = vadd.f32 0.0, %v2987
  %v2989 = vpop.f32.mrf.mxu0
  %2990 = vdwg.mxu0
  %v2991 = vadd.f32 %v2902, %v2988
  %v2992 = vld [vmem:[#allocation2 + $0x88] sm:$0xff]
  %s2993 = scalar_lea.vmem %s6, 2176
  %v2994 = vld [vmem:[%s2993] sm:$0xff]
  %v2995 = vld [vmem:[%s2993 + $0x8] sm:$0xff]
  %v2996 = vld [vmem:[%s2993 + $0x10] sm:$0xff]
  %v2997 = vld [vmem:[%s2993 + $0x18] sm:$0xff]
  %v2998 = vld [vmem:[%s2993 + $0x20] sm:$0xff]
  %v2999 = vld [vmem:[%s2993 + $0x28] sm:$0xff]
  %v3000 = vld [vmem:[%s2993 + $0x30] sm:$0xff]
  %v3001 = vld [vmem:[%s2993 + $0x38] sm:$0xff]
  %v3002 = vld [vmem:[%s2993 + $0x40] sm:$0xff]
  %v3003 = vld [vmem:[%s2993 + $0x48] sm:$0xff]
  %v3004 = vld [vmem:[%s2993 + $0x50] sm:$0xff]
  %v3005 = vld [vmem:[%s2993 + $0x58] sm:$0xff]
  %v3006 = vld [vmem:[%s2993 + $0x60] sm:$0xff]
  %v3007 = vld [vmem:[%s2993 + $0x68] sm:$0xff]
  %v3008 = vld [vmem:[%s2993 + $0x70] sm:$0xff]
  %v3009 = vld [vmem:[%s2993 + $0x78] sm:$0xff]
  %3010 = vmatprep.subr.mxu0 0.0
  %3011 = vmatpush1.msra.mxu0 %v3009
  %3012 = vmatprep.subr.mxu0 0.0
  %3013 = vmatpush1.msra.mxu0 %v3008
  %3014 = vmatprep.subr.mxu0 0.0
  %3015 = vmatpush1.msra.mxu0 %v3007
  %3016 = vmatprep.subr.mxu0 0.0
  %3017 = vmatpush1.msra.mxu0 %v3006
  %3018 = vmatprep.subr.mxu0 0.0
  %3019 = vmatpush1.msra.mxu0 %v3005
  %3020 = vmatprep.subr.mxu0 0.0
  %3021 = vmatpush1.msra.mxu0 %v3004
  %3022 = vmatprep.subr.mxu0 0.0
  %3023 = vmatpush1.msra.mxu0 %v3003
  %3024 = vmatprep.subr.mxu0 0.0
  %3025 = vmatpush1.msra.mxu0 %v3002
  %3026 = vmatprep.subr.mxu0 0.0
  %3027 = vmatpush1.msra.mxu0 %v3001
  %3028 = vmatprep.subr.mxu0 0.0
  %3029 = vmatpush1.msra.mxu0 %v3000
  %3030 = vmatprep.subr.mxu0 0.0
  %3031 = vmatpush1.msra.mxu0 %v2999
  %3032 = vmatprep.subr.mxu0 0.0
  %3033 = vmatpush1.msra.mxu0 %v2998
  %3034 = vmatprep.subr.mxu0 0.0
  %3035 = vmatpush1.msra.mxu0 %v2997
  %3036 = vmatprep.subr.mxu0 0.0
  %3037 = vmatpush1.msra.mxu0 %v2996
  %3038 = vmatprep.subr.mxu0 0.0
  %3039 = vmatpush1.msra.mxu0 %v2995
  %3040 = vmatprep.subr.mxu0 0.0
  %3041 = vmatpush1.msra.mxu0 %v2994
  %3042 = vmatprep.subr.mxu0 0.0
  %3043 = vmatpush2.msra.mxu0 0.0
  %3044 = vmatprep.subr.mxu0 0.0
  %3045 = vmatpush2.msra.mxu0 0.0
  %3046 = vmatprep.subr.mxu0 0.0
  %3047 = vmatpush2.msra.mxu0 0.0
  %3048 = vmatprep.subr.mxu0 0.0
  %3049 = vmatpush2.msra.mxu0 0.0
  %3050 = vmatprep.subr.mxu0 0.0
  %3051 = vmatpush2.msra.mxu0 0.0
  %3052 = vmatprep.subr.mxu0 0.0
  %3053 = vmatpush2.msra.mxu0 0.0
  %3054 = vmatprep.subr.mxu0 0.0
  %3055 = vmatpush2.msra.mxu0 0.0
  %3056 = vmatprep.subr.mxu0 0.0
  %3057 = vmatpush2.msra.mxu0 0.0
  %3058 = vmatprep.subr.mxu0 0.0
  %3059 = vmatpush2.msra.mxu0 0.0
  %3060 = vmatprep.subr.mxu0 0.0
  %3061 = vmatpush2.msra.mxu0 0.0
  %3062 = vmatprep.subr.mxu0 0.0
  %3063 = vmatpush2.msra.mxu0 0.0
  %3064 = vmatprep.subr.mxu0 0.0
  %3065 = vmatpush2.msra.mxu0 0.0
  %3066 = vmatprep.subr.mxu0 0.0
  %3067 = vmatpush2.msra.mxu0 0.0
  %3068 = vmatprep.subr.mxu0 0.0
  %3069 = vmatpush2.msra.mxu0 0.0
  %3070 = vmatprep.subr.mxu0 0.0
  %3071 = vmatpush2.msra.mxu0 0.0
  %3072 = vmatprep.subr.mxu0 0.0
  %3073 = vmatpush2.msra.mxu0 0.0
  %3074 = vmatprep.mubr.f32.mxu0 0.0
  %3075 = vmatmul.mubr.f32.gmra.mxu0 %v2992
  %v3076 = vpop.f32.mrf.mxu0
  %v3077 = vadd.f32 0.0, %v3076
  %v3078 = vpop.f32.mrf.mxu0
  %3079 = vdwg.mxu0
  %v3080 = vadd.f32 %v2991, %v3077
  %v3081 = vld [vmem:[#allocation2 + $0x90] sm:$0xff]
  %s3082 = scalar_lea.vmem %s6, 2304
  %v3083 = vld [vmem:[%s3082] sm:$0xff]
  %v3084 = vld [vmem:[%s3082 + $0x8] sm:$0xff]
  %v3085 = vld [vmem:[%s3082 + $0x10] sm:$0xff]
  %v3086 = vld [vmem:[%s3082 + $0x18] sm:$0xff]
  %v3087 = vld [vmem:[%s3082 + $0x20] sm:$0xff]
  %v3088 = vld [vmem:[%s3082 + $0x28] sm:$0xff]
  %v3089 = vld [vmem:[%s3082 + $0x30] sm:$0xff]
  %v3090 = vld [vmem:[%s3082 + $0x38] sm:$0xff]
  %v3091 = vld [vmem:[%s3082 + $0x40] sm:$0xff]
  %v3092 = vld [vmem:[%s3082 + $0x48] sm:$0xff]
  %v3093 = vld [vmem:[%s3082 + $0x50] sm:$0xff]
  %v3094 = vld [vmem:[%s3082 + $0x58] sm:$0xff]
  %v3095 = vld [vmem:[%s3082 + $0x60] sm:$0xff]
  %v3096 = vld [vmem:[%s3082 + $0x68] sm:$0xff]
  %v3097 = vld [vmem:[%s3082 + $0x70] sm:$0xff]
  %v3098 = vld [vmem:[%s3082 + $0x78] sm:$0xff]
  %3099 = vmatprep.subr.mxu0 0.0
  %3100 = vmatpush1.msra.mxu0 %v3098
  %3101 = vmatprep.subr.mxu0 0.0
  %3102 = vmatpush1.msra.mxu0 %v3097
  %3103 = vmatprep.subr.mxu0 0.0
  %3104 = vmatpush1.msra.mxu0 %v3096
  %3105 = vmatprep.subr.mxu0 0.0
  %3106 = vmatpush1.msra.mxu0 %v3095
  %3107 = vmatprep.subr.mxu0 0.0
  %3108 = vmatpush1.msra.mxu0 %v3094
  %3109 = vmatprep.subr.mxu0 0.0
  %3110 = vmatpush1.msra.mxu0 %v3093
  %3111 = vmatprep.subr.mxu0 0.0
  %3112 = vmatpush1.msra.mxu0 %v3092
  %3113 = vmatprep.subr.mxu0 0.0
  %3114 = vmatpush1.msra.mxu0 %v3091
  %3115 = vmatprep.subr.mxu0 0.0
  %3116 = vmatpush1.msra.mxu0 %v3090
  %3117 = vmatprep.subr.mxu0 0.0
  %3118 = vmatpush1.msra.mxu0 %v3089
  %3119 = vmatprep.subr.mxu0 0.0
  %3120 = vmatpush1.msra.mxu0 %v3088
  %3121 = vmatprep.subr.mxu0 0.0
  %3122 = vmatpush1.msra.mxu0 %v3087
  %3123 = vmatprep.subr.mxu0 0.0
  %3124 = vmatpush1.msra.mxu0 %v3086
  %3125 = vmatprep.subr.mxu0 0.0
  %3126 = vmatpush1.msra.mxu0 %v3085
  %3127 = vmatprep.subr.mxu0 0.0
  %3128 = vmatpush1.msra.mxu0 %v3084
  %3129 = vmatprep.subr.mxu0 0.0
  %3130 = vmatpush1.msra.mxu0 %v3083
  %3131 = vmatprep.subr.mxu0 0.0
  %3132 = vmatpush2.msra.mxu0 0.0
  %3133 = vmatprep.subr.mxu0 0.0
  %3134 = vmatpush2.msra.mxu0 0.0
  %3135 = vmatprep.subr.mxu0 0.0
  %3136 = vmatpush2.msra.mxu0 0.0
  %3137 = vmatprep.subr.mxu0 0.0
  %3138 = vmatpush2.msra.mxu0 0.0
  %3139 = vmatprep.subr.mxu0 0.0
  %3140 = vmatpush2.msra.mxu0 0.0
  %3141 = vmatprep.subr.mxu0 0.0
  %3142 = vmatpush2.msra.mxu0 0.0
  %3143 = vmatprep.subr.mxu0 0.0
  %3144 = vmatpush2.msra.mxu0 0.0
  %3145 = vmatprep.subr.mxu0 0.0
  %3146 = vmatpush2.msra.mxu0 0.0
  %3147 = vmatprep.subr.mxu0 0.0
  %3148 = vmatpush2.msra.mxu0 0.0
  %3149 = vmatprep.subr.mxu0 0.0
  %3150 = vmatpush2.msra.mxu0 0.0
  %3151 = vmatprep.subr.mxu0 0.0
  %3152 = vmatpush2.msra.mxu0 0.0
  %3153 = vmatprep.subr.mxu0 0.0
  %3154 = vmatpush2.msra.mxu0 0.0
  %3155 = vmatprep.subr.mxu0 0.0
  %3156 = vmatpush2.msra.mxu0 0.0
  %3157 = vmatprep.subr.mxu0 0.0
  %3158 = vmatpush2.msra.mxu0 0.0
  %3159 = vmatprep.subr.mxu0 0.0
  %3160 = vmatpush2.msra.mxu0 0.0
  %3161 = vmatprep.subr.mxu0 0.0
  %3162 = vmatpush2.msra.mxu0 0.0
  %3163 = vmatprep.mubr.f32.mxu0 0.0
  %3164 = vmatmul.mubr.f32.gmra.mxu0 %v3081
  %v3165 = vpop.f32.mrf.mxu0
  %v3166 = vadd.f32 0.0, %v3165
  %v3167 = vpop.f32.mrf.mxu0
  %3168 = vdwg.mxu0
  %v3169 = vadd.f32 %v3080, %v3166
  %v3170 = vld [vmem:[#allocation2 + $0x98] sm:$0xff]
  %s3171 = scalar_lea.vmem %s6, 2432
  %v3172 = vld [vmem:[%s3171] sm:$0xff]
  %v3173 = vld [vmem:[%s3171 + $0x8] sm:$0xff]
  %v3174 = vld [vmem:[%s3171 + $0x10] sm:$0xff]
  %v3175 = vld [vmem:[%s3171 + $0x18] sm:$0xff]
  %v3176 = vld [vmem:[%s3171 + $0x20] sm:$0xff]
  %v3177 = vld [vmem:[%s3171 + $0x28] sm:$0xff]
  %v3178 = vld [vmem:[%s3171 + $0x30] sm:$0xff]
  %v3179 = vld [vmem:[%s3171 + $0x38] sm:$0xff]
  %v3180 = vld [vmem:[%s3171 + $0x40] sm:$0xff]
  %v3181 = vld [vmem:[%s3171 + $0x48] sm:$0xff]
  %v3182 = vld [vmem:[%s3171 + $0x50] sm:$0xff]
  %v3183 = vld [vmem:[%s3171 + $0x58] sm:$0xff]
  %v3184 = vld [vmem:[%s3171 + $0x60] sm:$0xff]
  %v3185 = vld [vmem:[%s3171 + $0x68] sm:$0xff]
  %v3186 = vld [vmem:[%s3171 + $0x70] sm:$0xff]
  %v3187 = vld [vmem:[%s3171 + $0x78] sm:$0xff]
  %3188 = vmatprep.subr.mxu0 0.0
  %3189 = vmatpush1.msra.mxu0 %v3187
  %3190 = vmatprep.subr.mxu0 0.0
  %3191 = vmatpush1.msra.mxu0 %v3186
  %3192 = vmatprep.subr.mxu0 0.0
  %3193 = vmatpush1.msra.mxu0 %v3185
  %3194 = vmatprep.subr.mxu0 0.0
  %3195 = vmatpush1.msra.mxu0 %v3184
  %3196 = vmatprep.subr.mxu0 0.0
  %3197 = vmatpush1.msra.mxu0 %v3183
  %3198 = vmatprep.subr.mxu0 0.0
  %3199 = vmatpush1.msra.mxu0 %v3182
  %3200 = vmatprep.subr.mxu0 0.0
  %3201 = vmatpush1.msra.mxu0 %v3181
  %3202 = vmatprep.subr.mxu0 0.0
  %3203 = vmatpush1.msra.mxu0 %v3180
  %3204 = vmatprep.subr.mxu0 0.0
  %3205 = vmatpush1.msra.mxu0 %v3179
  %3206 = vmatprep.subr.mxu0 0.0
  %3207 = vmatpush1.msra.mxu0 %v3178
  %3208 = vmatprep.subr.mxu0 0.0
  %3209 = vmatpush1.msra.mxu0 %v3177
  %3210 = vmatprep.subr.mxu0 0.0
  %3211 = vmatpush1.msra.mxu0 %v3176
  %3212 = vmatprep.subr.mxu0 0.0
  %3213 = vmatpush1.msra.mxu0 %v3175
  %3214 = vmatprep.subr.mxu0 0.0
  %3215 = vmatpush1.msra.mxu0 %v3174
  %3216 = vmatprep.subr.mxu0 0.0
  %3217 = vmatpush1.msra.mxu0 %v3173
  %3218 = vmatprep.subr.mxu0 0.0
  %3219 = vmatpush1.msra.mxu0 %v3172
  %3220 = vmatprep.subr.mxu0 0.0
  %3221 = vmatpush2.msra.mxu0 0.0
  %3222 = vmatprep.subr.mxu0 0.0
  %3223 = vmatpush2.msra.mxu0 0.0
  %3224 = vmatprep.subr.mxu0 0.0
  %3225 = vmatpush2.msra.mxu0 0.0
  %3226 = vmatprep.subr.mxu0 0.0
  %3227 = vmatpush2.msra.mxu0 0.0
  %3228 = vmatprep.subr.mxu0 0.0
  %3229 = vmatpush2.msra.mxu0 0.0
  %3230 = vmatprep.subr.mxu0 0.0
  %3231 = vmatpush2.msra.mxu0 0.0
  %3232 = vmatprep.subr.mxu0 0.0
  %3233 = vmatpush2.msra.mxu0 0.0
  %3234 = vmatprep.subr.mxu0 0.0
  %3235 = vmatpush2.msra.mxu0 0.0
  %3236 = vmatprep.subr.mxu0 0.0
  %3237 = vmatpush2.msra.mxu0 0.0
  %3238 = vmatprep.subr.mxu0 0.0
  %3239 = vmatpush2.msra.mxu0 0.0
  %3240 = vmatprep.subr.mxu0 0.0
  %3241 = vmatpush2.msra.mxu0 0.0
  %3242 = vmatprep.subr.mxu0 0.0
  %3243 = vmatpush2.msra.mxu0 0.0
  %3244 = vmatprep.subr.mxu0 0.0
  %3245 = vmatpush2.msra.mxu0 0.0
  %3246 = vmatprep.subr.mxu0 0.0
  %3247 = vmatpush2.msra.mxu0 0.0
  %3248 = vmatprep.subr.mxu0 0.0
  %3249 = vmatpush2.msra.mxu0 0.0
  %3250 = vmatprep.subr.mxu0 0.0
  %3251 = vmatpush2.msra.mxu0 0.0
  %3252 = vmatprep.mubr.f32.mxu0 0.0
  %3253 = vmatmul.mubr.f32.gmra.mxu0 %v3170
  %v3254 = vpop.f32.mrf.mxu0
  %v3255 = vadd.f32 0.0, %v3254
  %v3256 = vpop.f32.mrf.mxu0
  %3257 = vdwg.mxu0
  %v3258 = vadd.f32 %v3169, %v3255
  %v3259 = vld [vmem:[#allocation2 + $0xa0] sm:$0xff]
  %s3260 = scalar_lea.vmem %s6, 2560
  %v3261 = vld [vmem:[%s3260] sm:$0xff]
  %v3262 = vld [vmem:[%s3260 + $0x8] sm:$0xff]
  %v3263 = vld [vmem:[%s3260 + $0x10] sm:$0xff]
  %v3264 = vld [vmem:[%s3260 + $0x18] sm:$0xff]
  %v3265 = vld [vmem:[%s3260 + $0x20] sm:$0xff]
  %v3266 = vld [vmem:[%s3260 + $0x28] sm:$0xff]
  %v3267 = vld [vmem:[%s3260 + $0x30] sm:$0xff]
  %v3268 = vld [vmem:[%s3260 + $0x38] sm:$0xff]
  %v3269 = vld [vmem:[%s3260 + $0x40] sm:$0xff]
  %v3270 = vld [vmem:[%s3260 + $0x48] sm:$0xff]
  %v3271 = vld [vmem:[%s3260 + $0x50] sm:$0xff]
  %v3272 = vld [vmem:[%s3260 + $0x58] sm:$0xff]
  %v3273 = vld [vmem:[%s3260 + $0x60] sm:$0xff]
  %v3274 = vld [vmem:[%s3260 + $0x68] sm:$0xff]
  %v3275 = vld [vmem:[%s3260 + $0x70] sm:$0xff]
  %v3276 = vld [vmem:[%s3260 + $0x78] sm:$0xff]
  %3277 = vmatprep.subr.mxu0 0.0
  %3278 = vmatpush1.msra.mxu0 %v3276
  %3279 = vmatprep.subr.mxu0 0.0
  %3280 = vmatpush1.msra.mxu0 %v3275
  %3281 = vmatprep.subr.mxu0 0.0
  %3282 = vmatpush1.msra.mxu0 %v3274
  %3283 = vmatprep.subr.mxu0 0.0
  %3284 = vmatpush1.msra.mxu0 %v3273
  %3285 = vmatprep.subr.mxu0 0.0
  %3286 = vmatpush1.msra.mxu0 %v3272
  %3287 = vmatprep.subr.mxu0 0.0
  %3288 = vmatpush1.msra.mxu0 %v3271
  %3289 = vmatprep.subr.mxu0 0.0
  %3290 = vmatpush1.msra.mxu0 %v3270
  %3291 = vmatprep.subr.mxu0 0.0
  %3292 = vmatpush1.msra.mxu0 %v3269
  %3293 = vmatprep.subr.mxu0 0.0
  %3294 = vmatpush1.msra.mxu0 %v3268
  %3295 = vmatprep.subr.mxu0 0.0
  %3296 = vmatpush1.msra.mxu0 %v3267
  %3297 = vmatprep.subr.mxu0 0.0
  %3298 = vmatpush1.msra.mxu0 %v3266
  %3299 = vmatprep.subr.mxu0 0.0
  %3300 = vmatpush1.msra.mxu0 %v3265
  %3301 = vmatprep.subr.mxu0 0.0
  %3302 = vmatpush1.msra.mxu0 %v3264
  %3303 = vmatprep.subr.mxu0 0.0
  %3304 = vmatpush1.msra.mxu0 %v3263
  %3305 = vmatprep.subr.mxu0 0.0
  %3306 = vmatpush1.msra.mxu0 %v3262
  %3307 = vmatprep.subr.mxu0 0.0
  %3308 = vmatpush1.msra.mxu0 %v3261
  %3309 = vmatprep.subr.mxu0 0.0
  %3310 = vmatpush2.msra.mxu0 0.0
  %3311 = vmatprep.subr.mxu0 0.0
  %3312 = vmatpush2.msra.mxu0 0.0
  %3313 = vmatprep.subr.mxu0 0.0
  %3314 = vmatpush2.msra.mxu0 0.0
  %3315 = vmatprep.subr.mxu0 0.0
  %3316 = vmatpush2.msra.mxu0 0.0
  %3317 = vmatprep.subr.mxu0 0.0
  %3318 = vmatpush2.msra.mxu0 0.0
  %3319 = vmatprep.subr.mxu0 0.0
  %3320 = vmatpush2.msra.mxu0 0.0
  %3321 = vmatprep.subr.mxu0 0.0
  %3322 = vmatpush2.msra.mxu0 0.0
  %3323 = vmatprep.subr.mxu0 0.0
  %3324 = vmatpush2.msra.mxu0 0.0
  %3325 = vmatprep.subr.mxu0 0.0
  %3326 = vmatpush2.msra.mxu0 0.0
  %3327 = vmatprep.subr.mxu0 0.0
  %3328 = vmatpush2.msra.mxu0 0.0
  %3329 = vmatprep.subr.mxu0 0.0
  %3330 = vmatpush2.msra.mxu0 0.0
  %3331 = vmatprep.subr.mxu0 0.0
  %3332 = vmatpush2.msra.mxu0 0.0
  %3333 = vmatprep.subr.mxu0 0.0
  %3334 = vmatpush2.msra.mxu0 0.0
  %3335 = vmatprep.subr.mxu0 0.0
  %3336 = vmatpush2.msra.mxu0 0.0
  %3337 = vmatprep.subr.mxu0 0.0
  %3338 = vmatpush2.msra.mxu0 0.0
  %3339 = vmatprep.subr.mxu0 0.0
  %3340 = vmatpush2.msra.mxu0 0.0
  %3341 = vmatprep.mubr.f32.mxu0 0.0
  %3342 = vmatmul.mubr.f32.gmra.mxu0 %v3259
  %v3343 = vpop.f32.mrf.mxu0
  %v3344 = vadd.f32 0.0, %v3343
  %v3345 = vpop.f32.mrf.mxu0
  %3346 = vdwg.mxu0
  %v3347 = vadd.f32 %v3258, %v3344
  %v3348 = vld [vmem:[#allocation2 + $0xa8] sm:$0xff]
  %s3349 = scalar_lea.vmem %s6, 2688
  %v3350 = vld [vmem:[%s3349] sm:$0xff]
  %v3351 = vld [vmem:[%s3349 + $0x8] sm:$0xff]
  %v3352 = vld [vmem:[%s3349 + $0x10] sm:$0xff]
  %v3353 = vld [vmem:[%s3349 + $0x18] sm:$0xff]
  %v3354 = vld [vmem:[%s3349 + $0x20] sm:$0xff]
  %v3355 = vld [vmem:[%s3349 + $0x28] sm:$0xff]
  %v3356 = vld [vmem:[%s3349 + $0x30] sm:$0xff]
  %v3357 = vld [vmem:[%s3349 + $0x38] sm:$0xff]
  %v3358 = vld [vmem:[%s3349 + $0x40] sm:$0xff]
  %v3359 = vld [vmem:[%s3349 + $0x48] sm:$0xff]
  %v3360 = vld [vmem:[%s3349 + $0x50] sm:$0xff]
  %v3361 = vld [vmem:[%s3349 + $0x58] sm:$0xff]
  %v3362 = vld [vmem:[%s3349 + $0x60] sm:$0xff]
  %v3363 = vld [vmem:[%s3349 + $0x68] sm:$0xff]
  %v3364 = vld [vmem:[%s3349 + $0x70] sm:$0xff]
  %v3365 = vld [vmem:[%s3349 + $0x78] sm:$0xff]
  %3366 = vmatprep.subr.mxu0 0.0
  %3367 = vmatpush1.msra.mxu0 %v3365
  %3368 = vmatprep.subr.mxu0 0.0
  %3369 = vmatpush1.msra.mxu0 %v3364
  %3370 = vmatprep.subr.mxu0 0.0
  %3371 = vmatpush1.msra.mxu0 %v3363
  %3372 = vmatprep.subr.mxu0 0.0
  %3373 = vmatpush1.msra.mxu0 %v3362
  %3374 = vmatprep.subr.mxu0 0.0
  %3375 = vmatpush1.msra.mxu0 %v3361
  %3376 = vmatprep.subr.mxu0 0.0
  %3377 = vmatpush1.msra.mxu0 %v3360
  %3378 = vmatprep.subr.mxu0 0.0
  %3379 = vmatpush1.msra.mxu0 %v3359
  %3380 = vmatprep.subr.mxu0 0.0
  %3381 = vmatpush1.msra.mxu0 %v3358
  %3382 = vmatprep.subr.mxu0 0.0
  %3383 = vmatpush1.msra.mxu0 %v3357
  %3384 = vmatprep.subr.mxu0 0.0
  %3385 = vmatpush1.msra.mxu0 %v3356
  %3386 = vmatprep.subr.mxu0 0.0
  %3387 = vmatpush1.msra.mxu0 %v3355
  %3388 = vmatprep.subr.mxu0 0.0
  %3389 = vmatpush1.msra.mxu0 %v3354
  %3390 = vmatprep.subr.mxu0 0.0
  %3391 = vmatpush1.msra.mxu0 %v3353
  %3392 = vmatprep.subr.mxu0 0.0
  %3393 = vmatpush1.msra.mxu0 %v3352
  %3394 = vmatprep.subr.mxu0 0.0
  %3395 = vmatpush1.msra.mxu0 %v3351
  %3396 = vmatprep.subr.mxu0 0.0
  %3397 = vmatpush1.msra.mxu0 %v3350
  %3398 = vmatprep.subr.mxu0 0.0
  %3399 = vmatpush2.msra.mxu0 0.0
  %3400 = vmatprep.subr.mxu0 0.0
  %3401 = vmatpush2.msra.mxu0 0.0
  %3402 = vmatprep.subr.mxu0 0.0
  %3403 = vmatpush2.msra.mxu0 0.0
  %3404 = vmatprep.subr.mxu0 0.0
  %3405 = vmatpush2.msra.mxu0 0.0
  %3406 = vmatprep.subr.mxu0 0.0
  %3407 = vmatpush2.msra.mxu0 0.0
  %3408 = vmatprep.subr.mxu0 0.0
  %3409 = vmatpush2.msra.mxu0 0.0
  %3410 = vmatprep.subr.mxu0 0.0
  %3411 = vmatpush2.msra.mxu0 0.0
  %3412 = vmatprep.subr.mxu0 0.0
  %3413 = vmatpush2.msra.mxu0 0.0
  %3414 = vmatprep.subr.mxu0 0.0
  %3415 = vmatpush2.msra.mxu0 0.0
  %3416 = vmatprep.subr.mxu0 0.0
  %3417 = vmatpush2.msra.mxu0 0.0
  %3418 = vmatprep.subr.mxu0 0.0
  %3419 = vmatpush2.msra.mxu0 0.0
  %3420 = vmatprep.subr.mxu0 0.0
  %3421 = vmatpush2.msra.mxu0 0.0
  %3422 = vmatprep.subr.mxu0 0.0
  %3423 = vmatpush2.msra.mxu0 0.0
  %3424 = vmatprep.subr.mxu0 0.0
  %3425 = vmatpush2.msra.mxu0 0.0
  %3426 = vmatprep.subr.mxu0 0.0
  %3427 = vmatpush2.msra.mxu0 0.0
  %3428 = vmatprep.subr.mxu0 0.0
  %3429 = vmatpush2.msra.mxu0 0.0
  %3430 = vmatprep.mubr.f32.mxu0 0.0
  %3431 = vmatmul.mubr.f32.gmra.mxu0 %v3348
  %v3432 = vpop.f32.mrf.mxu0
  %v3433 = vadd.f32 0.0, %v3432
  %v3434 = vpop.f32.mrf.mxu0
  %3435 = vdwg.mxu0
  %v3436 = vadd.f32 %v3347, %v3433
  %v3437 = vld [vmem:[#allocation2 + $0xb0] sm:$0xff]
  %s3438 = scalar_lea.vmem %s6, 2816
  %v3439 = vld [vmem:[%s3438] sm:$0xff]
  %v3440 = vld [vmem:[%s3438 + $0x8] sm:$0xff]
  %v3441 = vld [vmem:[%s3438 + $0x10] sm:$0xff]
  %v3442 = vld [vmem:[%s3438 + $0x18] sm:$0xff]
  %v3443 = vld [vmem:[%s3438 + $0x20] sm:$0xff]
  %v3444 = vld [vmem:[%s3438 + $0x28] sm:$0xff]
  %v3445 = vld [vmem:[%s3438 + $0x30] sm:$0xff]
  %v3446 = vld [vmem:[%s3438 + $0x38] sm:$0xff]
  %v3447 = vld [vmem:[%s3438 + $0x40] sm:$0xff]
  %v3448 = vld [vmem:[%s3438 + $0x48] sm:$0xff]
  %v3449 = vld [vmem:[%s3438 + $0x50] sm:$0xff]
  %v3450 = vld [vmem:[%s3438 + $0x58] sm:$0xff]
  %v3451 = vld [vmem:[%s3438 + $0x60] sm:$0xff]
  %v3452 = vld [vmem:[%s3438 + $0x68] sm:$0xff]
  %v3453 = vld [vmem:[%s3438 + $0x70] sm:$0xff]
  %v3454 = vld [vmem:[%s3438 + $0x78] sm:$0xff]
  %3455 = vmatprep.subr.mxu0 0.0
  %3456 = vmatpush1.msra.mxu0 %v3454
  %3457 = vmatprep.subr.mxu0 0.0
  %3458 = vmatpush1.msra.mxu0 %v3453
  %3459 = vmatprep.subr.mxu0 0.0
  %3460 = vmatpush1.msra.mxu0 %v3452
  %3461 = vmatprep.subr.mxu0 0.0
  %3462 = vmatpush1.msra.mxu0 %v3451
  %3463 = vmatprep.subr.mxu0 0.0
  %3464 = vmatpush1.msra.mxu0 %v3450
  %3465 = vmatprep.subr.mxu0 0.0
  %3466 = vmatpush1.msra.mxu0 %v3449
  %3467 = vmatprep.subr.mxu0 0.0
  %3468 = vmatpush1.msra.mxu0 %v3448
  %3469 = vmatprep.subr.mxu0 0.0
  %3470 = vmatpush1.msra.mxu0 %v3447
  %3471 = vmatprep.subr.mxu0 0.0
  %3472 = vmatpush1.msra.mxu0 %v3446
  %3473 = vmatprep.subr.mxu0 0.0
  %3474 = vmatpush1.msra.mxu0 %v3445
  %3475 = vmatprep.subr.mxu0 0.0
  %3476 = vmatpush1.msra.mxu0 %v3444
  %3477 = vmatprep.subr.mxu0 0.0
  %3478 = vmatpush1.msra.mxu0 %v3443
  %3479 = vmatprep.subr.mxu0 0.0
  %3480 = vmatpush1.msra.mxu0 %v3442
  %3481 = vmatprep.subr.mxu0 0.0
  %3482 = vmatpush1.msra.mxu0 %v3441
  %3483 = vmatprep.subr.mxu0 0.0
  %3484 = vmatpush1.msra.mxu0 %v3440
  %3485 = vmatprep.subr.mxu0 0.0
  %3486 = vmatpush1.msra.mxu0 %v3439
  %3487 = vmatprep.subr.mxu0 0.0
  %3488 = vmatpush2.msra.mxu0 0.0
  %3489 = vmatprep.subr.mxu0 0.0
  %3490 = vmatpush2.msra.mxu0 0.0
  %3491 = vmatprep.subr.mxu0 0.0
  %3492 = vmatpush2.msra.mxu0 0.0
  %3493 = vmatprep.subr.mxu0 0.0
  %3494 = vmatpush2.msra.mxu0 0.0
  %3495 = vmatprep.subr.mxu0 0.0
  %3496 = vmatpush2.msra.mxu0 0.0
  %3497 = vmatprep.subr.mxu0 0.0
  %3498 = vmatpush2.msra.mxu0 0.0
  %3499 = vmatprep.subr.mxu0 0.0
  %3500 = vmatpush2.msra.mxu0 0.0
  %3501 = vmatprep.subr.mxu0 0.0
  %3502 = vmatpush2.msra.mxu0 0.0
  %3503 = vmatprep.subr.mxu0 0.0
  %3504 = vmatpush2.msra.mxu0 0.0
  %3505 = vmatprep.subr.mxu0 0.0
  %3506 = vmatpush2.msra.mxu0 0.0
  %3507 = vmatprep.subr.mxu0 0.0
  %3508 = vmatpush2.msra.mxu0 0.0
  %3509 = vmatprep.subr.mxu0 0.0
  %3510 = vmatpush2.msra.mxu0 0.0
  %3511 = vmatprep.subr.mxu0 0.0
  %3512 = vmatpush2.msra.mxu0 0.0
  %3513 = vmatprep.subr.mxu0 0.0
  %3514 = vmatpush2.msra.mxu0 0.0
  %3515 = vmatprep.subr.mxu0 0.0
  %3516 = vmatpush2.msra.mxu0 0.0
  %3517 = vmatprep.subr.mxu0 0.0
  %3518 = vmatpush2.msra.mxu0 0.0
  %3519 = vmatprep.mubr.f32.mxu0 0.0
  %3520 = vmatmul.mubr.f32.gmra.mxu0 %v3437
  %v3521 = vpop.f32.mrf.mxu0
  %v3522 = vadd.f32 0.0, %v3521
  %v3523 = vpop.f32.mrf.mxu0
  %3524 = vdwg.mxu0
  %v3525 = vadd.f32 %v3436, %v3522
  %v3526 = vld [vmem:[#allocation2 + $0xb8] sm:$0xff]
  %s3527 = scalar_lea.vmem %s6, 2944
  %v3528 = vld [vmem:[%s3527] sm:$0xff]
  %v3529 = vld [vmem:[%s3527 + $0x8] sm:$0xff]
  %v3530 = vld [vmem:[%s3527 + $0x10] sm:$0xff]
  %v3531 = vld [vmem:[%s3527 + $0x18] sm:$0xff]
  %v3532 = vld [vmem:[%s3527 + $0x20] sm:$0xff]
  %v3533 = vld [vmem:[%s3527 + $0x28] sm:$0xff]
  %v3534 = vld [vmem:[%s3527 + $0x30] sm:$0xff]
  %v3535 = vld [vmem:[%s3527 + $0x38] sm:$0xff]
  %v3536 = vld [vmem:[%s3527 + $0x40] sm:$0xff]
  %v3537 = vld [vmem:[%s3527 + $0x48] sm:$0xff]
  %v3538 = vld [vmem:[%s3527 + $0x50] sm:$0xff]
  %v3539 = vld [vmem:[%s3527 + $0x58] sm:$0xff]
  %v3540 = vld [vmem:[%s3527 + $0x60] sm:$0xff]
  %v3541 = vld [vmem:[%s3527 + $0x68] sm:$0xff]
  %v3542 = vld [vmem:[%s3527 + $0x70] sm:$0xff]
  %v3543 = vld [vmem:[%s3527 + $0x78] sm:$0xff]
  %3544 = vmatprep.subr.mxu0 0.0
  %3545 = vmatpush1.msra.mxu0 %v3543
  %3546 = vmatprep.subr.mxu0 0.0
  %3547 = vmatpush1.msra.mxu0 %v3542
  %3548 = vmatprep.subr.mxu0 0.0
  %3549 = vmatpush1.msra.mxu0 %v3541
  %3550 = vmatprep.subr.mxu0 0.0
  %3551 = vmatpush1.msra.mxu0 %v3540
  %3552 = vmatprep.subr.mxu0 0.0
  %3553 = vmatpush1.msra.mxu0 %v3539
  %3554 = vmatprep.subr.mxu0 0.0
  %3555 = vmatpush1.msra.mxu0 %v3538
  %3556 = vmatprep.subr.mxu0 0.0
  %3557 = vmatpush1.msra.mxu0 %v3537
  %3558 = vmatprep.subr.mxu0 0.0
  %3559 = vmatpush1.msra.mxu0 %v3536
  %3560 = vmatprep.subr.mxu0 0.0
  %3561 = vmatpush1.msra.mxu0 %v3535
  %3562 = vmatprep.subr.mxu0 0.0
  %3563 = vmatpush1.msra.mxu0 %v3534
  %3564 = vmatprep.subr.mxu0 0.0
  %3565 = vmatpush1.msra.mxu0 %v3533
  %3566 = vmatprep.subr.mxu0 0.0
  %3567 = vmatpush1.msra.mxu0 %v3532
  %3568 = vmatprep.subr.mxu0 0.0
  %3569 = vmatpush1.msra.mxu0 %v3531
  %3570 = vmatprep.subr.mxu0 0.0
  %3571 = vmatpush1.msra.mxu0 %v3530
  %3572 = vmatprep.subr.mxu0 0.0
  %3573 = vmatpush1.msra.mxu0 %v3529
  %3574 = vmatprep.subr.mxu0 0.0
  %3575 = vmatpush1.msra.mxu0 %v3528
  %3576 = vmatprep.subr.mxu0 0.0
  %3577 = vmatpush2.msra.mxu0 0.0
  %3578 = vmatprep.subr.mxu0 0.0
  %3579 = vmatpush2.msra.mxu0 0.0
  %3580 = vmatprep.subr.mxu0 0.0
  %3581 = vmatpush2.msra.mxu0 0.0
  %3582 = vmatprep.subr.mxu0 0.0
  %3583 = vmatpush2.msra.mxu0 0.0
  %3584 = vmatprep.subr.mxu0 0.0
  %3585 = vmatpush2.msra.mxu0 0.0
  %3586 = vmatprep.subr.mxu0 0.0
  %3587 = vmatpush2.msra.mxu0 0.0
  %3588 = vmatprep.subr.mxu0 0.0
  %3589 = vmatpush2.msra.mxu0 0.0
  %3590 = vmatprep.subr.mxu0 0.0
  %3591 = vmatpush2.msra.mxu0 0.0
  %3592 = vmatprep.subr.mxu0 0.0
  %3593 = vmatpush2.msra.mxu0 0.0
  %3594 = vmatprep.subr.mxu0 0.0
  %3595 = vmatpush2.msra.mxu0 0.0
  %3596 = vmatprep.subr.mxu0 0.0
  %3597 = vmatpush2.msra.mxu0 0.0
  %3598 = vmatprep.subr.mxu0 0.0
  %3599 = vmatpush2.msra.mxu0 0.0
  %3600 = vmatprep.subr.mxu0 0.0
  %3601 = vmatpush2.msra.mxu0 0.0
  %3602 = vmatprep.subr.mxu0 0.0
  %3603 = vmatpush2.msra.mxu0 0.0
  %3604 = vmatprep.subr.mxu0 0.0
  %3605 = vmatpush2.msra.mxu0 0.0
  %3606 = vmatprep.subr.mxu0 0.0
  %3607 = vmatpush2.msra.mxu0 0.0
  %3608 = vmatprep.mubr.f32.mxu0 0.0
  %3609 = vmatmul.mubr.f32.gmra.mxu0 %v3526
  %v3610 = vpop.f32.mrf.mxu0
  %v3611 = vadd.f32 0.0, %v3610
  %v3612 = vpop.f32.mrf.mxu0
  %3613 = vdwg.mxu0
  %v3614 = vadd.f32 %v3525, %v3611
  %v3615 = vld [vmem:[#allocation2 + $0xc0] sm:$0xff]
  %s3616 = scalar_lea.vmem %s6, 3072
  %v3617 = vld [vmem:[%s3616] sm:$0xff]
  %v3618 = vld [vmem:[%s3616 + $0x8] sm:$0xff]
  %v3619 = vld [vmem:[%s3616 + $0x10] sm:$0xff]
  %v3620 = vld [vmem:[%s3616 + $0x18] sm:$0xff]
  %v3621 = vld [vmem:[%s3616 + $0x20] sm:$0xff]
  %v3622 = vld [vmem:[%s3616 + $0x28] sm:$0xff]
  %v3623 = vld [vmem:[%s3616 + $0x30] sm:$0xff]
  %v3624 = vld [vmem:[%s3616 + $0x38] sm:$0xff]
  %v3625 = vld [vmem:[%s3616 + $0x40] sm:$0xff]
  %v3626 = vld [vmem:[%s3616 + $0x48] sm:$0xff]
  %v3627 = vld [vmem:[%s3616 + $0x50] sm:$0xff]
  %v3628 = vld [vmem:[%s3616 + $0x58] sm:$0xff]
  %v3629 = vld [vmem:[%s3616 + $0x60] sm:$0xff]
  %v3630 = vld [vmem:[%s3616 + $0x68] sm:$0xff]
  %v3631 = vld [vmem:[%s3616 + $0x70] sm:$0xff]
  %v3632 = vld [vmem:[%s3616 + $0x78] sm:$0xff]
  %3633 = vmatprep.subr.mxu0 0.0
  %3634 = vmatpush1.msra.mxu0 %v3632
  %3635 = vmatprep.subr.mxu0 0.0
  %3636 = vmatpush1.msra.mxu0 %v3631
  %3637 = vmatprep.subr.mxu0 0.0
  %3638 = vmatpush1.msra.mxu0 %v3630
  %3639 = vmatprep.subr.mxu0 0.0
  %3640 = vmatpush1.msra.mxu0 %v3629
  %3641 = vmatprep.subr.mxu0 0.0
  %3642 = vmatpush1.msra.mxu0 %v3628
  %3643 = vmatprep.subr.mxu0 0.0
  %3644 = vmatpush1.msra.mxu0 %v3627
  %3645 = vmatprep.subr.mxu0 0.0
  %3646 = vmatpush1.msra.mxu0 %v3626
  %3647 = vmatprep.subr.mxu0 0.0
  %3648 = vmatpush1.msra.mxu0 %v3625
  %3649 = vmatprep.subr.mxu0 0.0
  %3650 = vmatpush1.msra.mxu0 %v3624
  %3651 = vmatprep.subr.mxu0 0.0
  %3652 = vmatpush1.msra.mxu0 %v3623
  %3653 = vmatprep.subr.mxu0 0.0
  %3654 = vmatpush1.msra.mxu0 %v3622
  %3655 = vmatprep.subr.mxu0 0.0
  %3656 = vmatpush1.msra.mxu0 %v3621
  %3657 = vmatprep.subr.mxu0 0.0
  %3658 = vmatpush1.msra.mxu0 %v3620
  %3659 = vmatprep.subr.mxu0 0.0
  %3660 = vmatpush1.msra.mxu0 %v3619
  %3661 = vmatprep.subr.mxu0 0.0
  %3662 = vmatpush1.msra.mxu0 %v3618
  %3663 = vmatprep.subr.mxu0 0.0
  %3664 = vmatpush1.msra.mxu0 %v3617
  %3665 = vmatprep.subr.mxu0 0.0
  %3666 = vmatpush2.msra.mxu0 0.0
  %3667 = vmatprep.subr.mxu0 0.0
  %3668 = vmatpush2.msra.mxu0 0.0
  %3669 = vmatprep.subr.mxu0 0.0
  %3670 = vmatpush2.msra.mxu0 0.0
  %3671 = vmatprep.subr.mxu0 0.0
  %3672 = vmatpush2.msra.mxu0 0.0
  %3673 = vmatprep.subr.mxu0 0.0
  %3674 = vmatpush2.msra.mxu0 0.0
  %3675 = vmatprep.subr.mxu0 0.0
  %3676 = vmatpush2.msra.mxu0 0.0
  %3677 = vmatprep.subr.mxu0 0.0
  %3678 = vmatpush2.msra.mxu0 0.0
  %3679 = vmatprep.subr.mxu0 0.0
  %3680 = vmatpush2.msra.mxu0 0.0
  %3681 = vmatprep.subr.mxu0 0.0
  %3682 = vmatpush2.msra.mxu0 0.0
  %3683 = vmatprep.subr.mxu0 0.0
  %3684 = vmatpush2.msra.mxu0 0.0
  %3685 = vmatprep.subr.mxu0 0.0
  %3686 = vmatpush2.msra.mxu0 0.0
  %3687 = vmatprep.subr.mxu0 0.0
  %3688 = vmatpush2.msra.mxu0 0.0
  %3689 = vmatprep.subr.mxu0 0.0
  %3690 = vmatpush2.msra.mxu0 0.0
  %3691 = vmatprep.subr.mxu0 0.0
  %3692 = vmatpush2.msra.mxu0 0.0
  %3693 = vmatprep.subr.mxu0 0.0
  %3694 = vmatpush2.msra.mxu0 0.0
  %3695 = vmatprep.subr.mxu0 0.0
  %3696 = vmatpush2.msra.mxu0 0.0
  %3697 = vmatprep.mubr.f32.mxu0 0.0
  %3698 = vmatmul.mubr.f32.gmra.mxu0 %v3615
  %v3699 = vpop.f32.mrf.mxu0
  %v3700 = vadd.f32 0.0, %v3699
  %v3701 = vpop.f32.mrf.mxu0
  %3702 = vdwg.mxu0
  %v3703 = vadd.f32 %v3614, %v3700
  %v3704 = vld [vmem:[%s7] sm:$0x1]
  %v3706 = vlaneseq
  %v3707 = vshrl.u32 %v3706, 7
  %v3708 = vsub.s32 0, %v3707
  %v3709 = vrot.slane %v3704, %v3708
  %v3711 = vadd.f32 %v3703, %v3709
  %v3712 = vmax.f32 %v3711, 0.0
  %v3713 = vld [vmem:[%s8] sm:$0xff]
  %v3714 = vld [vmem:[%s8 + $0x8] sm:$0xff]
  %v3715 = vld [vmem:[%s8 + $0x10] sm:$0xff]
  %v3716 = vld [vmem:[%s8 + $0x18] sm:$0xff]
  %v3717 = vld [vmem:[%s8 + $0x20] sm:$0xff]
  %v3718 = vld [vmem:[%s8 + $0x28] sm:$0xff]
  %v3719 = vld [vmem:[%s8 + $0x30] sm:$0xff]
  %v3720 = vld [vmem:[%s8 + $0x38] sm:$0xff]
  %v3721 = vld [vmem:[%s8 + $0x40] sm:$0xff]
  %v3722 = vld [vmem:[%s8 + $0x48] sm:$0xff]
  %v3723 = vld [vmem:[%s8 + $0x50] sm:$0xff]
  %v3724 = vld [vmem:[%s8 + $0x58] sm:$0xff]
  %v3725 = vld [vmem:[%s8 + $0x60] sm:$0xff]
  %v3726 = vld [vmem:[%s8 + $0x68] sm:$0xff]
  %v3727 = vld [vmem:[%s8 + $0x70] sm:$0xff]
  %v3728 = vld [vmem:[%s8 + $0x78] sm:$0xff]
  %v3729 = vld [vmem:[%s9] sm:$0x1]
  %v3731 = vlaneseq
  %v3732 = vshrl.u32 %v3731, 7
  %v3733 = vsub.s32 0, %v3732
  %v3734 = vrot.slane %v3729, %v3733
  %3736 = vmatprep.subr.mxu0 0.0
  %3737 = vmatpush1.msra.mxu0 %v3728
  %3738 = vmatprep.subr.mxu0 0.0
  %3739 = vmatpush1.msra.mxu0 %v3727
  %3740 = vmatprep.subr.mxu0 0.0
  %3741 = vmatpush1.msra.mxu0 %v3726
  %3742 = vmatprep.subr.mxu0 0.0
  %3743 = vmatpush1.msra.mxu0 %v3725
  %3744 = vmatprep.subr.mxu0 0.0
  %3745 = vmatpush1.msra.mxu0 %v3724
  %3746 = vmatprep.subr.mxu0 0.0
  %3747 = vmatpush1.msra.mxu0 %v3723
  %3748 = vmatprep.subr.mxu0 0.0
  %3749 = vmatpush1.msra.mxu0 %v3722
  %3750 = vmatprep.subr.mxu0 0.0
  %3751 = vmatpush1.msra.mxu0 %v3721
  %3752 = vmatprep.subr.mxu0 0.0
  %3753 = vmatpush1.msra.mxu0 %v3720
  %3754 = vmatprep.subr.mxu0 0.0
  %3755 = vmatpush1.msra.mxu0 %v3719
  %3756 = vmatprep.subr.mxu0 0.0
  %3757 = vmatpush1.msra.mxu0 %v3718
  %3758 = vmatprep.subr.mxu0 0.0
  %3759 = vmatpush1.msra.mxu0 %v3717
  %3760 = vmatprep.subr.mxu0 0.0
  %3761 = vmatpush1.msra.mxu0 %v3716
  %3762 = vmatprep.subr.mxu0 0.0
  %3763 = vmatpush1.msra.mxu0 %v3715
  %3764 = vmatprep.subr.mxu0 0.0
  %3765 = vmatpush1.msra.mxu0 %v3714
  %3766 = vmatprep.subr.mxu0 0.0
  %3767 = vmatpush1.msra.mxu0 %v3713
  %3768 = vmatprep.subr.mxu0 0.0
  %3769 = vmatpush2.msra.mxu0 0.0
  %3770 = vmatprep.subr.mxu0 0.0
  %3771 = vmatpush2.msra.mxu0 0.0
  %3772 = vmatprep.subr.mxu0 0.0
  %3773 = vmatpush2.msra.mxu0 0.0
  %3774 = vmatprep.subr.mxu0 0.0
  %3775 = vmatpush2.msra.mxu0 0.0
  %3776 = vmatprep.subr.mxu0 0.0
  %3777 = vmatpush2.msra.mxu0 0.0
  %3778 = vmatprep.subr.mxu0 0.0
  %3779 = vmatpush2.msra.mxu0 0.0
  %3780 = vmatprep.subr.mxu0 0.0
  %3781 = vmatpush2.msra.mxu0 0.0
  %3782 = vmatprep.subr.mxu0 0.0
  %3783 = vmatpush2.msra.mxu0 0.0
  %3784 = vmatprep.subr.mxu0 0.0
  %3785 = vmatpush2.msra.mxu0 0.0
  %3786 = vmatprep.subr.mxu0 0.0
  %3787 = vmatpush2.msra.mxu0 0.0
  %3788 = vmatprep.subr.mxu0 0.0
  %3789 = vmatpush2.msra.mxu0 0.0
  %3790 = vmatprep.subr.mxu0 0.0
  %3791 = vmatpush2.msra.mxu0 0.0
  %3792 = vmatprep.subr.mxu0 0.0
  %3793 = vmatpush2.msra.mxu0 0.0
  %3794 = vmatprep.subr.mxu0 0.0
  %3795 = vmatpush2.msra.mxu0 0.0
  %3796 = vmatprep.subr.mxu0 0.0
  %3797 = vmatpush2.msra.mxu0 0.0
  %3798 = vmatprep.subr.mxu0 0.0
  %3799 = vmatpush2.msra.mxu0 0.0
  %3800 = vmatprep.mubr.f32.mxu0 0.0
  %3801 = vmatmul.mubr.f32.gmra.mxu0 %v3712
  %v3802 = vpop.f32.mrf.mxu0
  %v3803 = vadd.f32 %v3734, %v3802
  %v3804 = vpop.f32.mrf.mxu0
  %3805 = vdwg.mxu0
  %v3806 = vmax.f32 %v3803, 0.0
  %v3807 = vld [vmem:[%s10] sm:$0xff]
  %v3808 = vld [vmem:[%s10 + $0x8] sm:$0xff]
  %v3809 = vld [vmem:[%s10 + $0x10] sm:$0xff]
  %v3810 = vld [vmem:[%s10 + $0x18] sm:$0xff]
  %v3811 = vld [vmem:[%s10 + $0x20] sm:$0xff]
  %v3812 = vld [vmem:[%s10 + $0x28] sm:$0xff]
  %v3813 = vld [vmem:[%s10 + $0x30] sm:$0xff]
  %v3814 = vld [vmem:[%s10 + $0x38] sm:$0xff]
  %v3815 = vld [vmem:[%s10 + $0x40] sm:$0xff]
  %v3816 = vld [vmem:[%s10 + $0x48] sm:$0xff]
  %v3817 = vld [vmem:[%s10 + $0x50] sm:$0xff]
  %v3818 = vld [vmem:[%s10 + $0x58] sm:$0xff]
  %v3819 = vld [vmem:[%s10 + $0x60] sm:$0xff]
  %v3820 = vld [vmem:[%s10 + $0x68] sm:$0xff]
  %v3821 = vld [vmem:[%s10 + $0x70] sm:$0xff]
  %v3822 = vld [vmem:[%s10 + $0x78] sm:$0xff]
  %v3823 = vld [vmem:[%s11] sm:$0x1]
  %v3825 = vlaneseq
  %v3826 = vshrl.u32 %v3825, 7
  %v3827 = vsub.s32 0, %v3826
  %v3828 = vrot.slane %v3823, %v3827
  %3830 = vmatprep.subr.mxu0 0.0
  %3831 = vmatpush1.msra.mxu0 %v3822
  %3832 = vmatprep.subr.mxu0 0.0
  %3833 = vmatpush1.msra.mxu0 %v3821
  %3834 = vmatprep.subr.mxu0 0.0
  %3835 = vmatpush1.msra.mxu0 %v3820
  %3836 = vmatprep.subr.mxu0 0.0
  %3837 = vmatpush1.msra.mxu0 %v3819
  %3838 = vmatprep.subr.mxu0 0.0
  %3839 = vmatpush1.msra.mxu0 %v3818
  %3840 = vmatprep.subr.mxu0 0.0
  %3841 = vmatpush1.msra.mxu0 %v3817
  %3842 = vmatprep.subr.mxu0 0.0
  %3843 = vmatpush1.msra.mxu0 %v3816
  %3844 = vmatprep.subr.mxu0 0.0
  %3845 = vmatpush1.msra.mxu0 %v3815
  %3846 = vmatprep.subr.mxu0 0.0
  %3847 = vmatpush1.msra.mxu0 %v3814
  %3848 = vmatprep.subr.mxu0 0.0
  %3849 = vmatpush1.msra.mxu0 %v3813
  %3850 = vmatprep.subr.mxu0 0.0
  %3851 = vmatpush1.msra.mxu0 %v3812
  %3852 = vmatprep.subr.mxu0 0.0
  %3853 = vmatpush1.msra.mxu0 %v3811
  %3854 = vmatprep.subr.mxu0 0.0
  %3855 = vmatpush1.msra.mxu0 %v3810
  %3856 = vmatprep.subr.mxu0 0.0
  %3857 = vmatpush1.msra.mxu0 %v3809
  %3858 = vmatprep.subr.mxu0 0.0
  %3859 = vmatpush1.msra.mxu0 %v3808
  %3860 = vmatprep.subr.mxu0 0.0
  %3861 = vmatpush1.msra.mxu0 %v3807
  %3862 = vmatprep.subr.mxu0 0.0
  %3863 = vmatpush2.msra.mxu0 0.0
  %3864 = vmatprep.subr.mxu0 0.0
  %3865 = vmatpush2.msra.mxu0 0.0
  %3866 = vmatprep.subr.mxu0 0.0
  %3867 = vmatpush2.msra.mxu0 0.0
  %3868 = vmatprep.subr.mxu0 0.0
  %3869 = vmatpush2.msra.mxu0 0.0
  %3870 = vmatprep.subr.mxu0 0.0
  %3871 = vmatpush2.msra.mxu0 0.0
  %3872 = vmatprep.subr.mxu0 0.0
  %3873 = vmatpush2.msra.mxu0 0.0
  %3874 = vmatprep.subr.mxu0 0.0
  %3875 = vmatpush2.msra.mxu0 0.0
  %3876 = vmatprep.subr.mxu0 0.0
  %3877 = vmatpush2.msra.mxu0 0.0
  %3878 = vmatprep.subr.mxu0 0.0
  %3879 = vmatpush2.msra.mxu0 0.0
  %3880 = vmatprep.subr.mxu0 0.0
  %3881 = vmatpush2.msra.mxu0 0.0
  %3882 = vmatprep.subr.mxu0 0.0
  %3883 = vmatpush2.msra.mxu0 0.0
  %3884 = vmatprep.subr.mxu0 0.0
  %3885 = vmatpush2.msra.mxu0 0.0
  %3886 = vmatprep.subr.mxu0 0.0
  %3887 = vmatpush2.msra.mxu0 0.0
  %3888 = vmatprep.subr.mxu0 0.0
  %3889 = vmatpush2.msra.mxu0 0.0
  %3890 = vmatprep.subr.mxu0 0.0
  %3891 = vmatpush2.msra.mxu0 0.0
  %3892 = vmatprep.subr.mxu0 0.0
  %3893 = vmatpush2.msra.mxu0 0.0
  %3894 = vmatprep.mubr.f32.mxu0 0.0
  %3895 = vmatmul.mubr.f32.gmra.mxu0 %v3806
  %v3896 = vpop.f32.mrf.mxu0
  %v3897 = vadd.f32 %v3828, %v3896
  %v3898 = vpop.f32.mrf.mxu0
  %3899 = vdwg.mxu0
  %3900 = vst [vmem:[%s12] sm:$0xff] %v3897
  // Predicated region
  $region50: #{lenet_forward.3} parent=0 // pred_check
    _
  $region51: #{lenet_forward.3} parent=0 // pred_check_branch
    %3902 = sbr.rel (0) target = $region53
  $region52: #{lenet_forward.3} parent=0 // pred_region
    _
  $region53: #{lenet_forward.3} parent=0 // pred_fallthru
    _
  // Predicated region
  $region54: #{lenet_forward.3} parent=0 // pred_check
    _
  $region55: #{lenet_forward.3} parent=0 // pred_check_branch
    %3904 = sbr.rel (0) target = $region57
  $region56: #{lenet_forward.3} parent=0 // pred_region
    _
  $region57: #{lenet_forward.3} parent=0 // pred_fallthru
    _

</llo_original>
